<compile_context>
chip_gen: v7x
topology: tpu7x:2x2x1
jax: 0.10.0
libtpu: 0.0.40
codegen_flags: <defaults>
</compile_context>

<pallas_src>
import functools

import jax
import jax.numpy as jnp
from jax.experimental import pallas as pl
from jax.experimental.pallas import tpu as pltpu

_MXU_DTYPE = jnp.bfloat16          # matmul operand dtype (accumulation in f32)
_ACT_DTYPE = jnp.bfloat16          # intermediate activation storage dtype
_LANE = 128
_SUBLANE = 16                      # bf16-safe sublane granule for M padding


def _round_up(x, m):
    return (x + m - 1) // m * m


def _tpu_budget():
    """Per-generation VMEM limit and max M tile (v7x: 64 MiB/TC; v5e/v6e: 128 MiB)."""
    phys = 64 << 20
    try:
        info = pltpu.get_tpu_info()
        phys = int(getattr(info, "vmem_capacity_bytes", phys) or phys)
    except Exception:
        pass
    if phys <= (64 << 20):                       # v7x-class: stay conservative
        return 48 << 20, 512
    return min(96 << 20, phys * 3 // 4), 1024    # v5e/v6e: use the big VMEM


_VMEM_LIMIT, _TM_MAX = _tpu_budget()


def _pick_batch_tile(batch, bytes_per_instance):
    """Largest batch tile whose double-buffered in+out slabs fit with headroom."""
    budget = (_VMEM_LIMIT // 2) * 4 // 5         # /2 double buffer, 20% headroom
    tb = max(1, min(batch, budget // max(bytes_per_instance, 1)))
    while batch % tb:
        tb -= 1
    return tb


# ----------------------------------------------------------------------------
# Kernel 1: fused 1x1 conv -> InstanceNorm2d(affine=False, eps=1e-5) -> ReLU
#   grid = (n_regressors, batch-tiles); whole-HW block per instance so the
#   per-instance mean/var reduction stays inside one grid step.
# ----------------------------------------------------------------------------
def _fusion_kernel(x_ref, w_ref, b_ref, o_ref):
    _, tb, hw, c2 = x_ref.shape
    c = w_ref.shape[2]
    x = x_ref[0].reshape(tb * hw, c2)                          # bf16
    y = jnp.dot(x, w_ref[0], preferred_element_type=jnp.float32) + b_ref[0]
    y = y.reshape(tb, hw, c)
    mean = jnp.mean(y, axis=1, keepdims=True)                  # per instance/channel
    var = jnp.mean(jnp.square(y - mean), axis=1, keepdims=True)
    y = (y - mean) * jax.lax.rsqrt(var + 1e-5)                 # biased var, eps=1e-5
    o_ref[0] = jnp.maximum(y, 0.0).astype(o_ref.dtype)


def fusion_conv_in_relu(x, w, b):
    """x: (L,B,HW,2C) bf16; w: (L,2C,C) bf16; b: (L,1,C) f32 -> (L,B,HW,C) bf16."""
    L, B, HW, C2 = x.shape
    C = w.shape[-1]
    per_inst = (HW * C2 * jnp.dtype(_MXU_DTYPE).itemsize
                + HW * C * jnp.dtype(_ACT_DTYPE).itemsize)
    tb = _pick_batch_tile(B, per_inst)
    return pl.pallas_call(
        _fusion_kernel,
        out_shape=jax.ShapeDtypeStruct((L, B, HW, C), _ACT_DTYPE),
        grid=(L, B // tb),
        in_specs=[
            pl.BlockSpec((1, tb, HW, C2), lambda l, bi: (l, bi, 0, 0)),
            pl.BlockSpec((1, C2, C), lambda l, bi: (l, 0, 0)),
            pl.BlockSpec((1, 1, C), lambda l, bi: (l, 0, 0)),
        ],
        out_specs=pl.BlockSpec((1, tb, HW, C), lambda l, bi: (l, bi, 0, 0)),
        compiler_params=pltpu.CompilerParams(
            dimension_semantics=("parallel", "parallel"),
            vmem_limit_bytes=_VMEM_LIMIT),
    )(x, w, b)


# ----------------------------------------------------------------------------
# Kernel 2: stride-1 tap convolution (no im2col in HBM).
#   The padded NHWC block is DMA'd once; the k*k taps are built by static
#   in-VMEM window loads and accumulated in f32 on the MXU.
# ----------------------------------------------------------------------------
def _conv_tap_kernel(x_ref, w_ref, b_ref, o_ref, *, oh, ow, relu):
    _, tb, _, _, cin = x_ref.shape
    kh, kw, cout = w_ref.shape[1], w_ref.shape[2], w_ref.shape[4]
    m = tb * oh * ow
    acc = jnp.zeros((m, cout), jnp.float32)
    for i in range(kh):                      # static, fully unrolled taps
        for j in range(kw):
            tap = x_ref[0, :, i:i + oh, j:j + ow, :].reshape(m, cin)
            acc = acc + jnp.dot(tap, w_ref[0, i, j],
                                preferred_element_type=jnp.float32)
    acc = acc + b_ref[0]
    if relu:
        acc = jnp.maximum(acc, 0.0)
    o_ref[0] = acc.reshape(tb, oh, ow, cout).astype(o_ref.dtype)


def conv2d_taps(x_padded, w, b, oh, ow, out_dtype, relu=True):
    """x_padded: (L,B,HP,WP,Cin) bf16; w: (L,KH,KW,Cin,Cout) bf16; b: (L,1,Cout) f32."""
    L, B, HP, WP, Cin = x_padded.shape
    KH, KW, Cout = w.shape[1], w.shape[2], w.shape[4]
    per_inst = (HP * WP * Cin * jnp.dtype(x_padded.dtype).itemsize
                + oh * ow * Cout * jnp.dtype(out_dtype).itemsize)
    tb = _pick_batch_tile(B, per_inst)
    return pl.pallas_call(
        functools.partial(_conv_tap_kernel, oh=oh, ow=ow, relu=relu),
        out_shape=jax.ShapeDtypeStruct((L, B, oh, ow, Cout), out_dtype),
        grid=(L, B // tb),
        in_specs=[
            pl.BlockSpec((1, tb, HP, WP, Cin), lambda l, bi: (l, bi, 0, 0, 0)),
            pl.BlockSpec((1, KH, KW, Cin, Cout), lambda l, bi: (l, 0, 0, 0, 0)),
            pl.BlockSpec((1, 1, Cout), lambda l, bi: (l, 0, 0)),
        ],
        out_specs=pl.BlockSpec((1, tb, oh, ow, Cout),
                               lambda l, bi: (l, bi, 0, 0, 0)),
        compiler_params=pltpu.CompilerParams(
            dimension_semantics=("parallel", "parallel"),
            vmem_limit_bytes=_VMEM_LIMIT),
    )(x_padded, w, b)


# ----------------------------------------------------------------------------
# Kernel 3: G-batched, M-tiled matmul + bias (+ReLU) — used for BOTH heads
# (one call for all regressors' w1, one for all w2).
# ----------------------------------------------------------------------------
def _matmul_bias_kernel(x_ref, w_ref, b_ref, o_ref, *, relu):
    acc = jnp.dot(x_ref[0], w_ref[0], preferred_element_type=jnp.float32)
    acc = acc + b_ref[0]
    if relu:
        acc = jnp.maximum(acc, 0.0)
    o_ref[0] = acc.astype(o_ref.dtype)


def matmul_bias(x, w, b, relu=False, out_dtype=jnp.float32):
    """x: (G,M,K); w: (G,K,N); b: (G,N) -> (G,M,N).  bf16 cast BEFORE pad,
    K/N lane-padded, M tiled with a VMEM-aware tile, both grid axes parallel."""
    G, M, K = x.shape
    N = w.shape[-1]
    Kp, Np = _round_up(K, _LANE), _round_up(N, _LANE)
    tm = min(_TM_MAX, _round_up(M, _SUBLANE))
    itm = jnp.dtype(_MXU_DTYPE).itemsize
    while tm > _SUBLANE and 2 * (tm * Kp * itm + Kp * Np * itm
                                 + tm * Np * jnp.dtype(out_dtype).itemsize) > _VMEM_LIMIT * 4 // 5:
        tm //= 2
    Mp = _round_up(M, tm)
    xp = jnp.pad(x.astype(_MXU_DTYPE), ((0, 0), (0, Mp - M), (0, Kp - K)))
    wp = jnp.pad(w.astype(_MXU_DTYPE), ((0, 0), (0, Kp - K), (0, Np - N)))
    bp = jnp.pad(b, ((0, 0), (0, Np - N))).reshape(G, 1, Np)
    out = pl.pallas_call(
        functools.partial(_matmul_bias_kernel, relu=relu),
        out_shape=jax.ShapeDtypeStruct((G, Mp, Np), out_dtype),
        grid=(G, Mp // tm),
        in_specs=[
            pl.BlockSpec((1, tm, Kp), lambda g, m: (g, m, 0)),
            pl.BlockSpec((1, Kp, Np), lambda g, m: (g, 0, 0)),
            pl.BlockSpec((1, 1, Np), lambda g, m: (g, 0, 0)),
        ],
        out_specs=pl.BlockSpec((1, tm, Np), lambda g, m: (g, m, 0)),
        compiler_params=pltpu.CompilerParams(
            dimension_semantics=("parallel", "parallel"),
            vmem_limit_bytes=_VMEM_LIMIT),
    )(xp, wp, bp)
    return out[:, :M, :N]


# ----------------------------------------------------------------------------
# Stride-2 -> stride-1 rewrite glue (space-to-depth; 1x pass, never k^2).
# ----------------------------------------------------------------------------
def _pad_nhwc(x, pad):
    if pad == 0:
        return x
    return jnp.pad(x, ((0, 0), (0, 0), (pad, pad), (pad, pad), (0, 0)))


def _space_to_depth2(x):
    """(L,B,H,W,C) -> (L,B,H//2,W//2,4C); channel order (ph, pw, c)."""
    L, B, H, W, C = x.shape
    x = x.reshape(L, B, H // 2, 2, W // 2, 2, C)
    x = x.transpose(0, 1, 2, 4, 3, 5, 6)
    return x.reshape(L, B, H // 2, W // 2, 4 * C)


def _s2d_weight(w):
    """(L,Cout,Cin,4,4) -> (L,2,2,4*Cin,Cout); matches _space_to_depth2 order."""
    L, Cout, Cin = w.shape[0], w.shape[1], w.shape[2]
    w = w.reshape(L, Cout, Cin, 2, 2, 2, 2)        # (L, o, c, gh, ph, gw, pw)
    w = w.transpose(0, 3, 5, 4, 6, 2, 1)           # (L, gh, gw, ph, pw, c, o)
    return w.reshape(L, 2, 2, 4 * Cin, Cout)


def _plain_weight(w):
    """(L,Cout,Cin,k,k) -> (L,k,k,Cin,Cout)."""
    return w.transpose(0, 3, 4, 2, 1)


# ----------------------------------------------------------------------------
# WeightRegressor / Hypernetwork parameters (deterministic synthetic init)
# ----------------------------------------------------------------------------
def init_weight_regressor(key, input_dim, hidden_dim, kernel_size, out_channels,
                          in_channels):
    ks = jax.random.split(key, 7)

    def conv_p(k_, cout, cin, ksz):
        fan_in = cin * ksz * ksz
        w = jax.random.normal(k_, (cout, cin, ksz, ksz), jnp.float32) * (2.0 / fan_in) ** 0.5
        return w, jnp.zeros((cout,), jnp.float32)

    p = {}
    p['fusion_w'], p['fusion_b'] = conv_p(ks[0], input_dim, 2 * input_dim, 1)
    p['fe'] = [
        conv_p(ks[1], 64, input_dim, 3),           # 3x3, s1, p1
        conv_p(ks[2], 64, 64, 4),                  # 4x4, s2, p1
        conv_p(ks[3], 64, 64, 4),                  # 4x4, s2, p1
        conv_p(ks[4], hidden_dim, 64, 4),          # 4x4, s2, p1
    ]
    p['w1'] = jax.random.normal(ks[5], (hidden_dim, in_channels * hidden_dim),
                                jnp.float32) * (2.0 / hidden_dim) ** 0.5
    p['b1'] = jnp.zeros((in_channels * hidden_dim,), jnp.float32)
    p['w2'] = jax.random.normal(ks[6], (hidden_dim, out_channels * kernel_size * kernel_size),
                                jnp.float32) * (2.0 / hidden_dim) ** 0.5
    p['b2'] = jnp.zeros((out_channels * kernel_size * kernel_size,), jnp.float32)
    p['cfg'] = (kernel_size, out_channels, in_channels)
    return p


def init_hypernetwork(key, input_dim, hidden_dim, target_shape):
    params = {}
    keys = jax.random.split(key, len(target_shape))
    for k_, layer_name in zip(keys, target_shape):
        shape = target_shape[layer_name]['shape']
        if len(shape) == 4:
            oc, ic, ksz = shape[0], shape[1], shape[2]
        else:
            oc, ic = shape
            ksz = 1
        params['_'.join(layer_name.split('.'))] = init_weight_regressor(
            k_, input_dim, hidden_dim, ksz, oc, ic)
    return params


_FE_CFG = ((3, 1, 1), (4, 2, 1), (4, 2, 1), (4, 2, 1))   # (k, stride, pad)


def prepare_packed_params(params, target_shape, input_dim, hidden_dim):
    """One-time weight packing (hoisted out of forward): stack over regressors,
    NHWC / s2d tap layouts, bf16 casts, head-width padding."""
    names = list(params.keys())
    L = len(names)
    cfgs = [params[n]['cfg'] for n in names]                  # (ksz, oc, ic)
    w_idx = tuple(int(target_shape['.'.join(n.split('_'))]['w_idx']) for n in names)

    pk = {}
    pk['fusion_w'] = jnp.stack(
        [params[n]['fusion_w'].reshape(input_dim, 2 * input_dim).T for n in names]
    ).astype(_MXU_DTYPE)                                       # (L, 2C, C)
    pk['fusion_b'] = jnp.stack([params[n]['fusion_b'] for n in names]).reshape(L, 1, input_dim)

    conv_w, conv_b = [], []
    for layer, (k, stride, _) in enumerate(_FE_CFG):
        wl = jnp.stack([params[n]['fe'][layer][0] for n in names])   # (L,Cout,Cin,k,k)
        bl = jnp.stack([params[n]['fe'][layer][1] for n in names])   # (L,Cout)
        wl = (_s2d_weight(wl) if stride == 2 else _plain_weight(wl)).astype(_MXU_DTYPE)
        conv_w.append(wl)
        conv_b.append(bl.reshape(L, 1, -1))
    pk['conv_w'], pk['conv_b'] = conv_w, conv_b

    n1 = max(ic * hidden_dim for (_, _, ic) in cfgs)
    n2 = max(oc * k * k for (k, oc, _) in cfgs)
    pk['w1'] = jnp.stack([jnp.pad(params[n]['w1'], ((0, 0), (0, n1 - params[n]['w1'].shape[1])))
                          for n in names]).astype(_MXU_DTYPE)         # (L, hd, n1)
    pk['b1'] = jnp.stack([jnp.pad(params[n]['b1'], (0, n1 - params[n]['b1'].shape[0]))
                          for n in names])
    pk['w2'] = jnp.stack([jnp.pad(params[n]['w2'], ((0, 0), (0, n2 - params[n]['w2'].shape[1])))
                          for n in names]).astype(_MXU_DTYPE)         # (L, hd, n2)
    pk['b2'] = jnp.stack([jnp.pad(params[n]['b2'], (0, n2 - params[n]['b2'].shape[0]))
                          for n in names])
    meta = dict(names=names, cfgs=cfgs, w_idx=w_idx)
    return pk, meta


# ----------------------------------------------------------------------------
# Hypernetwork forward
# ----------------------------------------------------------------------------
def make_hypernetwork_forward(target_shape, meta, hidden_dim):
    names, cfgs, w_idx = meta['names'], meta['cfgs'], meta['w_idx']
    L = len(names)
    max_ic = max(ic for (_, _, ic) in cfgs)

    def forward(pk, w_image_codes, w_bar_codes):
        B, _, C, H, W = w_image_codes.shape

        # ---- gather per-regressor codes; NCHW -> NHWC + bf16 cast exactly once
        idx = jnp.asarray(w_idx)
        xi = jnp.take(w_image_codes, idx, axis=1)              # (B,L,C,H,W)
        xb = jnp.take(w_bar_codes, idx, axis=1)
        x = jnp.concatenate([xi, xb], axis=2)                  # (B,L,2C,H,W)
        x = x.transpose(1, 0, 3, 4, 2).astype(_MXU_DTYPE)      # (L,B,H,W,2C)

        # ---- trunk, batched over all regressors (identical architecture) ----
        y = fusion_conv_in_relu(x.reshape(L, B, H * W, 2 * C),
                                pk['fusion_w'], pk['fusion_b'])
        y = y.reshape(L, B, H, W, C)                            # bf16

        oh, ow = H, W
        for layer, (k, stride, pad) in enumerate(_FE_CFG):
            yp = _pad_nhwc(y, pad)                              # bf16 pad, no cast
            if stride == 2:
                yp = _space_to_depth2(yp)                       # stride-2 -> stride-1 2x2
                oh = (oh + 2 * pad - k) // 2 + 1
                ow = (ow + 2 * pad - k) // 2 + 1
            else:
                oh = oh + 2 * pad - k + 1
                ow = ow + 2 * pad - k + 1
            y = conv2d_taps(yp, pk['conv_w'][layer], pk['conv_b'][layer],
                            oh, ow, out_dtype=_ACT_DTYPE, relu=True)
        assert oh == 1 and ow == 1, (
            "feature extractor must reduce spatial dims to 1x1 (input must be 8x8); "
            f"got {oh}x{ow}")
        feat = y.reshape(L, B, hidden_dim)        # NCHW flatten == NHWC at 1x1

        # ---- heads: ONE batched call for all w1, ONE for all w2 -------------
        out1 = matmul_bias(feat, pk['w1'], pk['b1'])            # (L, B, n1max) f32
        x2 = []
        for li, (_, _, ic) in enumerate(cfgs):
            o1 = out1[li, :, :ic * hidden_dim].reshape(B * ic, hidden_dim)
            x2.append(jnp.pad(o1, ((0, B * (max_ic - ic)), (0, 0))))
        x2 = jnp.stack(x2)                                       # (L, B*max_ic, hd)
        out2 = matmul_bias(x2, pk['w2'], pk['b2'])               # (L, B*max_ic, n2max)

        out_weights = {}
        for li, name in enumerate(names):
            ksz, oc, ic = cfgs[li]
            ori = '.'.join(name.split('_'))
            o2 = out2[li, :B * ic, :oc * ksz * ksz]
            # row-major (B, ic, oc*k*k) reinterpreted as (B, oc, ic, k, k),
            # exactly matching the PyTorch .view chain.
            kernel = o2.reshape(B, oc, ic, ksz, ksz)
            out_weights[ori] = kernel.reshape((B,) + tuple(target_shape[ori]['shape']))
        return out_weights

    return forward


# ----------------------------------------------------------------------------
if __name__ == "__main__":
    key = jax.random.PRNGKey(0)
    kp, k1, k2 = jax.random.split(key, 3)

    # small but shape-consistent config: 3 stride-2 downsamples require 8x8 input
    input_dim, hidden_dim = 16, 32
    target_shape = {
        'layer1.conv': {'shape': (8, 4, 3, 3), 'w_idx': 0},
        'layer2.fc':   {'shape': (6, 5),       'w_idx': 1},
    }
    B, H, W = 2, 8, 8
    n_layers = len(target_shape)

    params = init_hypernetwork(kp, input_dim, hidden_dim, target_shape)
    packed, meta = prepare_packed_params(params, target_shape, input_dim, hidden_dim)
    forward = jax.jit(make_hypernetwork_forward(target_shape, meta, hidden_dim))

    w_image_codes = jax.random.normal(k1, (B, n_layers, input_dim, H, W), jnp.float32)
    w_bar_codes = jax.random.normal(k2, (B, n_layers, input_dim, H, W), jnp.float32)

    out = forward(packed, w_image_codes, w_bar_codes)
    out = jax.block_until_ready(out)

    assert out['layer1.conv'].shape == (B, 8, 4, 3, 3)
    assert out['layer2.fc'].shape == (B, 6, 5)
    assert all(bool(jnp.isfinite(v).all()) for v in out.values())
    print("KERNEL_OK")
</pallas_src>

<mosaic_0001>
module attributes {stable_mosaic.version = 11 : i64} {
  func.func @_fusion_kernel(%arg0: i32, %arg1: i32, %arg2: memref<1x2x64x32xbf16, #tpu.memory_space<vmem>>, %arg3: memref<1x32x16xbf16, #tpu.memory_space<vmem>>, %arg4: memref<1x1x16xf32, #tpu.memory_space<vmem>>, %arg5: memref<1x2x64x16xbf16, #tpu.memory_space<vmem>>) attributes {dimension_semantics = [#tpu.dimension_semantics<parallel>, #tpu.dimension_semantics<parallel>], iteration_bounds = array<i64: 2, 1>, scalar_prefetch = 0 : i64, scratch_operands = 0 : i64, tpu.core_type = #tpu.core_type<tc>, window_params = [{transform_indices = @transform_0, window_bounds = array<i64: 1, 2, 64, 32>}, {transform_indices = @transform_1, window_bounds = array<i64: 1, 32, 16>}, {transform_indices = @transform_2, window_bounds = array<i64: 1, 1, 16>}, {transform_indices = @transform_3, window_bounds = array<i64: 1, 2, 64, 16>}]} {
    %c0 = arith.constant 0 : index
    %c0_0 = arith.constant 0 : index
    %c0_1 = arith.constant 0 : index
    %c0_2 = arith.constant 0 : index
    %0 = vector.load %arg2[%c0, %c0_0, %c0_1, %c0_2] : memref<1x2x64x32xbf16, #tpu.memory_space<vmem>>, vector<1x2x64x32xbf16>
    %1 = vector.shape_cast %0 : vector<1x2x64x32xbf16> to vector<2x64x32xbf16>
    %2 = vector.shape_cast %1 : vector<2x64x32xbf16> to vector<128x32xbf16>
    %c0_3 = arith.constant 0 : index
    %c0_4 = arith.constant 0 : index
    %c0_5 = arith.constant 0 : index
    %3 = vector.load %arg3[%c0_3, %c0_4, %c0_5] : memref<1x32x16xbf16, #tpu.memory_space<vmem>>, vector<1x32x16xbf16>
    %4 = vector.shape_cast %3 : vector<1x32x16xbf16> to vector<32x16xbf16>
    %cst = arith.constant dense<0.000000e+00> : vector<128x16xf32>
    %5 = tpu.matmul %2, %4, %cst {dimension_numbers = #tpu.dot_dimension_numbers<[1], [0], [0], [1], [0, 0, 1, 1], [], []>} : vector<128x32xbf16>, vector<32x16xbf16>, vector<128x16xf32> -> vector<128x16xf32>
    %c0_6 = arith.constant 0 : index
    %c0_7 = arith.constant 0 : index
    %c0_8 = arith.constant 0 : index
    %6 = vector.load %arg4[%c0_6, %c0_7, %c0_8] : memref<1x1x16xf32, #tpu.memory_space<vmem>>, vector<1x1x16xf32>
    %7 = vector.shape_cast %6 : vector<1x1x16xf32> to vector<1x16xf32>
    %8 = vector.broadcast %7 : vector<1x16xf32> to vector<128x16xf32>
    %9 = arith.addf %5, %8 : vector<128x16xf32>
    %10 = vector.shape_cast %9 : vector<128x16xf32> to vector<2x64x16xf32>
    %cst_9 = arith.constant dense<0.000000e+00> : vector<2x16xf32>
    %11 = vector.multi_reduction <add>, %10, %cst_9 [1] : vector<2x64x16xf32> to vector<2x16xf32>
    %12 = vector.shape_cast %11 : vector<2x16xf32> to vector<2x1x16xf32>
    %cst_10 = arith.constant 6.400000e+01 : f32
    %13 = vector.broadcast %cst_10 : f32 to vector<2x1x16xf32>
    %14 = arith.divf %12, %13 : vector<2x1x16xf32>
    %15 = vector.broadcast %14 : vector<2x1x16xf32> to vector<2x64x16xf32>
    %16 = arith.subf %10, %15 : vector<2x64x16xf32>
    %17 = arith.mulf %16, %16 : vector<2x64x16xf32>
    %cst_11 = arith.constant dense<0.000000e+00> : vector<2x16xf32>
    %18 = vector.multi_reduction <add>, %17, %cst_11 [1] : vector<2x64x16xf32> to vector<2x16xf32>
    %19 = vector.shape_cast %18 : vector<2x16xf32> to vector<2x1x16xf32>
    %cst_12 = arith.constant 6.400000e+01 : f32
    %20 = vector.broadcast %cst_12 : f32 to vector<2x1x16xf32>
    %21 = arith.divf %19, %20 : vector<2x1x16xf32>
    %22 = vector.broadcast %14 : vector<2x1x16xf32> to vector<2x64x16xf32>
    %23 = arith.subf %10, %22 : vector<2x64x16xf32>
    %cst_13 = arith.constant 9.99999974E-6 : f32
    %24 = vector.broadcast %cst_13 : f32 to vector<2x1x16xf32>
    %25 = arith.addf %21, %24 : vector<2x1x16xf32>
    %26 = math.rsqrt %25 : vector<2x1x16xf32>
    %27 = vector.broadcast %26 : vector<2x1x16xf32> to vector<2x64x16xf32>
    %28 = arith.mulf %23, %27 : vector<2x64x16xf32>
    %cst_14 = arith.constant 0.000000e+00 : f32
    %29 = vector.broadcast %cst_14 : f32 to vector<2x64x16xf32>
    %30 = arith.maximumf %28, %29 : vector<2x64x16xf32>
    %31 = arith.truncf %30 : vector<2x64x16xf32> to vector<2x64x16xbf16>
    %c0_15 = arith.constant 0 : index
    %c0_16 = arith.constant 0 : index
    %c0_17 = arith.constant 0 : index
    %c0_18 = arith.constant 0 : index
    %32 = vector.load %arg5[%c0_15, %c0_16, %c0_17, %c0_18] : memref<1x2x64x16xbf16, #tpu.memory_space<vmem>>, vector<1x2x64x16xbf16>
    %33 = vector.shape_cast %32 : vector<1x2x64x16xbf16> to vector<2x64x16xbf16>
    %34 = vector.shape_cast %31 : vector<2x64x16xbf16> to vector<1x2x64x16xbf16>
    tpu.vector_store %arg5[%c0_15, %c0_16, %c0_17, %c0_18], %34 {strides = array<i32>} : memref<1x2x64x16xbf16, #tpu.memory_space<vmem>>, vector<1x2x64x16xbf16>,
    return
  }
  func.func @transform_0(%arg0: i32, %arg1: i32) -> (i32, i32, i32, i32) {
    %c0_i32 = arith.constant 0 : i32
    %c0_i32_0 = arith.constant 0 : i32
    %c0_i32_1 = arith.constant 0 : i32
    return %arg0, %arg1, %c0_i32, %c0_i32_0 : i32, i32, i32, i32
  }
  func.func @transform_1(%arg0: i32, %arg1: i32) -> (i32, i32, i32) {
    %c0_i32 = arith.constant 0 : i32
    %c0_i32_0 = arith.constant 0 : i32
    %c0_i32_1 = arith.constant 0 : i32
    return %arg0, %c0_i32, %c0_i32_0 : i32, i32, i32
  }
  func.func @transform_2(%arg0: i32, %arg1: i32) -> (i32, i32, i32) {
    %c0_i32 = arith.constant 0 : i32
    %c0_i32_0 = arith.constant 0 : i32
    %c0_i32_1 = arith.constant 0 : i32
    return %arg0, %c0_i32, %c0_i32_0 : i32, i32, i32
  }
  func.func @transform_3(%arg0: i32, %arg1: i32) -> (i32, i32, i32, i32) {
    %c0_i32 = arith.constant 0 : i32
    %c0_i32_0 = arith.constant 0 : i32
    %c0_i32_1 = arith.constant 0 : i32
    return %arg0, %arg1, %c0_i32, %c0_i32_0 : i32, i32, i32, i32
  }
}

module attributes {stable_mosaic.version = 11 : i64} {
  func.func @_conv_tap_kernel(%arg0: i32, %arg1: i32, %arg2: memref<1x2x10x10x16xbf16, #tpu.memory_space<vmem>>, %arg3: memref<1x3x3x16x64xbf16, #tpu.memory_space<vmem>>, %arg4: memref<1x1x64xf32, #tpu.memory_space<vmem>>, %arg5: memref<1x2x8x8x64xbf16, #tpu.memory_space<vmem>>) attributes {dimension_semantics = [#tpu.dimension_semantics<parallel>, #tpu.dimension_semantics<parallel>], iteration_bounds = array<i64: 2, 1>, scalar_prefetch = 0 : i64, scratch_operands = 0 : i64, tpu.core_type = #tpu.core_type<tc>, window_params = [{transform_indices = @transform_0, window_bounds = array<i64: 1, 2, 10, 10, 16>}, {transform_indices = @transform_1, window_bounds = array<i64: 1, 3, 3, 16, 64>}, {transform_indices = @transform_2, window_bounds = array<i64: 1, 1, 64>}, {transform_indices = @transform_3, window_bounds = array<i64: 1, 2, 8, 8, 64>}]} {
    %cst = arith.constant 0.000000e+00 : f32
    %0 = vector.broadcast %cst : f32 to vector<128x64xf32>
    %c0 = arith.constant 0 : index
    %c0_0 = arith.constant 0 : index
    %c0_1 = arith.constant 0 : index
    %c0_2 = arith.constant 0 : index
    %c0_3 = arith.constant 0 : index
    %1 = vector.load %arg2[%c0, %c0_0, %c0_1, %c0_2, %c0_3] : memref<1x2x10x10x16xbf16, #tpu.memory_space<vmem>>, vector<1x2x8x8x16xbf16>
    %2 = vector.shape_cast %1 : vector<1x2x8x8x16xbf16> to vector<2x8x8x16xbf16>
    %3 = vector.shape_cast %2 : vector<2x8x8x16xbf16> to vector<128x16xbf16>
    %c0_4 = arith.constant 0 : index
    %c0_5 = arith.constant 0 : index
    %c0_6 = arith.constant 0 : index
    %c0_7 = arith.constant 0 : index
    %c0_8 = arith.constant 0 : index
    %4 = vector.load %arg3[%c0_4, %c0_5, %c0_6, %c0_7, %c0_8] : memref<1x3x3x16x64xbf16, #tpu.memory_space<vmem>>, vector<1x1x1x16x64xbf16>
    %5 = vector.shape_cast %4 : vector<1x1x1x16x64xbf16> to vector<16x64xbf16>
    %cst_9 = arith.constant dense<0.000000e+00> : vector<128x64xf32>
    %6 = tpu.matmul %3, %5, %cst_9 {dimension_numbers = #tpu.dot_dimension_numbers<[1], [0], [0], [1], [0, 0, 1, 1], [], []>} : vector<128x16xbf16>, vector<16x64xbf16>, vector<128x64xf32> -> vector<128x64xf32>
    %7 = arith.addf %0, %6 : vector<128x64xf32>
    %c0_10 = arith.constant 0 : index
    %c0_11 = arith.constant 0 : index
    %c0_12 = arith.constant 0 : index
    %c1 = arith.constant 1 : index
    %c0_13 = arith.constant 0 : index
    %8 = vector.load %arg2[%c0_10, %c0_11, %c0_12, %c1, %c0_13] : memref<1x2x10x10x16xbf16, #tpu.memory_space<vmem>>, vector<1x2x8x8x16xbf16>
    %9 = vector.shape_cast %8 : vector<1x2x8x8x16xbf16> to vector<2x8x8x16xbf16>
    %10 = vector.shape_cast %9 : vector<2x8x8x16xbf16> to vector<128x16xbf16>
    %c0_14 = arith.constant 0 : index
    %c0_15 = arith.constant 0 : index
    %c1_16 = arith.constant 1 : index
    %c0_17 = arith.constant 0 : index
    %c0_18 = arith.constant 0 : index
    %11 = vector.load %arg3[%c0_14, %c0_15, %c1_16, %c0_17, %c0_18] : memref<1x3x3x16x64xbf16, #tpu.memory_space<vmem>>, vector<1x1x1x16x64xbf16>
    %12 = vector.shape_cast %11 : vector<1x1x1x16x64xbf16> to vector<16x64xbf16>
    %cst_19 = arith.constant dense<0.000000e+00> : vector<128x64xf32>
    %13 = tpu.matmul %10, %12, %cst_19 {dimension_numbers = #tpu.dot_dimension_numbers<[1], [0], [0], [1], [0, 0, 1, 1], [], []>} : vector<128x16xbf16>, vector<16x64xbf16>, vector<128x64xf32> -> vector<128x64xf32>
    %14 = arith.addf %7, %13 : vector<128x64xf32>
    %c0_20 = arith.constant 0 : index
    %c0_21 = arith.constant 0 : index
    %c0_22 = arith.constant 0 : index
    %c2 = arith.constant 2 : index
    %c0_23 = arith.constant 0 : index
    %15 = vector.load %arg2[%c0_20, %c0_21, %c0_22, %c2, %c0_23] : memref<1x2x10x10x16xbf16, #tpu.memory_space<vmem>>, vector<1x2x8x8x16xbf16>
    %16 = vector.shape_cast %15 : vector<1x2x8x8x16xbf16> to vector<2x8x8x16xbf16>
    %17 = vector.shape_cast %16 : vector<2x8x8x16xbf16> to vector<128x16xbf16>
    %c0_24 = arith.constant 0 : index
    %c0_25 = arith.constant 0 : index
    %c2_26 = arith.constant 2 : index
    %c0_27 = arith.constant 0 : index
    %c0_28 = arith.constant 0 : index
    %18 = vector.load %arg3[%c0_24, %c0_25, %c2_26, %c0_27, %c0_28] : memref<1x3x3x16x64xbf16, #tpu.memory_space<vmem>>, vector<1x1x1x16x64xbf16>
    %19 = vector.shape_cast %18 : vector<1x1x1x16x64xbf16> to vector<16x64xbf16>
    %cst_29 = arith.constant dense<0.000000e+00> : vector<128x64xf32>
    %20 = tpu.matmul %17, %19, %cst_29 {dimension_numbers = #tpu.dot_dimension_numbers<[1], [0], [0], [1], [0, 0, 1, 1], [], []>} : vector<128x16xbf16>, vector<16x64xbf16>, vector<128x64xf32> -> vector<128x64xf32>
    %21 = arith.addf %14, %20 : vector<128x64xf32>
    %c0_30 = arith.constant 0 : index
    %c0_31 = arith.constant 0 : index
    %c1_32 = arith.constant 1 : index
    %c0_33 = arith.constant 0 : index
    %c0_34 = arith.constant 0 : index
    %22 = vector.load %arg2[%c0_30, %c0_31, %c1_32, %c0_33, %c0_34] : memref<1x2x10x10x16xbf16, #tpu.memory_space<vmem>>, vector<1x2x8x8x16xbf16>
    %23 = vector.shape_cast %22 : vector<1x2x8x8x16xbf16> to vector<2x8x8x16xbf16>
    %24 = vector.shape_cast %23 : vector<2x8x8x16xbf16> to vector<128x16xbf16>
    %c0_35 = arith.constant 0 : index
    %c1_36 = arith.constant 1 : index
    %c0_37 = arith.constant 0 : index
    %c0_38 = arith.constant 0 : index
    %c0_39 = arith.constant 0 : index
    %25 = vector.load %arg3[%c0_35, %c1_36, %c0_37, %c0_38, %c0_39] : memref<1x3x3x16x64xbf16, #tpu.memory_space<vmem>>, vector<1x1x1x16x64xbf16>
    %26 = vector.shape_cast %25 : vector<1x1x1x16x64xbf16> to vector<16x64xbf16>
    %cst_40 = arith.constant dense<0.000000e+00> : vector<128x64xf32>
    %27 = tpu.matmul %24, %26, %cst_40 {dimension_numbers = #tpu.dot_dimension_numbers<[1], [0], [0], [1], [0, 0, 1, 1], [], []>} : vector<128x16xbf16>, vector<16x64xbf16>, vector<128x64xf32> -> vector<128x64xf32>
    %28 = arith.addf %21, %27 : vector<128x64xf32>
    %c0_41 = arith.constant 0 : index
    %c0_42 = arith.constant 0 : index
    %c1_43 = arith.constant 1 : index
    %c1_44 = arith.constant 1 : index
    %c0_45 = arith.constant 0 : index
    %29 = vector.load %arg2[%c0_41, %c0_42, %c1_43, %c1_44, %c0_45] : memref<1x2x10x10x16xbf16, #tpu.memory_space<vmem>>, vector<1x2x8x8x16xbf16>
    %30 = vector.shape_cast %29 : vector<1x2x8x8x16xbf16> to vector<2x8x8x16xbf16>
    %31 = vector.shape_cast %30 : vector<2x8x8x16xbf16> to vector<128x16xbf16>
    %c0_46 = arith.constant 0 : index
    %c1_47 = arith.constant 1 : index
    %c1_48 = arith.constant 1 : index
    %c0_49 = arith.constant 0 : index
    %c0_50 = arith.constant 0 : index
    %32 = vector.load %arg3[%c0_46, %c1_47, %c1_48, %c0_49, %c0_50] : memref<1x3x3x16x64xbf16, #tpu.memory_space<vmem>>, vector<1x1x1x16x64xbf16>
    %33 = vector.shape_cast %32 : vector<1x1x1x16x64xbf16> to vector<16x64xbf16>
    %cst_51 = arith.constant dense<0.000000e+00> : vector<128x64xf32>
    %34 = tpu.matmul %31, %33, %cst_51 {dimension_numbers = #tpu.dot_dimension_numbers<[1], [0], [0], [1], [0, 0, 1, 1], [], []>} : vector<128x16xbf16>, vector<16x64xbf16>, vector<128x64xf32> -> vector<128x64xf32>
    %35 = arith.addf %28, %34 : vector<128x64xf32>
    %c0_52 = arith.constant 0 : index
    %c0_53 = arith.constant 0 : index
    %c1_54 = arith.constant 1 : index
    %c2_55 = arith.constant 2 : index
    %c0_56 = arith.constant 0 : index
    %36 = vector.load %arg2[%c0_52, %c0_53, %c1_54, %c2_55, %c0_56] : memref<1x2x10x10x16xbf16, #tpu.memory_space<vmem>>, vector<1x2x8x8x16xbf16>
    %37 = vector.shape_cast %36 : vector<1x2x8x8x16xbf16> to vector<2x8x8x16xbf16>
    %38 = vector.shape_cast %37 : vector<2x8x8x16xbf16> to vector<128x16xbf16>
    %c0_57 = arith.constant 0 : index
    %c1_58 = arith.constant 1 : index
    %c2_59 = arith.constant 2 : index
    %c0_60 = arith.constant 0 : index
    %c0_61 = arith.constant 0 : index
    %39 = vector.load %arg3[%c0_57, %c1_58, %c2_59, %c0_60, %c0_61] : memref<1x3x3x16x64xbf16, #tpu.memory_space<vmem>>, vector<1x1x1x16x64xbf16>
    %40 = vector.shape_cast %39 : vector<1x1x1x16x64xbf16> to vector<16x64xbf16>
    %cst_62 = arith.constant dense<0.000000e+00> : vector<128x64xf32>
    %41 = tpu.matmul %38, %40, %cst_62 {dimension_numbers = #tpu.dot_dimension_numbers<[1], [0], [0], [1], [0, 0, 1, 1], [], []>} : vector<128x16xbf16>, vector<16x64xbf16>, vector<128x64xf32> -> vector<128x64xf32>
    %42 = arith.addf %35, %41 : vector<128x64xf32>
    %c0_63 = arith.constant 0 : index
    %c0_64 = arith.constant 0 : index
    %c2_65 = arith.constant 2 : index
    %c0_66 = arith.constant 0 : index
    %c0_67 = arith.constant 0 : index
    %43 = vector.load %arg2[%c0_63, %c0_64, %c2_65, %c0_66, %c0_67] : memref<1x2x10x10x16xbf16, #tpu.memory_space<vmem>>, vector<1x2x8x8x16xbf16>
    %44 = vector.shape_cast %43 : vector<1x2x8x8x16xbf16> to vector<2x8x8x16xbf16>
    %45 = vector.shape_cast %44 : vector<2x8x8x16xbf16> to vector<128x16xbf16>
    %c0_68 = arith.constant 0 : index
    %c2_69 = arith.constant 2 : index
    %c0_70 = arith.constant 0 : index
    %c0_71 = arith.constant 0 : index
    %c0_72 = arith.constant 0 : index
    %46 = vector.load %arg3[%c0_68, %c2_69, %c0_70, %c0_71, %c0_72] : memref<1x3x3x16x64xbf16, #tpu.memory_space<vmem>>, vector<1x1x1x16x64xbf16>
    %47 = vector.shape_cast %46 : vector<1x1x1x16x64xbf16> to vector<16x64xbf16>
    %cst_73 = arith.constant dense<0.000000e+00> : vector<128x64xf32>
    %48 = tpu.matmul %45, %47, %cst_73 {dimension_numbers = #tpu.dot_dimension_numbers<[1], [0], [0], [1], [0, 0, 1, 1], [], []>} : vector<128x16xbf16>, vector<16x64xbf16>, vector<128x64xf32> -> vector<128x64xf32>
    %49 = arith.addf %42, %48 : vector<128x64xf32>
    %c0_74 = arith.constant 0 : index
    %c0_75 = arith.constant 0 : index
    %c2_76 = arith.constant 2 : index
    %c1_77 = arith.constant 1 : index
    %c0_78 = arith.constant 0 : index
    %50 = vector.load %arg2[%c0_74, %c0_75, %c2_76, %c1_77, %c0_78] : memref<1x2x10x10x16xbf16, #tpu.memory_space<vmem>>, vector<1x2x8x8x16xbf16>
    %51 = vector.shape_cast %50 : vector<1x2x8x8x16xbf16> to vector<2x8x8x16xbf16>
    %52 = vector.shape_cast %51 : vector<2x8x8x16xbf16> to vector<128x16xbf16>
    %c0_79 = arith.constant 0 : index
    %c2_80 = arith.constant 2 : index
    %c1_81 = arith.constant 1 : index
    %c0_82 = arith.constant 0 : index
    %c0_83 = arith.constant 0 : index
    %53 = vector.load %arg3[%c0_79, %c2_80, %c1_81, %c0_82, %c0_83] : memref<1x3x3x16x64xbf16, #tpu.memory_space<vmem>>, vector<1x1x1x16x64xbf16>
    %54 = vector.shape_cast %53 : vector<1x1x1x16x64xbf16> to vector<16x64xbf16>
    %cst_84 = arith.constant dense<0.000000e+00> : vector<128x64xf32>
    %55 = tpu.matmul %52, %54, %cst_84 {dimension_numbers = #tpu.dot_dimension_numbers<[1], [0], [0], [1], [0, 0, 1, 1], [], []>} : vector<128x16xbf16>, vector<16x64xbf16>, vector<128x64xf32> -> vector<128x64xf32>
    %56 = arith.addf %49, %55 : vector<128x64xf32>
    %c0_85 = arith.constant 0 : index
    %c0_86 = arith.constant 0 : index
    %c2_87 = arith.constant 2 : index
    %c2_88 = arith.constant 2 : index
    %c0_89 = arith.constant 0 : index
    %57 = vector.load %arg2[%c0_85, %c0_86, %c2_87, %c2_88, %c0_89] : memref<1x2x10x10x16xbf16, #tpu.memory_space<vmem>>, vector<1x2x8x8x16xbf16>
    %58 = vector.shape_cast %57 : vector<1x2x8x8x16xbf16> to vector<2x8x8x16xbf16>
    %59 = vector.shape_cast %58 : vector<2x8x8x16xbf16> to vector<128x16xbf16>
    %c0_90 = arith.constant 0 : index
    %c2_91 = arith.constant 2 : index
    %c2_92 = arith.constant 2 : index
    %c0_93 = arith.constant 0 : index
    %c0_94 = arith.constant 0 : index
    %60 = vector.load %arg3[%c0_90, %c2_91, %c2_92, %c0_93, %c0_94] : memref<1x3x3x16x64xbf16, #tpu.memory_space<vmem>>, vector<1x1x1x16x64xbf16>
    %61 = vector.shape_cast %60 : vector<1x1x1x16x64xbf16> to vector<16x64xbf16>
    %cst_95 = arith.constant dense<0.000000e+00> : vector<128x64xf32>
    %62 = tpu.matmul %59, %61, %cst_95 {dimension_numbers = #tpu.dot_dimension_numbers<[1], [0], [0], [1], [0, 0, 1, 1], [], []>} : vector<128x16xbf16>, vector<16x64xbf16>, vector<128x64xf32> -> vector<128x64xf32>
    %63 = arith.addf %56, %62 : vector<128x64xf32>
    %c0_96 = arith.constant 0 : index
    %c0_97 = arith.constant 0 : index
    %c0_98 = arith.constant 0 : index
    %64 = vector.load %arg4[%c0_96, %c0_97, %c0_98] : memref<1x1x64xf32, #tpu.memory_space<vmem>>, vector<1x1x64xf32>
    %65 = vector.shape_cast %64 : vector<1x1x64xf32> to vector<1x64xf32>
    %66 = vector.broadcast %65 : vector<1x64xf32> to vector<128x64xf32>
    %67 = arith.addf %63, %66 : vector<128x64xf32>
    %cst_99 = arith.constant 0.000000e+00 : f32
    %68 = vector.broadcast %cst_99 : f32 to vector<128x64xf32>
    %69 = arith.maximumf %67, %68 : vector<128x64xf32>
    %70 = vector.shape_cast %69 : vector<128x64xf32> to vector<2x8x8x64xf32>
    %71 = arith.truncf %70 : vector<2x8x8x64xf32> to vector<2x8x8x64xbf16>
    %c0_100 = arith.constant 0 : index
    %c0_101 = arith.constant 0 : index
    %c0_102 = arith.constant 0 : index
    %c0_103 = arith.constant 0 : index
    %c0_104 = arith.constant 0 : index
    %72 = vector.load %arg5[%c0_100, %c0_101, %c0_102, %c0_103, %c0_104] : memref<1x2x8x8x64xbf16, #tpu.memory_space<vmem>>, vector<1x2x8x8x64xbf16>
    %73 = vector.shape_cast %72 : vector<1x2x8x8x64xbf16> to vector<2x8x8x64xbf16>
    %74 = vector.shape_cast %71 : vector<2x8x8x64xbf16> to vector<1x2x8x8x64xbf16>
    tpu.vector_store %arg5[%c0_100, %c0_101, %c0_102, %c0_103, %c0_104], %74 {strides = array<i32>} : memref<1x2x8x8x64xbf16, #tpu.memory_space<vmem>>, vector<1x2x8x8x64xbf16>,
    return
  }
  func.func @transform_0(%arg0: i32, %arg1: i32) -> (i32, i32, i32, i32, i32) {
    %c0_i32 = arith.constant 0 : i32
    %c0_i32_0 = arith.constant 0 : i32
    %c0_i32_1 = arith.constant 0 : i32
    %c0_i32_2 = arith.constant 0 : i32
    return %arg0, %arg1, %c0_i32, %c0_i32_0, %c0_i32_1 : i32, i32, i32, i32, i32
  }
  func.func @transform_1(%arg0: i32, %arg1: i32) -> (i32, i32, i32, i32, i32) {
    %c0_i32 = arith.constant 0 : i32
    %c0_i32_0 = arith.constant 0 : i32
    %c0_i32_1 = arith.constant 0 : i32
    %c0_i32_2 = arith.constant 0 : i32
    %c0_i32_3 = arith.constant 0 : i32
    return %arg0, %c0_i32, %c0_i32_0, %c0_i32_1, %c0_i32_2 : i32, i32, i32, i32, i32
  }
  func.func @transform_2(%arg0: i32, %arg1: i32) -> (i32, i32, i32) {
    %c0_i32 = arith.constant 0 : i32
    %c0_i32_0 = arith.constant 0 : i32
    %c0_i32_1 = arith.constant 0 : i32
    return %arg0, %c0_i32, %c0_i32_0 : i32, i32, i32
  }
  func.func @transform_3(%arg0: i32, %arg1: i32) -> (i32, i32, i32, i32, i32) {
    %c0_i32 = arith.constant 0 : i32
    %c0_i32_0 = arith.constant 0 : i32
    %c0_i32_1 = arith.constant 0 : i32
    %c0_i32_2 = arith.constant 0 : i32
    return %arg0, %arg1, %c0_i32, %c0_i32_0, %c0_i32_1 : i32, i32, i32, i32, i32
  }
}

module attributes {stable_mosaic.version = 11 : i64} {
  func.func @_conv_tap_kernel(%arg0: i32, %arg1: i32, %arg2: memref<1x2x5x5x256xbf16, #tpu.memory_space<vmem>>, %arg3: memref<1x2x2x256x64xbf16, #tpu.memory_space<vmem>>, %arg4: memref<1x1x64xf32, #tpu.memory_space<vmem>>, %arg5: memref<1x2x4x4x64xbf16, #tpu.memory_space<vmem>>) attributes {dimension_semantics = [#tpu.dimension_semantics<parallel>, #tpu.dimension_semantics<parallel>], iteration_bounds = array<i64: 2, 1>, scalar_prefetch = 0 : i64, scratch_operands = 0 : i64, tpu.core_type = #tpu.core_type<tc>, window_params = [{transform_indices = @transform_0, window_bounds = array<i64: 1, 2, 5, 5, 256>}, {transform_indices = @transform_1, window_bounds = array<i64: 1, 2, 2, 256, 64>}, {transform_indices = @transform_2, window_bounds = array<i64: 1, 1, 64>}, {transform_indices = @transform_3, window_bounds = array<i64: 1, 2, 4, 4, 64>}]} {
    %cst = arith.constant 0.000000e+00 : f32
    %0 = vector.broadcast %cst : f32 to vector<32x64xf32>
    %c0 = arith.constant 0 : index
    %c0_0 = arith.constant 0 : index
    %c0_1 = arith.constant 0 : index
    %c0_2 = arith.constant 0 : index
    %c0_3 = arith.constant 0 : index
    %1 = vector.load %arg2[%c0, %c0_0, %c0_1, %c0_2, %c0_3] : memref<1x2x5x5x256xbf16, #tpu.memory_space<vmem>>, vector<1x2x4x4x256xbf16>
    %2 = vector.shape_cast %1 : vector<1x2x4x4x256xbf16> to vector<2x4x4x256xbf16>
    %3 = vector.shape_cast %2 : vector<2x4x4x256xbf16> to vector<32x256xbf16>
    %c0_4 = arith.constant 0 : index
    %c0_5 = arith.constant 0 : index
    %c0_6 = arith.constant 0 : index
    %c0_7 = arith.constant 0 : index
    %c0_8 = arith.constant 0 : index
    %4 = vector.load %arg3[%c0_4, %c0_5, %c0_6, %c0_7, %c0_8] : memref<1x2x2x256x64xbf16, #tpu.memory_space<vmem>>, vector<1x1x1x256x64xbf16>
    %5 = vector.shape_cast %4 : vector<1x1x1x256x64xbf16> to vector<256x64xbf16>
    %cst_9 = arith.constant dense<0.000000e+00> : vector<32x64xf32>
    %6 = tpu.matmul %3, %5, %cst_9 {dimension_numbers = #tpu.dot_dimension_numbers<[1], [0], [0], [1], [0, 0, 1, 1], [], []>} : vector<32x256xbf16>, vector<256x64xbf16>, vector<32x64xf32> -> vector<32x64xf32>
    %7 = arith.addf %0, %6 : vector<32x64xf32>
    %c0_10 = arith.constant 0 : index
    %c0_11 = arith.constant 0 : index
    %c0_12 = arith.constant 0 : index
    %c1 = arith.constant 1 : index
    %c0_13 = arith.constant 0 : index
    %8 = vector.load %arg2[%c0_10, %c0_11, %c0_12, %c1, %c0_13] : memref<1x2x5x5x256xbf16, #tpu.memory_space<vmem>>, vector<1x2x4x4x256xbf16>
    %9 = vector.shape_cast %8 : vector<1x2x4x4x256xbf16> to vector<2x4x4x256xbf16>
    %10 = vector.shape_cast %9 : vector<2x4x4x256xbf16> to vector<32x256xbf16>
    %c0_14 = arith.constant 0 : index
    %c0_15 = arith.constant 0 : index
    %c1_16 = arith.constant 1 : index
    %c0_17 = arith.constant 0 : index
    %c0_18 = arith.constant 0 : index
    %11 = vector.load %arg3[%c0_14, %c0_15, %c1_16, %c0_17, %c0_18] : memref<1x2x2x256x64xbf16, #tpu.memory_space<vmem>>, vector<1x1x1x256x64xbf16>
    %12 = vector.shape_cast %11 : vector<1x1x1x256x64xbf16> to vector<256x64xbf16>
    %cst_19 = arith.constant dense<0.000000e+00> : vector<32x64xf32>
    %13 = tpu.matmul %10, %12, %cst_19 {dimension_numbers = #tpu.dot_dimension_numbers<[1], [0], [0], [1], [0, 0, 1, 1], [], []>} : vector<32x256xbf16>, vector<256x64xbf16>, vector<32x64xf32> -> vector<32x64xf32>
    %14 = arith.addf %7, %13 : vector<32x64xf32>
    %c0_20 = arith.constant 0 : index
    %c0_21 = arith.constant 0 : index
    %c1_22 = arith.constant 1 : index
    %c0_23 = arith.constant 0 : index
    %c0_24 = arith.constant 0 : index
    %15 = vector.load %arg2[%c0_20, %c0_21, %c1_22, %c0_23, %c0_24] : memref<1x2x5x5x256xbf16, #tpu.memory_space<vmem>>, vector<1x2x4x4x256xbf16>
    %16 = vector.shape_cast %15 : vector<1x2x4x4x256xbf16> to vector<2x4x4x256xbf16>
    %17 = vector.shape_cast %16 : vector<2x4x4x256xbf16> to vector<32x256xbf16>
    %c0_25 = arith.constant 0 : index
    %c1_26 = arith.constant 1 : index
    %c0_27 = arith.constant 0 : index
    %c0_28 = arith.constant 0 : index
    %c0_29 = arith.constant 0 : index
    %18 = vector.load %arg3[%c0_25, %c1_26, %c0_27, %c0_28, %c0_29] : memref<1x2x2x256x64xbf16, #tpu.memory_space<vmem>>, vector<1x1x1x256x64xbf16>
    %19 = vector.shape_cast %18 : vector<1x1x1x256x64xbf16> to vector<256x64xbf16>
    %cst_30 = arith.constant dense<0.000000e+00> : vector<32x64xf32>
    %20 = tpu.matmul %17, %19, %cst_30 {dimension_numbers = #tpu.dot_dimension_numbers<[1], [0], [0], [1], [0, 0, 1, 1], [], []>} : vector<32x256xbf16>, vector<256x64xbf16>, vector<32x64xf32> -> vector<32x64xf32>
    %21 = arith.addf %14, %20 : vector<32x64xf32>
    %c0_31 = arith.constant 0 : index
    %c0_32 = arith.constant 0 : index
    %c1_33 = arith.constant 1 : index
    %c1_34 = arith.constant 1 : index
    %c0_35 = arith.constant 0 : index
    %22 = vector.load %arg2[%c0_31, %c0_32, %c1_33, %c1_34, %c0_35] : memref<1x2x5x5x256xbf16, #tpu.memory_space<vmem>>, vector<1x2x4x4x256xbf16>
    %23 = vector.shape_cast %22 : vector<1x2x4x4x256xbf16> to vector<2x4x4x256xbf16>
    %24 = vector.shape_cast %23 : vector<2x4x4x256xbf16> to vector<32x256xbf16>
    %c0_36 = arith.constant 0 : index
    %c1_37 = arith.constant 1 : index
    %c1_38 = arith.constant 1 : index
    %c0_39 = arith.constant 0 : index
    %c0_40 = arith.constant 0 : index
    %25 = vector.load %arg3[%c0_36, %c1_37, %c1_38, %c0_39, %c0_40] : memref<1x2x2x256x64xbf16, #tpu.memory_space<vmem>>, vector<1x1x1x256x64xbf16>
    %26 = vector.shape_cast %25 : vector<1x1x1x256x64xbf16> to vector<256x64xbf16>
    %cst_41 = arith.constant dense<0.000000e+00> : vector<32x64xf32>
    %27 = tpu.matmul %24, %26, %cst_41 {dimension_numbers = #tpu.dot_dimension_numbers<[1], [0], [0], [1], [0, 0, 1, 1], [], []>} : vector<32x256xbf16>, vector<256x64xbf16>, vector<32x64xf32> -> vector<32x64xf32>
    %28 = arith.addf %21, %27 : vector<32x64xf32>
    %c0_42 = arith.constant 0 : index
    %c0_43 = arith.constant 0 : index
    %c0_44 = arith.constant 0 : index
    %29 = vector.load %arg4[%c0_42, %c0_43, %c0_44] : memref<1x1x64xf32, #tpu.memory_space<vmem>>, vector<1x1x64xf32>
    %30 = vector.shape_cast %29 : vector<1x1x64xf32> to vector<1x64xf32>
    %31 = vector.broadcast %30 : vector<1x64xf32> to vector<32x64xf32>
    %32 = arith.addf %28, %31 : vector<32x64xf32>
    %cst_45 = arith.constant 0.000000e+00 : f32
    %33 = vector.broadcast %cst_45 : f32 to vector<32x64xf32>
    %34 = arith.maximumf %32, %33 : vector<32x64xf32>
    %35 = vector.shape_cast %34 : vector<32x64xf32> to vector<2x4x4x64xf32>
    %36 = arith.truncf %35 : vector<2x4x4x64xf32> to vector<2x4x4x64xbf16>
    %c0_46 = arith.constant 0 : index
    %c0_47 = arith.constant 0 : index
    %c0_48 = arith.constant 0 : index
    %c0_49 = arith.constant 0 : index
    %c0_50 = arith.constant 0 : index
    %37 = vector.load %arg5[%c0_46, %c0_47, %c0_48, %c0_49, %c0_50] : memref<1x2x4x4x64xbf16, #tpu.memory_space<vmem>>, vector<1x2x4x4x64xbf16>
    %38 = vector.shape_cast %37 : vector<1x2x4x4x64xbf16> to vector<2x4x4x64xbf16>
    %39 = vector.shape_cast %36 : vector<2x4x4x64xbf16> to vector<1x2x4x4x64xbf16>
    tpu.vector_store %arg5[%c0_46, %c0_47, %c0_48, %c0_49, %c0_50], %39 {strides = array<i32>} : memref<1x2x4x4x64xbf16, #tpu.memory_space<vmem>>, vector<1x2x4x4x64xbf16>,
    return
  }
  func.func @transform_0(%arg0: i32, %arg1: i32) -> (i32, i32, i32, i32, i32) {
    %c0_i32 = arith.constant 0 : i32
    %c0_i32_0 = arith.constant 0 : i32
    %c0_i32_1 = arith.constant 0 : i32
    %c0_i32_2 = arith.constant 0 : i32
    return %arg0, %arg1, %c0_i32, %c0_i32_0, %c0_i32_1 : i32, i32, i32, i32, i32
  }
  func.func @transform_1(%arg0: i32, %arg1: i32) -> (i32, i32, i32, i32, i32) {
    %c0_i32 = arith.constant 0 : i32
    %c0_i32_0 = arith.constant 0 : i32
    %c0_i32_1 = arith.constant 0 : i32
    %c0_i32_2 = arith.constant 0 : i32
    %c0_i32_3 = arith.constant 0 : i32
    return %arg0, %c0_i32, %c0_i32_0, %c0_i32_1, %c0_i32_2 : i32, i32, i32, i32, i32
  }
  func.func @transform_2(%arg0: i32, %arg1: i32) -> (i32, i32, i32) {
    %c0_i32 = arith.constant 0 : i32
    %c0_i32_0 = arith.constant 0 : i32
    %c0_i32_1 = arith.constant 0 : i32
    return %arg0, %c0_i32, %c0_i32_0 : i32, i32, i32
  }
  func.func @transform_3(%arg0: i32, %arg1: i32) -> (i32, i32, i32, i32, i32) {
    %c0_i32 = arith.constant 0 : i32
    %c0_i32_0 = arith.constant 0 : i32
    %c0_i32_1 = arith.constant 0 : i32
    %c0_i32_2 = arith.constant 0 : i32
    return %arg0, %arg1, %c0_i32, %c0_i32_0, %c0_i32_1 : i32, i32, i32, i32, i32
  }
}

module attributes {stable_mosaic.version = 11 : i64} {
  func.func @_conv_tap_kernel(%arg0: i32, %arg1: i32, %arg2: memref<1x2x3x3x256xbf16, #tpu.memory_space<vmem>>, %arg3: memref<1x2x2x256x64xbf16, #tpu.memory_space<vmem>>, %arg4: memref<1x1x64xf32, #tpu.memory_space<vmem>>, %arg5: memref<1x2x2x2x64xbf16, #tpu.memory_space<vmem>>) attributes {dimension_semantics = [#tpu.dimension_semantics<parallel>, #tpu.dimension_semantics<parallel>], iteration_bounds = array<i64: 2, 1>, scalar_prefetch = 0 : i64, scratch_operands = 0 : i64, tpu.core_type = #tpu.core_type<tc>, window_params = [{transform_indices = @transform_0, window_bounds = array<i64: 1, 2, 3, 3, 256>}, {transform_indices = @transform_1, window_bounds = array<i64: 1, 2, 2, 256, 64>}, {transform_indices = @transform_2, window_bounds = array<i64: 1, 1, 64>}, {transform_indices = @transform_3, window_bounds = array<i64: 1, 2, 2, 2, 64>}]} {
    %cst = arith.constant 0.000000e+00 : f32
    %0 = vector.broadcast %cst : f32 to vector<8x64xf32>
    %c0 = arith.constant 0 : index
    %c0_0 = arith.constant 0 : index
    %c0_1 = arith.constant 0 : index
    %c0_2 = arith.constant 0 : index
    %c0_3 = arith.constant 0 : index
    %1 = vector.load %arg2[%c0, %c0_0, %c0_1, %c0_2, %c0_3] : memref<1x2x3x3x256xbf16, #tpu.memory_space<vmem>>, vector<1x2x2x2x256xbf16>
    %2 = vector.shape_cast %1 : vector<1x2x2x2x256xbf16> to vector<2x2x2x256xbf16>
    %3 = vector.shape_cast %2 : vector<2x2x2x256xbf16> to vector<8x256xbf16>
    %c0_4 = arith.constant 0 : index
    %c0_5 = arith.constant 0 : index
    %c0_6 = arith.constant 0 : index
    %c0_7 = arith.constant 0 : index
    %c0_8 = arith.constant 0 : index
    %4 = vector.load %arg3[%c0_4, %c0_5, %c0_6, %c0_7, %c0_8] : memref<1x2x2x256x64xbf16, #tpu.memory_space<vmem>>, vector<1x1x1x256x64xbf16>
    %5 = vector.shape_cast %4 : vector<1x1x1x256x64xbf16> to vector<256x64xbf16>
    %cst_9 = arith.constant dense<0.000000e+00> : vector<8x64xf32>
    %6 = tpu.matmul %3, %5, %cst_9 {dimension_numbers = #tpu.dot_dimension_numbers<[1], [0], [0], [1], [0, 0, 1, 1], [], []>} : vector<8x256xbf16>, vector<256x64xbf16>, vector<8x64xf32> -> vector<8x64xf32>
    %7 = arith.addf %0, %6 : vector<8x64xf32>
    %c0_10 = arith.constant 0 : index
    %c0_11 = arith.constant 0 : index
    %c0_12 = arith.constant 0 : index
    %c1 = arith.constant 1 : index
    %c0_13 = arith.constant 0 : index
    %8 = vector.load %arg2[%c0_10, %c0_11, %c0_12, %c1, %c0_13] : memref<1x2x3x3x256xbf16, #tpu.memory_space<vmem>>, vector<1x2x2x2x256xbf16>
    %9 = vector.shape_cast %8 : vector<1x2x2x2x256xbf16> to vector<2x2x2x256xbf16>
    %10 = vector.shape_cast %9 : vector<2x2x2x256xbf16> to vector<8x256xbf16>
    %c0_14 = arith.constant 0 : index
    %c0_15 = arith.constant 0 : index
    %c1_16 = arith.constant 1 : index
    %c0_17 = arith.constant 0 : index
    %c0_18 = arith.constant 0 : index
    %11 = vector.load %arg3[%c0_14, %c0_15, %c1_16, %c0_17, %c0_18] : memref<1x2x2x256x64xbf16, #tpu.memory_space<vmem>>, vector<1x1x1x256x64xbf16>
    %12 = vector.shape_cast %11 : vector<1x1x1x256x64xbf16> to vector<256x64xbf16>
    %cst_19 = arith.constant dense<0.000000e+00> : vector<8x64xf32>
    %13 = tpu.matmul %10, %12, %cst_19 {dimension_numbers = #tpu.dot_dimension_numbers<[1], [0], [0], [1], [0, 0, 1, 1], [], []>} : vector<8x256xbf16>, vector<256x64xbf16>, vector<8x64xf32> -> vector<8x64xf32>
    %14 = arith.addf %7, %13 : vector<8x64xf32>
    %c0_20 = arith.constant 0 : index
    %c0_21 = arith.constant 0 : index
    %c1_22 = arith.constant 1 : index
    %c0_23 = arith.constant 0 : index
    %c0_24 = arith.constant 0 : index
    %15 = vector.load %arg2[%c0_20, %c0_21, %c1_22, %c0_23, %c0_24] : memref<1x2x3x3x256xbf16, #tpu.memory_space<vmem>>, vector<1x2x2x2x256xbf16>
    %16 = vector.shape_cast %15 : vector<1x2x2x2x256xbf16> to vector<2x2x2x256xbf16>
    %17 = vector.shape_cast %16 : vector<2x2x2x256xbf16> to vector<8x256xbf16>
    %c0_25 = arith.constant 0 : index
    %c1_26 = arith.constant 1 : index
    %c0_27 = arith.constant 0 : index
    %c0_28 = arith.constant 0 : index
    %c0_29 = arith.constant 0 : index
    %18 = vector.load %arg3[%c0_25, %c1_26, %c0_27, %c0_28, %c0_29] : memref<1x2x2x256x64xbf16, #tpu.memory_space<vmem>>, vector<1x1x1x256x64xbf16>
    %19 = vector.shape_cast %18 : vector<1x1x1x256x64xbf16> to vector<256x64xbf16>
    %cst_30 = arith.constant dense<0.000000e+00> : vector<8x64xf32>
    %20 = tpu.matmul %17, %19, %cst_30 {dimension_numbers = #tpu.dot_dimension_numbers<[1], [0], [0], [1], [0, 0, 1, 1], [], []>} : vector<8x256xbf16>, vector<256x64xbf16>, vector<8x64xf32> -> vector<8x64xf32>
    %21 = arith.addf %14, %20 : vector<8x64xf32>
    %c0_31 = arith.constant 0 : index
    %c0_32 = arith.constant 0 : index
    %c1_33 = arith.constant 1 : index
    %c1_34 = arith.constant 1 : index
    %c0_35 = arith.constant 0 : index
    %22 = vector.load %arg2[%c0_31, %c0_32, %c1_33, %c1_34, %c0_35] : memref<1x2x3x3x256xbf16, #tpu.memory_space<vmem>>, vector<1x2x2x2x256xbf16>
    %23 = vector.shape_cast %22 : vector<1x2x2x2x256xbf16> to vector<2x2x2x256xbf16>
    %24 = vector.shape_cast %23 : vector<2x2x2x256xbf16> to vector<8x256xbf16>
    %c0_36 = arith.constant 0 : index
    %c1_37 = arith.constant 1 : index
    %c1_38 = arith.constant 1 : index
    %c0_39 = arith.constant 0 : index
    %c0_40 = arith.constant 0 : index
    %25 = vector.load %arg3[%c0_36, %c1_37, %c1_38, %c0_39, %c0_40] : memref<1x2x2x256x64xbf16, #tpu.memory_space<vmem>>, vector<1x1x1x256x64xbf16>
    %26 = vector.shape_cast %25 : vector<1x1x1x256x64xbf16> to vector<256x64xbf16>
    %cst_41 = arith.constant dense<0.000000e+00> : vector<8x64xf32>
    %27 = tpu.matmul %24, %26, %cst_41 {dimension_numbers = #tpu.dot_dimension_numbers<[1], [0], [0], [1], [0, 0, 1, 1], [], []>} : vector<8x256xbf16>, vector<256x64xbf16>, vector<8x64xf32> -> vector<8x64xf32>
    %28 = arith.addf %21, %27 : vector<8x64xf32>
    %c0_42 = arith.constant 0 : index
    %c0_43 = arith.constant 0 : index
    %c0_44 = arith.constant 0 : index
    %29 = vector.load %arg4[%c0_42, %c0_43, %c0_44] : memref<1x1x64xf32, #tpu.memory_space<vmem>>, vector<1x1x64xf32>
    %30 = vector.shape_cast %29 : vector<1x1x64xf32> to vector<1x64xf32>
    %31 = vector.broadcast %30 : vector<1x64xf32> to vector<8x64xf32>
    %32 = arith.addf %28, %31 : vector<8x64xf32>
    %cst_45 = arith.constant 0.000000e+00 : f32
    %33 = vector.broadcast %cst_45 : f32 to vector<8x64xf32>
    %34 = arith.maximumf %32, %33 : vector<8x64xf32>
    %35 = vector.shape_cast %34 : vector<8x64xf32> to vector<2x2x2x64xf32>
    %36 = arith.truncf %35 : vector<2x2x2x64xf32> to vector<2x2x2x64xbf16>
    %c0_46 = arith.constant 0 : index
    %c0_47 = arith.constant 0 : index
    %c0_48 = arith.constant 0 : index
    %c0_49 = arith.constant 0 : index
    %c0_50 = arith.constant 0 : index
    %37 = vector.load %arg5[%c0_46, %c0_47, %c0_48, %c0_49, %c0_50] : memref<1x2x2x2x64xbf16, #tpu.memory_space<vmem>>, vector<1x2x2x2x64xbf16>
    %38 = vector.shape_cast %37 : vector<1x2x2x2x64xbf16> to vector<2x2x2x64xbf16>
    %39 = vector.shape_cast %36 : vector<2x2x2x64xbf16> to vector<1x2x2x2x64xbf16>
    tpu.vector_store %arg5[%c0_46, %c0_47, %c0_48, %c0_49, %c0_50], %39 {strides = array<i32>} : memref<1x2x2x2x64xbf16, #tpu.memory_space<vmem>>, vector<1x2x2x2x64xbf16>,
    return
  }
  func.func @transform_0(%arg0: i32, %arg1: i32) -> (i32, i32, i32, i32, i32) {
    %c0_i32 = arith.constant 0 : i32
    %c0_i32_0 = arith.constant 0 : i32
    %c0_i32_1 = arith.constant 0 : i32
    %c0_i32_2 = arith.constant 0 : i32
    return %arg0, %arg1, %c0_i32, %c0_i32_0, %c0_i32_1 : i32, i32, i32, i32, i32
  }
  func.func @transform_1(%arg0: i32, %arg1: i32) -> (i32, i32, i32, i32, i32) {
    %c0_i32 = arith.constant 0 : i32
    %c0_i32_0 = arith.constant 0 : i32
    %c0_i32_1 = arith.constant 0 : i32
    %c0_i32_2 = arith.constant 0 : i32
    %c0_i32_3 = arith.constant 0 : i32
    return %arg0, %c0_i32, %c0_i32_0, %c0_i32_1, %c0_i32_2 : i32, i32, i32, i32, i32
  }
  func.func @transform_2(%arg0: i32, %arg1: i32) -> (i32, i32, i32) {
    %c0_i32 = arith.constant 0 : i32
    %c0_i32_0 = arith.constant 0 : i32
    %c0_i32_1 = arith.constant 0 : i32
    return %arg0, %c0_i32, %c0_i32_0 : i32, i32, i32
  }
  func.func @transform_3(%arg0: i32, %arg1: i32) -> (i32, i32, i32, i32, i32) {
    %c0_i32 = arith.constant 0 : i32
    %c0_i32_0 = arith.constant 0 : i32
    %c0_i32_1 = arith.constant 0 : i32
    %c0_i32_2 = arith.constant 0 : i32
    return %arg0, %arg1, %c0_i32, %c0_i32_0, %c0_i32_1 : i32, i32, i32, i32, i32
  }
}

module attributes {stable_mosaic.version = 11 : i64} {
  func.func @_conv_tap_kernel(%arg0: i32, %arg1: i32, %arg2: memref<1x2x2x2x256xbf16, #tpu.memory_space<vmem>>, %arg3: memref<1x2x2x256x32xbf16, #tpu.memory_space<vmem>>, %arg4: memref<1x1x32xf32, #tpu.memory_space<vmem>>, %arg5: memref<1x2x1x1x32xbf16, #tpu.memory_space<vmem>>) attributes {dimension_semantics = [#tpu.dimension_semantics<parallel>, #tpu.dimension_semantics<parallel>], iteration_bounds = array<i64: 2, 1>, scalar_prefetch = 0 : i64, scratch_operands = 0 : i64, tpu.core_type = #tpu.core_type<tc>, window_params = [{transform_indices = @transform_0, window_bounds = array<i64: 1, 2, 2, 2, 256>}, {transform_indices = @transform_1, window_bounds = array<i64: 1, 2, 2, 256, 32>}, {transform_indices = @transform_2, window_bounds = array<i64: 1, 1, 32>}, {transform_indices = @transform_3, window_bounds = array<i64: 1, 2, 1, 1, 32>}]} {
    %cst = arith.constant 0.000000e+00 : f32
    %0 = vector.broadcast %cst : f32 to vector<2x32xf32>
    %c0 = arith.constant 0 : index
    %c0_0 = arith.constant 0 : index
    %c0_1 = arith.constant 0 : index
    %c0_2 = arith.constant 0 : index
    %c0_3 = arith.constant 0 : index
    %1 = vector.load %arg2[%c0, %c0_0, %c0_1, %c0_2, %c0_3] : memref<1x2x2x2x256xbf16, #tpu.memory_space<vmem>>, vector<1x2x1x1x256xbf16>
    %2 = vector.shape_cast %1 : vector<1x2x1x1x256xbf16> to vector<2x1x1x256xbf16>
    %3 = vector.shape_cast %2 : vector<2x1x1x256xbf16> to vector<2x256xbf16>
    %c0_4 = arith.constant 0 : index
    %c0_5 = arith.constant 0 : index
    %c0_6 = arith.constant 0 : index
    %c0_7 = arith.constant 0 : index
    %c0_8 = arith.constant 0 : index
    %4 = vector.load %arg3[%c0_4, %c0_5, %c0_6, %c0_7, %c0_8] : memref<1x2x2x256x32xbf16, #tpu.memory_space<vmem>>, vector<1x1x1x256x32xbf16>
    %5 = vector.shape_cast %4 : vector<1x1x1x256x32xbf16> to vector<256x32xbf16>
    %cst_9 = arith.constant dense<0.000000e+00> : vector<2x32xf32>
    %6 = tpu.matmul %3, %5, %cst_9 {dimension_numbers = #tpu.dot_dimension_numbers<[1], [0], [0], [1], [0, 0, 1, 1], [], []>} : vector<2x256xbf16>, vector<256x32xbf16>, vector<2x32xf32> -> vector<2x32xf32>
    %7 = arith.addf %0, %6 : vector<2x32xf32>
    %c0_10 = arith.constant 0 : index
    %c0_11 = arith.constant 0 : index
    %c0_12 = arith.constant 0 : index
    %c1 = arith.constant 1 : index
    %c0_13 = arith.constant 0 : index
    %8 = vector.load %arg2[%c0_10, %c0_11, %c0_12, %c1, %c0_13] : memref<1x2x2x2x256xbf16, #tpu.memory_space<vmem>>, vector<1x2x1x1x256xbf16>
    %9 = vector.shape_cast %8 : vector<1x2x1x1x256xbf16> to vector<2x1x1x256xbf16>
    %10 = vector.shape_cast %9 : vector<2x1x1x256xbf16> to vector<2x256xbf16>
    %c0_14 = arith.constant 0 : index
    %c0_15 = arith.constant 0 : index
    %c1_16 = arith.constant 1 : index
    %c0_17 = arith.constant 0 : index
    %c0_18 = arith.constant 0 : index
    %11 = vector.load %arg3[%c0_14, %c0_15, %c1_16, %c0_17, %c0_18] : memref<1x2x2x256x32xbf16, #tpu.memory_space<vmem>>, vector<1x1x1x256x32xbf16>
    %12 = vector.shape_cast %11 : vector<1x1x1x256x32xbf16> to vector<256x32xbf16>
    %cst_19 = arith.constant dense<0.000000e+00> : vector<2x32xf32>
    %13 = tpu.matmul %10, %12, %cst_19 {dimension_numbers = #tpu.dot_dimension_numbers<[1], [0], [0], [1], [0, 0, 1, 1], [], []>} : vector<2x256xbf16>, vector<256x32xbf16>, vector<2x32xf32> -> vector<2x32xf32>
    %14 = arith.addf %7, %13 : vector<2x32xf32>
    %c0_20 = arith.constant 0 : index
    %c0_21 = arith.constant 0 : index
    %c1_22 = arith.constant 1 : index
    %c0_23 = arith.constant 0 : index
    %c0_24 = arith.constant 0 : index
    %15 = vector.load %arg2[%c0_20, %c0_21, %c1_22, %c0_23, %c0_24] : memref<1x2x2x2x256xbf16, #tpu.memory_space<vmem>>, vector<1x2x1x1x256xbf16>
    %16 = vector.shape_cast %15 : vector<1x2x1x1x256xbf16> to vector<2x1x1x256xbf16>
    %17 = vector.shape_cast %16 : vector<2x1x1x256xbf16> to vector<2x256xbf16>
    %c0_25 = arith.constant 0 : index
    %c1_26 = arith.constant 1 : index
    %c0_27 = arith.constant 0 : index
    %c0_28 = arith.constant 0 : index
    %c0_29 = arith.constant 0 : index
    %18 = vector.load %arg3[%c0_25, %c1_26, %c0_27, %c0_28, %c0_29] : memref<1x2x2x256x32xbf16, #tpu.memory_space<vmem>>, vector<1x1x1x256x32xbf16>
    %19 = vector.shape_cast %18 : vector<1x1x1x256x32xbf16> to vector<256x32xbf16>
    %cst_30 = arith.constant dense<0.000000e+00> : vector<2x32xf32>
    %20 = tpu.matmul %17, %19, %cst_30 {dimension_numbers = #tpu.dot_dimension_numbers<[1], [0], [0], [1], [0, 0, 1, 1], [], []>} : vector<2x256xbf16>, vector<256x32xbf16>, vector<2x32xf32> -> vector<2x32xf32>
    %21 = arith.addf %14, %20 : vector<2x32xf32>
    %c0_31 = arith.constant 0 : index
    %c0_32 = arith.constant 0 : index
    %c1_33 = arith.constant 1 : index
    %c1_34 = arith.constant 1 : index
    %c0_35 = arith.constant 0 : index
    %22 = vector.load %arg2[%c0_31, %c0_32, %c1_33, %c1_34, %c0_35] : memref<1x2x2x2x256xbf16, #tpu.memory_space<vmem>>, vector<1x2x1x1x256xbf16>
    %23 = vector.shape_cast %22 : vector<1x2x1x1x256xbf16> to vector<2x1x1x256xbf16>
    %24 = vector.shape_cast %23 : vector<2x1x1x256xbf16> to vector<2x256xbf16>
    %c0_36 = arith.constant 0 : index
    %c1_37 = arith.constant 1 : index
    %c1_38 = arith.constant 1 : index
    %c0_39 = arith.constant 0 : index
    %c0_40 = arith.constant 0 : index
    %25 = vector.load %arg3[%c0_36, %c1_37, %c1_38, %c0_39, %c0_40] : memref<1x2x2x256x32xbf16, #tpu.memory_space<vmem>>, vector<1x1x1x256x32xbf16>
    %26 = vector.shape_cast %25 : vector<1x1x1x256x32xbf16> to vector<256x32xbf16>
    %cst_41 = arith.constant dense<0.000000e+00> : vector<2x32xf32>
    %27 = tpu.matmul %24, %26, %cst_41 {dimension_numbers = #tpu.dot_dimension_numbers<[1], [0], [0], [1], [0, 0, 1, 1], [], []>} : vector<2x256xbf16>, vector<256x32xbf16>, vector<2x32xf32> -> vector<2x32xf32>
    %28 = arith.addf %21, %27 : vector<2x32xf32>
    %c0_42 = arith.constant 0 : index
    %c0_43 = arith.constant 0 : index
    %c0_44 = arith.constant 0 : index
    %29 = vector.load %arg4[%c0_42, %c0_43, %c0_44] : memref<1x1x32xf32, #tpu.memory_space<vmem>>, vector<1x1x32xf32>
    %30 = vector.shape_cast %29 : vector<1x1x32xf32> to vector<1x32xf32>
    %31 = vector.broadcast %30 : vector<1x32xf32> to vector<2x32xf32>
    %32 = arith.addf %28, %31 : vector<2x32xf32>
    %cst_45 = arith.constant 0.000000e+00 : f32
    %33 = vector.broadcast %cst_45 : f32 to vector<2x32xf32>
    %34 = arith.maximumf %32, %33 : vector<2x32xf32>
    %35 = vector.shape_cast %34 : vector<2x32xf32> to vector<2x1x1x32xf32>
    %36 = arith.truncf %35 : vector<2x1x1x32xf32> to vector<2x1x1x32xbf16>
    %c0_46 = arith.constant 0 : index
    %c0_47 = arith.constant 0 : index
    %c0_48 = arith.constant 0 : index
    %c0_49 = arith.constant 0 : index
    %c0_50 = arith.constant 0 : index
    %37 = vector.load %arg5[%c0_46, %c0_47, %c0_48, %c0_49, %c0_50] : memref<1x2x1x1x32xbf16, #tpu.memory_space<vmem>>, vector<1x2x1x1x32xbf16>
    %38 = vector.shape_cast %37 : vector<1x2x1x1x32xbf16> to vector<2x1x1x32xbf16>
    %39 = vector.shape_cast %36 : vector<2x1x1x32xbf16> to vector<1x2x1x1x32xbf16>
    tpu.vector_store %arg5[%c0_46, %c0_47, %c0_48, %c0_49, %c0_50], %39 {strides = array<i32>} : memref<1x2x1x1x32xbf16, #tpu.memory_space<vmem>>, vector<1x2x1x1x32xbf16>,
    return
  }
  func.func @transform_0(%arg0: i32, %arg1: i32) -> (i32, i32, i32, i32, i32) {
    %c0_i32 = arith.constant 0 : i32
    %c0_i32_0 = arith.constant 0 : i32
    %c0_i32_1 = arith.constant 0 : i32
    %c0_i32_2 = arith.constant 0 : i32
    return %arg0, %arg1, %c0_i32, %c0_i32_0, %c0_i32_1 : i32, i32, i32, i32, i32
  }
  func.func @transform_1(%arg0: i32, %arg1: i32) -> (i32, i32, i32, i32, i32) {
    %c0_i32 = arith.constant 0 : i32
    %c0_i32_0 = arith.constant 0 : i32
    %c0_i32_1 = arith.constant 0 : i32
    %c0_i32_2 = arith.constant 0 : i32
    %c0_i32_3 = arith.constant 0 : i32
    return %arg0, %c0_i32, %c0_i32_0, %c0_i32_1, %c0_i32_2 : i32, i32, i32, i32, i32
  }
  func.func @transform_2(%arg0: i32, %arg1: i32) -> (i32, i32, i32) {
    %c0_i32 = arith.constant 0 : i32
    %c0_i32_0 = arith.constant 0 : i32
    %c0_i32_1 = arith.constant 0 : i32
    return %arg0, %c0_i32, %c0_i32_0 : i32, i32, i32
  }
  func.func @transform_3(%arg0: i32, %arg1: i32) -> (i32, i32, i32, i32, i32) {
    %c0_i32 = arith.constant 0 : i32
    %c0_i32_0 = arith.constant 0 : i32
    %c0_i32_1 = arith.constant 0 : i32
    %c0_i32_2 = arith.constant 0 : i32
    return %arg0, %arg1, %c0_i32, %c0_i32_0, %c0_i32_1 : i32, i32, i32, i32, i32
  }
}

module attributes {stable_mosaic.version = 11 : i64} {
  func.func @_matmul_bias_kernel(%arg0: i32, %arg1: i32, %arg2: memref<1x16x128xbf16, #tpu.memory_space<vmem>>, %arg3: memref<1x128x256xbf16, #tpu.memory_space<vmem>>, %arg4: memref<1x1x256xf32, #tpu.memory_space<vmem>>, %arg5: memref<1x16x256xf32, #tpu.memory_space<vmem>>) attributes {dimension_semantics = [#tpu.dimension_semantics<parallel>, #tpu.dimension_semantics<parallel>], iteration_bounds = array<i64: 2, 1>, scalar_prefetch = 0 : i64, scratch_operands = 0 : i64, tpu.core_type = #tpu.core_type<tc>, window_params = [{transform_indices = @transform_0, window_bounds = array<i64: 1, 16, 128>}, {transform_indices = @transform_1, window_bounds = array<i64: 1, 128, 256>}, {transform_indices = @transform_2, window_bounds = array<i64: 1, 1, 256>}, {transform_indices = @transform_3, window_bounds = array<i64: 1, 16, 256>}]} {
    %c0 = arith.constant 0 : index
    %c0_0 = arith.constant 0 : index
    %c0_1 = arith.constant 0 : index
    %0 = vector.load %arg2[%c0, %c0_0, %c0_1] : memref<1x16x128xbf16, #tpu.memory_space<vmem>>, vector<1x16x128xbf16>
    %1 = vector.shape_cast %0 : vector<1x16x128xbf16> to vector<16x128xbf16>
    %c0_2 = arith.constant 0 : index
    %c0_3 = arith.constant 0 : index
    %c0_4 = arith.constant 0 : index
    %2 = vector.load %arg3[%c0_2, %c0_3, %c0_4] : memref<1x128x256xbf16, #tpu.memory_space<vmem>>, vector<1x128x256xbf16>
    %3 = vector.shape_cast %2 : vector<1x128x256xbf16> to vector<128x256xbf16>
    %cst = arith.constant dense<0.000000e+00> : vector<16x256xf32>
    %4 = tpu.matmul %1, %3, %cst {dimension_numbers = #tpu.dot_dimension_numbers<[1], [0], [0], [1], [0, 0, 1, 1], [], []>} : vector<16x128xbf16>, vector<128x256xbf16>, vector<16x256xf32> -> vector<16x256xf32>
    %c0_5 = arith.constant 0 : index
    %c0_6 = arith.constant 0 : index
    %c0_7 = arith.constant 0 : index
    %5 = vector.load %arg4[%c0_5, %c0_6, %c0_7] : memref<1x1x256xf32, #tpu.memory_space<vmem>>, vector<1x1x256xf32>
    %6 = vector.shape_cast %5 : vector<1x1x256xf32> to vector<1x256xf32>
    %7 = vector.broadcast %6 : vector<1x256xf32> to vector<16x256xf32>
    %8 = arith.addf %4, %7 : vector<16x256xf32>
    %c0_8 = arith.constant 0 : index
    %c0_9 = arith.constant 0 : index
    %c0_10 = arith.constant 0 : index
    %9 = vector.load %arg5[%c0_8, %c0_9, %c0_10] : memref<1x16x256xf32, #tpu.memory_space<vmem>>, vector<1x16x256xf32>
    %10 = vector.shape_cast %9 : vector<1x16x256xf32> to vector<16x256xf32>
    %11 = vector.shape_cast %8 : vector<16x256xf32> to vector<1x16x256xf32>
    tpu.vector_store %arg5[%c0_8, %c0_9, %c0_10], %11 {strides = array<i32>} : memref<1x16x256xf32, #tpu.memory_space<vmem>>, vector<1x16x256xf32>,
    return
  }
  func.func @transform_0(%arg0: i32, %arg1: i32) -> (i32, i32, i32) {
    %c0_i32 = arith.constant 0 : i32
    %c0_i32_0 = arith.constant 0 : i32
    return %arg0, %arg1, %c0_i32 : i32, i32, i32
  }
  func.func @transform_1(%arg0: i32, %arg1: i32) -> (i32, i32, i32) {
    %c0_i32 = arith.constant 0 : i32
    %c0_i32_0 = arith.constant 0 : i32
    %c0_i32_1 = arith.constant 0 : i32
    return %arg0, %c0_i32, %c0_i32_0 : i32, i32, i32
  }
  func.func @transform_2(%arg0: i32, %arg1: i32) -> (i32, i32, i32) {
    %c0_i32 = arith.constant 0 : i32
    %c0_i32_0 = arith.constant 0 : i32
    %c0_i32_1 = arith.constant 0 : i32
    return %arg0, %c0_i32, %c0_i32_0 : i32, i32, i32
  }
  func.func @transform_3(%arg0: i32, %arg1: i32) -> (i32, i32, i32) {
    %c0_i32 = arith.constant 0 : i32
    %c0_i32_0 = arith.constant 0 : i32
    return %arg0, %arg1, %c0_i32 : i32, i32, i32
  }
}

module attributes {stable_mosaic.version = 11 : i64} {
  func.func @_matmul_bias_kernel(%arg0: i32, %arg1: i32, %arg2: memref<1x16x128xbf16, #tpu.memory_space<vmem>>, %arg3: memref<1x128x128xbf16, #tpu.memory_space<vmem>>, %arg4: memref<1x1x128xf32, #tpu.memory_space<vmem>>, %arg5: memref<1x16x128xf32, #tpu.memory_space<vmem>>) attributes {dimension_semantics = [#tpu.dimension_semantics<parallel>, #tpu.dimension_semantics<parallel>], iteration_bounds = array<i64: 2, 1>, scalar_prefetch = 0 : i64, scratch_operands = 0 : i64, tpu.core_type = #tpu.core_type<tc>, window_params = [{transform_indices = @transform_0, window_bounds = array<i64: 1, 16, 128>}, {transform_indices = @transform_1, window_bounds = array<i64: 1, 128, 128>}, {transform_indices = @transform_2, window_bounds = array<i64: 1, 1, 128>}, {transform_indices = @transform_3, window_bounds = array<i64: 1, 16, 128>}]} {
    %c0 = arith.constant 0 : index
    %c0_0 = arith.constant 0 : index
    %c0_1 = arith.constant 0 : index
    %0 = vector.load %arg2[%c0, %c0_0, %c0_1] : memref<1x16x128xbf16, #tpu.memory_space<vmem>>, vector<1x16x128xbf16>
    %1 = vector.shape_cast %0 : vector<1x16x128xbf16> to vector<16x128xbf16>
    %c0_2 = arith.constant 0 : index
    %c0_3 = arith.constant 0 : index
    %c0_4 = arith.constant 0 : index
    %2 = vector.load %arg3[%c0_2, %c0_3, %c0_4] : memref<1x128x128xbf16, #tpu.memory_space<vmem>>, vector<1x128x128xbf16>
    %3 = vector.shape_cast %2 : vector<1x128x128xbf16> to vector<128x128xbf16>
    %cst = arith.constant dense<0.000000e+00> : vector<16x128xf32>
    %4 = tpu.matmul %1, %3, %cst {dimension_numbers = #tpu.dot_dimension_numbers<[1], [0], [0], [1], [0, 0, 1, 1], [], []>} : vector<16x128xbf16>, vector<128x128xbf16>, vector<16x128xf32> -> vector<16x128xf32>
    %c0_5 = arith.constant 0 : index
    %c0_6 = arith.constant 0 : index
    %c0_7 = arith.constant 0 : index
    %5 = vector.load %arg4[%c0_5, %c0_6, %c0_7] : memref<1x1x128xf32, #tpu.memory_space<vmem>>, vector<1x1x128xf32>
    %6 = vector.shape_cast %5 : vector<1x1x128xf32> to vector<1x128xf32>
    %7 = vector.broadcast %6 : vector<1x128xf32> to vector<16x128xf32>
    %8 = arith.addf %4, %7 : vector<16x128xf32>
    %c0_8 = arith.constant 0 : index
    %c0_9 = arith.constant 0 : index
    %c0_10 = arith.constant 0 : index
    %9 = vector.load %arg5[%c0_8, %c0_9, %c0_10] : memref<1x16x128xf32, #tpu.memory_space<vmem>>, vector<1x16x128xf32>
    %10 = vector.shape_cast %9 : vector<1x16x128xf32> to vector<16x128xf32>
    %11 = vector.shape_cast %8 : vector<16x128xf32> to vector<1x16x128xf32>
    tpu.vector_store %arg5[%c0_8, %c0_9, %c0_10], %11 {strides = array<i32>} : memref<1x16x128xf32, #tpu.memory_space<vmem>>, vector<1x16x128xf32>,
    return
  }
  func.func @transform_0(%arg0: i32, %arg1: i32) -> (i32, i32, i32) {
    %c0_i32 = arith.constant 0 : i32
    %c0_i32_0 = arith.constant 0 : i32
    return %arg0, %arg1, %c0_i32 : i32, i32, i32
  }
  func.func @transform_1(%arg0: i32, %arg1: i32) -> (i32, i32, i32) {
    %c0_i32 = arith.constant 0 : i32
    %c0_i32_0 = arith.constant 0 : i32
    %c0_i32_1 = arith.constant 0 : i32
    return %arg0, %c0_i32, %c0_i32_0 : i32, i32, i32
  }
  func.func @transform_2(%arg0: i32, %arg1: i32) -> (i32, i32, i32) {
    %c0_i32 = arith.constant 0 : i32
    %c0_i32_0 = arith.constant 0 : i32
    %c0_i32_1 = arith.constant 0 : i32
    return %arg0, %c0_i32, %c0_i32_0 : i32, i32, i32
  }
  func.func @transform_3(%arg0: i32, %arg1: i32) -> (i32, i32, i32) {
    %c0_i32 = arith.constant 0 : i32
    %c0_i32_0 = arith.constant 0 : i32
    return %arg0, %arg1, %c0_i32 : i32, i32, i32
  }
}

</mosaic_0001>

<llo_original>
// kernel: forward.7
$region0: #{forward.7}
  #allocation0 [shape = 'u32[]', space=smem, size = 0x4, offset = 0x4, fixed_abs, tag = 'smem constant byte address 0x4 - core index']
  #allocation1 [shape = 'u32[144,128]{1,0:T(1,128)}', space=vmem, size = 0x12000, scoped, tag = 'internal scratch']
  %s0 = inlined_call_operand.vmem [shape: bf16[2,2,64,32], index: 0, kind: input, shape index: {}]
  %s1 = inlined_call_operand.vmem [shape: bf16[2,32,16], index: 1, kind: input, shape index: {}]
  %s2 = inlined_call_operand.vmem [shape: f32[2,1,16], index: 2, kind: input, shape index: {}]
  %s3 = inlined_call_operand.vmem [shape: bf16[2,2,64,16], index: 3, kind: output, shape index: {}]
  %s4 = sld [smem:[#allocation0]]
  $region45: #{forward.7} parent=0
    _
  %s6 = ssub.s32 1, %s4
  %s7 = scalar_select 0, %s6, %s4
  loop: start=0, step=1, limit=4
  $region2: #{forward.7} parent=0 // loop_pre_header
    _
  $region3: #{forward.7} parent=0 // loop_header
    %s9 = sphi 0, %s13
    %p10 = scmp.ge.s32.totalorder %s9, 4
    %s16 = sphi 0, %s28
    %s17 = sphi 0, %s24
    %s18 = sphi 0, %s16
    %s19 = sphi 0, %s17
    %s20 = sphi 0, %s18
    %s21 = sphi 0, %s19
    %s33 = sphi 0, %s35
    %s36 = sphi 0, %s33
    %s37 = sphi 0, %s36
    %s53 = sphi 0, %s37
    %s59 = sphi 0, %s61
    %s62 = sphi 0, %s59
    %s63 = sphi 0, %s62
    %s79 = sphi 0, %s63
    %s85 = sphi 0, %s87
    %s88 = sphi 0, %s85
    %s89 = sphi 0, %s88
    %s105 = sphi 0, %s89
    %s113 = sphi 0, %s115
    %s116 = sphi 0, %s113
    %s117 = sphi 0, %s116
    %s133 = sphi 0, %s117
  $region4: #{forward.7} parent=0 // loop_header_branch
    %12 = sbr.rel (%p10) target = $region8
  $region5: #{forward.7} parent=0 // loop_body
    %s14 = ssub.s32 %s9, 1
    %s15 = ssub.s32 %s9, 2
    %s22 = sadd.s32 1, %s17
    %p23 = scmp.ge.s32.totalorder %s22, 1
    %s24 = scalar_select %p23, 0, %s22
    %s25 = sadd.s32 1, %s16
    %s26 = scalar_select %p23, %s25, %s16
    %p27 = scmp.ge.s32.totalorder %s26, 2
    %s28 = scalar_select %p27, 0, %s26
    %s29 = ssub.s32 %s16, %s28
    %s30 = ssub.s32 %s17, %s24
    %s31 = sor.u32 %s29, %s30
    %p32 = scmp.eq.s32.totalorder %s31, 0
    %s34 = sadd.s32 %s33, 1
    %s35 = scalar_select %p32, %s33, %s34
    %p38 = pneg %p32
    %p39 = scmp.eq.s32.totalorder %s9, 1
    %p40 = por %p38, %p39
    %p41 = scmp.ne.s32.totalorder %s33, %s36
    %p42 = scmp.eq.s32.totalorder %s9, 0
    %p43 = por %p41, %p42
    %p44 = scmp.ne.s32.totalorder %s33, %s36
    %p45 = scmp.eq.s32.totalorder %s14, 1
    %p46 = por %p44, %p45
    %p47 = scmp.ne.s32.totalorder %s36, %s37
    %p48 = scmp.eq.s32.totalorder %s14, 0
    %p49 = por %p47, %p48
    %p50 = scmp.ne.s32.totalorder %s36, %s37
    %p51 = scmp.eq.s32.totalorder %s15, 1
    %p52 = por %p50, %p51
    %p54 = scmp.ne.s32.totalorder %s37, %s53
    %p55 = scmp.eq.s32.totalorder %s15, 0
    %p56 = por %p54, %p55
    %s57 = ssub.s32 %s16, %s28
    %p58 = scmp.eq.s32.totalorder %s57, 0
    %s60 = sadd.s32 %s59, 1
    %s61 = scalar_select %p58, %s59, %s60
    %p64 = pneg %p58
    %p65 = scmp.eq.s32.totalorder %s9, 1
    %p66 = por %p64, %p65
    %p67 = scmp.ne.s32.totalorder %s59, %s62
    %p68 = scmp.eq.s32.totalorder %s9, 0
    %p69 = por %p67, %p68
    %p70 = scmp.ne.s32.totalorder %s59, %s62
    %p71 = scmp.eq.s32.totalorder %s14, 1
    %p72 = por %p70, %p71
    %p73 = scmp.ne.s32.totalorder %s62, %s63
    %p74 = scmp.eq.s32.totalorder %s14, 0
    %p75 = por %p73, %p74
    %p76 = scmp.ne.s32.totalorder %s62, %s63
    %p77 = scmp.eq.s32.totalorder %s15, 1
    %p78 = por %p76, %p77
    %p80 = scmp.ne.s32.totalorder %s63, %s79
    %p81 = scmp.eq.s32.totalorder %s15, 0
    %p82 = por %p80, %p81
    %s83 = ssub.s32 %s16, %s28
    %p84 = scmp.eq.s32.totalorder %s83, 0
    %s86 = sadd.s32 %s85, 1
    %s87 = scalar_select %p84, %s85, %s86
    %p90 = pneg %p84
    %p91 = scmp.eq.s32.totalorder %s9, 1
    %p92 = por %p90, %p91
    %p93 = scmp.ne.s32.totalorder %s85, %s88
    %p94 = scmp.eq.s32.totalorder %s9, 0
    %p95 = por %p93, %p94
    %p96 = scmp.ne.s32.totalorder %s85, %s88
    %p97 = scmp.eq.s32.totalorder %s14, 1
    %p98 = por %p96, %p97
    %p99 = scmp.ne.s32.totalorder %s88, %s89
    %p100 = scmp.eq.s32.totalorder %s14, 0
    %p101 = por %p99, %p100
    %p102 = scmp.ne.s32.totalorder %s88, %s89
    %p103 = scmp.eq.s32.totalorder %s15, 1
    %p104 = por %p102, %p103
    %p106 = scmp.ne.s32.totalorder %s89, %s105
    %p107 = scmp.eq.s32.totalorder %s15, 0
    %p108 = por %p106, %p107
    %s109 = ssub.s32 %s16, %s28
    %s110 = ssub.s32 %s17, %s24
    %s111 = sor.u32 %s109, %s110
    %p112 = scmp.eq.s32.totalorder %s111, 0
    %s114 = sadd.s32 %s113, 1
    %s115 = scalar_select %p112, %s113, %s114
    %p118 = pneg %p112
    %p119 = scmp.eq.s32.totalorder %s9, 1
    %p120 = por %p118, %p119
    %p121 = scmp.ne.s32.totalorder %s113, %s116
    %p122 = scmp.eq.s32.totalorder %s9, 0
    %p123 = por %p121, %p122
    %p124 = scmp.ne.s32.totalorder %s113, %s116
    %p125 = scmp.eq.s32.totalorder %s14, 1
    %p126 = por %p124, %p125
    %p127 = scmp.ne.s32.totalorder %s116, %s117
    %p128 = scmp.eq.s32.totalorder %s14, 0
    %p129 = por %p127, %p128
    %p130 = scmp.ne.s32.totalorder %s116, %s117
    %p131 = scmp.eq.s32.totalorder %s15, 1
    %p132 = por %p130, %p131
    %p134 = scmp.ne.s32.totalorder %s117, %s133
    %p135 = scmp.eq.s32.totalorder %s15, 0
    %p136 = por %p134, %p135
    %p137 = scmp.le.s32.totalorder 1, %s9
    %p138 = scmp.lt.s32.totalorder %s9, 3
    %p139 = pnand %p137, %p138
    %p140 = pneg %p139
    // Predicated region
    $region9: #{forward.7} parent=5 // pred_check
      _
    $region10: #{forward.7} parent=5 // pred_check_branch
      %142 = sbr.rel (%p139) target = $region12
    $region11: #{forward.7} parent=5 // pred_region
      %s143 = ssub.s32 %s9, 1
    $region12: #{forward.7} parent=5 // pred_fallthru
      _
    %p144 = scmp.lt.s32.totalorder %s9, 2
    // Predicated region
    $region13: #{forward.7} parent=5 // pred_check
      %p145 = pneg %p144
    $region14: #{forward.7} parent=5 // pred_check_branch
      %147 = sbr.rel (%p145) target = $region16
    $region15: #{forward.7} parent=5 // pred_region
      // Predicated region
      $region17: #{forward.7} parent=15 // pred_check
        %p148 = pneg %p43
      $region18: #{forward.7} parent=15 // pred_check_branch
        %150 = sbr.rel (%p148) target = $region20
      $region19: #{forward.7} parent=15 // pred_region
        %s151 = smul.u32 2, %s17
        %p152 = scmp.lt.s32.totalorder %s16, 1
        %s153 = scalar_select %p152, %s16, 1
        %p154 = scmp.lt.s32.totalorder %s151, 1
        %s155 = scalar_select %p154, %s151, 1
        %s156 = smul.addr %s155, 8
        %s157 = smul.addr %s153, 16
        %s158 = sadd.s32 %s156, %s157
        %s159 = smul.addr %s158, 4
        %s160 = scalar_lea.vmem %s0, %s159
        %s161 = smul.u32 2, %s17
      $region20: #{forward.7} parent=15 // pred_fallthru
        _
      // Predicated region
      $region21: #{forward.7} parent=15 // pred_check
        %p162 = pneg %p69
      $region22: #{forward.7} parent=15 // pred_check_branch
        %164 = sbr.rel (%p162) target = $region24
      $region23: #{forward.7} parent=15 // pred_region
        %p165 = scmp.lt.s32.totalorder %s16, 1
        %s166 = scalar_select %p165, %s16, 1
        %s167 = smul.addr %s166, 4
        %s168 = smul.addr %s167, 4
        %s169 = scalar_lea.vmem %s1, %s168
      $region24: #{forward.7} parent=15 // pred_fallthru
        _
      // Predicated region
      $region25: #{forward.7} parent=15 // pred_check
        %p170 = pneg %p95
      $region26: #{forward.7} parent=15 // pred_check_branch
        %172 = sbr.rel (%p170) target = $region28
      $region27: #{forward.7} parent=15 // pred_region
        %p173 = scmp.lt.s32.totalorder %s16, 1
        %s174 = scalar_select %p173, %s16, 1
        %s175 = scalar_lea.vmem %s2, %s174
      $region28: #{forward.7} parent=15 // pred_fallthru
        _
    $region16: #{forward.7} parent=5 // pred_fallthru
      _
    %p176 = scmp.le.s32.totalorder 1, %s9
    %p177 = scmp.lt.s32.totalorder %s9, 3
    %p178 = pnand %p176, %p177
    %p179 = pneg %p178
    // Predicated region
    $region29: #{forward.7} parent=5 // pred_check
      _
    $region30: #{forward.7} parent=5 // pred_check_branch
      %181 = sbr.rel (%p178) target = $region32
    $region31: #{forward.7} parent=5 // pred_region
      %s182 = ssub.s32 %s9, 1
      %s183 = smul.u32 2, %s19
      %p184 = scmp.lt.s32.totalorder %s18, 1
      %s185 = scalar_select %p184, %s18, 1
      %p186 = scmp.lt.s32.totalorder %s183, 1
      %s187 = scalar_select %p186, %s183, 1
      %s188 = smul.addr %s187, 8
      %s189 = smul.addr %s185, 16
      %s190 = sadd.s32 %s188, %s189
      %s191 = smul.addr %s190, 4
      %s192 = scalar_lea.vmem %s0, %s191
      %p193 = pneg %p49
      %p194 = pneg %p46
      %p195 = scmp.lt.s32.totalorder %s18, 1
      %s196 = scalar_select %p195, %s18, 1
      %s197 = smul.addr %s196, 4
      %s198 = smul.addr %s197, 4
      %s199 = scalar_lea.vmem %s1, %s198
      %p200 = pneg %p75
      %p201 = pneg %p72
      %p202 = scmp.lt.s32.totalorder %s18, 1
      %s203 = scalar_select %p202, %s18, 1
      %s204 = scalar_lea.vmem %s2, %s203
      %p205 = pneg %p101
      %p206 = pneg %p98
      %p207 = pneg %p129
      %p208 = pneg %p126
      %s209 = smul.u32 2, %s19
      %p210 = scmp.lt.s32.totalorder %s18, 1
      %s211 = scalar_select %p210, %s18, 1
      %p212 = scmp.lt.s32.totalorder %s209, 1
      %s213 = scalar_select %p212, %s209, 1
      %s214 = smul.addr %s213, 8
      %s215 = smul.addr %s211, 16
      %s216 = sadd.s32 %s214, %s215
      %s217 = smul.addr %s216, 4
      %s218 = scalar_lea.vmem %s3, %s217
      %s219 = smul.u32 2, %s19
      %p220 = scmp.lt.s32.totalorder %s18, 1
      %s221 = scalar_select %p220, %s18, 1
      %p222 = scmp.lt.s32.totalorder %s219, 1
      %s223 = scalar_select %p222, %s219, 1
      %s224 = smul.addr %s223, 8
      %s225 = smul.addr %s221, 16
      %s226 = sadd.s32 %s224, %s225
      %s227 = smul.addr %s226, 4
      %s228 = scalar_lea.vmem %s0, %s227
      %s229 = smul.u32 2, %s19
      %p230 = scmp.lt.s32.totalorder %s18, 1
      %s231 = scalar_select %p230, %s18, 1
      %s232 = smul.addr %s231, 4
      %s233 = smul.addr %s232, 4
      %s234 = scalar_lea.vmem %s1, %s233
      %p235 = scmp.lt.s32.totalorder %s18, 1
      %s236 = scalar_select %p235, %s18, 1
      %s237 = scalar_lea.vmem %s2, %s236
      %s238 = smul.u32 2, %s19
      %p239 = scmp.lt.s32.totalorder %s18, 1
      %s240 = scalar_select %p239, %s18, 1
      %p241 = scmp.lt.s32.totalorder %s238, 1
      %s242 = scalar_select %p241, %s238, 1
      %s243 = smul.addr %s242, 8
      %s244 = smul.addr %s240, 16
      %s245 = sadd.s32 %s243, %s244
      %s246 = smul.addr %s245, 4
      %s247 = scalar_lea.vmem %s3, %s246
      %s248 = smul.u32 2, %s19
      %v250 = vld [vmem:[%s228] sm:$0xf]
      %v251 = vld [vmem:[%s228 + $0x4] sm:$0xf]
      %v252 = vld [vmem:[%s228 + $0x8] sm:$0xf]
      %v253 = vld [vmem:[%s228 + $0xc] sm:$0xf]
      %v254 = vld [vmem:[%s228 + $0x10] sm:$0xf]
      %v255 = vld [vmem:[%s228 + $0x14] sm:$0xf]
      %v256 = vld [vmem:[%s228 + $0x18] sm:$0xf]
      %v257 = vld [vmem:[%s228 + $0x1c] sm:$0xf]
      %v258 = vld [vmem:[%s228 + $0x20] sm:$0xf]
      %v259 = vld [vmem:[%s228 + $0x24] sm:$0xf]
      %v260 = vld [vmem:[%s228 + $0x28] sm:$0xf]
      %v261 = vld [vmem:[%s228 + $0x2c] sm:$0xf]
      %v262 = vld [vmem:[%s228 + $0x30] sm:$0xf]
      %v263 = vld [vmem:[%s228 + $0x34] sm:$0xf]
      %v264 = vld [vmem:[%s228 + $0x38] sm:$0xf]
      %v265 = vld [vmem:[%s228 + $0x3c] sm:$0xf]
      %v266 = vld [vmem:[%s234] sm:$0xf]
      %v267 = vld [vmem:[%s234 + $0x4] sm:$0xf]
      %v268 = vld [vmem:[%s234 + $0x8] sm:$0xf]
      %v269 = vld [vmem:[%s234 + $0xc] sm:$0xf]
      %v270 = vld [vmem:[%s237] sm:$0x1]
      %v272 = vlaneseq
      %v273 = vshrl.u32 %v272, 7
      %v274 = vsub.s32 0, %v273
      %v275 = vrot.slane %v270, %v274
      %v293 = vunpack.c.l.b16 %v250
      %v294 = vunpack.c.l.b16 %v251
      %v295 = vunpack.c.l.b16 %v252
      %v296 = vunpack.c.l.b16 %v253
      %v297 = vunpack.c.l.b16 %v254
      %v298 = vunpack.c.l.b16 %v255
      %v299 = vunpack.c.l.b16 %v256
      %v300 = vunpack.c.l.b16 %v257
      %v301 = vunpack.c.l.b16 %v258
      %v302 = vunpack.c.l.b16 %v259
      %v303 = vunpack.c.l.b16 %v260
      %v304 = vunpack.c.l.b16 %v261
      %v305 = vunpack.c.l.b16 %v262
      %v306 = vunpack.c.l.b16 %v263
      %v307 = vunpack.c.l.b16 %v264
      %v308 = vunpack.c.l.b16 %v265
      %v309 = vpack.c.b16 %v294, %v293
      %v310 = vpack.c.b16 %v296, %v295
      %v311 = vpack.c.b16 %v298, %v297
      %v312 = vpack.c.b16 %v300, %v299
      %v313 = vpack.c.b16 %v302, %v301
      %v314 = vpack.c.b16 %v304, %v303
      %v315 = vpack.c.b16 %v306, %v305
      %v316 = vpack.c.b16 %v308, %v307
      %v321 = vunpack.c.l.b16 %v266
      %v322 = vunpack.c.l.b16 %v267
      %v323 = vunpack.c.l.b16 %v268
      %v324 = vunpack.c.l.b16 %v269
      %v325 = vpack.c.b16 %v322, %v321
      %v326 = vpack.c.b16 %v324, %v323
      %vm329 = vcmask 261120
      %v331 = vsel %vm329, %v309, 0
      %v334 = vsel %vm329, %v310, 0
      %v337 = vsel %vm329, %v311, 0
      %v340 = vsel %vm329, %v312, 0
      %v343 = vsel %vm329, %v313, 0
      %v346 = vsel %vm329, %v314, 0
      %v349 = vsel %vm329, %v315, 0
      %v352 = vsel %vm329, %v316, 0
      %354 = vmatprep.subr.bf16.mxu0 0
      %355 = vmatpush1.bf16.msra.mxu0 %v325
      %356 = vmatprep.subr.bf16.mxu0 0
      %357 = vmatpush1.bf16.msra.mxu0 %v326
      %358 = vmatprep.subr.bf16.mxu0 0
      %359 = vmatpush1.bf16.msra.mxu0 0
      %360 = vmatprep.subr.bf16.mxu0 0
      %361 = vmatpush1.bf16.msra.mxu0 0
      %362 = vmatprep.subr.bf16.mxu0 0
      %363 = vmatpush1.bf16.msra.mxu0 0
      %364 = vmatprep.subr.bf16.mxu0 0
      %365 = vmatpush1.bf16.msra.mxu0 0
      %366 = vmatprep.subr.bf16.mxu0 0
      %367 = vmatpush1.bf16.msra.mxu0 0
      %368 = vmatprep.subr.bf16.mxu0 0
      %369 = vmatpush1.bf16.msra.mxu0 0
      %370 = vmatprep.subr.bf16.mxu0 0
      %371 = vmatpush1.bf16.msra.mxu0 0
      %372 = vmatprep.subr.bf16.mxu0 0
      %373 = vmatpush1.bf16.msra.mxu0 0
      %374 = vmatprep.subr.bf16.mxu0 0
      %375 = vmatpush1.bf16.msra.mxu0 0
      %376 = vmatprep.subr.bf16.mxu0 0
      %377 = vmatpush1.bf16.msra.mxu0 0
      %378 = vmatprep.subr.bf16.mxu0 0
      %379 = vmatpush1.bf16.msra.mxu0 0
      %380 = vmatprep.subr.bf16.mxu0 0
      %381 = vmatpush1.bf16.msra.mxu0 0
      %382 = vmatprep.subr.bf16.mxu0 0
      %383 = vmatpush1.bf16.msra.mxu0 0
      %384 = vmatprep.subr.bf16.mxu0 0
      %385 = vmatpush1.bf16.msra.mxu0 0
      %386 = vmatprep.mubr.bf16.mxu0 0
      %387 = vmatmul.mubr.bf16.gmra.mrb[0].mxu0 %v331
      %v388 = vpop.f32.mrb[0].mxu0
      %v389 = vadd.f32 %v275, %v388
      %v390 = vpop.f32.mrb[0].mxu0
      %v391 = vpop.f32.mrb[0].mxu0
      %v392 = vadd.f32 %v275, %v391
      %v393 = vpop.f32.mrb[0].mxu0
      %394 = vmatprep.mubr.bf16.mxu0 0
      %395 = vmatmul.mubr.bf16.gmra.mrb[0].mxu0 %v334
      %v396 = vpop.f32.mrb[0].mxu0
      %v397 = vadd.f32 %v275, %v396
      %v398 = vpop.f32.mrb[0].mxu0
      %v399 = vpop.f32.mrb[0].mxu0
      %v400 = vadd.f32 %v275, %v399
      %v401 = vpop.f32.mrb[0].mxu0
      %402 = vmatprep.mubr.bf16.mxu0 0
      %403 = vmatmul.mubr.bf16.gmra.mrb[0].mxu0 %v337
      %v404 = vpop.f32.mrb[0].mxu0
      %v405 = vadd.f32 %v275, %v404
      %v406 = vpop.f32.mrb[0].mxu0
      %v407 = vpop.f32.mrb[0].mxu0
      %v408 = vadd.f32 %v275, %v407
      %v409 = vpop.f32.mrb[0].mxu0
      %410 = vmatprep.mubr.bf16.mxu0 0
      %411 = vmatmul.mubr.bf16.gmra.mrb[0].mxu0 %v340
      %v412 = vpop.f32.mrb[0].mxu0
      %v413 = vadd.f32 %v275, %v412
      %v414 = vpop.f32.mrb[0].mxu0
      %v415 = vpop.f32.mrb[0].mxu0
      %v416 = vadd.f32 %v275, %v415
      %v417 = vpop.f32.mrb[0].mxu0
      %418 = vmatprep.mubr.bf16.mxu0 0
      %419 = vmatmul.mubr.bf16.gmra.mrb[0].mxu0 %v343
      %v420 = vpop.f32.mrb[0].mxu0
      %v421 = vadd.f32 %v275, %v420
      %v422 = vpop.f32.mrb[0].mxu0
      %v423 = vpop.f32.mrb[0].mxu0
      %v424 = vadd.f32 %v275, %v423
      %v425 = vpop.f32.mrb[0].mxu0
      %426 = vmatprep.mubr.bf16.mxu0 0
      %427 = vmatmul.mubr.bf16.gmra.mrb[0].mxu0 %v346
      %v428 = vpop.f32.mrb[0].mxu0
      %v429 = vadd.f32 %v275, %v428
      %v430 = vpop.f32.mrb[0].mxu0
      %v431 = vpop.f32.mrb[0].mxu0
      %v432 = vadd.f32 %v275, %v431
      %v433 = vpop.f32.mrb[0].mxu0
      %434 = vmatprep.mubr.bf16.mxu0 0
      %435 = vmatmul.mubr.bf16.gmra.mrb[0].mxu0 %v349
      %v436 = vpop.f32.mrb[0].mxu0
      %v437 = vadd.f32 %v275, %v436
      %v438 = vpop.f32.mrb[0].mxu0
      %v439 = vpop.f32.mrb[0].mxu0
      %v440 = vadd.f32 %v275, %v439
      %v441 = vpop.f32.mrb[0].mxu0
      %442 = vmatprep.mubr.bf16.mxu0 0
      %443 = vmatmul.mubr.bf16.gmra.mrb[0].mxu0 %v352
      %v444 = vpop.f32.mrb[0].mxu0
      %v445 = vadd.f32 %v275, %v444
      %v446 = vpop.f32.mrb[0].mxu0
      %v447 = vpop.f32.mrb[0].mxu0
      %v448 = vadd.f32 %v275, %v447
      %v449 = vpop.f32.mrb[0].mxu0
      %450 = vdwg.mxu0
      %vm451 = vcmask 130048
      %v452 = vsel %vm451, %v389, 0.0
      %v453 = vsel %vm451, %v392, 0.0
      %v454 = vadd.f32 %v452, %v453
      %v455 = vsel %vm451, %v397, 0.0
      %v456 = vadd.f32 %v454, %v455
      %v457 = vsel %vm451, %v400, 0.0
      %v458 = vadd.f32 %v456, %v457
      %v459 = vsel %vm451, %v405, 0.0
      %v460 = vadd.f32 %v458, %v459
      %v461 = vsel %vm451, %v408, 0.0
      %v462 = vadd.f32 %v460, %v461
      %v463 = vsel %vm451, %v413, 0.0
      %v464 = vadd.f32 %v462, %v463
      %v465 = vsel %vm451, %v416, 0.0
      %v466 = vadd.f32 %v464, %v465
      %v467 = vrot.slane %v466, 4
      %v468 = vadd.f32 %v466, %v467
      %v469 = vrot.slane %v468, 2
      %v470 = vadd.f32 %v468, %v469
      %v471 = vrot.slane %v470, 1
      %v472 = vadd.f32 %v470, %v471
      %v473 = vsel %vm451, %v421, 0.0
      %v474 = vsel %vm451, %v424, 0.0
      %v475 = vadd.f32 %v473, %v474
      %v476 = vsel %vm451, %v429, 0.0
      %v477 = vadd.f32 %v475, %v476
      %v478 = vsel %vm451, %v432, 0.0
      %v479 = vadd.f32 %v477, %v478
      %v480 = vsel %vm451, %v437, 0.0
      %v481 = vadd.f32 %v479, %v480
      %v482 = vsel %vm451, %v440, 0.0
      %v483 = vadd.f32 %v481, %v482
      %v484 = vsel %vm451, %v445, 0.0
      %v485 = vadd.f32 %v483, %v484
      %v486 = vsel %vm451, %v448, 0.0
      %v487 = vadd.f32 %v485, %v486
      %v488 = vrot.slane %v487, 4
      %v489 = vadd.f32 %v487, %v488
      %v490 = vrot.slane %v489, 2
      %v491 = vadd.f32 %v489, %v490
      %v492 = vrot.slane %v491, 1
      %v493 = vadd.f32 %v491, %v492
      %v494 = vrcp.pop 64.0
      %v495 = vmul.f32 %v472, %v494
      %v496 = vmul.f32 %v493, %v494
      %v497 = vsub.f32 %v389, %v495
      %v498 = vsub.f32 %v392, %v495
      %v499 = vsub.f32 %v397, %v495
      %v500 = vsub.f32 %v400, %v495
      %v501 = vsub.f32 %v405, %v495
      %v502 = vsub.f32 %v408, %v495
      %v503 = vsub.f32 %v413, %v495
      %v504 = vsub.f32 %v416, %v495
      %v505 = vsub.f32 %v421, %v496
      %v506 = vsub.f32 %v424, %v496
      %v507 = vsub.f32 %v429, %v496
      %v508 = vsub.f32 %v432, %v496
      %v509 = vsub.f32 %v437, %v496
      %v510 = vsub.f32 %v440, %v496
      %v511 = vsub.f32 %v445, %v496
      %v512 = vsub.f32 %v448, %v496
      %v513 = vmul.f32 %v497, %v497
      %v514 = vmul.f32 %v498, %v498
      %v515 = vmul.f32 %v499, %v499
      %v516 = vmul.f32 %v500, %v500
      %v517 = vmul.f32 %v501, %v501
      %v518 = vmul.f32 %v502, %v502
      %v519 = vmul.f32 %v503, %v503
      %v520 = vmul.f32 %v504, %v504
      %v521 = vmul.f32 %v505, %v505
      %v522 = vmul.f32 %v506, %v506
      %v523 = vmul.f32 %v507, %v507
      %v524 = vmul.f32 %v508, %v508
      %v525 = vmul.f32 %v509, %v509
      %v526 = vmul.f32 %v510, %v510
      %v527 = vmul.f32 %v511, %v511
      %v528 = vmul.f32 %v512, %v512
      %v529 = vsel %vm451, %v513, 0.0
      %v530 = vsel %vm451, %v514, 0.0
      %v531 = vadd.f32 %v529, %v530
      %v532 = vsel %vm451, %v515, 0.0
      %v533 = vadd.f32 %v531, %v532
      %v534 = vsel %vm451, %v516, 0.0
      %v535 = vadd.f32 %v533, %v534
      %v536 = vsel %vm451, %v517, 0.0
      %v537 = vadd.f32 %v535, %v536
      %v538 = vsel %vm451, %v518, 0.0
      %v539 = vadd.f32 %v537, %v538
      %v540 = vsel %vm451, %v519, 0.0
      %v541 = vadd.f32 %v539, %v540
      %v542 = vsel %vm451, %v520, 0.0
      %v543 = vadd.f32 %v541, %v542
      %v544 = vrot.slane %v543, 4
      %v545 = vadd.f32 %v543, %v544
      %v546 = vrot.slane %v545, 2
      %v547 = vadd.f32 %v545, %v546
      %v548 = vrot.slane %v547, 1
      %v549 = vadd.f32 %v547, %v548
      %v550 = vsel %vm451, %v521, 0.0
      %v551 = vsel %vm451, %v522, 0.0
      %v552 = vadd.f32 %v550, %v551
      %v553 = vsel %vm451, %v523, 0.0
      %v554 = vadd.f32 %v552, %v553
      %v555 = vsel %vm451, %v524, 0.0
      %v556 = vadd.f32 %v554, %v555
      %v557 = vsel %vm451, %v525, 0.0
      %v558 = vadd.f32 %v556, %v557
      %v559 = vsel %vm451, %v526, 0.0
      %v560 = vadd.f32 %v558, %v559
      %v561 = vsel %vm451, %v527, 0.0
      %v562 = vadd.f32 %v560, %v561
      %v563 = vsel %vm451, %v528, 0.0
      %v564 = vadd.f32 %v562, %v563
      %v565 = vrot.slane %v564, 4
      %v566 = vadd.f32 %v564, %v565
      %v567 = vrot.slane %v566, 2
      %v568 = vadd.f32 %v566, %v567
      %v569 = vrot.slane %v568, 1
      %v570 = vadd.f32 %v568, %v569
      %v571 = vmul.f32 %v549, %v494
      %v572 = vmul.f32 %v570, %v494
      %v573 = vadd.f32 %v571, 1e-05
      %v574 = vadd.f32 %v572, 1e-05
      %v575 = vrsqrt.pop %v573
      %v576 = vrsqrt.pop %v574
      %v577 = vmul.f32 %v497, %v575
      %v578 = vmul.f32 %v498, %v575
      %v579 = vmul.f32 %v499, %v575
      %v580 = vmul.f32 %v500, %v575
      %v581 = vmul.f32 %v501, %v575
      %v582 = vmul.f32 %v502, %v575
      %v583 = vmul.f32 %v503, %v575
      %v584 = vmul.f32 %v504, %v575
      %v585 = vmul.f32 %v505, %v576
      %v586 = vmul.f32 %v506, %v576
      %v587 = vmul.f32 %v507, %v576
      %v588 = vmul.f32 %v508, %v576
      %v589 = vmul.f32 %v509, %v576
      %v590 = vmul.f32 %v510, %v576
      %v591 = vmul.f32 %v511, %v576
      %v592 = vmul.f32 %v512, %v576
      %v593 = vmax.f32 %v577, 0.0
      %v594 = vmax.f32 %v578, 0.0
      %v595 = vmax.f32 %v579, 0.0
      %v596 = vmax.f32 %v580, 0.0
      %v597 = vmax.f32 %v581, 0.0
      %v598 = vmax.f32 %v582, 0.0
      %v599 = vmax.f32 %v583, 0.0
      %v600 = vmax.f32 %v584, 0.0
      %v601 = vmax.f32 %v585, 0.0
      %v602 = vmax.f32 %v586, 0.0
      %v603 = vmax.f32 %v587, 0.0
      %v604 = vmax.f32 %v588, 0.0
      %v605 = vmax.f32 %v589, 0.0
      %v606 = vmax.f32 %v590, 0.0
      %v607 = vmax.f32 %v591, 0.0
      %v608 = vmax.f32 %v592, 0.0
      %v609 = vpack.c.bf16 %v594, %v593
      %v610 = vpack.c.bf16 %v596, %v595
      %v611 = vpack.c.bf16 %v598, %v597
      %v612 = vpack.c.bf16 %v600, %v599
      %v613 = vpack.c.bf16 %v602, %v601
      %v614 = vpack.c.bf16 %v604, %v603
      %v615 = vpack.c.bf16 %v606, %v605
      %v616 = vpack.c.bf16 %v608, %v607
      %v625 = vunpack.c.l.b16 %v609
      %v626 = vunpack.c.h.b16 %v609
      %v627 = vunpack.c.l.b16 %v610
      %v628 = vunpack.c.h.b16 %v610
      %v629 = vunpack.c.l.b16 %v611
      %v630 = vunpack.c.h.b16 %v611
      %v631 = vunpack.c.l.b16 %v612
      %v632 = vunpack.c.h.b16 %v612
      %v633 = vunpack.c.l.b16 %v613
      %v634 = vunpack.c.h.b16 %v613
      %v635 = vunpack.c.l.b16 %v614
      %v636 = vunpack.c.h.b16 %v614
      %v637 = vunpack.c.l.b16 %v615
      %v638 = vunpack.c.h.b16 %v615
      %v639 = vunpack.c.l.b16 %v616
      %v640 = vunpack.c.h.b16 %v616
      %v641 = vpack.c.b16 %v625, %v625
      %v642 = vpack.c.b16 %v626, %v626
      %v643 = vpack.c.b16 %v627, %v627
      %v644 = vpack.c.b16 %v628, %v628
      %v645 = vpack.c.b16 %v629, %v629
      %v646 = vpack.c.b16 %v630, %v630
      %v647 = vpack.c.b16 %v631, %v631
      %v648 = vpack.c.b16 %v632, %v632
      %v649 = vpack.c.b16 %v633, %v633
      %v650 = vpack.c.b16 %v634, %v634
      %v651 = vpack.c.b16 %v635, %v635
      %v652 = vpack.c.b16 %v636, %v636
      %v653 = vpack.c.b16 %v637, %v637
      %v654 = vpack.c.b16 %v638, %v638
      %v655 = vpack.c.b16 %v639, %v639
      %v656 = vpack.c.b16 %v640, %v640
      %vm673 = vcmask 125952
      %674 = vst.msk [vmem:[%s247] sm:$0xf] %vm673, %v641
      %675 = vst.msk [vmem:[%s247 + $0x4] sm:$0xf] %vm673, %v642
      %676 = vst.msk [vmem:[%s247 + $0x8] sm:$0xf] %vm673, %v643
      %677 = vst.msk [vmem:[%s247 + $0xc] sm:$0xf] %vm673, %v644
      %678 = vst.msk [vmem:[%s247 + $0x10] sm:$0xf] %vm673, %v645
      %679 = vst.msk [vmem:[%s247 + $0x14] sm:$0xf] %vm673, %v646
      %680 = vst.msk [vmem:[%s247 + $0x18] sm:$0xf] %vm673, %v647
      %681 = vst.msk [vmem:[%s247 + $0x1c] sm:$0xf] %vm673, %v648
      %682 = vst.msk [vmem:[%s247 + $0x20] sm:$0xf] %vm673, %v649
      %683 = vst.msk [vmem:[%s247 + $0x24] sm:$0xf] %vm673, %v650
      %684 = vst.msk [vmem:[%s247 + $0x28] sm:$0xf] %vm673, %v651
      %685 = vst.msk [vmem:[%s247 + $0x2c] sm:$0xf] %vm673, %v652
      %686 = vst.msk [vmem:[%s247 + $0x30] sm:$0xf] %vm673, %v653
      %687 = vst.msk [vmem:[%s247 + $0x34] sm:$0xf] %vm673, %v654
      %688 = vst.msk [vmem:[%s247 + $0x38] sm:$0xf] %vm673, %v655
      %689 = vst.msk [vmem:[%s247 + $0x3c] sm:$0xf] %vm673, %v656
      %s690 = smul.u32 2, %s19
      %p691 = scmp.lt.s32.totalorder %s18, 1
      %s692 = scalar_select %p691, %s18, 1
      %p693 = scmp.lt.s32.totalorder %s690, 1
      %s694 = scalar_select %p693, %s690, 1
      %s695 = smul.addr %s694, 8
      %s696 = smul.addr %s692, 16
      %s697 = sadd.s32 %s695, %s696
      %s698 = smul.addr %s697, 4
      %s699 = scalar_lea.vmem %s3, %s698
      // Predicated region
      $region33: #{forward.7} parent=31 // pred_check
        %p700 = pneg %p126
      $region34: #{forward.7} parent=31 // pred_check_branch
        %702 = sbr.rel (%p700) target = $region36
      $region35: #{forward.7} parent=31 // pred_region
        %s703 = smul.u32 2, %s19
      $region36: #{forward.7} parent=31 // pred_fallthru
        _
    $region32: #{forward.7} parent=5 // pred_fallthru
      _
    %p704 = scmp.le.s32.totalorder 2, %s9
    // Predicated region
    $region37: #{forward.7} parent=5 // pred_check
      %p705 = pneg %p704
    $region38: #{forward.7} parent=5 // pred_check_branch
      %707 = sbr.rel (%p705) target = $region40
    $region39: #{forward.7} parent=5 // pred_region
      %s708 = ssub.s32 %s9, 2
      // Predicated region
      $region41: #{forward.7} parent=39 // pred_check
        %p709 = pneg %p132
      $region42: #{forward.7} parent=39 // pred_check_branch
        %711 = sbr.rel (%p709) target = $region44
      $region43: #{forward.7} parent=39 // pred_region
        %s712 = smul.u32 2, %s21
        %p713 = scmp.lt.s32.totalorder %s20, 1
        %s714 = scalar_select %p713, %s20, 1
        %p715 = scmp.lt.s32.totalorder %s712, 1
        %s716 = scalar_select %p715, %s712, 1
        %s717 = smul.addr %s716, 8
        %s718 = smul.addr %s714, 16
        %s719 = sadd.s32 %s717, %s718
        %s720 = smul.addr %s719, 4
        %s721 = scalar_lea.vmem %s3, %s720
      $region44: #{forward.7} parent=39 // pred_fallthru
        _
    $region40: #{forward.7} parent=5 // pred_fallthru
      _
  $region6: #{forward.7} parent=0 // loop_footer
    %s13 = sadd.s32 1, %s9
  $region7: #{forward.7} parent=0 // loop_footer_branch
    %8 = sbr.rel target = $region3
  $region8: #{forward.7} parent=0 // loop_exit
    _

// kernel: forward.8
$region0: #{forward.8}
  #allocation0 [shape = 'u32[]', space=smem, size = 0x4, offset = 0x4, fixed_abs, tag = 'smem constant byte address 0x4 - core index']
  #allocation1 [shape = 'u32[144,128]{1,0:T(1,128)}', space=vmem, size = 0x12000, scoped, tag = 'internal scratch']
  %s0 = inlined_call_operand.vmem [shape: bf16[2,2,10,10,16], index: 0, kind: input, shape index: {}]
  %s1 = inlined_call_operand.vmem [shape: bf16[2,3,3,16,64], index: 1, kind: input, shape index: {}]
  %s2 = inlined_call_operand.vmem [shape: f32[2,1,64], index: 2, kind: input, shape index: {}]
  %s3 = inlined_call_operand.vmem [shape: bf16[2,2,8,8,64], index: 3, kind: output, shape index: {}]
  %s4 = sld [smem:[#allocation0]]
  $region45: #{forward.8} parent=0
    _
  %s6 = ssub.s32 1, %s4
  %s7 = scalar_select 0, %s6, %s4
  loop: start=0, step=1, limit=4
  $region2: #{forward.8} parent=0 // loop_pre_header
    _
  $region3: #{forward.8} parent=0 // loop_header
    %s9 = sphi 0, %s13
    %p10 = scmp.ge.s32.totalorder %s9, 4
    %s16 = sphi 0, %s28
    %s17 = sphi 0, %s24
    %s18 = sphi 0, %s16
    %s19 = sphi 0, %s17
    %s20 = sphi 0, %s18
    %s21 = sphi 0, %s19
    %s33 = sphi 0, %s35
    %s36 = sphi 0, %s33
    %s37 = sphi 0, %s36
    %s53 = sphi 0, %s37
    %s59 = sphi 0, %s61
    %s62 = sphi 0, %s59
    %s63 = sphi 0, %s62
    %s79 = sphi 0, %s63
    %s85 = sphi 0, %s87
    %s88 = sphi 0, %s85
    %s89 = sphi 0, %s88
    %s105 = sphi 0, %s89
    %s113 = sphi 0, %s115
    %s116 = sphi 0, %s113
    %s117 = sphi 0, %s116
    %s133 = sphi 0, %s117
  $region4: #{forward.8} parent=0 // loop_header_branch
    %12 = sbr.rel (%p10) target = $region8
  $region5: #{forward.8} parent=0 // loop_body
    %s14 = ssub.s32 %s9, 1
    %s15 = ssub.s32 %s9, 2
    %s22 = sadd.s32 1, %s17
    %p23 = scmp.ge.s32.totalorder %s22, 1
    %s24 = scalar_select %p23, 0, %s22
    %s25 = sadd.s32 1, %s16
    %s26 = scalar_select %p23, %s25, %s16
    %p27 = scmp.ge.s32.totalorder %s26, 2
    %s28 = scalar_select %p27, 0, %s26
    %s29 = ssub.s32 %s16, %s28
    %s30 = ssub.s32 %s17, %s24
    %s31 = sor.u32 %s29, %s30
    %p32 = scmp.eq.s32.totalorder %s31, 0
    %s34 = sadd.s32 %s33, 1
    %s35 = scalar_select %p32, %s33, %s34
    %p38 = pneg %p32
    %p39 = scmp.eq.s32.totalorder %s9, 1
    %p40 = por %p38, %p39
    %p41 = scmp.ne.s32.totalorder %s33, %s36
    %p42 = scmp.eq.s32.totalorder %s9, 0
    %p43 = por %p41, %p42
    %p44 = scmp.ne.s32.totalorder %s33, %s36
    %p45 = scmp.eq.s32.totalorder %s14, 1
    %p46 = por %p44, %p45
    %p47 = scmp.ne.s32.totalorder %s36, %s37
    %p48 = scmp.eq.s32.totalorder %s14, 0
    %p49 = por %p47, %p48
    %p50 = scmp.ne.s32.totalorder %s36, %s37
    %p51 = scmp.eq.s32.totalorder %s15, 1
    %p52 = por %p50, %p51
    %p54 = scmp.ne.s32.totalorder %s37, %s53
    %p55 = scmp.eq.s32.totalorder %s15, 0
    %p56 = por %p54, %p55
    %s57 = ssub.s32 %s16, %s28
    %p58 = scmp.eq.s32.totalorder %s57, 0
    %s60 = sadd.s32 %s59, 1
    %s61 = scalar_select %p58, %s59, %s60
    %p64 = pneg %p58
    %p65 = scmp.eq.s32.totalorder %s9, 1
    %p66 = por %p64, %p65
    %p67 = scmp.ne.s32.totalorder %s59, %s62
    %p68 = scmp.eq.s32.totalorder %s9, 0
    %p69 = por %p67, %p68
    %p70 = scmp.ne.s32.totalorder %s59, %s62
    %p71 = scmp.eq.s32.totalorder %s14, 1
    %p72 = por %p70, %p71
    %p73 = scmp.ne.s32.totalorder %s62, %s63
    %p74 = scmp.eq.s32.totalorder %s14, 0
    %p75 = por %p73, %p74
    %p76 = scmp.ne.s32.totalorder %s62, %s63
    %p77 = scmp.eq.s32.totalorder %s15, 1
    %p78 = por %p76, %p77
    %p80 = scmp.ne.s32.totalorder %s63, %s79
    %p81 = scmp.eq.s32.totalorder %s15, 0
    %p82 = por %p80, %p81
    %s83 = ssub.s32 %s16, %s28
    %p84 = scmp.eq.s32.totalorder %s83, 0
    %s86 = sadd.s32 %s85, 1
    %s87 = scalar_select %p84, %s85, %s86
    %p90 = pneg %p84
    %p91 = scmp.eq.s32.totalorder %s9, 1
    %p92 = por %p90, %p91
    %p93 = scmp.ne.s32.totalorder %s85, %s88
    %p94 = scmp.eq.s32.totalorder %s9, 0
    %p95 = por %p93, %p94
    %p96 = scmp.ne.s32.totalorder %s85, %s88
    %p97 = scmp.eq.s32.totalorder %s14, 1
    %p98 = por %p96, %p97
    %p99 = scmp.ne.s32.totalorder %s88, %s89
    %p100 = scmp.eq.s32.totalorder %s14, 0
    %p101 = por %p99, %p100
    %p102 = scmp.ne.s32.totalorder %s88, %s89
    %p103 = scmp.eq.s32.totalorder %s15, 1
    %p104 = por %p102, %p103
    %p106 = scmp.ne.s32.totalorder %s89, %s105
    %p107 = scmp.eq.s32.totalorder %s15, 0
    %p108 = por %p106, %p107
    %s109 = ssub.s32 %s16, %s28
    %s110 = ssub.s32 %s17, %s24
    %s111 = sor.u32 %s109, %s110
    %p112 = scmp.eq.s32.totalorder %s111, 0
    %s114 = sadd.s32 %s113, 1
    %s115 = scalar_select %p112, %s113, %s114
    %p118 = pneg %p112
    %p119 = scmp.eq.s32.totalorder %s9, 1
    %p120 = por %p118, %p119
    %p121 = scmp.ne.s32.totalorder %s113, %s116
    %p122 = scmp.eq.s32.totalorder %s9, 0
    %p123 = por %p121, %p122
    %p124 = scmp.ne.s32.totalorder %s113, %s116
    %p125 = scmp.eq.s32.totalorder %s14, 1
    %p126 = por %p124, %p125
    %p127 = scmp.ne.s32.totalorder %s116, %s117
    %p128 = scmp.eq.s32.totalorder %s14, 0
    %p129 = por %p127, %p128
    %p130 = scmp.ne.s32.totalorder %s116, %s117
    %p131 = scmp.eq.s32.totalorder %s15, 1
    %p132 = por %p130, %p131
    %p134 = scmp.ne.s32.totalorder %s117, %s133
    %p135 = scmp.eq.s32.totalorder %s15, 0
    %p136 = por %p134, %p135
    %p137 = scmp.le.s32.totalorder 1, %s9
    %p138 = scmp.lt.s32.totalorder %s9, 3
    %p139 = pnand %p137, %p138
    %p140 = pneg %p139
    // Predicated region
    $region9: #{forward.8} parent=5 // pred_check
      _
    $region10: #{forward.8} parent=5 // pred_check_branch
      %142 = sbr.rel (%p139) target = $region12
    $region11: #{forward.8} parent=5 // pred_region
      %s143 = ssub.s32 %s9, 1
    $region12: #{forward.8} parent=5 // pred_fallthru
      _
    %p144 = scmp.lt.s32.totalorder %s9, 2
    // Predicated region
    $region13: #{forward.8} parent=5 // pred_check
      %p145 = pneg %p144
    $region14: #{forward.8} parent=5 // pred_check_branch
      %147 = sbr.rel (%p145) target = $region16
    $region15: #{forward.8} parent=5 // pred_region
      // Predicated region
      $region17: #{forward.8} parent=15 // pred_check
        %p148 = pneg %p43
      $region18: #{forward.8} parent=15 // pred_check_branch
        %150 = sbr.rel (%p148) target = $region20
      $region19: #{forward.8} parent=15 // pred_region
        %s151 = smul.u32 2, %s17
        %p152 = scmp.lt.s32.totalorder %s16, 1
        %s153 = scalar_select %p152, %s16, 1
        %p154 = scmp.lt.s32.totalorder %s151, 1
        %s155 = scalar_select %p154, %s151, 1
        %s156 = smul.addr %s155, 20
        %s157 = smul.addr %s153, 40
        %s158 = sadd.s32 %s156, %s157
        %s159 = smul.addr %s158, 4
        %s160 = scalar_lea.vmem %s0, %s159
        %s161 = smul.u32 2, %s17
      $region20: #{forward.8} parent=15 // pred_fallthru
        _
      // Predicated region
      $region21: #{forward.8} parent=15 // pred_check
        %p162 = pneg %p69
      $region22: #{forward.8} parent=15 // pred_check_branch
        %164 = sbr.rel (%p162) target = $region24
      $region23: #{forward.8} parent=15 // pred_region
        %p165 = scmp.lt.s32.totalorder %s16, 1
        %s166 = scalar_select %p165, %s16, 1
        %s167 = smul.addr %s166, 18
        %s168 = smul.addr %s167, 4
        %s169 = scalar_lea.vmem %s1, %s168
      $region24: #{forward.8} parent=15 // pred_fallthru
        _
      // Predicated region
      $region25: #{forward.8} parent=15 // pred_check
        %p170 = pneg %p95
      $region26: #{forward.8} parent=15 // pred_check_branch
        %172 = sbr.rel (%p170) target = $region28
      $region27: #{forward.8} parent=15 // pred_region
        %p173 = scmp.lt.s32.totalorder %s16, 1
        %s174 = scalar_select %p173, %s16, 1
        %s175 = scalar_lea.vmem %s2, %s174
      $region28: #{forward.8} parent=15 // pred_fallthru
        _
    $region16: #{forward.8} parent=5 // pred_fallthru
      _
    %p176 = scmp.le.s32.totalorder 1, %s9
    %p177 = scmp.lt.s32.totalorder %s9, 3
    %p178 = pnand %p176, %p177
    %p179 = pneg %p178
    // Predicated region
    $region29: #{forward.8} parent=5 // pred_check
      _
    $region30: #{forward.8} parent=5 // pred_check_branch
      %181 = sbr.rel (%p178) target = $region32
    $region31: #{forward.8} parent=5 // pred_region
      %s182 = ssub.s32 %s9, 1
      %s183 = smul.u32 2, %s19
      %p184 = scmp.lt.s32.totalorder %s18, 1
      %s185 = scalar_select %p184, %s18, 1
      %p186 = scmp.lt.s32.totalorder %s183, 1
      %s187 = scalar_select %p186, %s183, 1
      %s188 = smul.addr %s187, 20
      %s189 = smul.addr %s185, 40
      %s190 = sadd.s32 %s188, %s189
      %s191 = smul.addr %s190, 4
      %s192 = scalar_lea.vmem %s0, %s191
      %p193 = pneg %p49
      %p194 = pneg %p46
      %p195 = scmp.lt.s32.totalorder %s18, 1
      %s196 = scalar_select %p195, %s18, 1
      %s197 = smul.addr %s196, 18
      %s198 = smul.addr %s197, 4
      %s199 = scalar_lea.vmem %s1, %s198
      %p200 = pneg %p75
      %p201 = pneg %p72
      %p202 = scmp.lt.s32.totalorder %s18, 1
      %s203 = scalar_select %p202, %s18, 1
      %s204 = scalar_lea.vmem %s2, %s203
      %p205 = pneg %p101
      %p206 = pneg %p98
      %p207 = pneg %p129
      %p208 = pneg %p126
      %s209 = smul.u32 2, %s19
      %p210 = scmp.lt.s32.totalorder %s18, 1
      %s211 = scalar_select %p210, %s18, 1
      %p212 = scmp.lt.s32.totalorder %s209, 1
      %s213 = scalar_select %p212, %s209, 1
      %s214 = smul.addr %s213, 8
      %s215 = smul.addr %s211, 16
      %s216 = sadd.s32 %s214, %s215
      %s217 = smul.addr %s216, 4
      %s218 = scalar_lea.vmem %s3, %s217
      %s219 = smul.u32 2, %s19
      %p220 = scmp.lt.s32.totalorder %s18, 1
      %s221 = scalar_select %p220, %s18, 1
      %p222 = scmp.lt.s32.totalorder %s219, 1
      %s223 = scalar_select %p222, %s219, 1
      %s224 = smul.addr %s223, 20
      %s225 = smul.addr %s221, 40
      %s226 = sadd.s32 %s224, %s225
      %s227 = smul.addr %s226, 4
      %s228 = scalar_lea.vmem %s0, %s227
      %s229 = smul.u32 2, %s19
      %p230 = scmp.lt.s32.totalorder %s18, 1
      %s231 = scalar_select %p230, %s18, 1
      %s232 = smul.addr %s231, 18
      %s233 = smul.addr %s232, 4
      %s234 = scalar_lea.vmem %s1, %s233
      %p235 = scmp.lt.s32.totalorder %s18, 1
      %s236 = scalar_select %p235, %s18, 1
      %s237 = scalar_lea.vmem %s2, %s236
      %s238 = smul.u32 2, %s19
      %p239 = scmp.lt.s32.totalorder %s18, 1
      %s240 = scalar_select %p239, %s18, 1
      %p241 = scmp.lt.s32.totalorder %s238, 1
      %s242 = scalar_select %p241, %s238, 1
      %s243 = smul.addr %s242, 8
      %s244 = smul.addr %s240, 16
      %s245 = sadd.s32 %s243, %s244
      %s246 = smul.addr %s245, 4
      %s247 = scalar_lea.vmem %s3, %s246
      %s248 = smul.u32 2, %s19
      %v250 = vld [vmem:[%s228] sm:$0xf]
      %v251 = vld [vmem:[%s228 + $0x8] sm:$0xf]
      %v252 = vld [vmem:[%s228 + $0x10] sm:$0xf]
      %v253 = vld [vmem:[%s228 + $0x18] sm:$0xf]
      %v254 = vld [vmem:[%s228 + $0x20] sm:$0xf]
      %v255 = vld [vmem:[%s228 + $0x28] sm:$0xf]
      %v256 = vld [vmem:[%s228 + $0x30] sm:$0xf]
      %v257 = vld [vmem:[%s228 + $0x38] sm:$0xf]
      %v258 = vld [vmem:[%s228 + $0x50] sm:$0xf]
      %v259 = vld [vmem:[%s228 + $0x58] sm:$0xf]
      %v260 = vld [vmem:[%s228 + $0x60] sm:$0xf]
      %v261 = vld [vmem:[%s228 + $0x68] sm:$0xf]
      %v262 = vld [vmem:[%s228 + $0x70] sm:$0xf]
      %v263 = vld [vmem:[%s228 + $0x78] sm:$0xf]
      %v264 = vld [vmem:[%s228 + $0x80] sm:$0xf]
      %v265 = vld [vmem:[%s228 + $0x88] sm:$0xf]
      %v266 = vld [vmem:[%s234] sm:$0xf]
      %v267 = vld [vmem:[%s234 + $0x4] sm:$0xf]
      %v268 = vld [vmem:[%s228 + $0x4] sm:$0x1]
      %v269 = vld [vmem:[%s228 + $0xc] sm:$0x1]
      %v270 = vld [vmem:[%s228 + $0x14] sm:$0x1]
      %v271 = vld [vmem:[%s228 + $0x1c] sm:$0x1]
      %v272 = vld [vmem:[%s228 + $0x24] sm:$0x1]
      %v273 = vld [vmem:[%s228 + $0x2c] sm:$0x1]
      %v274 = vld [vmem:[%s228 + $0x34] sm:$0x1]
      %v275 = vld [vmem:[%s228 + $0x3c] sm:$0x1]
      %v276 = vld [vmem:[%s228 + $0x54] sm:$0x1]
      %v277 = vld [vmem:[%s228 + $0x5c] sm:$0x1]
      %v278 = vld [vmem:[%s228 + $0x64] sm:$0x1]
      %v279 = vld [vmem:[%s228 + $0x6c] sm:$0x1]
      %v280 = vld [vmem:[%s228 + $0x74] sm:$0x1]
      %v281 = vld [vmem:[%s228 + $0x7c] sm:$0x1]
      %v282 = vld [vmem:[%s228 + $0x84] sm:$0x1]
      %v283 = vld [vmem:[%s228 + $0x8c] sm:$0x1]
      %vm284 = vsmask.f32 3328
      %vm285 = vsmask.f32 7440
      %vm286 = vmor %vm284, %vm285
      %v288 = vshrl.u32 %v250, 16
      %v290 = vrot.slane %v288, 4
      %v291 = vshll.u32 %v250, 16
      %v293 = vrot.slane %v291, 5
      %v294 = vor.u32 %v290, %v293
      %v295 = vrot.slane %v294, 4
      %v297 = vshll.u32 %v268, 16
      %v299 = vrot.slane %v297, 5
      %v300 = vsel %vm286, %v295, %v299
      %v302 = vshrl.u32 %v251, 16
      %v304 = vrot.slane %v302, 4
      %v305 = vshll.u32 %v251, 16
      %v307 = vrot.slane %v305, 5
      %v308 = vor.u32 %v304, %v307
      %v309 = vrot.slane %v308, 4
      %v311 = vshll.u32 %v269, 16
      %v313 = vrot.slane %v311, 5
      %v314 = vsel %vm286, %v309, %v313
      %v316 = vshrl.u32 %v252, 16
      %v318 = vrot.slane %v316, 4
      %v319 = vshll.u32 %v252, 16
      %v321 = vrot.slane %v319, 5
      %v322 = vor.u32 %v318, %v321
      %v323 = vrot.slane %v322, 4
      %v325 = vshll.u32 %v270, 16
      %v327 = vrot.slane %v325, 5
      %v328 = vsel %vm286, %v323, %v327
      %v330 = vshrl.u32 %v253, 16
      %v332 = vrot.slane %v330, 4
      %v333 = vshll.u32 %v253, 16
      %v335 = vrot.slane %v333, 5
      %v336 = vor.u32 %v332, %v335
      %v337 = vrot.slane %v336, 4
      %v339 = vshll.u32 %v271, 16
      %v341 = vrot.slane %v339, 5
      %v342 = vsel %vm286, %v337, %v341
      %v344 = vshrl.u32 %v254, 16
      %v346 = vrot.slane %v344, 4
      %v347 = vshll.u32 %v254, 16
      %v349 = vrot.slane %v347, 5
      %v350 = vor.u32 %v346, %v349
      %v351 = vrot.slane %v350, 4
      %v353 = vshll.u32 %v272, 16
      %v355 = vrot.slane %v353, 5
      %v356 = vsel %vm286, %v351, %v355
      %v358 = vshrl.u32 %v255, 16
      %v360 = vrot.slane %v358, 4
      %v361 = vshll.u32 %v255, 16
      %v363 = vrot.slane %v361, 5
      %v364 = vor.u32 %v360, %v363
      %v365 = vrot.slane %v364, 4
      %v367 = vshll.u32 %v273, 16
      %v369 = vrot.slane %v367, 5
      %v370 = vsel %vm286, %v365, %v369
      %v372 = vshrl.u32 %v256, 16
      %v374 = vrot.slane %v372, 4
      %v375 = vshll.u32 %v256, 16
      %v377 = vrot.slane %v375, 5
      %v378 = vor.u32 %v374, %v377
      %v379 = vrot.slane %v378, 4
      %v381 = vshll.u32 %v274, 16
      %v383 = vrot.slane %v381, 5
      %v384 = vsel %vm286, %v379, %v383
      %v386 = vshrl.u32 %v257, 16
      %v388 = vrot.slane %v386, 4
      %v389 = vshll.u32 %v257, 16
      %v391 = vrot.slane %v389, 5
      %v392 = vor.u32 %v388, %v391
      %v393 = vrot.slane %v392, 4
      %v395 = vshll.u32 %v275, 16
      %v397 = vrot.slane %v395, 5
      %v398 = vsel %vm286, %v393, %v397
      %v400 = vshrl.u32 %v258, 16
      %v402 = vrot.slane %v400, 4
      %v403 = vshll.u32 %v258, 16
      %v405 = vrot.slane %v403, 5
      %v406 = vor.u32 %v402, %v405
      %v407 = vrot.slane %v406, 4
      %v409 = vshll.u32 %v276, 16
      %v411 = vrot.slane %v409, 5
      %v412 = vsel %vm286, %v407, %v411
      %v414 = vshrl.u32 %v259, 16
      %v416 = vrot.slane %v414, 4
      %v417 = vshll.u32 %v259, 16
      %v419 = vrot.slane %v417, 5
      %v420 = vor.u32 %v416, %v419
      %v421 = vrot.slane %v420, 4
      %v423 = vshll.u32 %v277, 16
      %v425 = vrot.slane %v423, 5
      %v426 = vsel %vm286, %v421, %v425
      %v428 = vshrl.u32 %v260, 16
      %v430 = vrot.slane %v428, 4
      %v431 = vshll.u32 %v260, 16
      %v433 = vrot.slane %v431, 5
      %v434 = vor.u32 %v430, %v433
      %v435 = vrot.slane %v434, 4
      %v437 = vshll.u32 %v278, 16
      %v439 = vrot.slane %v437, 5
      %v440 = vsel %vm286, %v435, %v439
      %v442 = vshrl.u32 %v261, 16
      %v444 = vrot.slane %v442, 4
      %v445 = vshll.u32 %v261, 16
      %v447 = vrot.slane %v445, 5
      %v448 = vor.u32 %v444, %v447
      %v449 = vrot.slane %v448, 4
      %v451 = vshll.u32 %v279, 16
      %v453 = vrot.slane %v451, 5
      %v454 = vsel %vm286, %v449, %v453
      %v456 = vshrl.u32 %v262, 16
      %v458 = vrot.slane %v456, 4
      %v459 = vshll.u32 %v262, 16
      %v461 = vrot.slane %v459, 5
      %v462 = vor.u32 %v458, %v461
      %v463 = vrot.slane %v462, 4
      %v465 = vshll.u32 %v280, 16
      %v467 = vrot.slane %v465, 5
      %v468 = vsel %vm286, %v463, %v467
      %v470 = vshrl.u32 %v263, 16
      %v472 = vrot.slane %v470, 4
      %v473 = vshll.u32 %v263, 16
      %v475 = vrot.slane %v473, 5
      %v476 = vor.u32 %v472, %v475
      %v477 = vrot.slane %v476, 4
      %v479 = vshll.u32 %v281, 16
      %v481 = vrot.slane %v479, 5
      %v482 = vsel %vm286, %v477, %v481
      %v484 = vshrl.u32 %v264, 16
      %v486 = vrot.slane %v484, 4
      %v487 = vshll.u32 %v264, 16
      %v489 = vrot.slane %v487, 5
      %v490 = vor.u32 %v486, %v489
      %v491 = vrot.slane %v490, 4
      %v493 = vshll.u32 %v282, 16
      %v495 = vrot.slane %v493, 5
      %v496 = vsel %vm286, %v491, %v495
      %v498 = vshrl.u32 %v265, 16
      %v500 = vrot.slane %v498, 4
      %v501 = vshll.u32 %v265, 16
      %v503 = vrot.slane %v501, 5
      %v504 = vor.u32 %v500, %v503
      %v505 = vrot.slane %v504, 4
      %v507 = vshll.u32 %v283, 16
      %v509 = vrot.slane %v507, 5
      %v510 = vsel %vm286, %v505, %v509
      %s511 = scalar_lea.vmem %s234, 8
      %v512 = vld [vmem:[%s511] sm:$0xf]
      %v513 = vld [vmem:[%s511 + $0x4] sm:$0xf]
      %v514 = vunpack.c.l.b16 %v300
      %v515 = vunpack.c.l.b16 %v314
      %v516 = vunpack.c.l.b16 %v328
      %v517 = vunpack.c.l.b16 %v342
      %v518 = vunpack.c.l.b16 %v356
      %v519 = vunpack.c.l.b16 %v370
      %v520 = vunpack.c.l.b16 %v384
      %v521 = vunpack.c.l.b16 %v398
      %v522 = vunpack.c.l.b16 %v412
      %v523 = vunpack.c.l.b16 %v426
      %v524 = vunpack.c.l.b16 %v440
      %v525 = vunpack.c.l.b16 %v454
      %v526 = vunpack.c.l.b16 %v468
      %v527 = vunpack.c.l.b16 %v482
      %v528 = vunpack.c.l.b16 %v496
      %v529 = vunpack.c.l.b16 %v510
      %v530 = vpack.c.b16 %v515, %v514
      %v531 = vpack.c.b16 %v517, %v516
      %v532 = vpack.c.b16 %v519, %v518
      %v533 = vpack.c.b16 %v521, %v520
      %v534 = vpack.c.b16 %v523, %v522
      %v535 = vpack.c.b16 %v525, %v524
      %v536 = vpack.c.b16 %v527, %v526
      %v537 = vpack.c.b16 %v529, %v528
      %v540 = vunpack.c.l.b16 %v512
      %v541 = vunpack.c.l.b16 %v513
      %v542 = vpack.c.b16 %v541, %v540
      %vm544 = vcmask 130048
      %v546 = vsel %vm544, %v530, 0
      %v549 = vsel %vm544, %v531, 0
      %v552 = vsel %vm544, %v532, 0
      %v555 = vsel %vm544, %v533, 0
      %v558 = vsel %vm544, %v534, 0
      %v561 = vsel %vm544, %v535, 0
      %v564 = vsel %vm544, %v536, 0
      %v567 = vsel %vm544, %v537, 0
      %569 = vmatprep.subr.bf16.mxu0 0
      %570 = vmatpush1.bf16.msra.mxu0 %v542
      %571 = vmatprep.subr.bf16.mxu0 0
      %572 = vmatpush1.bf16.msra.mxu0 0
      %573 = vmatprep.subr.bf16.mxu0 0
      %574 = vmatpush1.bf16.msra.mxu0 0
      %575 = vmatprep.subr.bf16.mxu0 0
      %576 = vmatpush1.bf16.msra.mxu0 0
      %577 = vmatprep.subr.bf16.mxu0 0
      %578 = vmatpush1.bf16.msra.mxu0 0
      %579 = vmatprep.subr.bf16.mxu0 0
      %580 = vmatpush1.bf16.msra.mxu0 0
      %581 = vmatprep.subr.bf16.mxu0 0
      %582 = vmatpush1.bf16.msra.mxu0 0
      %583 = vmatprep.subr.bf16.mxu0 0
      %584 = vmatpush1.bf16.msra.mxu0 0
      %585 = vmatprep.subr.bf16.mxu0 0
      %586 = vmatpush1.bf16.msra.mxu0 0
      %587 = vmatprep.subr.bf16.mxu0 0
      %588 = vmatpush1.bf16.msra.mxu0 0
      %589 = vmatprep.subr.bf16.mxu0 0
      %590 = vmatpush1.bf16.msra.mxu0 0
      %591 = vmatprep.subr.bf16.mxu0 0
      %592 = vmatpush1.bf16.msra.mxu0 0
      %593 = vmatprep.subr.bf16.mxu0 0
      %594 = vmatpush1.bf16.msra.mxu0 0
      %595 = vmatprep.subr.bf16.mxu0 0
      %596 = vmatpush1.bf16.msra.mxu0 0
      %597 = vmatprep.subr.bf16.mxu0 0
      %598 = vmatpush1.bf16.msra.mxu0 0
      %599 = vmatprep.subr.bf16.mxu0 0
      %600 = vmatpush1.bf16.msra.mxu0 0
      %601 = vmatprep.mubr.bf16.mxu0 0
      %602 = vmatmul.mubr.bf16.gmra.mrb[0].mxu0 %v546
      %v603 = vpop.f32.mrb[0].mxu0
      %v604 = vadd.f32 0.0, %v603
      %v605 = vpop.f32.mrb[0].mxu0
      %v606 = vpop.f32.mrb[0].mxu0
      %v607 = vadd.f32 0.0, %v606
      %v608 = vpop.f32.mrb[0].mxu0
      %609 = vmatprep.mubr.bf16.mxu0 0
      %610 = vmatmul.mubr.bf16.gmra.mrb[0].mxu0 %v549
      %v611 = vpop.f32.mrb[0].mxu0
      %v612 = vadd.f32 0.0, %v611
      %v613 = vpop.f32.mrb[0].mxu0
      %v614 = vpop.f32.mrb[0].mxu0
      %v615 = vadd.f32 0.0, %v614
      %v616 = vpop.f32.mrb[0].mxu0
      %617 = vmatprep.mubr.bf16.mxu0 0
      %618 = vmatmul.mubr.bf16.gmra.mrb[0].mxu0 %v552
      %v619 = vpop.f32.mrb[0].mxu0
      %v620 = vadd.f32 0.0, %v619
      %v621 = vpop.f32.mrb[0].mxu0
      %v622 = vpop.f32.mrb[0].mxu0
      %v623 = vadd.f32 0.0, %v622
      %v624 = vpop.f32.mrb[0].mxu0
      %625 = vmatprep.mubr.bf16.mxu0 0
      %626 = vmatmul.mubr.bf16.gmra.mrb[0].mxu0 %v555
      %v627 = vpop.f32.mrb[0].mxu0
      %v628 = vadd.f32 0.0, %v627
      %v629 = vpop.f32.mrb[0].mxu0
      %v630 = vpop.f32.mrb[0].mxu0
      %v631 = vadd.f32 0.0, %v630
      %v632 = vpop.f32.mrb[0].mxu0
      %633 = vmatprep.mubr.bf16.mxu0 0
      %634 = vmatmul.mubr.bf16.gmra.mrb[0].mxu0 %v558
      %v635 = vpop.f32.mrb[0].mxu0
      %v636 = vadd.f32 0.0, %v635
      %v637 = vpop.f32.mrb[0].mxu0
      %v638 = vpop.f32.mrb[0].mxu0
      %v639 = vadd.f32 0.0, %v638
      %v640 = vpop.f32.mrb[0].mxu0
      %641 = vmatprep.mubr.bf16.mxu0 0
      %642 = vmatmul.mubr.bf16.gmra.mrb[0].mxu0 %v561
      %v643 = vpop.f32.mrb[0].mxu0
      %v644 = vadd.f32 0.0, %v643
      %v645 = vpop.f32.mrb[0].mxu0
      %v646 = vpop.f32.mrb[0].mxu0
      %v647 = vadd.f32 0.0, %v646
      %v648 = vpop.f32.mrb[0].mxu0
      %649 = vmatprep.mubr.bf16.mxu0 0
      %650 = vmatmul.mubr.bf16.gmra.mrb[0].mxu0 %v564
      %v651 = vpop.f32.mrb[0].mxu0
      %v652 = vadd.f32 0.0, %v651
      %v653 = vpop.f32.mrb[0].mxu0
      %v654 = vpop.f32.mrb[0].mxu0
      %v655 = vadd.f32 0.0, %v654
      %v656 = vpop.f32.mrb[0].mxu0
      %657 = vmatprep.mubr.bf16.mxu0 0
      %658 = vmatmul.mubr.bf16.gmra.mrb[0].mxu0 %v567
      %v659 = vpop.f32.mrb[0].mxu0
      %v660 = vadd.f32 0.0, %v659
      %v661 = vpop.f32.mrb[0].mxu0
      %v662 = vpop.f32.mrb[0].mxu0
      %v663 = vadd.f32 0.0, %v662
      %v664 = vpop.f32.mrb[0].mxu0
      %665 = vdwg.mxu0
      %v682 = vunpack.c.l.b16 %v250
      %v683 = vunpack.c.l.b16 %v251
      %v684 = vunpack.c.l.b16 %v252
      %v685 = vunpack.c.l.b16 %v253
      %v686 = vunpack.c.l.b16 %v254
      %v687 = vunpack.c.l.b16 %v255
      %v688 = vunpack.c.l.b16 %v256
      %v689 = vunpack.c.l.b16 %v257
      %v690 = vunpack.c.l.b16 %v258
      %v691 = vunpack.c.l.b16 %v259
      %v692 = vunpack.c.l.b16 %v260
      %v693 = vunpack.c.l.b16 %v261
      %v694 = vunpack.c.l.b16 %v262
      %v695 = vunpack.c.l.b16 %v263
      %v696 = vunpack.c.l.b16 %v264
      %v697 = vunpack.c.l.b16 %v265
      %v698 = vpack.c.b16 %v683, %v682
      %v699 = vpack.c.b16 %v685, %v684
      %v700 = vpack.c.b16 %v687, %v686
      %v701 = vpack.c.b16 %v689, %v688
      %v702 = vpack.c.b16 %v691, %v690
      %v703 = vpack.c.b16 %v693, %v692
      %v704 = vpack.c.b16 %v695, %v694
      %v705 = vpack.c.b16 %v697, %v696
      %v708 = vunpack.c.l.b16 %v266
      %v709 = vunpack.c.l.b16 %v267
      %v710 = vpack.c.b16 %v709, %v708
      %v713 = vsel %vm544, %v698, 0
      %v716 = vsel %vm544, %v699, 0
      %v719 = vsel %vm544, %v700, 0
      %v722 = vsel %vm544, %v701, 0
      %v725 = vsel %vm544, %v702, 0
      %v728 = vsel %vm544, %v703, 0
      %v731 = vsel %vm544, %v704, 0
      %v734 = vsel %vm544, %v705, 0
      %736 = vmatprep.subr.bf16.mxu0 0
      %737 = vmatpush1.bf16.msra.mxu0 %v710
      %738 = vmatprep.subr.bf16.mxu0 0
      %739 = vmatpush1.bf16.msra.mxu0 0
      %740 = vmatprep.subr.bf16.mxu0 0
      %741 = vmatpush1.bf16.msra.mxu0 0
      %742 = vmatprep.subr.bf16.mxu0 0
      %743 = vmatpush1.bf16.msra.mxu0 0
      %744 = vmatprep.subr.bf16.mxu0 0
      %745 = vmatpush1.bf16.msra.mxu0 0
      %746 = vmatprep.subr.bf16.mxu0 0
      %747 = vmatpush1.bf16.msra.mxu0 0
      %748 = vmatprep.subr.bf16.mxu0 0
      %749 = vmatpush1.bf16.msra.mxu0 0
      %750 = vmatprep.subr.bf16.mxu0 0
      %751 = vmatpush1.bf16.msra.mxu0 0
      %752 = vmatprep.subr.bf16.mxu0 0
      %753 = vmatpush1.bf16.msra.mxu0 0
      %754 = vmatprep.subr.bf16.mxu0 0
      %755 = vmatpush1.bf16.msra.mxu0 0
      %756 = vmatprep.subr.bf16.mxu0 0
      %757 = vmatpush1.bf16.msra.mxu0 0
      %758 = vmatprep.subr.bf16.mxu0 0
      %759 = vmatpush1.bf16.msra.mxu0 0
      %760 = vmatprep.subr.bf16.mxu0 0
      %761 = vmatpush1.bf16.msra.mxu0 0
      %762 = vmatprep.subr.bf16.mxu0 0
      %763 = vmatpush1.bf16.msra.mxu0 0
      %764 = vmatprep.subr.bf16.mxu0 0
      %765 = vmatpush1.bf16.msra.mxu0 0
      %766 = vmatprep.subr.bf16.mxu0 0
      %767 = vmatpush1.bf16.msra.mxu0 0
      %768 = vmatprep.mubr.bf16.mxu0 0
      %769 = vmatmul.mubr.bf16.gmra.mrb[0].mxu0 %v713
      %v770 = vpop.f32.mrb[0].mxu0
      %v771 = vadd.f32 %v604, %v770
      %v772 = vpop.f32.mrb[0].mxu0
      %v773 = vpop.f32.mrb[0].mxu0
      %v774 = vadd.f32 %v607, %v773
      %v775 = vpop.f32.mrb[0].mxu0
      %776 = vmatprep.mubr.bf16.mxu0 0
      %777 = vmatmul.mubr.bf16.gmra.mrb[0].mxu0 %v716
      %v778 = vpop.f32.mrb[0].mxu0
      %v779 = vadd.f32 %v612, %v778
      %v780 = vpop.f32.mrb[0].mxu0
      %v781 = vpop.f32.mrb[0].mxu0
      %v782 = vadd.f32 %v615, %v781
      %v783 = vpop.f32.mrb[0].mxu0
      %784 = vmatprep.mubr.bf16.mxu0 0
      %785 = vmatmul.mubr.bf16.gmra.mrb[0].mxu0 %v719
      %v786 = vpop.f32.mrb[0].mxu0
      %v787 = vadd.f32 %v620, %v786
      %v788 = vpop.f32.mrb[0].mxu0
      %v789 = vpop.f32.mrb[0].mxu0
      %v790 = vadd.f32 %v623, %v789
      %v791 = vpop.f32.mrb[0].mxu0
      %792 = vmatprep.mubr.bf16.mxu0 0
      %793 = vmatmul.mubr.bf16.gmra.mrb[0].mxu0 %v722
      %v794 = vpop.f32.mrb[0].mxu0
      %v795 = vadd.f32 %v628, %v794
      %v796 = vpop.f32.mrb[0].mxu0
      %v797 = vpop.f32.mrb[0].mxu0
      %v798 = vadd.f32 %v631, %v797
      %v799 = vpop.f32.mrb[0].mxu0
      %800 = vmatprep.mubr.bf16.mxu0 0
      %801 = vmatmul.mubr.bf16.gmra.mrb[0].mxu0 %v725
      %v802 = vpop.f32.mrb[0].mxu0
      %v803 = vadd.f32 %v636, %v802
      %v804 = vpop.f32.mrb[0].mxu0
      %v805 = vpop.f32.mrb[0].mxu0
      %v806 = vadd.f32 %v639, %v805
      %v807 = vpop.f32.mrb[0].mxu0
      %808 = vmatprep.mubr.bf16.mxu0 0
      %809 = vmatmul.mubr.bf16.gmra.mrb[0].mxu0 %v728
      %v810 = vpop.f32.mrb[0].mxu0
      %v811 = vadd.f32 %v644, %v810
      %v812 = vpop.f32.mrb[0].mxu0
      %v813 = vpop.f32.mrb[0].mxu0
      %v814 = vadd.f32 %v647, %v813
      %v815 = vpop.f32.mrb[0].mxu0
      %816 = vmatprep.mubr.bf16.mxu0 0
      %817 = vmatmul.mubr.bf16.gmra.mrb[0].mxu0 %v731
      %v818 = vpop.f32.mrb[0].mxu0
      %v819 = vadd.f32 %v652, %v818
      %v820 = vpop.f32.mrb[0].mxu0
      %v821 = vpop.f32.mrb[0].mxu0
      %v822 = vadd.f32 %v655, %v821
      %v823 = vpop.f32.mrb[0].mxu0
      %824 = vmatprep.mubr.bf16.mxu0 0
      %825 = vmatmul.mubr.bf16.gmra.mrb[0].mxu0 %v734
      %v826 = vpop.f32.mrb[0].mxu0
      %v827 = vadd.f32 %v660, %v826
      %v828 = vpop.f32.mrb[0].mxu0
      %v829 = vpop.f32.mrb[0].mxu0
      %v830 = vadd.f32 %v663, %v829
      %v831 = vpop.f32.mrb[0].mxu0
      %832 = vdwg.mxu0
      %v833 = vld [vmem:[%s228] sm:$0xe]
      %v834 = vld [vmem:[%s228 + $0x8] sm:$0xe]
      %v835 = vld [vmem:[%s228 + $0x10] sm:$0xe]
      %v836 = vld [vmem:[%s228 + $0x18] sm:$0xe]
      %v837 = vld [vmem:[%s228 + $0x20] sm:$0xe]
      %v838 = vld [vmem:[%s228 + $0x28] sm:$0xe]
      %v839 = vld [vmem:[%s228 + $0x30] sm:$0xe]
      %v840 = vld [vmem:[%s228 + $0x38] sm:$0xe]
      %v841 = vld [vmem:[%s228 + $0x50] sm:$0xe]
      %v842 = vld [vmem:[%s228 + $0x58] sm:$0xe]
      %v843 = vld [vmem:[%s228 + $0x60] sm:$0xe]
      %v844 = vld [vmem:[%s228 + $0x68] sm:$0xe]
      %v845 = vld [vmem:[%s228 + $0x70] sm:$0xe]
      %v846 = vld [vmem:[%s228 + $0x78] sm:$0xe]
      %v847 = vld [vmem:[%s228 + $0x80] sm:$0xe]
      %v848 = vld [vmem:[%s228 + $0x88] sm:$0xe]
      %vm881 = vcmask 1042432
      %vm882 = vcmask 1046532
      %vm883 = vmor %vm881, %vm882
      %v884 = vrot.slane %v833, 5
      %v885 = vrot.slane %v884, 4
      %v886 = vrot.slane %v268, 5
      %v887 = vsel %vm883, %v885, %v886
      %v888 = vrot.slane %v834, 5
      %v889 = vrot.slane %v888, 4
      %v890 = vrot.slane %v269, 5
      %v891 = vsel %vm883, %v889, %v890
      %v892 = vrot.slane %v835, 5
      %v893 = vrot.slane %v892, 4
      %v894 = vrot.slane %v270, 5
      %v895 = vsel %vm883, %v893, %v894
      %v896 = vrot.slane %v836, 5
      %v897 = vrot.slane %v896, 4
      %v898 = vrot.slane %v271, 5
      %v899 = vsel %vm883, %v897, %v898
      %v900 = vrot.slane %v837, 5
      %v901 = vrot.slane %v900, 4
      %v902 = vrot.slane %v272, 5
      %v903 = vsel %vm883, %v901, %v902
      %v904 = vrot.slane %v838, 5
      %v905 = vrot.slane %v904, 4
      %v906 = vrot.slane %v273, 5
      %v907 = vsel %vm883, %v905, %v906
      %v908 = vrot.slane %v839, 5
      %v909 = vrot.slane %v908, 4
      %v910 = vrot.slane %v274, 5
      %v911 = vsel %vm883, %v909, %v910
      %v912 = vrot.slane %v840, 5
      %v913 = vrot.slane %v912, 4
      %v914 = vrot.slane %v275, 5
      %v915 = vsel %vm883, %v913, %v914
      %v916 = vrot.slane %v841, 5
      %v917 = vrot.slane %v916, 4
      %v918 = vrot.slane %v276, 5
      %v919 = vsel %vm883, %v917, %v918
      %v920 = vrot.slane %v842, 5
      %v921 = vrot.slane %v920, 4
      %v922 = vrot.slane %v277, 5
      %v923 = vsel %vm883, %v921, %v922
      %v924 = vrot.slane %v843, 5
      %v925 = vrot.slane %v924, 4
      %v926 = vrot.slane %v278, 5
      %v927 = vsel %vm883, %v925, %v926
      %v928 = vrot.slane %v844, 5
      %v929 = vrot.slane %v928, 4
      %v930 = vrot.slane %v279, 5
      %v931 = vsel %vm883, %v929, %v930
      %v932 = vrot.slane %v845, 5
      %v933 = vrot.slane %v932, 4
      %v934 = vrot.slane %v280, 5
      %v935 = vsel %vm883, %v933, %v934
      %v936 = vrot.slane %v846, 5
      %v937 = vrot.slane %v936, 4
      %v938 = vrot.slane %v281, 5
      %v939 = vsel %vm883, %v937, %v938
      %v940 = vrot.slane %v847, 5
      %v941 = vrot.slane %v940, 4
      %v942 = vrot.slane %v282, 5
      %v943 = vsel %vm883, %v941, %v942
      %v944 = vrot.slane %v848, 5
      %v945 = vrot.slane %v944, 4
      %v946 = vrot.slane %v283, 5
      %v947 = vsel %vm883, %v945, %v946
      %s948 = scalar_lea.vmem %s234, 16
      %v949 = vld [vmem:[%s948] sm:$0xf]
      %v950 = vld [vmem:[%s948 + $0x4] sm:$0xf]
      %v951 = vunpack.c.l.b16 %v887
      %v952 = vunpack.c.l.b16 %v891
      %v953 = vunpack.c.l.b16 %v895
      %v954 = vunpack.c.l.b16 %v899
      %v955 = vunpack.c.l.b16 %v903
      %v956 = vunpack.c.l.b16 %v907
      %v957 = vunpack.c.l.b16 %v911
      %v958 = vunpack.c.l.b16 %v915
      %v959 = vunpack.c.l.b16 %v919
      %v960 = vunpack.c.l.b16 %v923
      %v961 = vunpack.c.l.b16 %v927
      %v962 = vunpack.c.l.b16 %v931
      %v963 = vunpack.c.l.b16 %v935
      %v964 = vunpack.c.l.b16 %v939
      %v965 = vunpack.c.l.b16 %v943
      %v966 = vunpack.c.l.b16 %v947
      %v967 = vpack.c.b16 %v952, %v951
      %v968 = vpack.c.b16 %v954, %v953
      %v969 = vpack.c.b16 %v956, %v955
      %v970 = vpack.c.b16 %v958, %v957
      %v971 = vpack.c.b16 %v960, %v959
      %v972 = vpack.c.b16 %v962, %v961
      %v973 = vpack.c.b16 %v964, %v963
      %v974 = vpack.c.b16 %v966, %v965
      %v977 = vunpack.c.l.b16 %v949
      %v978 = vunpack.c.l.b16 %v950
      %v979 = vpack.c.b16 %v978, %v977
      %v982 = vsel %vm544, %v967, 0
      %v985 = vsel %vm544, %v968, 0
      %v988 = vsel %vm544, %v969, 0
      %v991 = vsel %vm544, %v970, 0
      %v994 = vsel %vm544, %v971, 0
      %v997 = vsel %vm544, %v972, 0
      %v1000 = vsel %vm544, %v973, 0
      %v1003 = vsel %vm544, %v974, 0
      %1005 = vmatprep.subr.bf16.mxu0 0
      %1006 = vmatpush1.bf16.msra.mxu0 %v979
      %1007 = vmatprep.subr.bf16.mxu0 0
      %1008 = vmatpush1.bf16.msra.mxu0 0
      %1009 = vmatprep.subr.bf16.mxu0 0
      %1010 = vmatpush1.bf16.msra.mxu0 0
      %1011 = vmatprep.subr.bf16.mxu0 0
      %1012 = vmatpush1.bf16.msra.mxu0 0
      %1013 = vmatprep.subr.bf16.mxu0 0
      %1014 = vmatpush1.bf16.msra.mxu0 0
      %1015 = vmatprep.subr.bf16.mxu0 0
      %1016 = vmatpush1.bf16.msra.mxu0 0
      %1017 = vmatprep.subr.bf16.mxu0 0
      %1018 = vmatpush1.bf16.msra.mxu0 0
      %1019 = vmatprep.subr.bf16.mxu0 0
      %1020 = vmatpush1.bf16.msra.mxu0 0
      %1021 = vmatprep.subr.bf16.mxu0 0
      %1022 = vmatpush1.bf16.msra.mxu0 0
      %1023 = vmatprep.subr.bf16.mxu0 0
      %1024 = vmatpush1.bf16.msra.mxu0 0
      %1025 = vmatprep.subr.bf16.mxu0 0
      %1026 = vmatpush1.bf16.msra.mxu0 0
      %1027 = vmatprep.subr.bf16.mxu0 0
      %1028 = vmatpush1.bf16.msra.mxu0 0
      %1029 = vmatprep.subr.bf16.mxu0 0
      %1030 = vmatpush1.bf16.msra.mxu0 0
      %1031 = vmatprep.subr.bf16.mxu0 0
      %1032 = vmatpush1.bf16.msra.mxu0 0
      %1033 = vmatprep.subr.bf16.mxu0 0
      %1034 = vmatpush1.bf16.msra.mxu0 0
      %1035 = vmatprep.subr.bf16.mxu0 0
      %1036 = vmatpush1.bf16.msra.mxu0 0
      %1037 = vmatprep.mubr.bf16.mxu0 0
      %1038 = vmatmul.mubr.bf16.gmra.mrb[0].mxu0 %v982
      %v1039 = vpop.f32.mrb[0].mxu0
      %v1040 = vadd.f32 0.0, %v1039
      %v1041 = vpop.f32.mrb[0].mxu0
      %v1042 = vpop.f32.mrb[0].mxu0
      %v1043 = vadd.f32 0.0, %v1042
      %v1044 = vpop.f32.mrb[0].mxu0
      %1045 = vmatprep.mubr.bf16.mxu0 0
      %1046 = vmatmul.mubr.bf16.gmra.mrb[0].mxu0 %v985
      %v1047 = vpop.f32.mrb[0].mxu0
      %v1048 = vadd.f32 0.0, %v1047
      %v1049 = vpop.f32.mrb[0].mxu0
      %v1050 = vpop.f32.mrb[0].mxu0
      %v1051 = vadd.f32 0.0, %v1050
      %v1052 = vpop.f32.mrb[0].mxu0
      %1053 = vmatprep.mubr.bf16.mxu0 0
      %1054 = vmatmul.mubr.bf16.gmra.mrb[0].mxu0 %v988
      %v1055 = vpop.f32.mrb[0].mxu0
      %v1056 = vadd.f32 0.0, %v1055
      %v1057 = vpop.f32.mrb[0].mxu0
      %v1058 = vpop.f32.mrb[0].mxu0
      %v1059 = vadd.f32 0.0, %v1058
      %v1060 = vpop.f32.mrb[0].mxu0
      %1061 = vmatprep.mubr.bf16.mxu0 0
      %1062 = vmatmul.mubr.bf16.gmra.mrb[0].mxu0 %v991
      %v1063 = vpop.f32.mrb[0].mxu0
      %v1064 = vadd.f32 0.0, %v1063
      %v1065 = vpop.f32.mrb[0].mxu0
      %v1066 = vpop.f32.mrb[0].mxu0
      %v1067 = vadd.f32 0.0, %v1066
      %v1068 = vpop.f32.mrb[0].mxu0
      %1069 = vmatprep.mubr.bf16.mxu0 0
      %1070 = vmatmul.mubr.bf16.gmra.mrb[0].mxu0 %v994
      %v1071 = vpop.f32.mrb[0].mxu0
      %v1072 = vadd.f32 0.0, %v1071
      %v1073 = vpop.f32.mrb[0].mxu0
      %v1074 = vpop.f32.mrb[0].mxu0
      %v1075 = vadd.f32 0.0, %v1074
      %v1076 = vpop.f32.mrb[0].mxu0
      %1077 = vmatprep.mubr.bf16.mxu0 0
      %1078 = vmatmul.mubr.bf16.gmra.mrb[0].mxu0 %v997
      %v1079 = vpop.f32.mrb[0].mxu0
      %v1080 = vadd.f32 0.0, %v1079
      %v1081 = vpop.f32.mrb[0].mxu0
      %v1082 = vpop.f32.mrb[0].mxu0
      %v1083 = vadd.f32 0.0, %v1082
      %v1084 = vpop.f32.mrb[0].mxu0
      %1085 = vmatprep.mubr.bf16.mxu0 0
      %1086 = vmatmul.mubr.bf16.gmra.mrb[0].mxu0 %v1000
      %v1087 = vpop.f32.mrb[0].mxu0
      %v1088 = vadd.f32 0.0, %v1087
      %v1089 = vpop.f32.mrb[0].mxu0
      %v1090 = vpop.f32.mrb[0].mxu0
      %v1091 = vadd.f32 0.0, %v1090
      %v1092 = vpop.f32.mrb[0].mxu0
      %1093 = vmatprep.mubr.bf16.mxu0 0
      %1094 = vmatmul.mubr.bf16.gmra.mrb[0].mxu0 %v1003
      %v1095 = vpop.f32.mrb[0].mxu0
      %v1096 = vadd.f32 0.0, %v1095
      %v1097 = vpop.f32.mrb[0].mxu0
      %v1098 = vpop.f32.mrb[0].mxu0
      %v1099 = vadd.f32 0.0, %v1098
      %v1100 = vpop.f32.mrb[0].mxu0
      %1101 = vdwg.mxu0
      %v1102 = vadd.f32 %v771, %v1040
      %v1103 = vadd.f32 %v774, %v1043
      %v1104 = vadd.f32 %v779, %v1048
      %v1105 = vadd.f32 %v782, %v1051
      %v1106 = vadd.f32 %v787, %v1056
      %v1107 = vadd.f32 %v790, %v1059
      %v1108 = vadd.f32 %v795, %v1064
      %v1109 = vadd.f32 %v798, %v1067
      %v1110 = vadd.f32 %v803, %v1072
      %v1111 = vadd.f32 %v806, %v1075
      %v1112 = vadd.f32 %v811, %v1080
      %v1113 = vadd.f32 %v814, %v1083
      %v1114 = vadd.f32 %v819, %v1088
      %v1115 = vadd.f32 %v822, %v1091
      %v1116 = vadd.f32 %v827, %v1096
      %v1117 = vadd.f32 %v830, %v1099
      %s1118 = scalar_lea.vmem %s228, 8
      %v1119 = vld [vmem:[%s1118] sm:$0xf]
      %v1120 = vld [vmem:[%s1118 + $0x8] sm:$0xf]
      %v1121 = vld [vmem:[%s1118 + $0x10] sm:$0xf]
      %v1122 = vld [vmem:[%s1118 + $0x18] sm:$0xf]
      %v1123 = vld [vmem:[%s1118 + $0x20] sm:$0xf]
      %v1124 = vld [vmem:[%s1118 + $0x28] sm:$0xf]
      %v1125 = vld [vmem:[%s1118 + $0x30] sm:$0xf]
      %v1126 = vld [vmem:[%s1118 + $0x38] sm:$0xf]
      %v1127 = vld [vmem:[%s1118 + $0x50] sm:$0xf]
      %v1128 = vld [vmem:[%s1118 + $0x58] sm:$0xf]
      %v1129 = vld [vmem:[%s1118 + $0x60] sm:$0xf]
      %v1130 = vld [vmem:[%s1118 + $0x68] sm:$0xf]
      %v1131 = vld [vmem:[%s1118 + $0x70] sm:$0xf]
      %v1132 = vld [vmem:[%s1118 + $0x78] sm:$0xf]
      %v1133 = vld [vmem:[%s1118 + $0x80] sm:$0xf]
      %v1134 = vld [vmem:[%s1118 + $0x88] sm:$0xf]
      %s1135 = scalar_lea.vmem %s234, 24
      %v1136 = vld [vmem:[%s1135] sm:$0xf]
      %v1137 = vld [vmem:[%s1135 + $0x4] sm:$0xf]
      %v1154 = vunpack.c.l.b16 %v1119
      %v1155 = vunpack.c.l.b16 %v1120
      %v1156 = vunpack.c.l.b16 %v1121
      %v1157 = vunpack.c.l.b16 %v1122
      %v1158 = vunpack.c.l.b16 %v1123
      %v1159 = vunpack.c.l.b16 %v1124
      %v1160 = vunpack.c.l.b16 %v1125
      %v1161 = vunpack.c.l.b16 %v1126
      %v1162 = vunpack.c.l.b16 %v1127
      %v1163 = vunpack.c.l.b16 %v1128
      %v1164 = vunpack.c.l.b16 %v1129
      %v1165 = vunpack.c.l.b16 %v1130
      %v1166 = vunpack.c.l.b16 %v1131
      %v1167 = vunpack.c.l.b16 %v1132
      %v1168 = vunpack.c.l.b16 %v1133
      %v1169 = vunpack.c.l.b16 %v1134
      %v1170 = vpack.c.b16 %v1155, %v1154
      %v1171 = vpack.c.b16 %v1157, %v1156
      %v1172 = vpack.c.b16 %v1159, %v1158
      %v1173 = vpack.c.b16 %v1161, %v1160
      %v1174 = vpack.c.b16 %v1163, %v1162
      %v1175 = vpack.c.b16 %v1165, %v1164
      %v1176 = vpack.c.b16 %v1167, %v1166
      %v1177 = vpack.c.b16 %v1169, %v1168
      %v1180 = vunpack.c.l.b16 %v1136
      %v1181 = vunpack.c.l.b16 %v1137
      %v1182 = vpack.c.b16 %v1181, %v1180
      %v1185 = vsel %vm544, %v1170, 0
      %v1188 = vsel %vm544, %v1171, 0
      %v1191 = vsel %vm544, %v1172, 0
      %v1194 = vsel %vm544, %v1173, 0
      %v1197 = vsel %vm544, %v1174, 0
      %v1200 = vsel %vm544, %v1175, 0
      %v1203 = vsel %vm544, %v1176, 0
      %v1206 = vsel %vm544, %v1177, 0
      %1208 = vmatprep.subr.bf16.mxu0 0
      %1209 = vmatpush1.bf16.msra.mxu0 %v1182
      %1210 = vmatprep.subr.bf16.mxu0 0
      %1211 = vmatpush1.bf16.msra.mxu0 0
      %1212 = vmatprep.subr.bf16.mxu0 0
      %1213 = vmatpush1.bf16.msra.mxu0 0
      %1214 = vmatprep.subr.bf16.mxu0 0
      %1215 = vmatpush1.bf16.msra.mxu0 0
      %1216 = vmatprep.subr.bf16.mxu0 0
      %1217 = vmatpush1.bf16.msra.mxu0 0
      %1218 = vmatprep.subr.bf16.mxu0 0
      %1219 = vmatpush1.bf16.msra.mxu0 0
      %1220 = vmatprep.subr.bf16.mxu0 0
      %1221 = vmatpush1.bf16.msra.mxu0 0
      %1222 = vmatprep.subr.bf16.mxu0 0
      %1223 = vmatpush1.bf16.msra.mxu0 0
      %1224 = vmatprep.subr.bf16.mxu0 0
      %1225 = vmatpush1.bf16.msra.mxu0 0
      %1226 = vmatprep.subr.bf16.mxu0 0
      %1227 = vmatpush1.bf16.msra.mxu0 0
      %1228 = vmatprep.subr.bf16.mxu0 0
      %1229 = vmatpush1.bf16.msra.mxu0 0
      %1230 = vmatprep.subr.bf16.mxu0 0
      %1231 = vmatpush1.bf16.msra.mxu0 0
      %1232 = vmatprep.subr.bf16.mxu0 0
      %1233 = vmatpush1.bf16.msra.mxu0 0
      %1234 = vmatprep.subr.bf16.mxu0 0
      %1235 = vmatpush1.bf16.msra.mxu0 0
      %1236 = vmatprep.subr.bf16.mxu0 0
      %1237 = vmatpush1.bf16.msra.mxu0 0
      %1238 = vmatprep.subr.bf16.mxu0 0
      %1239 = vmatpush1.bf16.msra.mxu0 0
      %1240 = vmatprep.mubr.bf16.mxu0 0
      %1241 = vmatmul.mubr.bf16.gmra.mrb[0].mxu0 %v1185
      %v1242 = vpop.f32.mrb[0].mxu0
      %v1243 = vadd.f32 0.0, %v1242
      %v1244 = vpop.f32.mrb[0].mxu0
      %v1245 = vpop.f32.mrb[0].mxu0
      %v1246 = vadd.f32 0.0, %v1245
      %v1247 = vpop.f32.mrb[0].mxu0
      %1248 = vmatprep.mubr.bf16.mxu0 0
      %1249 = vmatmul.mubr.bf16.gmra.mrb[0].mxu0 %v1188
      %v1250 = vpop.f32.mrb[0].mxu0
      %v1251 = vadd.f32 0.0, %v1250
      %v1252 = vpop.f32.mrb[0].mxu0
      %v1253 = vpop.f32.mrb[0].mxu0
      %v1254 = vadd.f32 0.0, %v1253
      %v1255 = vpop.f32.mrb[0].mxu0
      %1256 = vmatprep.mubr.bf16.mxu0 0
      %1257 = vmatmul.mubr.bf16.gmra.mrb[0].mxu0 %v1191
      %v1258 = vpop.f32.mrb[0].mxu0
      %v1259 = vadd.f32 0.0, %v1258
      %v1260 = vpop.f32.mrb[0].mxu0
      %v1261 = vpop.f32.mrb[0].mxu0
      %v1262 = vadd.f32 0.0, %v1261
      %v1263 = vpop.f32.mrb[0].mxu0
      %1264 = vmatprep.mubr.bf16.mxu0 0
      %1265 = vmatmul.mubr.bf16.gmra.mrb[0].mxu0 %v1194
      %v1266 = vpop.f32.mrb[0].mxu0
      %v1267 = vadd.f32 0.0, %v1266
      %v1268 = vpop.f32.mrb[0].mxu0
      %v1269 = vpop.f32.mrb[0].mxu0
      %v1270 = vadd.f32 0.0, %v1269
      %v1271 = vpop.f32.mrb[0].mxu0
      %1272 = vmatprep.mubr.bf16.mxu0 0
      %1273 = vmatmul.mubr.bf16.gmra.mrb[0].mxu0 %v1197
      %v1274 = vpop.f32.mrb[0].mxu0
      %v1275 = vadd.f32 0.0, %v1274
      %v1276 = vpop.f32.mrb[0].mxu0
      %v1277 = vpop.f32.mrb[0].mxu0
      %v1278 = vadd.f32 0.0, %v1277
      %v1279 = vpop.f32.mrb[0].mxu0
      %1280 = vmatprep.mubr.bf16.mxu0 0
      %1281 = vmatmul.mubr.bf16.gmra.mrb[0].mxu0 %v1200
      %v1282 = vpop.f32.mrb[0].mxu0
      %v1283 = vadd.f32 0.0, %v1282
      %v1284 = vpop.f32.mrb[0].mxu0
      %v1285 = vpop.f32.mrb[0].mxu0
      %v1286 = vadd.f32 0.0, %v1285
      %v1287 = vpop.f32.mrb[0].mxu0
      %1288 = vmatprep.mubr.bf16.mxu0 0
      %1289 = vmatmul.mubr.bf16.gmra.mrb[0].mxu0 %v1203
      %v1290 = vpop.f32.mrb[0].mxu0
      %v1291 = vadd.f32 0.0, %v1290
      %v1292 = vpop.f32.mrb[0].mxu0
      %v1293 = vpop.f32.mrb[0].mxu0
      %v1294 = vadd.f32 0.0, %v1293
      %v1295 = vpop.f32.mrb[0].mxu0
      %1296 = vmatprep.mubr.bf16.mxu0 0
      %1297 = vmatmul.mubr.bf16.gmra.mrb[0].mxu0 %v1206
      %v1298 = vpop.f32.mrb[0].mxu0
      %v1299 = vadd.f32 0.0, %v1298
      %v1300 = vpop.f32.mrb[0].mxu0
      %v1301 = vpop.f32.mrb[0].mxu0
      %v1302 = vadd.f32 0.0, %v1301
      %v1303 = vpop.f32.mrb[0].mxu0
      %1304 = vdwg.mxu0
      %v1305 = vadd.f32 %v1102, %v1243
      %v1306 = vadd.f32 %v1103, %v1246
      %v1307 = vadd.f32 %v1104, %v1251
      %v1308 = vadd.f32 %v1105, %v1254
      %v1309 = vadd.f32 %v1106, %v1259
      %v1310 = vadd.f32 %v1107, %v1262
      %v1311 = vadd.f32 %v1108, %v1267
      %v1312 = vadd.f32 %v1109, %v1270
      %v1313 = vadd.f32 %v1110, %v1275
      %v1314 = vadd.f32 %v1111, %v1278
      %v1315 = vadd.f32 %v1112, %v1283
      %v1316 = vadd.f32 %v1113, %v1286
      %v1317 = vadd.f32 %v1114, %v1291
      %v1318 = vadd.f32 %v1115, %v1294
      %v1319 = vadd.f32 %v1116, %v1299
      %v1320 = vadd.f32 %v1117, %v1302
      %v1321 = vld [vmem:[%s1118] sm:$0xf]
      %v1322 = vld [vmem:[%s1118 + $0x4] sm:$0x1]
      %v1323 = vld [vmem:[%s1118 + $0x8] sm:$0xf]
      %v1324 = vld [vmem:[%s1118 + $0xc] sm:$0x1]
      %v1325 = vld [vmem:[%s1118 + $0x10] sm:$0xf]
      %v1326 = vld [vmem:[%s1118 + $0x14] sm:$0x1]
      %v1327 = vld [vmem:[%s1118 + $0x18] sm:$0xf]
      %v1328 = vld [vmem:[%s1118 + $0x1c] sm:$0x1]
      %v1329 = vld [vmem:[%s1118 + $0x20] sm:$0xf]
      %v1330 = vld [vmem:[%s1118 + $0x24] sm:$0x1]
      %v1331 = vld [vmem:[%s1118 + $0x28] sm:$0xf]
      %v1332 = vld [vmem:[%s1118 + $0x2c] sm:$0x1]
      %v1333 = vld [vmem:[%s1118 + $0x30] sm:$0xf]
      %v1334 = vld [vmem:[%s1118 + $0x34] sm:$0x1]
      %v1335 = vld [vmem:[%s1118 + $0x38] sm:$0xf]
      %v1336 = vld [vmem:[%s1118 + $0x3c] sm:$0x1]
      %v1337 = vld [vmem:[%s1118 + $0x50] sm:$0xf]
      %v1338 = vld [vmem:[%s1118 + $0x54] sm:$0x1]
      %v1339 = vld [vmem:[%s1118 + $0x58] sm:$0xf]
      %v1340 = vld [vmem:[%s1118 + $0x5c] sm:$0x1]
      %v1341 = vld [vmem:[%s1118 + $0x60] sm:$0xf]
      %v1342 = vld [vmem:[%s1118 + $0x64] sm:$0x1]
      %v1343 = vld [vmem:[%s1118 + $0x68] sm:$0xf]
      %v1344 = vld [vmem:[%s1118 + $0x6c] sm:$0x1]
      %v1345 = vld [vmem:[%s1118 + $0x70] sm:$0xf]
      %v1346 = vld [vmem:[%s1118 + $0x74] sm:$0x1]
      %v1347 = vld [vmem:[%s1118 + $0x78] sm:$0xf]
      %v1348 = vld [vmem:[%s1118 + $0x7c] sm:$0x1]
      %v1349 = vld [vmem:[%s1118 + $0x80] sm:$0xf]
      %v1350 = vld [vmem:[%s1118 + $0x84] sm:$0x1]
      %v1351 = vld [vmem:[%s1118 + $0x88] sm:$0xf]
      %v1352 = vld [vmem:[%s1118 + $0x8c] sm:$0x1]
      %v1354 = vshrl.u32 %v1321, 16
      %v1356 = vrot.slane %v1354, 4
      %v1357 = vshll.u32 %v1321, 16
      %v1359 = vrot.slane %v1357, 5
      %v1360 = vor.u32 %v1356, %v1359
      %v1361 = vrot.slane %v1360, 4
      %v1363 = vshll.u32 %v1322, 16
      %v1365 = vrot.slane %v1363, 5
      %v1366 = vsel %vm286, %v1361, %v1365
      %v1368 = vshrl.u32 %v1323, 16
      %v1370 = vrot.slane %v1368, 4
      %v1371 = vshll.u32 %v1323, 16
      %v1373 = vrot.slane %v1371, 5
      %v1374 = vor.u32 %v1370, %v1373
      %v1375 = vrot.slane %v1374, 4
      %v1377 = vshll.u32 %v1324, 16
      %v1379 = vrot.slane %v1377, 5
      %v1380 = vsel %vm286, %v1375, %v1379
      %v1382 = vshrl.u32 %v1325, 16
      %v1384 = vrot.slane %v1382, 4
      %v1385 = vshll.u32 %v1325, 16
      %v1387 = vrot.slane %v1385, 5
      %v1388 = vor.u32 %v1384, %v1387
      %v1389 = vrot.slane %v1388, 4
      %v1391 = vshll.u32 %v1326, 16
      %v1393 = vrot.slane %v1391, 5
      %v1394 = vsel %vm286, %v1389, %v1393
      %v1396 = vshrl.u32 %v1327, 16
      %v1398 = vrot.slane %v1396, 4
      %v1399 = vshll.u32 %v1327, 16
      %v1401 = vrot.slane %v1399, 5
      %v1402 = vor.u32 %v1398, %v1401
      %v1403 = vrot.slane %v1402, 4
      %v1405 = vshll.u32 %v1328, 16
      %v1407 = vrot.slane %v1405, 5
      %v1408 = vsel %vm286, %v1403, %v1407
      %v1410 = vshrl.u32 %v1329, 16
      %v1412 = vrot.slane %v1410, 4
      %v1413 = vshll.u32 %v1329, 16
      %v1415 = vrot.slane %v1413, 5
      %v1416 = vor.u32 %v1412, %v1415
      %v1417 = vrot.slane %v1416, 4
      %v1419 = vshll.u32 %v1330, 16
      %v1421 = vrot.slane %v1419, 5
      %v1422 = vsel %vm286, %v1417, %v1421
      %v1424 = vshrl.u32 %v1331, 16
      %v1426 = vrot.slane %v1424, 4
      %v1427 = vshll.u32 %v1331, 16
      %v1429 = vrot.slane %v1427, 5
      %v1430 = vor.u32 %v1426, %v1429
      %v1431 = vrot.slane %v1430, 4
      %v1433 = vshll.u32 %v1332, 16
      %v1435 = vrot.slane %v1433, 5
      %v1436 = vsel %vm286, %v1431, %v1435
      %v1438 = vshrl.u32 %v1333, 16
      %v1440 = vrot.slane %v1438, 4
      %v1441 = vshll.u32 %v1333, 16
      %v1443 = vrot.slane %v1441, 5
      %v1444 = vor.u32 %v1440, %v1443
      %v1445 = vrot.slane %v1444, 4
      %v1447 = vshll.u32 %v1334, 16
      %v1449 = vrot.slane %v1447, 5
      %v1450 = vsel %vm286, %v1445, %v1449
      %v1452 = vshrl.u32 %v1335, 16
      %v1454 = vrot.slane %v1452, 4
      %v1455 = vshll.u32 %v1335, 16
      %v1457 = vrot.slane %v1455, 5
      %v1458 = vor.u32 %v1454, %v1457
      %v1459 = vrot.slane %v1458, 4
      %v1461 = vshll.u32 %v1336, 16
      %v1463 = vrot.slane %v1461, 5
      %v1464 = vsel %vm286, %v1459, %v1463
      %v1466 = vshrl.u32 %v1337, 16
      %v1468 = vrot.slane %v1466, 4
      %v1469 = vshll.u32 %v1337, 16
      %v1471 = vrot.slane %v1469, 5
      %v1472 = vor.u32 %v1468, %v1471
      %v1473 = vrot.slane %v1472, 4
      %v1475 = vshll.u32 %v1338, 16
      %v1477 = vrot.slane %v1475, 5
      %v1478 = vsel %vm286, %v1473, %v1477
      %v1480 = vshrl.u32 %v1339, 16
      %v1482 = vrot.slane %v1480, 4
      %v1483 = vshll.u32 %v1339, 16
      %v1485 = vrot.slane %v1483, 5
      %v1486 = vor.u32 %v1482, %v1485
      %v1487 = vrot.slane %v1486, 4
      %v1489 = vshll.u32 %v1340, 16
      %v1491 = vrot.slane %v1489, 5
      %v1492 = vsel %vm286, %v1487, %v1491
      %v1494 = vshrl.u32 %v1341, 16
      %v1496 = vrot.slane %v1494, 4
      %v1497 = vshll.u32 %v1341, 16
      %v1499 = vrot.slane %v1497, 5
      %v1500 = vor.u32 %v1496, %v1499
      %v1501 = vrot.slane %v1500, 4
      %v1503 = vshll.u32 %v1342, 16
      %v1505 = vrot.slane %v1503, 5
      %v1506 = vsel %vm286, %v1501, %v1505
      %v1508 = vshrl.u32 %v1343, 16
      %v1510 = vrot.slane %v1508, 4
      %v1511 = vshll.u32 %v1343, 16
      %v1513 = vrot.slane %v1511, 5
      %v1514 = vor.u32 %v1510, %v1513
      %v1515 = vrot.slane %v1514, 4
      %v1517 = vshll.u32 %v1344, 16
      %v1519 = vrot.slane %v1517, 5
      %v1520 = vsel %vm286, %v1515, %v1519
      %v1522 = vshrl.u32 %v1345, 16
      %v1524 = vrot.slane %v1522, 4
      %v1525 = vshll.u32 %v1345, 16
      %v1527 = vrot.slane %v1525, 5
      %v1528 = vor.u32 %v1524, %v1527
      %v1529 = vrot.slane %v1528, 4
      %v1531 = vshll.u32 %v1346, 16
      %v1533 = vrot.slane %v1531, 5
      %v1534 = vsel %vm286, %v1529, %v1533
      %v1536 = vshrl.u32 %v1347, 16
      %v1538 = vrot.slane %v1536, 4
      %v1539 = vshll.u32 %v1347, 16
      %v1541 = vrot.slane %v1539, 5
      %v1542 = vor.u32 %v1538, %v1541
      %v1543 = vrot.slane %v1542, 4
      %v1545 = vshll.u32 %v1348, 16
      %v1547 = vrot.slane %v1545, 5
      %v1548 = vsel %vm286, %v1543, %v1547
      %v1550 = vshrl.u32 %v1349, 16
      %v1552 = vrot.slane %v1550, 4
      %v1553 = vshll.u32 %v1349, 16
      %v1555 = vrot.slane %v1553, 5
      %v1556 = vor.u32 %v1552, %v1555
      %v1557 = vrot.slane %v1556, 4
      %v1559 = vshll.u32 %v1350, 16
      %v1561 = vrot.slane %v1559, 5
      %v1562 = vsel %vm286, %v1557, %v1561
      %v1564 = vshrl.u32 %v1351, 16
      %v1566 = vrot.slane %v1564, 4
      %v1567 = vshll.u32 %v1351, 16
      %v1569 = vrot.slane %v1567, 5
      %v1570 = vor.u32 %v1566, %v1569
      %v1571 = vrot.slane %v1570, 4
      %v1573 = vshll.u32 %v1352, 16
      %v1575 = vrot.slane %v1573, 5
      %v1576 = vsel %vm286, %v1571, %v1575
      %s1577 = scalar_lea.vmem %s234, 32
      %v1578 = vld [vmem:[%s1577] sm:$0xf]
      %v1579 = vld [vmem:[%s1577 + $0x4] sm:$0xf]
      %v1580 = vunpack.c.l.b16 %v1366
      %v1581 = vunpack.c.l.b16 %v1380
      %v1582 = vunpack.c.l.b16 %v1394
      %v1583 = vunpack.c.l.b16 %v1408
      %v1584 = vunpack.c.l.b16 %v1422
      %v1585 = vunpack.c.l.b16 %v1436
      %v1586 = vunpack.c.l.b16 %v1450
      %v1587 = vunpack.c.l.b16 %v1464
      %v1588 = vunpack.c.l.b16 %v1478
      %v1589 = vunpack.c.l.b16 %v1492
      %v1590 = vunpack.c.l.b16 %v1506
      %v1591 = vunpack.c.l.b16 %v1520
      %v1592 = vunpack.c.l.b16 %v1534
      %v1593 = vunpack.c.l.b16 %v1548
      %v1594 = vunpack.c.l.b16 %v1562
      %v1595 = vunpack.c.l.b16 %v1576
      %v1596 = vpack.c.b16 %v1581, %v1580
      %v1597 = vpack.c.b16 %v1583, %v1582
      %v1598 = vpack.c.b16 %v1585, %v1584
      %v1599 = vpack.c.b16 %v1587, %v1586
      %v1600 = vpack.c.b16 %v1589, %v1588
      %v1601 = vpack.c.b16 %v1591, %v1590
      %v1602 = vpack.c.b16 %v1593, %v1592
      %v1603 = vpack.c.b16 %v1595, %v1594
      %v1606 = vunpack.c.l.b16 %v1578
      %v1607 = vunpack.c.l.b16 %v1579
      %v1608 = vpack.c.b16 %v1607, %v1606
      %v1611 = vsel %vm544, %v1596, 0
      %v1614 = vsel %vm544, %v1597, 0
      %v1617 = vsel %vm544, %v1598, 0
      %v1620 = vsel %vm544, %v1599, 0
      %v1623 = vsel %vm544, %v1600, 0
      %v1626 = vsel %vm544, %v1601, 0
      %v1629 = vsel %vm544, %v1602, 0
      %v1632 = vsel %vm544, %v1603, 0
      %1634 = vmatprep.subr.bf16.mxu0 0
      %1635 = vmatpush1.bf16.msra.mxu0 %v1608
      %1636 = vmatprep.subr.bf16.mxu0 0
      %1637 = vmatpush1.bf16.msra.mxu0 0
      %1638 = vmatprep.subr.bf16.mxu0 0
      %1639 = vmatpush1.bf16.msra.mxu0 0
      %1640 = vmatprep.subr.bf16.mxu0 0
      %1641 = vmatpush1.bf16.msra.mxu0 0
      %1642 = vmatprep.subr.bf16.mxu0 0
      %1643 = vmatpush1.bf16.msra.mxu0 0
      %1644 = vmatprep.subr.bf16.mxu0 0
      %1645 = vmatpush1.bf16.msra.mxu0 0
      %1646 = vmatprep.subr.bf16.mxu0 0
      %1647 = vmatpush1.bf16.msra.mxu0 0
      %1648 = vmatprep.subr.bf16.mxu0 0
      %1649 = vmatpush1.bf16.msra.mxu0 0
      %1650 = vmatprep.subr.bf16.mxu0 0
      %1651 = vmatpush1.bf16.msra.mxu0 0
      %1652 = vmatprep.subr.bf16.mxu0 0
      %1653 = vmatpush1.bf16.msra.mxu0 0
      %1654 = vmatprep.subr.bf16.mxu0 0
      %1655 = vmatpush1.bf16.msra.mxu0 0
      %1656 = vmatprep.subr.bf16.mxu0 0
      %1657 = vmatpush1.bf16.msra.mxu0 0
      %1658 = vmatprep.subr.bf16.mxu0 0
      %1659 = vmatpush1.bf16.msra.mxu0 0
      %1660 = vmatprep.subr.bf16.mxu0 0
      %1661 = vmatpush1.bf16.msra.mxu0 0
      %1662 = vmatprep.subr.bf16.mxu0 0
      %1663 = vmatpush1.bf16.msra.mxu0 0
      %1664 = vmatprep.subr.bf16.mxu0 0
      %1665 = vmatpush1.bf16.msra.mxu0 0
      %1666 = vmatprep.mubr.bf16.mxu0 0
      %1667 = vmatmul.mubr.bf16.gmra.mrb[0].mxu0 %v1611
      %v1668 = vpop.f32.mrb[0].mxu0
      %v1669 = vadd.f32 0.0, %v1668
      %v1670 = vpop.f32.mrb[0].mxu0
      %v1671 = vpop.f32.mrb[0].mxu0
      %v1672 = vadd.f32 0.0, %v1671
      %v1673 = vpop.f32.mrb[0].mxu0
      %1674 = vmatprep.mubr.bf16.mxu0 0
      %1675 = vmatmul.mubr.bf16.gmra.mrb[0].mxu0 %v1614
      %v1676 = vpop.f32.mrb[0].mxu0
      %v1677 = vadd.f32 0.0, %v1676
      %v1678 = vpop.f32.mrb[0].mxu0
      %v1679 = vpop.f32.mrb[0].mxu0
      %v1680 = vadd.f32 0.0, %v1679
      %v1681 = vpop.f32.mrb[0].mxu0
      %1682 = vmatprep.mubr.bf16.mxu0 0
      %1683 = vmatmul.mubr.bf16.gmra.mrb[0].mxu0 %v1617
      %v1684 = vpop.f32.mrb[0].mxu0
      %v1685 = vadd.f32 0.0, %v1684
      %v1686 = vpop.f32.mrb[0].mxu0
      %v1687 = vpop.f32.mrb[0].mxu0
      %v1688 = vadd.f32 0.0, %v1687
      %v1689 = vpop.f32.mrb[0].mxu0
      %1690 = vmatprep.mubr.bf16.mxu0 0
      %1691 = vmatmul.mubr.bf16.gmra.mrb[0].mxu0 %v1620
      %v1692 = vpop.f32.mrb[0].mxu0
      %v1693 = vadd.f32 0.0, %v1692
      %v1694 = vpop.f32.mrb[0].mxu0
      %v1695 = vpop.f32.mrb[0].mxu0
      %v1696 = vadd.f32 0.0, %v1695
      %v1697 = vpop.f32.mrb[0].mxu0
      %1698 = vmatprep.mubr.bf16.mxu0 0
      %1699 = vmatmul.mubr.bf16.gmra.mrb[0].mxu0 %v1623
      %v1700 = vpop.f32.mrb[0].mxu0
      %v1701 = vadd.f32 0.0, %v1700
      %v1702 = vpop.f32.mrb[0].mxu0
      %v1703 = vpop.f32.mrb[0].mxu0
      %v1704 = vadd.f32 0.0, %v1703
      %v1705 = vpop.f32.mrb[0].mxu0
      %1706 = vmatprep.mubr.bf16.mxu0 0
      %1707 = vmatmul.mubr.bf16.gmra.mrb[0].mxu0 %v1626
      %v1708 = vpop.f32.mrb[0].mxu0
      %v1709 = vadd.f32 0.0, %v1708
      %v1710 = vpop.f32.mrb[0].mxu0
      %v1711 = vpop.f32.mrb[0].mxu0
      %v1712 = vadd.f32 0.0, %v1711
      %v1713 = vpop.f32.mrb[0].mxu0
      %1714 = vmatprep.mubr.bf16.mxu0 0
      %1715 = vmatmul.mubr.bf16.gmra.mrb[0].mxu0 %v1629
      %v1716 = vpop.f32.mrb[0].mxu0
      %v1717 = vadd.f32 0.0, %v1716
      %v1718 = vpop.f32.mrb[0].mxu0
      %v1719 = vpop.f32.mrb[0].mxu0
      %v1720 = vadd.f32 0.0, %v1719
      %v1721 = vpop.f32.mrb[0].mxu0
      %1722 = vmatprep.mubr.bf16.mxu0 0
      %1723 = vmatmul.mubr.bf16.gmra.mrb[0].mxu0 %v1632
      %v1724 = vpop.f32.mrb[0].mxu0
      %v1725 = vadd.f32 0.0, %v1724
      %v1726 = vpop.f32.mrb[0].mxu0
      %v1727 = vpop.f32.mrb[0].mxu0
      %v1728 = vadd.f32 0.0, %v1727
      %v1729 = vpop.f32.mrb[0].mxu0
      %1730 = vdwg.mxu0
      %v1731 = vadd.f32 %v1305, %v1669
      %v1732 = vadd.f32 %v1306, %v1672
      %v1733 = vadd.f32 %v1307, %v1677
      %v1734 = vadd.f32 %v1308, %v1680
      %v1735 = vadd.f32 %v1309, %v1685
      %v1736 = vadd.f32 %v1310, %v1688
      %v1737 = vadd.f32 %v1311, %v1693
      %v1738 = vadd.f32 %v1312, %v1696
      %v1739 = vadd.f32 %v1313, %v1701
      %v1740 = vadd.f32 %v1314, %v1704
      %v1741 = vadd.f32 %v1315, %v1709
      %v1742 = vadd.f32 %v1316, %v1712
      %v1743 = vadd.f32 %v1317, %v1717
      %v1744 = vadd.f32 %v1318, %v1720
      %v1745 = vadd.f32 %v1319, %v1725
      %v1746 = vadd.f32 %v1320, %v1728
      %v1747 = vld [vmem:[%s1118] sm:$0xe]
      %v1748 = vld [vmem:[%s1118 + $0x8] sm:$0xe]
      %v1749 = vld [vmem:[%s1118 + $0x10] sm:$0xe]
      %v1750 = vld [vmem:[%s1118 + $0x18] sm:$0xe]
      %v1751 = vld [vmem:[%s1118 + $0x20] sm:$0xe]
      %v1752 = vld [vmem:[%s1118 + $0x28] sm:$0xe]
      %v1753 = vld [vmem:[%s1118 + $0x30] sm:$0xe]
      %v1754 = vld [vmem:[%s1118 + $0x38] sm:$0xe]
      %v1755 = vld [vmem:[%s1118 + $0x50] sm:$0xe]
      %v1756 = vld [vmem:[%s1118 + $0x58] sm:$0xe]
      %v1757 = vld [vmem:[%s1118 + $0x60] sm:$0xe]
      %v1758 = vld [vmem:[%s1118 + $0x68] sm:$0xe]
      %v1759 = vld [vmem:[%s1118 + $0x70] sm:$0xe]
      %v1760 = vld [vmem:[%s1118 + $0x78] sm:$0xe]
      %v1761 = vld [vmem:[%s1118 + $0x80] sm:$0xe]
      %v1762 = vld [vmem:[%s1118 + $0x88] sm:$0xe]
      %v1795 = vrot.slane %v1747, 5
      %v1796 = vrot.slane %v1795, 4
      %v1797 = vrot.slane %v1322, 5
      %v1798 = vsel %vm883, %v1796, %v1797
      %v1799 = vrot.slane %v1748, 5
      %v1800 = vrot.slane %v1799, 4
      %v1801 = vrot.slane %v1324, 5
      %v1802 = vsel %vm883, %v1800, %v1801
      %v1803 = vrot.slane %v1749, 5
      %v1804 = vrot.slane %v1803, 4
      %v1805 = vrot.slane %v1326, 5
      %v1806 = vsel %vm883, %v1804, %v1805
      %v1807 = vrot.slane %v1750, 5
      %v1808 = vrot.slane %v1807, 4
      %v1809 = vrot.slane %v1328, 5
      %v1810 = vsel %vm883, %v1808, %v1809
      %v1811 = vrot.slane %v1751, 5
      %v1812 = vrot.slane %v1811, 4
      %v1813 = vrot.slane %v1330, 5
      %v1814 = vsel %vm883, %v1812, %v1813
      %v1815 = vrot.slane %v1752, 5
      %v1816 = vrot.slane %v1815, 4
      %v1817 = vrot.slane %v1332, 5
      %v1818 = vsel %vm883, %v1816, %v1817
      %v1819 = vrot.slane %v1753, 5
      %v1820 = vrot.slane %v1819, 4
      %v1821 = vrot.slane %v1334, 5
      %v1822 = vsel %vm883, %v1820, %v1821
      %v1823 = vrot.slane %v1754, 5
      %v1824 = vrot.slane %v1823, 4
      %v1825 = vrot.slane %v1336, 5
      %v1826 = vsel %vm883, %v1824, %v1825
      %v1827 = vrot.slane %v1755, 5
      %v1828 = vrot.slane %v1827, 4
      %v1829 = vrot.slane %v1338, 5
      %v1830 = vsel %vm883, %v1828, %v1829
      %v1831 = vrot.slane %v1756, 5
      %v1832 = vrot.slane %v1831, 4
      %v1833 = vrot.slane %v1340, 5
      %v1834 = vsel %vm883, %v1832, %v1833
      %v1835 = vrot.slane %v1757, 5
      %v1836 = vrot.slane %v1835, 4
      %v1837 = vrot.slane %v1342, 5
      %v1838 = vsel %vm883, %v1836, %v1837
      %v1839 = vrot.slane %v1758, 5
      %v1840 = vrot.slane %v1839, 4
      %v1841 = vrot.slane %v1344, 5
      %v1842 = vsel %vm883, %v1840, %v1841
      %v1843 = vrot.slane %v1759, 5
      %v1844 = vrot.slane %v1843, 4
      %v1845 = vrot.slane %v1346, 5
      %v1846 = vsel %vm883, %v1844, %v1845
      %v1847 = vrot.slane %v1760, 5
      %v1848 = vrot.slane %v1847, 4
      %v1849 = vrot.slane %v1348, 5
      %v1850 = vsel %vm883, %v1848, %v1849
      %v1851 = vrot.slane %v1761, 5
      %v1852 = vrot.slane %v1851, 4
      %v1853 = vrot.slane %v1350, 5
      %v1854 = vsel %vm883, %v1852, %v1853
      %v1855 = vrot.slane %v1762, 5
      %v1856 = vrot.slane %v1855, 4
      %v1857 = vrot.slane %v1352, 5
      %v1858 = vsel %vm883, %v1856, %v1857
      %s1859 = scalar_lea.vmem %s234, 40
      %v1860 = vld [vmem:[%s1859] sm:$0xf]
      %v1861 = vld [vmem:[%s1859 + $0x4] sm:$0xf]
      %v1862 = vunpack.c.l.b16 %v1798
      %v1863 = vunpack.c.l.b16 %v1802
      %v1864 = vunpack.c.l.b16 %v1806
      %v1865 = vunpack.c.l.b16 %v1810
      %v1866 = vunpack.c.l.b16 %v1814
      %v1867 = vunpack.c.l.b16 %v1818
      %v1868 = vunpack.c.l.b16 %v1822
      %v1869 = vunpack.c.l.b16 %v1826
      %v1870 = vunpack.c.l.b16 %v1830
      %v1871 = vunpack.c.l.b16 %v1834
      %v1872 = vunpack.c.l.b16 %v1838
      %v1873 = vunpack.c.l.b16 %v1842
      %v1874 = vunpack.c.l.b16 %v1846
      %v1875 = vunpack.c.l.b16 %v1850
      %v1876 = vunpack.c.l.b16 %v1854
      %v1877 = vunpack.c.l.b16 %v1858
      %v1878 = vpack.c.b16 %v1863, %v1862
      %v1879 = vpack.c.b16 %v1865, %v1864
      %v1880 = vpack.c.b16 %v1867, %v1866
      %v1881 = vpack.c.b16 %v1869, %v1868
      %v1882 = vpack.c.b16 %v1871, %v1870
      %v1883 = vpack.c.b16 %v1873, %v1872
      %v1884 = vpack.c.b16 %v1875, %v1874
      %v1885 = vpack.c.b16 %v1877, %v1876
      %v1888 = vunpack.c.l.b16 %v1860
      %v1889 = vunpack.c.l.b16 %v1861
      %v1890 = vpack.c.b16 %v1889, %v1888
      %v1893 = vsel %vm544, %v1878, 0
      %v1896 = vsel %vm544, %v1879, 0
      %v1899 = vsel %vm544, %v1880, 0
      %v1902 = vsel %vm544, %v1881, 0
      %v1905 = vsel %vm544, %v1882, 0
      %v1908 = vsel %vm544, %v1883, 0
      %v1911 = vsel %vm544, %v1884, 0
      %v1914 = vsel %vm544, %v1885, 0
      %1916 = vmatprep.subr.bf16.mxu0 0
      %1917 = vmatpush1.bf16.msra.mxu0 %v1890
      %1918 = vmatprep.subr.bf16.mxu0 0
      %1919 = vmatpush1.bf16.msra.mxu0 0
      %1920 = vmatprep.subr.bf16.mxu0 0
      %1921 = vmatpush1.bf16.msra.mxu0 0
      %1922 = vmatprep.subr.bf16.mxu0 0
      %1923 = vmatpush1.bf16.msra.mxu0 0
      %1924 = vmatprep.subr.bf16.mxu0 0
      %1925 = vmatpush1.bf16.msra.mxu0 0
      %1926 = vmatprep.subr.bf16.mxu0 0
      %1927 = vmatpush1.bf16.msra.mxu0 0
      %1928 = vmatprep.subr.bf16.mxu0 0
      %1929 = vmatpush1.bf16.msra.mxu0 0
      %1930 = vmatprep.subr.bf16.mxu0 0
      %1931 = vmatpush1.bf16.msra.mxu0 0
      %1932 = vmatprep.subr.bf16.mxu0 0
      %1933 = vmatpush1.bf16.msra.mxu0 0
      %1934 = vmatprep.subr.bf16.mxu0 0
      %1935 = vmatpush1.bf16.msra.mxu0 0
      %1936 = vmatprep.subr.bf16.mxu0 0
      %1937 = vmatpush1.bf16.msra.mxu0 0
      %1938 = vmatprep.subr.bf16.mxu0 0
      %1939 = vmatpush1.bf16.msra.mxu0 0
      %1940 = vmatprep.subr.bf16.mxu0 0
      %1941 = vmatpush1.bf16.msra.mxu0 0
      %1942 = vmatprep.subr.bf16.mxu0 0
      %1943 = vmatpush1.bf16.msra.mxu0 0
      %1944 = vmatprep.subr.bf16.mxu0 0
      %1945 = vmatpush1.bf16.msra.mxu0 0
      %1946 = vmatprep.subr.bf16.mxu0 0
      %1947 = vmatpush1.bf16.msra.mxu0 0
      %1948 = vmatprep.mubr.bf16.mxu0 0
      %1949 = vmatmul.mubr.bf16.gmra.mrb[0].mxu0 %v1893
      %v1950 = vpop.f32.mrb[0].mxu0
      %v1951 = vadd.f32 0.0, %v1950
      %v1952 = vpop.f32.mrb[0].mxu0
      %v1953 = vpop.f32.mrb[0].mxu0
      %v1954 = vadd.f32 0.0, %v1953
      %v1955 = vpop.f32.mrb[0].mxu0
      %1956 = vmatprep.mubr.bf16.mxu0 0
      %1957 = vmatmul.mubr.bf16.gmra.mrb[0].mxu0 %v1896
      %v1958 = vpop.f32.mrb[0].mxu0
      %v1959 = vadd.f32 0.0, %v1958
      %v1960 = vpop.f32.mrb[0].mxu0
      %v1961 = vpop.f32.mrb[0].mxu0
      %v1962 = vadd.f32 0.0, %v1961
      %v1963 = vpop.f32.mrb[0].mxu0
      %1964 = vmatprep.mubr.bf16.mxu0 0
      %1965 = vmatmul.mubr.bf16.gmra.mrb[0].mxu0 %v1899
      %v1966 = vpop.f32.mrb[0].mxu0
      %v1967 = vadd.f32 0.0, %v1966
      %v1968 = vpop.f32.mrb[0].mxu0
      %v1969 = vpop.f32.mrb[0].mxu0
      %v1970 = vadd.f32 0.0, %v1969
      %v1971 = vpop.f32.mrb[0].mxu0
      %1972 = vmatprep.mubr.bf16.mxu0 0
      %1973 = vmatmul.mubr.bf16.gmra.mrb[0].mxu0 %v1902
      %v1974 = vpop.f32.mrb[0].mxu0
      %v1975 = vadd.f32 0.0, %v1974
      %v1976 = vpop.f32.mrb[0].mxu0
      %v1977 = vpop.f32.mrb[0].mxu0
      %v1978 = vadd.f32 0.0, %v1977
      %v1979 = vpop.f32.mrb[0].mxu0
      %1980 = vmatprep.mubr.bf16.mxu0 0
      %1981 = vmatmul.mubr.bf16.gmra.mrb[0].mxu0 %v1905
      %v1982 = vpop.f32.mrb[0].mxu0
      %v1983 = vadd.f32 0.0, %v1982
      %v1984 = vpop.f32.mrb[0].mxu0
      %v1985 = vpop.f32.mrb[0].mxu0
      %v1986 = vadd.f32 0.0, %v1985
      %v1987 = vpop.f32.mrb[0].mxu0
      %1988 = vmatprep.mubr.bf16.mxu0 0
      %1989 = vmatmul.mubr.bf16.gmra.mrb[0].mxu0 %v1908
      %v1990 = vpop.f32.mrb[0].mxu0
      %v1991 = vadd.f32 0.0, %v1990
      %v1992 = vpop.f32.mrb[0].mxu0
      %v1993 = vpop.f32.mrb[0].mxu0
      %v1994 = vadd.f32 0.0, %v1993
      %v1995 = vpop.f32.mrb[0].mxu0
      %1996 = vmatprep.mubr.bf16.mxu0 0
      %1997 = vmatmul.mubr.bf16.gmra.mrb[0].mxu0 %v1911
      %v1998 = vpop.f32.mrb[0].mxu0
      %v1999 = vadd.f32 0.0, %v1998
      %v2000 = vpop.f32.mrb[0].mxu0
      %v2001 = vpop.f32.mrb[0].mxu0
      %v2002 = vadd.f32 0.0, %v2001
      %v2003 = vpop.f32.mrb[0].mxu0
      %2004 = vmatprep.mubr.bf16.mxu0 0
      %2005 = vmatmul.mubr.bf16.gmra.mrb[0].mxu0 %v1914
      %v2006 = vpop.f32.mrb[0].mxu0
      %v2007 = vadd.f32 0.0, %v2006
      %v2008 = vpop.f32.mrb[0].mxu0
      %v2009 = vpop.f32.mrb[0].mxu0
      %v2010 = vadd.f32 0.0, %v2009
      %v2011 = vpop.f32.mrb[0].mxu0
      %2012 = vdwg.mxu0
      %v2013 = vadd.f32 %v1731, %v1951
      %v2014 = vadd.f32 %v1732, %v1954
      %v2015 = vadd.f32 %v1733, %v1959
      %v2016 = vadd.f32 %v1734, %v1962
      %v2017 = vadd.f32 %v1735, %v1967
      %v2018 = vadd.f32 %v1736, %v1970
      %v2019 = vadd.f32 %v1737, %v1975
      %v2020 = vadd.f32 %v1738, %v1978
      %v2021 = vadd.f32 %v1739, %v1983
      %v2022 = vadd.f32 %v1740, %v1986
      %v2023 = vadd.f32 %v1741, %v1991
      %v2024 = vadd.f32 %v1742, %v1994
      %v2025 = vadd.f32 %v1743, %v1999
      %v2026 = vadd.f32 %v1744, %v2002
      %v2027 = vadd.f32 %v1745, %v2007
      %v2028 = vadd.f32 %v1746, %v2010
      %s2029 = scalar_lea.vmem %s228, 16
      %v2030 = vld [vmem:[%s2029] sm:$0xf]
      %v2031 = vld [vmem:[%s2029 + $0x8] sm:$0xf]
      %v2032 = vld [vmem:[%s2029 + $0x10] sm:$0xf]
      %v2033 = vld [vmem:[%s2029 + $0x18] sm:$0xf]
      %v2034 = vld [vmem:[%s2029 + $0x20] sm:$0xf]
      %v2035 = vld [vmem:[%s2029 + $0x28] sm:$0xf]
      %v2036 = vld [vmem:[%s2029 + $0x30] sm:$0xf]
      %v2037 = vld [vmem:[%s2029 + $0x38] sm:$0xf]
      %v2038 = vld [vmem:[%s2029 + $0x50] sm:$0xf]
      %v2039 = vld [vmem:[%s2029 + $0x58] sm:$0xf]
      %v2040 = vld [vmem:[%s2029 + $0x60] sm:$0xf]
      %v2041 = vld [vmem:[%s2029 + $0x68] sm:$0xf]
      %v2042 = vld [vmem:[%s2029 + $0x70] sm:$0xf]
      %v2043 = vld [vmem:[%s2029 + $0x78] sm:$0xf]
      %v2044 = vld [vmem:[%s2029 + $0x80] sm:$0xf]
      %v2045 = vld [vmem:[%s2029 + $0x88] sm:$0xf]
      %s2046 = scalar_lea.vmem %s234, 48
      %v2047 = vld [vmem:[%s2046] sm:$0xf]
      %v2048 = vld [vmem:[%s2046 + $0x4] sm:$0xf]
      %v2065 = vunpack.c.l.b16 %v2030
      %v2066 = vunpack.c.l.b16 %v2031
      %v2067 = vunpack.c.l.b16 %v2032
      %v2068 = vunpack.c.l.b16 %v2033
      %v2069 = vunpack.c.l.b16 %v2034
      %v2070 = vunpack.c.l.b16 %v2035
      %v2071 = vunpack.c.l.b16 %v2036
      %v2072 = vunpack.c.l.b16 %v2037
      %v2073 = vunpack.c.l.b16 %v2038
      %v2074 = vunpack.c.l.b16 %v2039
      %v2075 = vunpack.c.l.b16 %v2040
      %v2076 = vunpack.c.l.b16 %v2041
      %v2077 = vunpack.c.l.b16 %v2042
      %v2078 = vunpack.c.l.b16 %v2043
      %v2079 = vunpack.c.l.b16 %v2044
      %v2080 = vunpack.c.l.b16 %v2045
      %v2081 = vpack.c.b16 %v2066, %v2065
      %v2082 = vpack.c.b16 %v2068, %v2067
      %v2083 = vpack.c.b16 %v2070, %v2069
      %v2084 = vpack.c.b16 %v2072, %v2071
      %v2085 = vpack.c.b16 %v2074, %v2073
      %v2086 = vpack.c.b16 %v2076, %v2075
      %v2087 = vpack.c.b16 %v2078, %v2077
      %v2088 = vpack.c.b16 %v2080, %v2079
      %v2091 = vunpack.c.l.b16 %v2047
      %v2092 = vunpack.c.l.b16 %v2048
      %v2093 = vpack.c.b16 %v2092, %v2091
      %v2096 = vsel %vm544, %v2081, 0
      %v2099 = vsel %vm544, %v2082, 0
      %v2102 = vsel %vm544, %v2083, 0
      %v2105 = vsel %vm544, %v2084, 0
      %v2108 = vsel %vm544, %v2085, 0
      %v2111 = vsel %vm544, %v2086, 0
      %v2114 = vsel %vm544, %v2087, 0
      %v2117 = vsel %vm544, %v2088, 0
      %2119 = vmatprep.subr.bf16.mxu0 0
      %2120 = vmatpush1.bf16.msra.mxu0 %v2093
      %2121 = vmatprep.subr.bf16.mxu0 0
      %2122 = vmatpush1.bf16.msra.mxu0 0
      %2123 = vmatprep.subr.bf16.mxu0 0
      %2124 = vmatpush1.bf16.msra.mxu0 0
      %2125 = vmatprep.subr.bf16.mxu0 0
      %2126 = vmatpush1.bf16.msra.mxu0 0
      %2127 = vmatprep.subr.bf16.mxu0 0
      %2128 = vmatpush1.bf16.msra.mxu0 0
      %2129 = vmatprep.subr.bf16.mxu0 0
      %2130 = vmatpush1.bf16.msra.mxu0 0
      %2131 = vmatprep.subr.bf16.mxu0 0
      %2132 = vmatpush1.bf16.msra.mxu0 0
      %2133 = vmatprep.subr.bf16.mxu0 0
      %2134 = vmatpush1.bf16.msra.mxu0 0
      %2135 = vmatprep.subr.bf16.mxu0 0
      %2136 = vmatpush1.bf16.msra.mxu0 0
      %2137 = vmatprep.subr.bf16.mxu0 0
      %2138 = vmatpush1.bf16.msra.mxu0 0
      %2139 = vmatprep.subr.bf16.mxu0 0
      %2140 = vmatpush1.bf16.msra.mxu0 0
      %2141 = vmatprep.subr.bf16.mxu0 0
      %2142 = vmatpush1.bf16.msra.mxu0 0
      %2143 = vmatprep.subr.bf16.mxu0 0
      %2144 = vmatpush1.bf16.msra.mxu0 0
      %2145 = vmatprep.subr.bf16.mxu0 0
      %2146 = vmatpush1.bf16.msra.mxu0 0
      %2147 = vmatprep.subr.bf16.mxu0 0
      %2148 = vmatpush1.bf16.msra.mxu0 0
      %2149 = vmatprep.subr.bf16.mxu0 0
      %2150 = vmatpush1.bf16.msra.mxu0 0
      %2151 = vmatprep.mubr.bf16.mxu0 0
      %2152 = vmatmul.mubr.bf16.gmra.mrb[0].mxu0 %v2096
      %v2153 = vpop.f32.mrb[0].mxu0
      %v2154 = vadd.f32 0.0, %v2153
      %v2155 = vpop.f32.mrb[0].mxu0
      %v2156 = vpop.f32.mrb[0].mxu0
      %v2157 = vadd.f32 0.0, %v2156
      %v2158 = vpop.f32.mrb[0].mxu0
      %2159 = vmatprep.mubr.bf16.mxu0 0
      %2160 = vmatmul.mubr.bf16.gmra.mrb[0].mxu0 %v2099
      %v2161 = vpop.f32.mrb[0].mxu0
      %v2162 = vadd.f32 0.0, %v2161
      %v2163 = vpop.f32.mrb[0].mxu0
      %v2164 = vpop.f32.mrb[0].mxu0
      %v2165 = vadd.f32 0.0, %v2164
      %v2166 = vpop.f32.mrb[0].mxu0
      %2167 = vmatprep.mubr.bf16.mxu0 0
      %2168 = vmatmul.mubr.bf16.gmra.mrb[0].mxu0 %v2102
      %v2169 = vpop.f32.mrb[0].mxu0
      %v2170 = vadd.f32 0.0, %v2169
      %v2171 = vpop.f32.mrb[0].mxu0
      %v2172 = vpop.f32.mrb[0].mxu0
      %v2173 = vadd.f32 0.0, %v2172
      %v2174 = vpop.f32.mrb[0].mxu0
      %2175 = vmatprep.mubr.bf16.mxu0 0
      %2176 = vmatmul.mubr.bf16.gmra.mrb[0].mxu0 %v2105
      %v2177 = vpop.f32.mrb[0].mxu0
      %v2178 = vadd.f32 0.0, %v2177
      %v2179 = vpop.f32.mrb[0].mxu0
      %v2180 = vpop.f32.mrb[0].mxu0
      %v2181 = vadd.f32 0.0, %v2180
      %v2182 = vpop.f32.mrb[0].mxu0
      %2183 = vmatprep.mubr.bf16.mxu0 0
      %2184 = vmatmul.mubr.bf16.gmra.mrb[0].mxu0 %v2108
      %v2185 = vpop.f32.mrb[0].mxu0
      %v2186 = vadd.f32 0.0, %v2185
      %v2187 = vpop.f32.mrb[0].mxu0
      %v2188 = vpop.f32.mrb[0].mxu0
      %v2189 = vadd.f32 0.0, %v2188
      %v2190 = vpop.f32.mrb[0].mxu0
      %2191 = vmatprep.mubr.bf16.mxu0 0
      %2192 = vmatmul.mubr.bf16.gmra.mrb[0].mxu0 %v2111
      %v2193 = vpop.f32.mrb[0].mxu0
      %v2194 = vadd.f32 0.0, %v2193
      %v2195 = vpop.f32.mrb[0].mxu0
      %v2196 = vpop.f32.mrb[0].mxu0
      %v2197 = vadd.f32 0.0, %v2196
      %v2198 = vpop.f32.mrb[0].mxu0
      %2199 = vmatprep.mubr.bf16.mxu0 0
      %2200 = vmatmul.mubr.bf16.gmra.mrb[0].mxu0 %v2114
      %v2201 = vpop.f32.mrb[0].mxu0
      %v2202 = vadd.f32 0.0, %v2201
      %v2203 = vpop.f32.mrb[0].mxu0
      %v2204 = vpop.f32.mrb[0].mxu0
      %v2205 = vadd.f32 0.0, %v2204
      %v2206 = vpop.f32.mrb[0].mxu0
      %2207 = vmatprep.mubr.bf16.mxu0 0
      %2208 = vmatmul.mubr.bf16.gmra.mrb[0].mxu0 %v2117
      %v2209 = vpop.f32.mrb[0].mxu0
      %v2210 = vadd.f32 0.0, %v2209
      %v2211 = vpop.f32.mrb[0].mxu0
      %v2212 = vpop.f32.mrb[0].mxu0
      %v2213 = vadd.f32 0.0, %v2212
      %v2214 = vpop.f32.mrb[0].mxu0
      %2215 = vdwg.mxu0
      %v2216 = vadd.f32 %v2013, %v2154
      %v2217 = vadd.f32 %v2014, %v2157
      %v2218 = vadd.f32 %v2015, %v2162
      %v2219 = vadd.f32 %v2016, %v2165
      %v2220 = vadd.f32 %v2017, %v2170
      %v2221 = vadd.f32 %v2018, %v2173
      %v2222 = vadd.f32 %v2019, %v2178
      %v2223 = vadd.f32 %v2020, %v2181
      %v2224 = vadd.f32 %v2021, %v2186
      %v2225 = vadd.f32 %v2022, %v2189
      %v2226 = vadd.f32 %v2023, %v2194
      %v2227 = vadd.f32 %v2024, %v2197
      %v2228 = vadd.f32 %v2025, %v2202
      %v2229 = vadd.f32 %v2026, %v2205
      %v2230 = vadd.f32 %v2027, %v2210
      %v2231 = vadd.f32 %v2028, %v2213
      %v2232 = vld [vmem:[%s2029] sm:$0xf]
      %v2233 = vld [vmem:[%s2029 + $0x4] sm:$0x1]
      %v2234 = vld [vmem:[%s2029 + $0x8] sm:$0xf]
      %v2235 = vld [vmem:[%s2029 + $0xc] sm:$0x1]
      %v2236 = vld [vmem:[%s2029 + $0x10] sm:$0xf]
      %v2237 = vld [vmem:[%s2029 + $0x14] sm:$0x1]
      %v2238 = vld [vmem:[%s2029 + $0x18] sm:$0xf]
      %v2239 = vld [vmem:[%s2029 + $0x1c] sm:$0x1]
      %v2240 = vld [vmem:[%s2029 + $0x20] sm:$0xf]
      %v2241 = vld [vmem:[%s2029 + $0x24] sm:$0x1]
      %v2242 = vld [vmem:[%s2029 + $0x28] sm:$0xf]
      %v2243 = vld [vmem:[%s2029 + $0x2c] sm:$0x1]
      %v2244 = vld [vmem:[%s2029 + $0x30] sm:$0xf]
      %v2245 = vld [vmem:[%s2029 + $0x34] sm:$0x1]
      %v2246 = vld [vmem:[%s2029 + $0x38] sm:$0xf]
      %v2247 = vld [vmem:[%s2029 + $0x3c] sm:$0x1]
      %v2248 = vld [vmem:[%s2029 + $0x50] sm:$0xf]
      %v2249 = vld [vmem:[%s2029 + $0x54] sm:$0x1]
      %v2250 = vld [vmem:[%s2029 + $0x58] sm:$0xf]
      %v2251 = vld [vmem:[%s2029 + $0x5c] sm:$0x1]
      %v2252 = vld [vmem:[%s2029 + $0x60] sm:$0xf]
      %v2253 = vld [vmem:[%s2029 + $0x64] sm:$0x1]
      %v2254 = vld [vmem:[%s2029 + $0x68] sm:$0xf]
      %v2255 = vld [vmem:[%s2029 + $0x6c] sm:$0x1]
      %v2256 = vld [vmem:[%s2029 + $0x70] sm:$0xf]
      %v2257 = vld [vmem:[%s2029 + $0x74] sm:$0x1]
      %v2258 = vld [vmem:[%s2029 + $0x78] sm:$0xf]
      %v2259 = vld [vmem:[%s2029 + $0x7c] sm:$0x1]
      %v2260 = vld [vmem:[%s2029 + $0x80] sm:$0xf]
      %v2261 = vld [vmem:[%s2029 + $0x84] sm:$0x1]
      %v2262 = vld [vmem:[%s2029 + $0x88] sm:$0xf]
      %v2263 = vld [vmem:[%s2029 + $0x8c] sm:$0x1]
      %v2265 = vshrl.u32 %v2232, 16
      %v2267 = vrot.slane %v2265, 4
      %v2268 = vshll.u32 %v2232, 16
      %v2270 = vrot.slane %v2268, 5
      %v2271 = vor.u32 %v2267, %v2270
      %v2272 = vrot.slane %v2271, 4
      %v2274 = vshll.u32 %v2233, 16
      %v2276 = vrot.slane %v2274, 5
      %v2277 = vsel %vm286, %v2272, %v2276
      %v2279 = vshrl.u32 %v2234, 16
      %v2281 = vrot.slane %v2279, 4
      %v2282 = vshll.u32 %v2234, 16
      %v2284 = vrot.slane %v2282, 5
      %v2285 = vor.u32 %v2281, %v2284
      %v2286 = vrot.slane %v2285, 4
      %v2288 = vshll.u32 %v2235, 16
      %v2290 = vrot.slane %v2288, 5
      %v2291 = vsel %vm286, %v2286, %v2290
      %v2293 = vshrl.u32 %v2236, 16
      %v2295 = vrot.slane %v2293, 4
      %v2296 = vshll.u32 %v2236, 16
      %v2298 = vrot.slane %v2296, 5
      %v2299 = vor.u32 %v2295, %v2298
      %v2300 = vrot.slane %v2299, 4
      %v2302 = vshll.u32 %v2237, 16
      %v2304 = vrot.slane %v2302, 5
      %v2305 = vsel %vm286, %v2300, %v2304
      %v2307 = vshrl.u32 %v2238, 16
      %v2309 = vrot.slane %v2307, 4
      %v2310 = vshll.u32 %v2238, 16
      %v2312 = vrot.slane %v2310, 5
      %v2313 = vor.u32 %v2309, %v2312
      %v2314 = vrot.slane %v2313, 4
      %v2316 = vshll.u32 %v2239, 16
      %v2318 = vrot.slane %v2316, 5
      %v2319 = vsel %vm286, %v2314, %v2318
      %v2321 = vshrl.u32 %v2240, 16
      %v2323 = vrot.slane %v2321, 4
      %v2324 = vshll.u32 %v2240, 16
      %v2326 = vrot.slane %v2324, 5
      %v2327 = vor.u32 %v2323, %v2326
      %v2328 = vrot.slane %v2327, 4
      %v2330 = vshll.u32 %v2241, 16
      %v2332 = vrot.slane %v2330, 5
      %v2333 = vsel %vm286, %v2328, %v2332
      %v2335 = vshrl.u32 %v2242, 16
      %v2337 = vrot.slane %v2335, 4
      %v2338 = vshll.u32 %v2242, 16
      %v2340 = vrot.slane %v2338, 5
      %v2341 = vor.u32 %v2337, %v2340
      %v2342 = vrot.slane %v2341, 4
      %v2344 = vshll.u32 %v2243, 16
      %v2346 = vrot.slane %v2344, 5
      %v2347 = vsel %vm286, %v2342, %v2346
      %v2349 = vshrl.u32 %v2244, 16
      %v2351 = vrot.slane %v2349, 4
      %v2352 = vshll.u32 %v2244, 16
      %v2354 = vrot.slane %v2352, 5
      %v2355 = vor.u32 %v2351, %v2354
      %v2356 = vrot.slane %v2355, 4
      %v2358 = vshll.u32 %v2245, 16
      %v2360 = vrot.slane %v2358, 5
      %v2361 = vsel %vm286, %v2356, %v2360
      %v2363 = vshrl.u32 %v2246, 16
      %v2365 = vrot.slane %v2363, 4
      %v2366 = vshll.u32 %v2246, 16
      %v2368 = vrot.slane %v2366, 5
      %v2369 = vor.u32 %v2365, %v2368
      %v2370 = vrot.slane %v2369, 4
      %v2372 = vshll.u32 %v2247, 16
      %v2374 = vrot.slane %v2372, 5
      %v2375 = vsel %vm286, %v2370, %v2374
      %v2377 = vshrl.u32 %v2248, 16
      %v2379 = vrot.slane %v2377, 4
      %v2380 = vshll.u32 %v2248, 16
      %v2382 = vrot.slane %v2380, 5
      %v2383 = vor.u32 %v2379, %v2382
      %v2384 = vrot.slane %v2383, 4
      %v2386 = vshll.u32 %v2249, 16
      %v2388 = vrot.slane %v2386, 5
      %v2389 = vsel %vm286, %v2384, %v2388
      %v2391 = vshrl.u32 %v2250, 16
      %v2393 = vrot.slane %v2391, 4
      %v2394 = vshll.u32 %v2250, 16
      %v2396 = vrot.slane %v2394, 5
      %v2397 = vor.u32 %v2393, %v2396
      %v2398 = vrot.slane %v2397, 4
      %v2400 = vshll.u32 %v2251, 16
      %v2402 = vrot.slane %v2400, 5
      %v2403 = vsel %vm286, %v2398, %v2402
      %v2405 = vshrl.u32 %v2252, 16
      %v2407 = vrot.slane %v2405, 4
      %v2408 = vshll.u32 %v2252, 16
      %v2410 = vrot.slane %v2408, 5
      %v2411 = vor.u32 %v2407, %v2410
      %v2412 = vrot.slane %v2411, 4
      %v2414 = vshll.u32 %v2253, 16
      %v2416 = vrot.slane %v2414, 5
      %v2417 = vsel %vm286, %v2412, %v2416
      %v2419 = vshrl.u32 %v2254, 16
      %v2421 = vrot.slane %v2419, 4
      %v2422 = vshll.u32 %v2254, 16
      %v2424 = vrot.slane %v2422, 5
      %v2425 = vor.u32 %v2421, %v2424
      %v2426 = vrot.slane %v2425, 4
      %v2428 = vshll.u32 %v2255, 16
      %v2430 = vrot.slane %v2428, 5
      %v2431 = vsel %vm286, %v2426, %v2430
      %v2433 = vshrl.u32 %v2256, 16
      %v2435 = vrot.slane %v2433, 4
      %v2436 = vshll.u32 %v2256, 16
      %v2438 = vrot.slane %v2436, 5
      %v2439 = vor.u32 %v2435, %v2438
      %v2440 = vrot.slane %v2439, 4
      %v2442 = vshll.u32 %v2257, 16
      %v2444 = vrot.slane %v2442, 5
      %v2445 = vsel %vm286, %v2440, %v2444
      %v2447 = vshrl.u32 %v2258, 16
      %v2449 = vrot.slane %v2447, 4
      %v2450 = vshll.u32 %v2258, 16
      %v2452 = vrot.slane %v2450, 5
      %v2453 = vor.u32 %v2449, %v2452
      %v2454 = vrot.slane %v2453, 4
      %v2456 = vshll.u32 %v2259, 16
      %v2458 = vrot.slane %v2456, 5
      %v2459 = vsel %vm286, %v2454, %v2458
      %v2461 = vshrl.u32 %v2260, 16
      %v2463 = vrot.slane %v2461, 4
      %v2464 = vshll.u32 %v2260, 16
      %v2466 = vrot.slane %v2464, 5
      %v2467 = vor.u32 %v2463, %v2466
      %v2468 = vrot.slane %v2467, 4
      %v2470 = vshll.u32 %v2261, 16
      %v2472 = vrot.slane %v2470, 5
      %v2473 = vsel %vm286, %v2468, %v2472
      %v2475 = vshrl.u32 %v2262, 16
      %v2477 = vrot.slane %v2475, 4
      %v2478 = vshll.u32 %v2262, 16
      %v2480 = vrot.slane %v2478, 5
      %v2481 = vor.u32 %v2477, %v2480
      %v2482 = vrot.slane %v2481, 4
      %v2484 = vshll.u32 %v2263, 16
      %v2486 = vrot.slane %v2484, 5
      %v2487 = vsel %vm286, %v2482, %v2486
      %s2488 = scalar_lea.vmem %s234, 56
      %v2489 = vld [vmem:[%s2488] sm:$0xf]
      %v2490 = vld [vmem:[%s2488 + $0x4] sm:$0xf]
      %v2491 = vunpack.c.l.b16 %v2277
      %v2492 = vunpack.c.l.b16 %v2291
      %v2493 = vunpack.c.l.b16 %v2305
      %v2494 = vunpack.c.l.b16 %v2319
      %v2495 = vunpack.c.l.b16 %v2333
      %v2496 = vunpack.c.l.b16 %v2347
      %v2497 = vunpack.c.l.b16 %v2361
      %v2498 = vunpack.c.l.b16 %v2375
      %v2499 = vunpack.c.l.b16 %v2389
      %v2500 = vunpack.c.l.b16 %v2403
      %v2501 = vunpack.c.l.b16 %v2417
      %v2502 = vunpack.c.l.b16 %v2431
      %v2503 = vunpack.c.l.b16 %v2445
      %v2504 = vunpack.c.l.b16 %v2459
      %v2505 = vunpack.c.l.b16 %v2473
      %v2506 = vunpack.c.l.b16 %v2487
      %v2507 = vpack.c.b16 %v2492, %v2491
      %v2508 = vpack.c.b16 %v2494, %v2493
      %v2509 = vpack.c.b16 %v2496, %v2495
      %v2510 = vpack.c.b16 %v2498, %v2497
      %v2511 = vpack.c.b16 %v2500, %v2499
      %v2512 = vpack.c.b16 %v2502, %v2501
      %v2513 = vpack.c.b16 %v2504, %v2503
      %v2514 = vpack.c.b16 %v2506, %v2505
      %v2517 = vunpack.c.l.b16 %v2489
      %v2518 = vunpack.c.l.b16 %v2490
      %v2519 = vpack.c.b16 %v2518, %v2517
      %v2522 = vsel %vm544, %v2507, 0
      %v2525 = vsel %vm544, %v2508, 0
      %v2528 = vsel %vm544, %v2509, 0
      %v2531 = vsel %vm544, %v2510, 0
      %v2534 = vsel %vm544, %v2511, 0
      %v2537 = vsel %vm544, %v2512, 0
      %v2540 = vsel %vm544, %v2513, 0
      %v2543 = vsel %vm544, %v2514, 0
      %2545 = vmatprep.subr.bf16.mxu0 0
      %2546 = vmatpush1.bf16.msra.mxu0 %v2519
      %2547 = vmatprep.subr.bf16.mxu0 0
      %2548 = vmatpush1.bf16.msra.mxu0 0
      %2549 = vmatprep.subr.bf16.mxu0 0
      %2550 = vmatpush1.bf16.msra.mxu0 0
      %2551 = vmatprep.subr.bf16.mxu0 0
      %2552 = vmatpush1.bf16.msra.mxu0 0
      %2553 = vmatprep.subr.bf16.mxu0 0
      %2554 = vmatpush1.bf16.msra.mxu0 0
      %2555 = vmatprep.subr.bf16.mxu0 0
      %2556 = vmatpush1.bf16.msra.mxu0 0
      %2557 = vmatprep.subr.bf16.mxu0 0
      %2558 = vmatpush1.bf16.msra.mxu0 0
      %2559 = vmatprep.subr.bf16.mxu0 0
      %2560 = vmatpush1.bf16.msra.mxu0 0
      %2561 = vmatprep.subr.bf16.mxu0 0
      %2562 = vmatpush1.bf16.msra.mxu0 0
      %2563 = vmatprep.subr.bf16.mxu0 0
      %2564 = vmatpush1.bf16.msra.mxu0 0
      %2565 = vmatprep.subr.bf16.mxu0 0
      %2566 = vmatpush1.bf16.msra.mxu0 0
      %2567 = vmatprep.subr.bf16.mxu0 0
      %2568 = vmatpush1.bf16.msra.mxu0 0
      %2569 = vmatprep.subr.bf16.mxu0 0
      %2570 = vmatpush1.bf16.msra.mxu0 0
      %2571 = vmatprep.subr.bf16.mxu0 0
      %2572 = vmatpush1.bf16.msra.mxu0 0
      %2573 = vmatprep.subr.bf16.mxu0 0
      %2574 = vmatpush1.bf16.msra.mxu0 0
      %2575 = vmatprep.subr.bf16.mxu0 0
      %2576 = vmatpush1.bf16.msra.mxu0 0
      %2577 = vmatprep.mubr.bf16.mxu0 0
      %2578 = vmatmul.mubr.bf16.gmra.mrb[0].mxu0 %v2522
      %v2579 = vpop.f32.mrb[0].mxu0
      %v2580 = vadd.f32 0.0, %v2579
      %v2581 = vpop.f32.mrb[0].mxu0
      %v2582 = vpop.f32.mrb[0].mxu0
      %v2583 = vadd.f32 0.0, %v2582
      %v2584 = vpop.f32.mrb[0].mxu0
      %2585 = vmatprep.mubr.bf16.mxu0 0
      %2586 = vmatmul.mubr.bf16.gmra.mrb[0].mxu0 %v2525
      %v2587 = vpop.f32.mrb[0].mxu0
      %v2588 = vadd.f32 0.0, %v2587
      %v2589 = vpop.f32.mrb[0].mxu0
      %v2590 = vpop.f32.mrb[0].mxu0
      %v2591 = vadd.f32 0.0, %v2590
      %v2592 = vpop.f32.mrb[0].mxu0
      %2593 = vmatprep.mubr.bf16.mxu0 0
      %2594 = vmatmul.mubr.bf16.gmra.mrb[0].mxu0 %v2528
      %v2595 = vpop.f32.mrb[0].mxu0
      %v2596 = vadd.f32 0.0, %v2595
      %v2597 = vpop.f32.mrb[0].mxu0
      %v2598 = vpop.f32.mrb[0].mxu0
      %v2599 = vadd.f32 0.0, %v2598
      %v2600 = vpop.f32.mrb[0].mxu0
      %2601 = vmatprep.mubr.bf16.mxu0 0
      %2602 = vmatmul.mubr.bf16.gmra.mrb[0].mxu0 %v2531
      %v2603 = vpop.f32.mrb[0].mxu0
      %v2604 = vadd.f32 0.0, %v2603
      %v2605 = vpop.f32.mrb[0].mxu0
      %v2606 = vpop.f32.mrb[0].mxu0
      %v2607 = vadd.f32 0.0, %v2606
      %v2608 = vpop.f32.mrb[0].mxu0
      %2609 = vmatprep.mubr.bf16.mxu0 0
      %2610 = vmatmul.mubr.bf16.gmra.mrb[0].mxu0 %v2534
      %v2611 = vpop.f32.mrb[0].mxu0
      %v2612 = vadd.f32 0.0, %v2611
      %v2613 = vpop.f32.mrb[0].mxu0
      %v2614 = vpop.f32.mrb[0].mxu0
      %v2615 = vadd.f32 0.0, %v2614
      %v2616 = vpop.f32.mrb[0].mxu0
      %2617 = vmatprep.mubr.bf16.mxu0 0
      %2618 = vmatmul.mubr.bf16.gmra.mrb[0].mxu0 %v2537
      %v2619 = vpop.f32.mrb[0].mxu0
      %v2620 = vadd.f32 0.0, %v2619
      %v2621 = vpop.f32.mrb[0].mxu0
      %v2622 = vpop.f32.mrb[0].mxu0
      %v2623 = vadd.f32 0.0, %v2622
      %v2624 = vpop.f32.mrb[0].mxu0
      %2625 = vmatprep.mubr.bf16.mxu0 0
      %2626 = vmatmul.mubr.bf16.gmra.mrb[0].mxu0 %v2540
      %v2627 = vpop.f32.mrb[0].mxu0
      %v2628 = vadd.f32 0.0, %v2627
      %v2629 = vpop.f32.mrb[0].mxu0
      %v2630 = vpop.f32.mrb[0].mxu0
      %v2631 = vadd.f32 0.0, %v2630
      %v2632 = vpop.f32.mrb[0].mxu0
      %2633 = vmatprep.mubr.bf16.mxu0 0
      %2634 = vmatmul.mubr.bf16.gmra.mrb[0].mxu0 %v2543
      %v2635 = vpop.f32.mrb[0].mxu0
      %v2636 = vadd.f32 0.0, %v2635
      %v2637 = vpop.f32.mrb[0].mxu0
      %v2638 = vpop.f32.mrb[0].mxu0
      %v2639 = vadd.f32 0.0, %v2638
      %v2640 = vpop.f32.mrb[0].mxu0
      %2641 = vdwg.mxu0
      %v2642 = vadd.f32 %v2216, %v2580
      %v2643 = vadd.f32 %v2217, %v2583
      %v2644 = vadd.f32 %v2218, %v2588
      %v2645 = vadd.f32 %v2219, %v2591
      %v2646 = vadd.f32 %v2220, %v2596
      %v2647 = vadd.f32 %v2221, %v2599
      %v2648 = vadd.f32 %v2222, %v2604
      %v2649 = vadd.f32 %v2223, %v2607
      %v2650 = vadd.f32 %v2224, %v2612
      %v2651 = vadd.f32 %v2225, %v2615
      %v2652 = vadd.f32 %v2226, %v2620
      %v2653 = vadd.f32 %v2227, %v2623
      %v2654 = vadd.f32 %v2228, %v2628
      %v2655 = vadd.f32 %v2229, %v2631
      %v2656 = vadd.f32 %v2230, %v2636
      %v2657 = vadd.f32 %v2231, %v2639
      %v2658 = vld [vmem:[%s2029] sm:$0xe]
      %v2659 = vld [vmem:[%s2029 + $0x8] sm:$0xe]
      %v2660 = vld [vmem:[%s2029 + $0x10] sm:$0xe]
      %v2661 = vld [vmem:[%s2029 + $0x18] sm:$0xe]
      %v2662 = vld [vmem:[%s2029 + $0x20] sm:$0xe]
      %v2663 = vld [vmem:[%s2029 + $0x28] sm:$0xe]
      %v2664 = vld [vmem:[%s2029 + $0x30] sm:$0xe]
      %v2665 = vld [vmem:[%s2029 + $0x38] sm:$0xe]
      %v2666 = vld [vmem:[%s2029 + $0x50] sm:$0xe]
      %v2667 = vld [vmem:[%s2029 + $0x58] sm:$0xe]
      %v2668 = vld [vmem:[%s2029 + $0x60] sm:$0xe]
      %v2669 = vld [vmem:[%s2029 + $0x68] sm:$0xe]
      %v2670 = vld [vmem:[%s2029 + $0x70] sm:$0xe]
      %v2671 = vld [vmem:[%s2029 + $0x78] sm:$0xe]
      %v2672 = vld [vmem:[%s2029 + $0x80] sm:$0xe]
      %v2673 = vld [vmem:[%s2029 + $0x88] sm:$0xe]
      %v2706 = vrot.slane %v2658, 5
      %v2707 = vrot.slane %v2706, 4
      %v2708 = vrot.slane %v2233, 5
      %v2709 = vsel %vm883, %v2707, %v2708
      %v2710 = vrot.slane %v2659, 5
      %v2711 = vrot.slane %v2710, 4
      %v2712 = vrot.slane %v2235, 5
      %v2713 = vsel %vm883, %v2711, %v2712
      %v2714 = vrot.slane %v2660, 5
      %v2715 = vrot.slane %v2714, 4
      %v2716 = vrot.slane %v2237, 5
      %v2717 = vsel %vm883, %v2715, %v2716
      %v2718 = vrot.slane %v2661, 5
      %v2719 = vrot.slane %v2718, 4
      %v2720 = vrot.slane %v2239, 5
      %v2721 = vsel %vm883, %v2719, %v2720
      %v2722 = vrot.slane %v2662, 5
      %v2723 = vrot.slane %v2722, 4
      %v2724 = vrot.slane %v2241, 5
      %v2725 = vsel %vm883, %v2723, %v2724
      %v2726 = vrot.slane %v2663, 5
      %v2727 = vrot.slane %v2726, 4
      %v2728 = vrot.slane %v2243, 5
      %v2729 = vsel %vm883, %v2727, %v2728
      %v2730 = vrot.slane %v2664, 5
      %v2731 = vrot.slane %v2730, 4
      %v2732 = vrot.slane %v2245, 5
      %v2733 = vsel %vm883, %v2731, %v2732
      %v2734 = vrot.slane %v2665, 5
      %v2735 = vrot.slane %v2734, 4
      %v2736 = vrot.slane %v2247, 5
      %v2737 = vsel %vm883, %v2735, %v2736
      %v2738 = vrot.slane %v2666, 5
      %v2739 = vrot.slane %v2738, 4
      %v2740 = vrot.slane %v2249, 5
      %v2741 = vsel %vm883, %v2739, %v2740
      %v2742 = vrot.slane %v2667, 5
      %v2743 = vrot.slane %v2742, 4
      %v2744 = vrot.slane %v2251, 5
      %v2745 = vsel %vm883, %v2743, %v2744
      %v2746 = vrot.slane %v2668, 5
      %v2747 = vrot.slane %v2746, 4
      %v2748 = vrot.slane %v2253, 5
      %v2749 = vsel %vm883, %v2747, %v2748
      %v2750 = vrot.slane %v2669, 5
      %v2751 = vrot.slane %v2750, 4
      %v2752 = vrot.slane %v2255, 5
      %v2753 = vsel %vm883, %v2751, %v2752
      %v2754 = vrot.slane %v2670, 5
      %v2755 = vrot.slane %v2754, 4
      %v2756 = vrot.slane %v2257, 5
      %v2757 = vsel %vm883, %v2755, %v2756
      %v2758 = vrot.slane %v2671, 5
      %v2759 = vrot.slane %v2758, 4
      %v2760 = vrot.slane %v2259, 5
      %v2761 = vsel %vm883, %v2759, %v2760
      %v2762 = vrot.slane %v2672, 5
      %v2763 = vrot.slane %v2762, 4
      %v2764 = vrot.slane %v2261, 5
      %v2765 = vsel %vm883, %v2763, %v2764
      %v2766 = vrot.slane %v2673, 5
      %v2767 = vrot.slane %v2766, 4
      %v2768 = vrot.slane %v2263, 5
      %v2769 = vsel %vm883, %v2767, %v2768
      %s2770 = scalar_lea.vmem %s234, 64
      %v2771 = vld [vmem:[%s2770] sm:$0xf]
      %v2772 = vld [vmem:[%s2770 + $0x4] sm:$0xf]
      %v2773 = vunpack.c.l.b16 %v2709
      %v2774 = vunpack.c.l.b16 %v2713
      %v2775 = vunpack.c.l.b16 %v2717
      %v2776 = vunpack.c.l.b16 %v2721
      %v2777 = vunpack.c.l.b16 %v2725
      %v2778 = vunpack.c.l.b16 %v2729
      %v2779 = vunpack.c.l.b16 %v2733
      %v2780 = vunpack.c.l.b16 %v2737
      %v2781 = vunpack.c.l.b16 %v2741
      %v2782 = vunpack.c.l.b16 %v2745
      %v2783 = vunpack.c.l.b16 %v2749
      %v2784 = vunpack.c.l.b16 %v2753
      %v2785 = vunpack.c.l.b16 %v2757
      %v2786 = vunpack.c.l.b16 %v2761
      %v2787 = vunpack.c.l.b16 %v2765
      %v2788 = vunpack.c.l.b16 %v2769
      %v2789 = vpack.c.b16 %v2774, %v2773
      %v2790 = vpack.c.b16 %v2776, %v2775
      %v2791 = vpack.c.b16 %v2778, %v2777
      %v2792 = vpack.c.b16 %v2780, %v2779
      %v2793 = vpack.c.b16 %v2782, %v2781
      %v2794 = vpack.c.b16 %v2784, %v2783
      %v2795 = vpack.c.b16 %v2786, %v2785
      %v2796 = vpack.c.b16 %v2788, %v2787
      %v2799 = vunpack.c.l.b16 %v2771
      %v2800 = vunpack.c.l.b16 %v2772
      %v2801 = vpack.c.b16 %v2800, %v2799
      %v2804 = vsel %vm544, %v2789, 0
      %v2807 = vsel %vm544, %v2790, 0
      %v2810 = vsel %vm544, %v2791, 0
      %v2813 = vsel %vm544, %v2792, 0
      %v2816 = vsel %vm544, %v2793, 0
      %v2819 = vsel %vm544, %v2794, 0
      %v2822 = vsel %vm544, %v2795, 0
      %v2825 = vsel %vm544, %v2796, 0
      %2827 = vmatprep.subr.bf16.mxu0 0
      %2828 = vmatpush1.bf16.msra.mxu0 %v2801
      %2829 = vmatprep.subr.bf16.mxu0 0
      %2830 = vmatpush1.bf16.msra.mxu0 0
      %2831 = vmatprep.subr.bf16.mxu0 0
      %2832 = vmatpush1.bf16.msra.mxu0 0
      %2833 = vmatprep.subr.bf16.mxu0 0
      %2834 = vmatpush1.bf16.msra.mxu0 0
      %2835 = vmatprep.subr.bf16.mxu0 0
      %2836 = vmatpush1.bf16.msra.mxu0 0
      %2837 = vmatprep.subr.bf16.mxu0 0
      %2838 = vmatpush1.bf16.msra.mxu0 0
      %2839 = vmatprep.subr.bf16.mxu0 0
      %2840 = vmatpush1.bf16.msra.mxu0 0
      %2841 = vmatprep.subr.bf16.mxu0 0
      %2842 = vmatpush1.bf16.msra.mxu0 0
      %2843 = vmatprep.subr.bf16.mxu0 0
      %2844 = vmatpush1.bf16.msra.mxu0 0
      %2845 = vmatprep.subr.bf16.mxu0 0
      %2846 = vmatpush1.bf16.msra.mxu0 0
      %2847 = vmatprep.subr.bf16.mxu0 0
      %2848 = vmatpush1.bf16.msra.mxu0 0
      %2849 = vmatprep.subr.bf16.mxu0 0
      %2850 = vmatpush1.bf16.msra.mxu0 0
      %2851 = vmatprep.subr.bf16.mxu0 0
      %2852 = vmatpush1.bf16.msra.mxu0 0
      %2853 = vmatprep.subr.bf16.mxu0 0
      %2854 = vmatpush1.bf16.msra.mxu0 0
      %2855 = vmatprep.subr.bf16.mxu0 0
      %2856 = vmatpush1.bf16.msra.mxu0 0
      %2857 = vmatprep.subr.bf16.mxu0 0
      %2858 = vmatpush1.bf16.msra.mxu0 0
      %2859 = vmatprep.mubr.bf16.mxu0 0
      %2860 = vmatmul.mubr.bf16.gmra.mrb[0].mxu0 %v2804
      %v2861 = vpop.f32.mrb[0].mxu0
      %v2862 = vadd.f32 0.0, %v2861
      %v2863 = vpop.f32.mrb[0].mxu0
      %v2864 = vpop.f32.mrb[0].mxu0
      %v2865 = vadd.f32 0.0, %v2864
      %v2866 = vpop.f32.mrb[0].mxu0
      %2867 = vmatprep.mubr.bf16.mxu0 0
      %2868 = vmatmul.mubr.bf16.gmra.mrb[0].mxu0 %v2807
      %v2869 = vpop.f32.mrb[0].mxu0
      %v2870 = vadd.f32 0.0, %v2869
      %v2871 = vpop.f32.mrb[0].mxu0
      %v2872 = vpop.f32.mrb[0].mxu0
      %v2873 = vadd.f32 0.0, %v2872
      %v2874 = vpop.f32.mrb[0].mxu0
      %2875 = vmatprep.mubr.bf16.mxu0 0
      %2876 = vmatmul.mubr.bf16.gmra.mrb[0].mxu0 %v2810
      %v2877 = vpop.f32.mrb[0].mxu0
      %v2878 = vadd.f32 0.0, %v2877
      %v2879 = vpop.f32.mrb[0].mxu0
      %v2880 = vpop.f32.mrb[0].mxu0
      %v2881 = vadd.f32 0.0, %v2880
      %v2882 = vpop.f32.mrb[0].mxu0
      %2883 = vmatprep.mubr.bf16.mxu0 0
      %2884 = vmatmul.mubr.bf16.gmra.mrb[0].mxu0 %v2813
      %v2885 = vpop.f32.mrb[0].mxu0
      %v2886 = vadd.f32 0.0, %v2885
      %v2887 = vpop.f32.mrb[0].mxu0
      %v2888 = vpop.f32.mrb[0].mxu0
      %v2889 = vadd.f32 0.0, %v2888
      %v2890 = vpop.f32.mrb[0].mxu0
      %2891 = vmatprep.mubr.bf16.mxu0 0
      %2892 = vmatmul.mubr.bf16.gmra.mrb[0].mxu0 %v2816
      %v2893 = vpop.f32.mrb[0].mxu0
      %v2894 = vadd.f32 0.0, %v2893
      %v2895 = vpop.f32.mrb[0].mxu0
      %v2896 = vpop.f32.mrb[0].mxu0
      %v2897 = vadd.f32 0.0, %v2896
      %v2898 = vpop.f32.mrb[0].mxu0
      %2899 = vmatprep.mubr.bf16.mxu0 0
      %2900 = vmatmul.mubr.bf16.gmra.mrb[0].mxu0 %v2819
      %v2901 = vpop.f32.mrb[0].mxu0
      %v2902 = vadd.f32 0.0, %v2901
      %v2903 = vpop.f32.mrb[0].mxu0
      %v2904 = vpop.f32.mrb[0].mxu0
      %v2905 = vadd.f32 0.0, %v2904
      %v2906 = vpop.f32.mrb[0].mxu0
      %2907 = vmatprep.mubr.bf16.mxu0 0
      %2908 = vmatmul.mubr.bf16.gmra.mrb[0].mxu0 %v2822
      %v2909 = vpop.f32.mrb[0].mxu0
      %v2910 = vadd.f32 0.0, %v2909
      %v2911 = vpop.f32.mrb[0].mxu0
      %v2912 = vpop.f32.mrb[0].mxu0
      %v2913 = vadd.f32 0.0, %v2912
      %v2914 = vpop.f32.mrb[0].mxu0
      %2915 = vmatprep.mubr.bf16.mxu0 0
      %2916 = vmatmul.mubr.bf16.gmra.mrb[0].mxu0 %v2825
      %v2917 = vpop.f32.mrb[0].mxu0
      %v2918 = vadd.f32 0.0, %v2917
      %v2919 = vpop.f32.mrb[0].mxu0
      %v2920 = vpop.f32.mrb[0].mxu0
      %v2921 = vadd.f32 0.0, %v2920
      %v2922 = vpop.f32.mrb[0].mxu0
      %2923 = vdwg.mxu0
      %v2924 = vadd.f32 %v2642, %v2862
      %v2925 = vadd.f32 %v2643, %v2865
      %v2926 = vadd.f32 %v2644, %v2870
      %v2927 = vadd.f32 %v2645, %v2873
      %v2928 = vadd.f32 %v2646, %v2878
      %v2929 = vadd.f32 %v2647, %v2881
      %v2930 = vadd.f32 %v2648, %v2886
      %v2931 = vadd.f32 %v2649, %v2889
      %v2932 = vadd.f32 %v2650, %v2894
      %v2933 = vadd.f32 %v2651, %v2897
      %v2934 = vadd.f32 %v2652, %v2902
      %v2935 = vadd.f32 %v2653, %v2905
      %v2936 = vadd.f32 %v2654, %v2910
      %v2937 = vadd.f32 %v2655, %v2913
      %v2938 = vadd.f32 %v2656, %v2918
      %v2939 = vadd.f32 %v2657, %v2921
      %v2940 = vld [vmem:[%s237] sm:$0x1]
      %v2942 = vlaneseq
      %v2943 = vshrl.u32 %v2942, 7
      %v2944 = vsub.s32 0, %v2943
      %v2945 = vrot.slane %v2940, %v2944
      %v2947 = vadd.f32 %v2924, %v2945
      %v2948 = vadd.f32 %v2925, %v2945
      %v2949 = vadd.f32 %v2926, %v2945
      %v2950 = vadd.f32 %v2927, %v2945
      %v2951 = vadd.f32 %v2928, %v2945
      %v2952 = vadd.f32 %v2929, %v2945
      %v2953 = vadd.f32 %v2930, %v2945
      %v2954 = vadd.f32 %v2931, %v2945
      %v2955 = vadd.f32 %v2932, %v2945
      %v2956 = vadd.f32 %v2933, %v2945
      %v2957 = vadd.f32 %v2934, %v2945
      %v2958 = vadd.f32 %v2935, %v2945
      %v2959 = vadd.f32 %v2936, %v2945
      %v2960 = vadd.f32 %v2937, %v2945
      %v2961 = vadd.f32 %v2938, %v2945
      %v2962 = vadd.f32 %v2939, %v2945
      %v2963 = vmax.f32 %v2947, 0.0
      %v2964 = vmax.f32 %v2948, 0.0
      %v2965 = vmax.f32 %v2949, 0.0
      %v2966 = vmax.f32 %v2950, 0.0
      %v2967 = vmax.f32 %v2951, 0.0
      %v2968 = vmax.f32 %v2952, 0.0
      %v2969 = vmax.f32 %v2953, 0.0
      %v2970 = vmax.f32 %v2954, 0.0
      %v2971 = vmax.f32 %v2955, 0.0
      %v2972 = vmax.f32 %v2956, 0.0
      %v2973 = vmax.f32 %v2957, 0.0
      %v2974 = vmax.f32 %v2958, 0.0
      %v2975 = vmax.f32 %v2959, 0.0
      %v2976 = vmax.f32 %v2960, 0.0
      %v2977 = vmax.f32 %v2961, 0.0
      %v2978 = vmax.f32 %v2962, 0.0
      %v2979 = vpack.c.bf16 %v2963, %v2963
      %v2980 = vpack.c.bf16 %v2964, %v2964
      %v2981 = vpack.c.bf16 %v2965, %v2965
      %v2982 = vpack.c.bf16 %v2966, %v2966
      %v2983 = vpack.c.bf16 %v2967, %v2967
      %v2984 = vpack.c.bf16 %v2968, %v2968
      %v2985 = vpack.c.bf16 %v2969, %v2969
      %v2986 = vpack.c.bf16 %v2970, %v2970
      %v2987 = vpack.c.bf16 %v2971, %v2971
      %v2988 = vpack.c.bf16 %v2972, %v2972
      %v2989 = vpack.c.bf16 %v2973, %v2973
      %v2990 = vpack.c.bf16 %v2974, %v2974
      %v2991 = vpack.c.bf16 %v2975, %v2975
      %v2992 = vpack.c.bf16 %v2976, %v2976
      %v2993 = vpack.c.bf16 %v2977, %v2977
      %v2994 = vpack.c.bf16 %v2978, %v2978
      %vm2995 = vcmask 519168
      %2996 = vst.msk [vmem:[%s247] sm:$0xf] %vm2995, %v2979
      %2997 = vst.msk [vmem:[%s247 + $0x4] sm:$0xf] %vm2995, %v2980
      %2998 = vst.msk [vmem:[%s247 + $0x8] sm:$0xf] %vm2995, %v2981
      %2999 = vst.msk [vmem:[%s247 + $0xc] sm:$0xf] %vm2995, %v2982
      %3000 = vst.msk [vmem:[%s247 + $0x10] sm:$0xf] %vm2995, %v2983
      %3001 = vst.msk [vmem:[%s247 + $0x14] sm:$0xf] %vm2995, %v2984
      %3002 = vst.msk [vmem:[%s247 + $0x18] sm:$0xf] %vm2995, %v2985
      %3003 = vst.msk [vmem:[%s247 + $0x1c] sm:$0xf] %vm2995, %v2986
      %3004 = vst.msk [vmem:[%s247 + $0x20] sm:$0xf] %vm2995, %v2987
      %3005 = vst.msk [vmem:[%s247 + $0x24] sm:$0xf] %vm2995, %v2988
      %3006 = vst.msk [vmem:[%s247 + $0x28] sm:$0xf] %vm2995, %v2989
      %3007 = vst.msk [vmem:[%s247 + $0x2c] sm:$0xf] %vm2995, %v2990
      %3008 = vst.msk [vmem:[%s247 + $0x30] sm:$0xf] %vm2995, %v2991
      %3009 = vst.msk [vmem:[%s247 + $0x34] sm:$0xf] %vm2995, %v2992
      %3010 = vst.msk [vmem:[%s247 + $0x38] sm:$0xf] %vm2995, %v2993
      %3011 = vst.msk [vmem:[%s247 + $0x3c] sm:$0xf] %vm2995, %v2994
      %s3012 = smul.u32 2, %s19
      %p3013 = scmp.lt.s32.totalorder %s18, 1
      %s3014 = scalar_select %p3013, %s18, 1
      %p3015 = scmp.lt.s32.totalorder %s3012, 1
      %s3016 = scalar_select %p3015, %s3012, 1
      %s3017 = smul.addr %s3016, 8
      %s3018 = smul.addr %s3014, 16
      %s3019 = sadd.s32 %s3017, %s3018
      %s3020 = smul.addr %s3019, 4
      %s3021 = scalar_lea.vmem %s3, %s3020
      // Predicated region
      $region33: #{forward.8} parent=31 // pred_check
        %p3022 = pneg %p126
      $region34: #{forward.8} parent=31 // pred_check_branch
        %3024 = sbr.rel (%p3022) target = $region36
      $region35: #{forward.8} parent=31 // pred_region
        %s3025 = smul.u32 2, %s19
      $region36: #{forward.8} parent=31 // pred_fallthru
        _
    $region32: #{forward.8} parent=5 // pred_fallthru
      _
    %p3026 = scmp.le.s32.totalorder 2, %s9
    // Predicated region
    $region37: #{forward.8} parent=5 // pred_check
      %p3027 = pneg %p3026
    $region38: #{forward.8} parent=5 // pred_check_branch
      %3029 = sbr.rel (%p3027) target = $region40
    $region39: #{forward.8} parent=5 // pred_region
      %s3030 = ssub.s32 %s9, 2
      // Predicated region
      $region41: #{forward.8} parent=39 // pred_check
        %p3031 = pneg %p132
      $region42: #{forward.8} parent=39 // pred_check_branch
        %3033 = sbr.rel (%p3031) target = $region44
      $region43: #{forward.8} parent=39 // pred_region
        %s3034 = smul.u32 2, %s21
        %p3035 = scmp.lt.s32.totalorder %s20, 1
        %s3036 = scalar_select %p3035, %s20, 1
        %p3037 = scmp.lt.s32.totalorder %s3034, 1
        %s3038 = scalar_select %p3037, %s3034, 1
        %s3039 = smul.addr %s3038, 8
        %s3040 = smul.addr %s3036, 16
        %s3041 = sadd.s32 %s3039, %s3040
        %s3042 = smul.addr %s3041, 4
        %s3043 = scalar_lea.vmem %s3, %s3042
      $region44: #{forward.8} parent=39 // pred_fallthru
        _
    $region40: #{forward.8} parent=5 // pred_fallthru
      _
  $region6: #{forward.8} parent=0 // loop_footer
    %s13 = sadd.s32 1, %s9
  $region7: #{forward.8} parent=0 // loop_footer_branch
    %8 = sbr.rel target = $region3
  $region8: #{forward.8} parent=0 // loop_exit
    _

// kernel: forward.9
$region0: #{forward.9}
  #allocation0 [shape = 'u32[]', space=smem, size = 0x4, offset = 0x4, fixed_abs, tag = 'smem constant byte address 0x4 - core index']
  #allocation1 [shape = 'u32[144,128]{1,0:T(1,128)}', space=vmem, size = 0x12000, scoped, tag = 'internal scratch']
  %s0 = inlined_call_operand.vmem [shape: bf16[2,2,5,5,256], index: 0, kind: input, shape index: {}]
  %s1 = inlined_call_operand.vmem [shape: bf16[2,2,2,256,64], index: 1, kind: input, shape index: {}]
  %s2 = inlined_call_operand.vmem [shape: f32[2,1,64], index: 2, kind: input, shape index: {}]
  %s3 = inlined_call_operand.vmem [shape: bf16[2,2,4,4,64], index: 3, kind: output, shape index: {}]
  %s4 = sld [smem:[#allocation0]]
  $region45: #{forward.9} parent=0
    _
  %s6 = ssub.s32 1, %s4
  %s7 = scalar_select 0, %s6, %s4
  loop: start=0, step=1, limit=4
  $region2: #{forward.9} parent=0 // loop_pre_header
    _
  $region3: #{forward.9} parent=0 // loop_header
    %s9 = sphi 0, %s13
    %p10 = scmp.ge.s32.totalorder %s9, 4
    %s16 = sphi 0, %s28
    %s17 = sphi 0, %s24
    %s18 = sphi 0, %s16
    %s19 = sphi 0, %s17
    %s20 = sphi 0, %s18
    %s21 = sphi 0, %s19
    %s33 = sphi 0, %s35
    %s36 = sphi 0, %s33
    %s37 = sphi 0, %s36
    %s53 = sphi 0, %s37
    %s59 = sphi 0, %s61
    %s62 = sphi 0, %s59
    %s63 = sphi 0, %s62
    %s79 = sphi 0, %s63
    %s85 = sphi 0, %s87
    %s88 = sphi 0, %s85
    %s89 = sphi 0, %s88
    %s105 = sphi 0, %s89
    %s113 = sphi 0, %s115
    %s116 = sphi 0, %s113
    %s117 = sphi 0, %s116
    %s133 = sphi 0, %s117
  $region4: #{forward.9} parent=0 // loop_header_branch
    %12 = sbr.rel (%p10) target = $region8
  $region5: #{forward.9} parent=0 // loop_body
    %s14 = ssub.s32 %s9, 1
    %s15 = ssub.s32 %s9, 2
    %s22 = sadd.s32 1, %s17
    %p23 = scmp.ge.s32.totalorder %s22, 1
    %s24 = scalar_select %p23, 0, %s22
    %s25 = sadd.s32 1, %s16
    %s26 = scalar_select %p23, %s25, %s16
    %p27 = scmp.ge.s32.totalorder %s26, 2
    %s28 = scalar_select %p27, 0, %s26
    %s29 = ssub.s32 %s16, %s28
    %s30 = ssub.s32 %s17, %s24
    %s31 = sor.u32 %s29, %s30
    %p32 = scmp.eq.s32.totalorder %s31, 0
    %s34 = sadd.s32 %s33, 1
    %s35 = scalar_select %p32, %s33, %s34
    %p38 = pneg %p32
    %p39 = scmp.eq.s32.totalorder %s9, 1
    %p40 = por %p38, %p39
    %p41 = scmp.ne.s32.totalorder %s33, %s36
    %p42 = scmp.eq.s32.totalorder %s9, 0
    %p43 = por %p41, %p42
    %p44 = scmp.ne.s32.totalorder %s33, %s36
    %p45 = scmp.eq.s32.totalorder %s14, 1
    %p46 = por %p44, %p45
    %p47 = scmp.ne.s32.totalorder %s36, %s37
    %p48 = scmp.eq.s32.totalorder %s14, 0
    %p49 = por %p47, %p48
    %p50 = scmp.ne.s32.totalorder %s36, %s37
    %p51 = scmp.eq.s32.totalorder %s15, 1
    %p52 = por %p50, %p51
    %p54 = scmp.ne.s32.totalorder %s37, %s53
    %p55 = scmp.eq.s32.totalorder %s15, 0
    %p56 = por %p54, %p55
    %s57 = ssub.s32 %s16, %s28
    %p58 = scmp.eq.s32.totalorder %s57, 0
    %s60 = sadd.s32 %s59, 1
    %s61 = scalar_select %p58, %s59, %s60
    %p64 = pneg %p58
    %p65 = scmp.eq.s32.totalorder %s9, 1
    %p66 = por %p64, %p65
    %p67 = scmp.ne.s32.totalorder %s59, %s62
    %p68 = scmp.eq.s32.totalorder %s9, 0
    %p69 = por %p67, %p68
    %p70 = scmp.ne.s32.totalorder %s59, %s62
    %p71 = scmp.eq.s32.totalorder %s14, 1
    %p72 = por %p70, %p71
    %p73 = scmp.ne.s32.totalorder %s62, %s63
    %p74 = scmp.eq.s32.totalorder %s14, 0
    %p75 = por %p73, %p74
    %p76 = scmp.ne.s32.totalorder %s62, %s63
    %p77 = scmp.eq.s32.totalorder %s15, 1
    %p78 = por %p76, %p77
    %p80 = scmp.ne.s32.totalorder %s63, %s79
    %p81 = scmp.eq.s32.totalorder %s15, 0
    %p82 = por %p80, %p81
    %s83 = ssub.s32 %s16, %s28
    %p84 = scmp.eq.s32.totalorder %s83, 0
    %s86 = sadd.s32 %s85, 1
    %s87 = scalar_select %p84, %s85, %s86
    %p90 = pneg %p84
    %p91 = scmp.eq.s32.totalorder %s9, 1
    %p92 = por %p90, %p91
    %p93 = scmp.ne.s32.totalorder %s85, %s88
    %p94 = scmp.eq.s32.totalorder %s9, 0
    %p95 = por %p93, %p94
    %p96 = scmp.ne.s32.totalorder %s85, %s88
    %p97 = scmp.eq.s32.totalorder %s14, 1
    %p98 = por %p96, %p97
    %p99 = scmp.ne.s32.totalorder %s88, %s89
    %p100 = scmp.eq.s32.totalorder %s14, 0
    %p101 = por %p99, %p100
    %p102 = scmp.ne.s32.totalorder %s88, %s89
    %p103 = scmp.eq.s32.totalorder %s15, 1
    %p104 = por %p102, %p103
    %p106 = scmp.ne.s32.totalorder %s89, %s105
    %p107 = scmp.eq.s32.totalorder %s15, 0
    %p108 = por %p106, %p107
    %s109 = ssub.s32 %s16, %s28
    %s110 = ssub.s32 %s17, %s24
    %s111 = sor.u32 %s109, %s110
    %p112 = scmp.eq.s32.totalorder %s111, 0
    %s114 = sadd.s32 %s113, 1
    %s115 = scalar_select %p112, %s113, %s114
    %p118 = pneg %p112
    %p119 = scmp.eq.s32.totalorder %s9, 1
    %p120 = por %p118, %p119
    %p121 = scmp.ne.s32.totalorder %s113, %s116
    %p122 = scmp.eq.s32.totalorder %s9, 0
    %p123 = por %p121, %p122
    %p124 = scmp.ne.s32.totalorder %s113, %s116
    %p125 = scmp.eq.s32.totalorder %s14, 1
    %p126 = por %p124, %p125
    %p127 = scmp.ne.s32.totalorder %s116, %s117
    %p128 = scmp.eq.s32.totalorder %s14, 0
    %p129 = por %p127, %p128
    %p130 = scmp.ne.s32.totalorder %s116, %s117
    %p131 = scmp.eq.s32.totalorder %s15, 1
    %p132 = por %p130, %p131
    %p134 = scmp.ne.s32.totalorder %s117, %s133
    %p135 = scmp.eq.s32.totalorder %s15, 0
    %p136 = por %p134, %p135
    %p137 = scmp.le.s32.totalorder 1, %s9
    %p138 = scmp.lt.s32.totalorder %s9, 3
    %p139 = pnand %p137, %p138
    %p140 = pneg %p139
    // Predicated region
    $region9: #{forward.9} parent=5 // pred_check
      _
    $region10: #{forward.9} parent=5 // pred_check_branch
      %142 = sbr.rel (%p139) target = $region12
    $region11: #{forward.9} parent=5 // pred_region
      %s143 = ssub.s32 %s9, 1
    $region12: #{forward.9} parent=5 // pred_fallthru
      _
    %p144 = scmp.lt.s32.totalorder %s9, 2
    // Predicated region
    $region13: #{forward.9} parent=5 // pred_check
      %p145 = pneg %p144
    $region14: #{forward.9} parent=5 // pred_check_branch
      %147 = sbr.rel (%p145) target = $region16
    $region15: #{forward.9} parent=5 // pred_region
      // Predicated region
      $region17: #{forward.9} parent=15 // pred_check
        %p148 = pneg %p43
      $region18: #{forward.9} parent=15 // pred_check_branch
        %150 = sbr.rel (%p148) target = $region20
      $region19: #{forward.9} parent=15 // pred_region
        %s151 = smul.u32 2, %s17
        %p152 = scmp.lt.s32.totalorder %s16, 1
        %s153 = scalar_select %p152, %s16, 1
        %p154 = scmp.lt.s32.totalorder %s151, 1
        %s155 = scalar_select %p154, %s151, 1
        %s156 = smul.addr %s155, 10
        %s157 = smul.addr %s153, 20
        %s158 = sadd.s32 %s156, %s157
        %s159 = smul.addr %s158, 4
        %s160 = scalar_lea.vmem %s0, %s159
        %s161 = smul.u32 2, %s17
      $region20: #{forward.9} parent=15 // pred_fallthru
        _
      // Predicated region
      $region21: #{forward.9} parent=15 // pred_check
        %p162 = pneg %p69
      $region22: #{forward.9} parent=15 // pred_check_branch
        %164 = sbr.rel (%p162) target = $region24
      $region23: #{forward.9} parent=15 // pred_region
        %p165 = scmp.lt.s32.totalorder %s16, 1
        %s166 = scalar_select %p165, %s16, 1
        %s167 = smul.addr %s166, 128
        %s168 = smul.addr %s167, 4
        %s169 = scalar_lea.vmem %s1, %s168
      $region24: #{forward.9} parent=15 // pred_fallthru
        _
      // Predicated region
      $region25: #{forward.9} parent=15 // pred_check
        %p170 = pneg %p95
      $region26: #{forward.9} parent=15 // pred_check_branch
        %172 = sbr.rel (%p170) target = $region28
      $region27: #{forward.9} parent=15 // pred_region
        %p173 = scmp.lt.s32.totalorder %s16, 1
        %s174 = scalar_select %p173, %s16, 1
        %s175 = scalar_lea.vmem %s2, %s174
      $region28: #{forward.9} parent=15 // pred_fallthru
        _
    $region16: #{forward.9} parent=5 // pred_fallthru
      _
    %p176 = scmp.le.s32.totalorder 1, %s9
    %p177 = scmp.lt.s32.totalorder %s9, 3
    %p178 = pnand %p176, %p177
    %p179 = pneg %p178
    // Predicated region
    $region29: #{forward.9} parent=5 // pred_check
      _
    $region30: #{forward.9} parent=5 // pred_check_branch
      %181 = sbr.rel (%p178) target = $region32
    $region31: #{forward.9} parent=5 // pred_region
      %s182 = ssub.s32 %s9, 1
      %s183 = smul.u32 2, %s19
      %p184 = scmp.lt.s32.totalorder %s18, 1
      %s185 = scalar_select %p184, %s18, 1
      %p186 = scmp.lt.s32.totalorder %s183, 1
      %s187 = scalar_select %p186, %s183, 1
      %s188 = smul.addr %s187, 10
      %s189 = smul.addr %s185, 20
      %s190 = sadd.s32 %s188, %s189
      %s191 = smul.addr %s190, 4
      %s192 = scalar_lea.vmem %s0, %s191
      %p193 = pneg %p49
      %p194 = pneg %p46
      %p195 = scmp.lt.s32.totalorder %s18, 1
      %s196 = scalar_select %p195, %s18, 1
      %s197 = smul.addr %s196, 128
      %s198 = smul.addr %s197, 4
      %s199 = scalar_lea.vmem %s1, %s198
      %p200 = pneg %p75
      %p201 = pneg %p72
      %p202 = scmp.lt.s32.totalorder %s18, 1
      %s203 = scalar_select %p202, %s18, 1
      %s204 = scalar_lea.vmem %s2, %s203
      %p205 = pneg %p101
      %p206 = pneg %p98
      %p207 = pneg %p129
      %p208 = pneg %p126
      %s209 = smul.u32 2, %s19
      %p210 = scmp.lt.s32.totalorder %s18, 1
      %s211 = scalar_select %p210, %s18, 1
      %p212 = scmp.lt.s32.totalorder %s209, 1
      %s213 = scalar_select %p212, %s209, 1
      %s214 = smul.addr %s213, 4
      %s215 = smul.addr %s211, 8
      %s216 = sadd.s32 %s214, %s215
      %s217 = smul.addr %s216, 2
      %s218 = scalar_lea.vmem %s3, %s217
      %s219 = smul.u32 2, %s19
      %p220 = scmp.lt.s32.totalorder %s18, 1
      %s221 = scalar_select %p220, %s18, 1
      %p222 = scmp.lt.s32.totalorder %s219, 1
      %s223 = scalar_select %p222, %s219, 1
      %s224 = smul.addr %s223, 10
      %s225 = smul.addr %s221, 20
      %s226 = sadd.s32 %s224, %s225
      %s227 = smul.addr %s226, 4
      %s228 = scalar_lea.vmem %s0, %s227
      %s229 = smul.u32 2, %s19
      %p230 = scmp.lt.s32.totalorder %s18, 1
      %s231 = scalar_select %p230, %s18, 1
      %s232 = smul.addr %s231, 128
      %s233 = smul.addr %s232, 4
      %s234 = scalar_lea.vmem %s1, %s233
      %p235 = scmp.lt.s32.totalorder %s18, 1
      %s236 = scalar_select %p235, %s18, 1
      %s237 = scalar_lea.vmem %s2, %s236
      %s238 = smul.u32 2, %s19
      %p239 = scmp.lt.s32.totalorder %s18, 1
      %s240 = scalar_select %p239, %s18, 1
      %p241 = scmp.lt.s32.totalorder %s238, 1
      %s242 = scalar_select %p241, %s238, 1
      %s243 = smul.addr %s242, 4
      %s244 = smul.addr %s240, 8
      %s245 = sadd.s32 %s243, %s244
      %s246 = smul.addr %s245, 2
      %s247 = scalar_lea.vmem %s3, %s246
      %s248 = smul.u32 2, %s19
      %v250 = vld [vmem:[%s228] sm:$0x33]
      %v251 = vld [vmem:[%s228 + $0x8] sm:$0x33]
      %v252 = vld [vmem:[%s228 + $0x10] sm:$0x33]
      %v253 = vld [vmem:[%s228 + $0x18] sm:$0x33]
      %v254 = vld [vmem:[%s228 + $0x28] sm:$0x33]
      %v255 = vld [vmem:[%s228 + $0x30] sm:$0x33]
      %v256 = vld [vmem:[%s228 + $0x38] sm:$0x33]
      %v257 = vld [vmem:[%s228 + $0x40] sm:$0x33]
      %v267 = vunpack.c.l.s4 1983009808
      %v268 = vunpack.c.0.s8 %v267
      %v269 = vlaneseq
      %v270 = vshrl.u32 %v269, 7
      %v271 = vsub.s32 %v268, %v270
      %v272 = vrot.slane %v250, %v271
      %v274 = vunpack.c.l.s4 1983009808
      %v275 = vunpack.c.0.s8 %v274
      %v276 = vlaneseq
      %v277 = vshrl.u32 %v276, 7
      %v278 = vsub.s32 %v275, %v277
      %v279 = vrot.slane %v251, %v278
      %v281 = vunpack.c.l.s4 1983009808
      %v282 = vunpack.c.0.s8 %v281
      %v283 = vlaneseq
      %v284 = vshrl.u32 %v283, 7
      %v285 = vsub.s32 %v282, %v284
      %v286 = vrot.slane %v252, %v285
      %v288 = vunpack.c.l.s4 1983009808
      %v289 = vunpack.c.0.s8 %v288
      %v290 = vlaneseq
      %v291 = vshrl.u32 %v290, 7
      %v292 = vsub.s32 %v289, %v291
      %v293 = vrot.slane %v253, %v292
      %v295 = vunpack.c.l.s4 1983009808
      %v296 = vunpack.c.0.s8 %v295
      %v297 = vlaneseq
      %v298 = vshrl.u32 %v297, 7
      %v299 = vsub.s32 %v296, %v298
      %v300 = vrot.slane %v254, %v299
      %v302 = vunpack.c.l.s4 1983009808
      %v303 = vunpack.c.0.s8 %v302
      %v304 = vlaneseq
      %v305 = vshrl.u32 %v304, 7
      %v306 = vsub.s32 %v303, %v305
      %v307 = vrot.slane %v255, %v306
      %v309 = vunpack.c.l.s4 1983009808
      %v310 = vunpack.c.0.s8 %v309
      %v311 = vlaneseq
      %v312 = vshrl.u32 %v311, 7
      %v313 = vsub.s32 %v310, %v312
      %v314 = vrot.slane %v256, %v313
      %v316 = vunpack.c.l.s4 1983009808
      %v317 = vunpack.c.0.s8 %v316
      %v318 = vlaneseq
      %v319 = vshrl.u32 %v318, 7
      %v320 = vsub.s32 %v317, %v319
      %v321 = vrot.slane %v257, %v320
      %v322 = vld [vmem:[%s234] sm:$0xf]
      %v323 = vld [vmem:[%s234 + $0x4] sm:$0xf]
      %v324 = vld [vmem:[%s234 + $0x8] sm:$0xf]
      %v325 = vld [vmem:[%s234 + $0xc] sm:$0xf]
      %v326 = vld [vmem:[%s234 + $0x10] sm:$0xf]
      %v327 = vld [vmem:[%s234 + $0x14] sm:$0xf]
      %v328 = vld [vmem:[%s234 + $0x18] sm:$0xf]
      %v329 = vld [vmem:[%s234 + $0x1c] sm:$0xf]
      %v330 = vld [vmem:[%s234 + $0x20] sm:$0xf]
      %v331 = vld [vmem:[%s234 + $0x24] sm:$0xf]
      %v332 = vld [vmem:[%s234 + $0x28] sm:$0xf]
      %v333 = vld [vmem:[%s234 + $0x2c] sm:$0xf]
      %v334 = vld [vmem:[%s234 + $0x30] sm:$0xf]
      %v335 = vld [vmem:[%s234 + $0x34] sm:$0xf]
      %v336 = vld [vmem:[%s234 + $0x38] sm:$0xf]
      %v337 = vld [vmem:[%s234 + $0x3c] sm:$0xf]
      %v338 = vld [vmem:[%s234 + $0x40] sm:$0xf]
      %v339 = vld [vmem:[%s234 + $0x44] sm:$0xf]
      %v340 = vld [vmem:[%s234 + $0x48] sm:$0xf]
      %v341 = vld [vmem:[%s234 + $0x4c] sm:$0xf]
      %v342 = vld [vmem:[%s234 + $0x50] sm:$0xf]
      %v343 = vld [vmem:[%s234 + $0x54] sm:$0xf]
      %v344 = vld [vmem:[%s234 + $0x58] sm:$0xf]
      %v345 = vld [vmem:[%s234 + $0x5c] sm:$0xf]
      %v346 = vld [vmem:[%s234 + $0x60] sm:$0xf]
      %v347 = vld [vmem:[%s234 + $0x64] sm:$0xf]
      %v348 = vld [vmem:[%s234 + $0x68] sm:$0xf]
      %v349 = vld [vmem:[%s234 + $0x6c] sm:$0xf]
      %v350 = vld [vmem:[%s234 + $0x70] sm:$0xf]
      %v351 = vld [vmem:[%s234 + $0x74] sm:$0xf]
      %v352 = vld [vmem:[%s234 + $0x78] sm:$0xf]
      %v353 = vld [vmem:[%s234 + $0x7c] sm:$0xf]
      %v354 = vld [vmem:[%s228] sm:$0x77]
      %v355 = vld [vmem:[%s228 + $0x8] sm:$0x77]
      %v356 = vld [vmem:[%s228 + $0x10] sm:$0x77]
      %v357 = vld [vmem:[%s228 + $0x18] sm:$0x77]
      %v358 = vld [vmem:[%s228 + $0x28] sm:$0x77]
      %v359 = vld [vmem:[%s228 + $0x30] sm:$0x77]
      %v360 = vld [vmem:[%s228 + $0x38] sm:$0x77]
      %v361 = vld [vmem:[%s228 + $0x40] sm:$0x77]
      %v371 = vunpack.c.l.s4 1983009808
      %v372 = vunpack.c.0.s8 %v371
      %v373 = vlaneseq
      %v374 = vshrl.u32 %v373, 7
      %v375 = vsub.s32 %v372, %v374
      %v376 = vrot.slane %v354, %v375
      %v377 = vcombine.high %v376, %v376
      %v379 = vunpack.c.l.s4 1983009808
      %v380 = vunpack.c.0.s8 %v379
      %v381 = vlaneseq
      %v382 = vshrl.u32 %v381, 7
      %v383 = vsub.s32 %v380, %v382
      %v384 = vrot.slane %v355, %v383
      %v385 = vcombine.high %v384, %v384
      %v387 = vunpack.c.l.s4 1983009808
      %v388 = vunpack.c.0.s8 %v387
      %v389 = vlaneseq
      %v390 = vshrl.u32 %v389, 7
      %v391 = vsub.s32 %v388, %v390
      %v392 = vrot.slane %v356, %v391
      %v393 = vcombine.high %v392, %v392
      %v395 = vunpack.c.l.s4 1983009808
      %v396 = vunpack.c.0.s8 %v395
      %v397 = vlaneseq
      %v398 = vshrl.u32 %v397, 7
      %v399 = vsub.s32 %v396, %v398
      %v400 = vrot.slane %v357, %v399
      %v401 = vcombine.high %v400, %v400
      %v403 = vunpack.c.l.s4 1983009808
      %v404 = vunpack.c.0.s8 %v403
      %v405 = vlaneseq
      %v406 = vshrl.u32 %v405, 7
      %v407 = vsub.s32 %v404, %v406
      %v408 = vrot.slane %v358, %v407
      %v409 = vcombine.high %v408, %v408
      %v411 = vunpack.c.l.s4 1983009808
      %v412 = vunpack.c.0.s8 %v411
      %v413 = vlaneseq
      %v414 = vshrl.u32 %v413, 7
      %v415 = vsub.s32 %v412, %v414
      %v416 = vrot.slane %v359, %v415
      %v417 = vcombine.high %v416, %v416
      %v419 = vunpack.c.l.s4 1983009808
      %v420 = vunpack.c.0.s8 %v419
      %v421 = vlaneseq
      %v422 = vshrl.u32 %v421, 7
      %v423 = vsub.s32 %v420, %v422
      %v424 = vrot.slane %v360, %v423
      %v425 = vcombine.high %v424, %v424
      %v427 = vunpack.c.l.s4 1983009808
      %v428 = vunpack.c.0.s8 %v427
      %v429 = vlaneseq
      %v430 = vshrl.u32 %v429, 7
      %v431 = vsub.s32 %v428, %v430
      %v432 = vrot.slane %v361, %v431
      %v433 = vcombine.high %v432, %v432
      %vm434 = vsmask.f32 1280
      %vm435 = vsmask.f32 3336
      %vm436 = vmor %vm434, %vm435
      %vm437 = vsmask.f32 5392
      %vm438 = vmor %vm436, %vm437
      %vm439 = vsmask.f32 7448
      %vm440 = vmor %vm438, %vm439
      %v442 = vshrl.u32 %v376, 16
      %v444 = vrot.slane %v442, 6
      %v445 = vshll.u32 %v376, 16
      %v447 = vrot.slane %v445, 7
      %v448 = vor.u32 %v444, %v447
      %v449 = vrot.slane %v448, 2
      %v451 = vshll.u32 %v377, 16
      %v453 = vrot.slane %v451, 7
      %v454 = vsel %vm440, %v449, %v453
      %v456 = vshrl.u32 %v384, 16
      %v458 = vrot.slane %v456, 6
      %v459 = vshll.u32 %v384, 16
      %v461 = vrot.slane %v459, 7
      %v462 = vor.u32 %v458, %v461
      %v463 = vrot.slane %v462, 2
      %v465 = vshll.u32 %v385, 16
      %v467 = vrot.slane %v465, 7
      %v468 = vsel %vm440, %v463, %v467
      %v470 = vshrl.u32 %v392, 16
      %v472 = vrot.slane %v470, 6
      %v473 = vshll.u32 %v392, 16
      %v475 = vrot.slane %v473, 7
      %v476 = vor.u32 %v472, %v475
      %v477 = vrot.slane %v476, 2
      %v479 = vshll.u32 %v393, 16
      %v481 = vrot.slane %v479, 7
      %v482 = vsel %vm440, %v477, %v481
      %v484 = vshrl.u32 %v400, 16
      %v486 = vrot.slane %v484, 6
      %v487 = vshll.u32 %v400, 16
      %v489 = vrot.slane %v487, 7
      %v490 = vor.u32 %v486, %v489
      %v491 = vrot.slane %v490, 2
      %v493 = vshll.u32 %v401, 16
      %v495 = vrot.slane %v493, 7
      %v496 = vsel %vm440, %v491, %v495
      %v498 = vshrl.u32 %v408, 16
      %v500 = vrot.slane %v498, 6
      %v501 = vshll.u32 %v408, 16
      %v503 = vrot.slane %v501, 7
      %v504 = vor.u32 %v500, %v503
      %v505 = vrot.slane %v504, 2
      %v507 = vshll.u32 %v409, 16
      %v509 = vrot.slane %v507, 7
      %v510 = vsel %vm440, %v505, %v509
      %v512 = vshrl.u32 %v416, 16
      %v514 = vrot.slane %v512, 6
      %v515 = vshll.u32 %v416, 16
      %v517 = vrot.slane %v515, 7
      %v518 = vor.u32 %v514, %v517
      %v519 = vrot.slane %v518, 2
      %v521 = vshll.u32 %v417, 16
      %v523 = vrot.slane %v521, 7
      %v524 = vsel %vm440, %v519, %v523
      %v526 = vshrl.u32 %v424, 16
      %v528 = vrot.slane %v526, 6
      %v529 = vshll.u32 %v424, 16
      %v531 = vrot.slane %v529, 7
      %v532 = vor.u32 %v528, %v531
      %v533 = vrot.slane %v532, 2
      %v535 = vshll.u32 %v425, 16
      %v537 = vrot.slane %v535, 7
      %v538 = vsel %vm440, %v533, %v537
      %v540 = vshrl.u32 %v432, 16
      %v542 = vrot.slane %v540, 6
      %v543 = vshll.u32 %v432, 16
      %v545 = vrot.slane %v543, 7
      %v546 = vor.u32 %v542, %v545
      %v547 = vrot.slane %v546, 2
      %v549 = vshll.u32 %v433, 16
      %v551 = vrot.slane %v549, 7
      %v552 = vsel %vm440, %v547, %v551
      %s553 = scalar_lea.vmem %s234, 128
      %v554 = vld [vmem:[%s553] sm:$0xf]
      %v555 = vld [vmem:[%s553 + $0x4] sm:$0xf]
      %v556 = vld [vmem:[%s553 + $0x8] sm:$0xf]
      %v557 = vld [vmem:[%s553 + $0xc] sm:$0xf]
      %v558 = vld [vmem:[%s553 + $0x10] sm:$0xf]
      %v559 = vld [vmem:[%s553 + $0x14] sm:$0xf]
      %v560 = vld [vmem:[%s553 + $0x18] sm:$0xf]
      %v561 = vld [vmem:[%s553 + $0x1c] sm:$0xf]
      %v562 = vld [vmem:[%s553 + $0x20] sm:$0xf]
      %v563 = vld [vmem:[%s553 + $0x24] sm:$0xf]
      %v564 = vld [vmem:[%s553 + $0x28] sm:$0xf]
      %v565 = vld [vmem:[%s553 + $0x2c] sm:$0xf]
      %v566 = vld [vmem:[%s553 + $0x30] sm:$0xf]
      %v567 = vld [vmem:[%s553 + $0x34] sm:$0xf]
      %v568 = vld [vmem:[%s553 + $0x38] sm:$0xf]
      %v569 = vld [vmem:[%s553 + $0x3c] sm:$0xf]
      %v570 = vld [vmem:[%s553 + $0x40] sm:$0xf]
      %v571 = vld [vmem:[%s553 + $0x44] sm:$0xf]
      %v572 = vld [vmem:[%s553 + $0x48] sm:$0xf]
      %v573 = vld [vmem:[%s553 + $0x4c] sm:$0xf]
      %v574 = vld [vmem:[%s553 + $0x50] sm:$0xf]
      %v575 = vld [vmem:[%s553 + $0x54] sm:$0xf]
      %v576 = vld [vmem:[%s553 + $0x58] sm:$0xf]
      %v577 = vld [vmem:[%s553 + $0x5c] sm:$0xf]
      %v578 = vld [vmem:[%s553 + $0x60] sm:$0xf]
      %v579 = vld [vmem:[%s553 + $0x64] sm:$0xf]
      %v580 = vld [vmem:[%s553 + $0x68] sm:$0xf]
      %v581 = vld [vmem:[%s553 + $0x6c] sm:$0xf]
      %v582 = vld [vmem:[%s553 + $0x70] sm:$0xf]
      %v583 = vld [vmem:[%s553 + $0x74] sm:$0xf]
      %v584 = vld [vmem:[%s553 + $0x78] sm:$0xf]
      %v585 = vld [vmem:[%s553 + $0x7c] sm:$0xf]
      %v586 = vcombine.low %v454, %v468
      %v587 = vcombine.low %v482, %v496
      %v589 = vunpack.c.l.s4 1983009808
      %v590 = vunpack.c.0.s8 %v589
      %v591 = vlaneseq
      %v592 = vshrl.u32 %v591, 7
      %v593 = vsub.s32 %v590, %v592
      %v594 = vrot.slane %v586, %v593
      %v596 = vunpack.c.l.s4 1983009808
      %v597 = vunpack.c.0.s8 %v596
      %v598 = vlaneseq
      %v599 = vshrl.u32 %v598, 7
      %v600 = vsub.s32 %v597, %v599
      %v601 = vrot.slane %v587, %v600
      %v602 = vcombine.low %v594, %v601
      %v603 = vcombine.high %v594, %v601
      %v604 = vcombine.low %v510, %v524
      %v605 = vcombine.low %v538, %v552
      %v607 = vunpack.c.l.s4 1983009808
      %v608 = vunpack.c.0.s8 %v607
      %v609 = vlaneseq
      %v610 = vshrl.u32 %v609, 7
      %v611 = vsub.s32 %v608, %v610
      %v612 = vrot.slane %v604, %v611
      %v614 = vunpack.c.l.s4 1983009808
      %v615 = vunpack.c.0.s8 %v614
      %v616 = vlaneseq
      %v617 = vshrl.u32 %v616, 7
      %v618 = vsub.s32 %v615, %v617
      %v619 = vrot.slane %v605, %v618
      %v620 = vcombine.low %v612, %v619
      %v621 = vcombine.high %v612, %v619
      %v658 = vunpack.c.l.b16 %v554
      %v659 = vunpack.c.l.b16 %v555
      %v660 = vunpack.c.l.b16 %v556
      %v661 = vunpack.c.l.b16 %v557
      %v662 = vunpack.c.l.b16 %v558
      %v663 = vunpack.c.l.b16 %v559
      %v664 = vunpack.c.l.b16 %v560
      %v665 = vunpack.c.l.b16 %v561
      %v666 = vunpack.c.l.b16 %v562
      %v667 = vunpack.c.l.b16 %v563
      %v668 = vunpack.c.l.b16 %v564
      %v669 = vunpack.c.l.b16 %v565
      %v670 = vunpack.c.l.b16 %v566
      %v671 = vunpack.c.l.b16 %v567
      %v672 = vunpack.c.l.b16 %v568
      %v673 = vunpack.c.l.b16 %v569
      %v674 = vunpack.c.l.b16 %v570
      %v675 = vunpack.c.l.b16 %v571
      %v676 = vunpack.c.l.b16 %v572
      %v677 = vunpack.c.l.b16 %v573
      %v678 = vunpack.c.l.b16 %v574
      %v679 = vunpack.c.l.b16 %v575
      %v680 = vunpack.c.l.b16 %v576
      %v681 = vunpack.c.l.b16 %v577
      %v682 = vunpack.c.l.b16 %v578
      %v683 = vunpack.c.l.b16 %v579
      %v684 = vunpack.c.l.b16 %v580
      %v685 = vunpack.c.l.b16 %v581
      %v686 = vunpack.c.l.b16 %v582
      %v687 = vunpack.c.l.b16 %v583
      %v688 = vunpack.c.l.b16 %v584
      %v689 = vunpack.c.l.b16 %v585
      %v690 = vpack.c.b16 %v659, %v658
      %v691 = vpack.c.b16 %v661, %v660
      %v692 = vpack.c.b16 %v663, %v662
      %v693 = vpack.c.b16 %v665, %v664
      %v694 = vpack.c.b16 %v667, %v666
      %v695 = vpack.c.b16 %v669, %v668
      %v696 = vpack.c.b16 %v671, %v670
      %v697 = vpack.c.b16 %v673, %v672
      %v698 = vpack.c.b16 %v675, %v674
      %v699 = vpack.c.b16 %v677, %v676
      %v700 = vpack.c.b16 %v679, %v678
      %v701 = vpack.c.b16 %v681, %v680
      %v702 = vpack.c.b16 %v683, %v682
      %v703 = vpack.c.b16 %v685, %v684
      %v704 = vpack.c.b16 %v687, %v686
      %v705 = vpack.c.b16 %v689, %v688
      %722 = vmatprep.subr.bf16.mxu0 0
      %723 = vmatpush1.bf16.msra.mxu0 %v690
      %724 = vmatprep.subr.bf16.mxu0 0
      %725 = vmatpush1.bf16.msra.mxu0 %v691
      %726 = vmatprep.subr.bf16.mxu0 0
      %727 = vmatpush1.bf16.msra.mxu0 %v692
      %728 = vmatprep.subr.bf16.mxu0 0
      %729 = vmatpush1.bf16.msra.mxu0 %v693
      %730 = vmatprep.subr.bf16.mxu0 0
      %731 = vmatpush1.bf16.msra.mxu0 %v694
      %732 = vmatprep.subr.bf16.mxu0 0
      %733 = vmatpush1.bf16.msra.mxu0 %v695
      %734 = vmatprep.subr.bf16.mxu0 0
      %735 = vmatpush1.bf16.msra.mxu0 %v696
      %736 = vmatprep.subr.bf16.mxu0 0
      %737 = vmatpush1.bf16.msra.mxu0 %v697
      %738 = vmatprep.subr.bf16.mxu0 0
      %739 = vmatpush1.bf16.msra.mxu0 %v698
      %740 = vmatprep.subr.bf16.mxu0 0
      %741 = vmatpush1.bf16.msra.mxu0 %v699
      %742 = vmatprep.subr.bf16.mxu0 0
      %743 = vmatpush1.bf16.msra.mxu0 %v700
      %744 = vmatprep.subr.bf16.mxu0 0
      %745 = vmatpush1.bf16.msra.mxu0 %v701
      %746 = vmatprep.subr.bf16.mxu0 0
      %747 = vmatpush1.bf16.msra.mxu0 %v702
      %748 = vmatprep.subr.bf16.mxu0 0
      %749 = vmatpush1.bf16.msra.mxu0 %v703
      %750 = vmatprep.subr.bf16.mxu0 0
      %751 = vmatpush1.bf16.msra.mxu0 %v704
      %752 = vmatprep.subr.bf16.mxu0 0
      %753 = vmatpush1.bf16.msra.mxu0 %v705
      %754 = vmatprep.mubr.bf16.mxu0 %v603
      %755 = vmatmul.mubr.bf16.gmra.mrb[0].mxu0 %v602
      %v756 = vpop.f32.mrb[0].mxu0
      %v757 = vadd.f32 0.0, %v756
      %v758 = vpop.f32.mrb[0].mxu0
      %v759 = vpop.f32.mrb[0].mxu0
      %v760 = vadd.f32 0.0, %v759
      %v761 = vpop.f32.mrb[0].mxu0
      %762 = vmatprep.mubr.bf16.mxu0 %v621
      %763 = vmatmul.mubr.bf16.gmra.mrb[0].mxu0 %v620
      %v764 = vpop.f32.mrb[0].mxu0
      %v765 = vadd.f32 0.0, %v764
      %v766 = vpop.f32.mrb[0].mxu0
      %v767 = vpop.f32.mrb[0].mxu0
      %v768 = vadd.f32 0.0, %v767
      %v769 = vpop.f32.mrb[0].mxu0
      %770 = vdwg.mxu0
      %v771 = vcombine.low %v272, %v279
      %v772 = vcombine.low %v286, %v293
      %v774 = vunpack.c.l.s4 1983009808
      %v775 = vunpack.c.0.s8 %v774
      %v776 = vlaneseq
      %v777 = vshrl.u32 %v776, 7
      %v778 = vsub.s32 %v775, %v777
      %v779 = vrot.slane %v771, %v778
      %v781 = vunpack.c.l.s4 1983009808
      %v782 = vunpack.c.0.s8 %v781
      %v783 = vlaneseq
      %v784 = vshrl.u32 %v783, 7
      %v785 = vsub.s32 %v782, %v784
      %v786 = vrot.slane %v772, %v785
      %v787 = vcombine.low %v779, %v786
      %v788 = vcombine.high %v779, %v786
      %v789 = vcombine.low %v300, %v307
      %v790 = vcombine.low %v314, %v321
      %v792 = vunpack.c.l.s4 1983009808
      %v793 = vunpack.c.0.s8 %v792
      %v794 = vlaneseq
      %v795 = vshrl.u32 %v794, 7
      %v796 = vsub.s32 %v793, %v795
      %v797 = vrot.slane %v789, %v796
      %v799 = vunpack.c.l.s4 1983009808
      %v800 = vunpack.c.0.s8 %v799
      %v801 = vlaneseq
      %v802 = vshrl.u32 %v801, 7
      %v803 = vsub.s32 %v800, %v802
      %v804 = vrot.slane %v790, %v803
      %v805 = vcombine.low %v797, %v804
      %v806 = vcombine.high %v797, %v804
      %v843 = vunpack.c.l.b16 %v322
      %v844 = vunpack.c.l.b16 %v323
      %v845 = vunpack.c.l.b16 %v324
      %v846 = vunpack.c.l.b16 %v325
      %v847 = vunpack.c.l.b16 %v326
      %v848 = vunpack.c.l.b16 %v327
      %v849 = vunpack.c.l.b16 %v328
      %v850 = vunpack.c.l.b16 %v329
      %v851 = vunpack.c.l.b16 %v330
      %v852 = vunpack.c.l.b16 %v331
      %v853 = vunpack.c.l.b16 %v332
      %v854 = vunpack.c.l.b16 %v333
      %v855 = vunpack.c.l.b16 %v334
      %v856 = vunpack.c.l.b16 %v335
      %v857 = vunpack.c.l.b16 %v336
      %v858 = vunpack.c.l.b16 %v337
      %v859 = vunpack.c.l.b16 %v338
      %v860 = vunpack.c.l.b16 %v339
      %v861 = vunpack.c.l.b16 %v340
      %v862 = vunpack.c.l.b16 %v341
      %v863 = vunpack.c.l.b16 %v342
      %v864 = vunpack.c.l.b16 %v343
      %v865 = vunpack.c.l.b16 %v344
      %v866 = vunpack.c.l.b16 %v345
      %v867 = vunpack.c.l.b16 %v346
      %v868 = vunpack.c.l.b16 %v347
      %v869 = vunpack.c.l.b16 %v348
      %v870 = vunpack.c.l.b16 %v349
      %v871 = vunpack.c.l.b16 %v350
      %v872 = vunpack.c.l.b16 %v351
      %v873 = vunpack.c.l.b16 %v352
      %v874 = vunpack.c.l.b16 %v353
      %v875 = vpack.c.b16 %v844, %v843
      %v876 = vpack.c.b16 %v846, %v845
      %v877 = vpack.c.b16 %v848, %v847
      %v878 = vpack.c.b16 %v850, %v849
      %v879 = vpack.c.b16 %v852, %v851
      %v880 = vpack.c.b16 %v854, %v853
      %v881 = vpack.c.b16 %v856, %v855
      %v882 = vpack.c.b16 %v858, %v857
      %v883 = vpack.c.b16 %v860, %v859
      %v884 = vpack.c.b16 %v862, %v861
      %v885 = vpack.c.b16 %v864, %v863
      %v886 = vpack.c.b16 %v866, %v865
      %v887 = vpack.c.b16 %v868, %v867
      %v888 = vpack.c.b16 %v870, %v869
      %v889 = vpack.c.b16 %v872, %v871
      %v890 = vpack.c.b16 %v874, %v873
      %907 = vmatprep.subr.bf16.mxu0 0
      %908 = vmatpush1.bf16.msra.mxu0 %v875
      %909 = vmatprep.subr.bf16.mxu0 0
      %910 = vmatpush1.bf16.msra.mxu0 %v876
      %911 = vmatprep.subr.bf16.mxu0 0
      %912 = vmatpush1.bf16.msra.mxu0 %v877
      %913 = vmatprep.subr.bf16.mxu0 0
      %914 = vmatpush1.bf16.msra.mxu0 %v878
      %915 = vmatprep.subr.bf16.mxu0 0
      %916 = vmatpush1.bf16.msra.mxu0 %v879
      %917 = vmatprep.subr.bf16.mxu0 0
      %918 = vmatpush1.bf16.msra.mxu0 %v880
      %919 = vmatprep.subr.bf16.mxu0 0
      %920 = vmatpush1.bf16.msra.mxu0 %v881
      %921 = vmatprep.subr.bf16.mxu0 0
      %922 = vmatpush1.bf16.msra.mxu0 %v882
      %923 = vmatprep.subr.bf16.mxu0 0
      %924 = vmatpush1.bf16.msra.mxu0 %v883
      %925 = vmatprep.subr.bf16.mxu0 0
      %926 = vmatpush1.bf16.msra.mxu0 %v884
      %927 = vmatprep.subr.bf16.mxu0 0
      %928 = vmatpush1.bf16.msra.mxu0 %v885
      %929 = vmatprep.subr.bf16.mxu0 0
      %930 = vmatpush1.bf16.msra.mxu0 %v886
      %931 = vmatprep.subr.bf16.mxu0 0
      %932 = vmatpush1.bf16.msra.mxu0 %v887
      %933 = vmatprep.subr.bf16.mxu0 0
      %934 = vmatpush1.bf16.msra.mxu0 %v888
      %935 = vmatprep.subr.bf16.mxu0 0
      %936 = vmatpush1.bf16.msra.mxu0 %v889
      %937 = vmatprep.subr.bf16.mxu0 0
      %938 = vmatpush1.bf16.msra.mxu0 %v890
      %939 = vmatprep.mubr.bf16.mxu0 %v788
      %940 = vmatmul.mubr.bf16.gmra.mrb[0].mxu0 %v787
      %v941 = vpop.f32.mrb[0].mxu0
      %v942 = vadd.f32 %v757, %v941
      %v943 = vpop.f32.mrb[0].mxu0
      %v944 = vpop.f32.mrb[0].mxu0
      %v945 = vadd.f32 %v760, %v944
      %v946 = vpop.f32.mrb[0].mxu0
      %947 = vmatprep.mubr.bf16.mxu0 %v806
      %948 = vmatmul.mubr.bf16.gmra.mrb[0].mxu0 %v805
      %v949 = vpop.f32.mrb[0].mxu0
      %v950 = vadd.f32 %v765, %v949
      %v951 = vpop.f32.mrb[0].mxu0
      %v952 = vpop.f32.mrb[0].mxu0
      %v953 = vadd.f32 %v768, %v952
      %v954 = vpop.f32.mrb[0].mxu0
      %955 = vdwg.mxu0
      %s956 = scalar_lea.vmem %s228, 8
      %v957 = vld [vmem:[%s956] sm:$0x33]
      %v958 = vld [vmem:[%s956 + $0x8] sm:$0x33]
      %v959 = vld [vmem:[%s956 + $0x10] sm:$0x33]
      %v960 = vld [vmem:[%s956 + $0x18] sm:$0x33]
      %v961 = vld [vmem:[%s956 + $0x28] sm:$0x33]
      %v962 = vld [vmem:[%s956 + $0x30] sm:$0x33]
      %v963 = vld [vmem:[%s956 + $0x38] sm:$0x33]
      %v964 = vld [vmem:[%s956 + $0x40] sm:$0x33]
      %v974 = vunpack.c.l.s4 1983009808
      %v975 = vunpack.c.0.s8 %v974
      %v976 = vlaneseq
      %v977 = vshrl.u32 %v976, 7
      %v978 = vsub.s32 %v975, %v977
      %v979 = vrot.slane %v957, %v978
      %v981 = vunpack.c.l.s4 1983009808
      %v982 = vunpack.c.0.s8 %v981
      %v983 = vlaneseq
      %v984 = vshrl.u32 %v983, 7
      %v985 = vsub.s32 %v982, %v984
      %v986 = vrot.slane %v958, %v985
      %v988 = vunpack.c.l.s4 1983009808
      %v989 = vunpack.c.0.s8 %v988
      %v990 = vlaneseq
      %v991 = vshrl.u32 %v990, 7
      %v992 = vsub.s32 %v989, %v991
      %v993 = vrot.slane %v959, %v992
      %v995 = vunpack.c.l.s4 1983009808
      %v996 = vunpack.c.0.s8 %v995
      %v997 = vlaneseq
      %v998 = vshrl.u32 %v997, 7
      %v999 = vsub.s32 %v996, %v998
      %v1000 = vrot.slane %v960, %v999
      %v1002 = vunpack.c.l.s4 1983009808
      %v1003 = vunpack.c.0.s8 %v1002
      %v1004 = vlaneseq
      %v1005 = vshrl.u32 %v1004, 7
      %v1006 = vsub.s32 %v1003, %v1005
      %v1007 = vrot.slane %v961, %v1006
      %v1009 = vunpack.c.l.s4 1983009808
      %v1010 = vunpack.c.0.s8 %v1009
      %v1011 = vlaneseq
      %v1012 = vshrl.u32 %v1011, 7
      %v1013 = vsub.s32 %v1010, %v1012
      %v1014 = vrot.slane %v962, %v1013
      %v1016 = vunpack.c.l.s4 1983009808
      %v1017 = vunpack.c.0.s8 %v1016
      %v1018 = vlaneseq
      %v1019 = vshrl.u32 %v1018, 7
      %v1020 = vsub.s32 %v1017, %v1019
      %v1021 = vrot.slane %v963, %v1020
      %v1023 = vunpack.c.l.s4 1983009808
      %v1024 = vunpack.c.0.s8 %v1023
      %v1025 = vlaneseq
      %v1026 = vshrl.u32 %v1025, 7
      %v1027 = vsub.s32 %v1024, %v1026
      %v1028 = vrot.slane %v964, %v1027
      %s1029 = scalar_lea.vmem %s234, 256
      %v1030 = vld [vmem:[%s1029] sm:$0xf]
      %v1031 = vld [vmem:[%s1029 + $0x4] sm:$0xf]
      %v1032 = vld [vmem:[%s1029 + $0x8] sm:$0xf]
      %v1033 = vld [vmem:[%s1029 + $0xc] sm:$0xf]
      %v1034 = vld [vmem:[%s1029 + $0x10] sm:$0xf]
      %v1035 = vld [vmem:[%s1029 + $0x14] sm:$0xf]
      %v1036 = vld [vmem:[%s1029 + $0x18] sm:$0xf]
      %v1037 = vld [vmem:[%s1029 + $0x1c] sm:$0xf]
      %v1038 = vld [vmem:[%s1029 + $0x20] sm:$0xf]
      %v1039 = vld [vmem:[%s1029 + $0x24] sm:$0xf]
      %v1040 = vld [vmem:[%s1029 + $0x28] sm:$0xf]
      %v1041 = vld [vmem:[%s1029 + $0x2c] sm:$0xf]
      %v1042 = vld [vmem:[%s1029 + $0x30] sm:$0xf]
      %v1043 = vld [vmem:[%s1029 + $0x34] sm:$0xf]
      %v1044 = vld [vmem:[%s1029 + $0x38] sm:$0xf]
      %v1045 = vld [vmem:[%s1029 + $0x3c] sm:$0xf]
      %v1046 = vld [vmem:[%s1029 + $0x40] sm:$0xf]
      %v1047 = vld [vmem:[%s1029 + $0x44] sm:$0xf]
      %v1048 = vld [vmem:[%s1029 + $0x48] sm:$0xf]
      %v1049 = vld [vmem:[%s1029 + $0x4c] sm:$0xf]
      %v1050 = vld [vmem:[%s1029 + $0x50] sm:$0xf]
      %v1051 = vld [vmem:[%s1029 + $0x54] sm:$0xf]
      %v1052 = vld [vmem:[%s1029 + $0x58] sm:$0xf]
      %v1053 = vld [vmem:[%s1029 + $0x5c] sm:$0xf]
      %v1054 = vld [vmem:[%s1029 + $0x60] sm:$0xf]
      %v1055 = vld [vmem:[%s1029 + $0x64] sm:$0xf]
      %v1056 = vld [vmem:[%s1029 + $0x68] sm:$0xf]
      %v1057 = vld [vmem:[%s1029 + $0x6c] sm:$0xf]
      %v1058 = vld [vmem:[%s1029 + $0x70] sm:$0xf]
      %v1059 = vld [vmem:[%s1029 + $0x74] sm:$0xf]
      %v1060 = vld [vmem:[%s1029 + $0x78] sm:$0xf]
      %v1061 = vld [vmem:[%s1029 + $0x7c] sm:$0xf]
      %v1062 = vcombine.low %v979, %v986
      %v1063 = vcombine.low %v993, %v1000
      %v1065 = vunpack.c.l.s4 1983009808
      %v1066 = vunpack.c.0.s8 %v1065
      %v1067 = vlaneseq
      %v1068 = vshrl.u32 %v1067, 7
      %v1069 = vsub.s32 %v1066, %v1068
      %v1070 = vrot.slane %v1062, %v1069
      %v1072 = vunpack.c.l.s4 1983009808
      %v1073 = vunpack.c.0.s8 %v1072
      %v1074 = vlaneseq
      %v1075 = vshrl.u32 %v1074, 7
      %v1076 = vsub.s32 %v1073, %v1075
      %v1077 = vrot.slane %v1063, %v1076
      %v1078 = vcombine.low %v1070, %v1077
      %v1079 = vcombine.high %v1070, %v1077
      %v1080 = vcombine.low %v1007, %v1014
      %v1081 = vcombine.low %v1021, %v1028
      %v1083 = vunpack.c.l.s4 1983009808
      %v1084 = vunpack.c.0.s8 %v1083
      %v1085 = vlaneseq
      %v1086 = vshrl.u32 %v1085, 7
      %v1087 = vsub.s32 %v1084, %v1086
      %v1088 = vrot.slane %v1080, %v1087
      %v1090 = vunpack.c.l.s4 1983009808
      %v1091 = vunpack.c.0.s8 %v1090
      %v1092 = vlaneseq
      %v1093 = vshrl.u32 %v1092, 7
      %v1094 = vsub.s32 %v1091, %v1093
      %v1095 = vrot.slane %v1081, %v1094
      %v1096 = vcombine.low %v1088, %v1095
      %v1097 = vcombine.high %v1088, %v1095
      %v1134 = vunpack.c.l.b16 %v1030
      %v1135 = vunpack.c.l.b16 %v1031
      %v1136 = vunpack.c.l.b16 %v1032
      %v1137 = vunpack.c.l.b16 %v1033
      %v1138 = vunpack.c.l.b16 %v1034
      %v1139 = vunpack.c.l.b16 %v1035
      %v1140 = vunpack.c.l.b16 %v1036
      %v1141 = vunpack.c.l.b16 %v1037
      %v1142 = vunpack.c.l.b16 %v1038
      %v1143 = vunpack.c.l.b16 %v1039
      %v1144 = vunpack.c.l.b16 %v1040
      %v1145 = vunpack.c.l.b16 %v1041
      %v1146 = vunpack.c.l.b16 %v1042
      %v1147 = vunpack.c.l.b16 %v1043
      %v1148 = vunpack.c.l.b16 %v1044
      %v1149 = vunpack.c.l.b16 %v1045
      %v1150 = vunpack.c.l.b16 %v1046
      %v1151 = vunpack.c.l.b16 %v1047
      %v1152 = vunpack.c.l.b16 %v1048
      %v1153 = vunpack.c.l.b16 %v1049
      %v1154 = vunpack.c.l.b16 %v1050
      %v1155 = vunpack.c.l.b16 %v1051
      %v1156 = vunpack.c.l.b16 %v1052
      %v1157 = vunpack.c.l.b16 %v1053
      %v1158 = vunpack.c.l.b16 %v1054
      %v1159 = vunpack.c.l.b16 %v1055
      %v1160 = vunpack.c.l.b16 %v1056
      %v1161 = vunpack.c.l.b16 %v1057
      %v1162 = vunpack.c.l.b16 %v1058
      %v1163 = vunpack.c.l.b16 %v1059
      %v1164 = vunpack.c.l.b16 %v1060
      %v1165 = vunpack.c.l.b16 %v1061
      %v1166 = vpack.c.b16 %v1135, %v1134
      %v1167 = vpack.c.b16 %v1137, %v1136
      %v1168 = vpack.c.b16 %v1139, %v1138
      %v1169 = vpack.c.b16 %v1141, %v1140
      %v1170 = vpack.c.b16 %v1143, %v1142
      %v1171 = vpack.c.b16 %v1145, %v1144
      %v1172 = vpack.c.b16 %v1147, %v1146
      %v1173 = vpack.c.b16 %v1149, %v1148
      %v1174 = vpack.c.b16 %v1151, %v1150
      %v1175 = vpack.c.b16 %v1153, %v1152
      %v1176 = vpack.c.b16 %v1155, %v1154
      %v1177 = vpack.c.b16 %v1157, %v1156
      %v1178 = vpack.c.b16 %v1159, %v1158
      %v1179 = vpack.c.b16 %v1161, %v1160
      %v1180 = vpack.c.b16 %v1163, %v1162
      %v1181 = vpack.c.b16 %v1165, %v1164
      %1198 = vmatprep.subr.bf16.mxu0 0
      %1199 = vmatpush1.bf16.msra.mxu0 %v1166
      %1200 = vmatprep.subr.bf16.mxu0 0
      %1201 = vmatpush1.bf16.msra.mxu0 %v1167
      %1202 = vmatprep.subr.bf16.mxu0 0
      %1203 = vmatpush1.bf16.msra.mxu0 %v1168
      %1204 = vmatprep.subr.bf16.mxu0 0
      %1205 = vmatpush1.bf16.msra.mxu0 %v1169
      %1206 = vmatprep.subr.bf16.mxu0 0
      %1207 = vmatpush1.bf16.msra.mxu0 %v1170
      %1208 = vmatprep.subr.bf16.mxu0 0
      %1209 = vmatpush1.bf16.msra.mxu0 %v1171
      %1210 = vmatprep.subr.bf16.mxu0 0
      %1211 = vmatpush1.bf16.msra.mxu0 %v1172
      %1212 = vmatprep.subr.bf16.mxu0 0
      %1213 = vmatpush1.bf16.msra.mxu0 %v1173
      %1214 = vmatprep.subr.bf16.mxu0 0
      %1215 = vmatpush1.bf16.msra.mxu0 %v1174
      %1216 = vmatprep.subr.bf16.mxu0 0
      %1217 = vmatpush1.bf16.msra.mxu0 %v1175
      %1218 = vmatprep.subr.bf16.mxu0 0
      %1219 = vmatpush1.bf16.msra.mxu0 %v1176
      %1220 = vmatprep.subr.bf16.mxu0 0
      %1221 = vmatpush1.bf16.msra.mxu0 %v1177
      %1222 = vmatprep.subr.bf16.mxu0 0
      %1223 = vmatpush1.bf16.msra.mxu0 %v1178
      %1224 = vmatprep.subr.bf16.mxu0 0
      %1225 = vmatpush1.bf16.msra.mxu0 %v1179
      %1226 = vmatprep.subr.bf16.mxu0 0
      %1227 = vmatpush1.bf16.msra.mxu0 %v1180
      %1228 = vmatprep.subr.bf16.mxu0 0
      %1229 = vmatpush1.bf16.msra.mxu0 %v1181
      %1230 = vmatprep.mubr.bf16.mxu0 %v1079
      %1231 = vmatmul.mubr.bf16.gmra.mrb[0].mxu0 %v1078
      %v1232 = vpop.f32.mrb[0].mxu0
      %v1233 = vadd.f32 0.0, %v1232
      %v1234 = vpop.f32.mrb[0].mxu0
      %v1235 = vpop.f32.mrb[0].mxu0
      %v1236 = vadd.f32 0.0, %v1235
      %v1237 = vpop.f32.mrb[0].mxu0
      %1238 = vmatprep.mubr.bf16.mxu0 %v1097
      %1239 = vmatmul.mubr.bf16.gmra.mrb[0].mxu0 %v1096
      %v1240 = vpop.f32.mrb[0].mxu0
      %v1241 = vadd.f32 0.0, %v1240
      %v1242 = vpop.f32.mrb[0].mxu0
      %v1243 = vpop.f32.mrb[0].mxu0
      %v1244 = vadd.f32 0.0, %v1243
      %v1245 = vpop.f32.mrb[0].mxu0
      %1246 = vdwg.mxu0
      %v1247 = vadd.f32 %v942, %v1233
      %v1248 = vadd.f32 %v945, %v1236
      %v1249 = vadd.f32 %v950, %v1241
      %v1250 = vadd.f32 %v953, %v1244
      %v1251 = vld [vmem:[%s956] sm:$0x77]
      %v1252 = vld [vmem:[%s956 + $0x8] sm:$0x77]
      %v1253 = vld [vmem:[%s956 + $0x10] sm:$0x77]
      %v1254 = vld [vmem:[%s956 + $0x18] sm:$0x77]
      %v1255 = vld [vmem:[%s956 + $0x28] sm:$0x77]
      %v1256 = vld [vmem:[%s956 + $0x30] sm:$0x77]
      %v1257 = vld [vmem:[%s956 + $0x38] sm:$0x77]
      %v1258 = vld [vmem:[%s956 + $0x40] sm:$0x77]
      %v1268 = vunpack.c.l.s4 1983009808
      %v1269 = vunpack.c.0.s8 %v1268
      %v1270 = vlaneseq
      %v1271 = vshrl.u32 %v1270, 7
      %v1272 = vsub.s32 %v1269, %v1271
      %v1273 = vrot.slane %v1251, %v1272
      %v1274 = vcombine.high %v1273, %v1273
      %v1276 = vunpack.c.l.s4 1983009808
      %v1277 = vunpack.c.0.s8 %v1276
      %v1278 = vlaneseq
      %v1279 = vshrl.u32 %v1278, 7
      %v1280 = vsub.s32 %v1277, %v1279
      %v1281 = vrot.slane %v1252, %v1280
      %v1282 = vcombine.high %v1281, %v1281
      %v1284 = vunpack.c.l.s4 1983009808
      %v1285 = vunpack.c.0.s8 %v1284
      %v1286 = vlaneseq
      %v1287 = vshrl.u32 %v1286, 7
      %v1288 = vsub.s32 %v1285, %v1287
      %v1289 = vrot.slane %v1253, %v1288
      %v1290 = vcombine.high %v1289, %v1289
      %v1292 = vunpack.c.l.s4 1983009808
      %v1293 = vunpack.c.0.s8 %v1292
      %v1294 = vlaneseq
      %v1295 = vshrl.u32 %v1294, 7
      %v1296 = vsub.s32 %v1293, %v1295
      %v1297 = vrot.slane %v1254, %v1296
      %v1298 = vcombine.high %v1297, %v1297
      %v1300 = vunpack.c.l.s4 1983009808
      %v1301 = vunpack.c.0.s8 %v1300
      %v1302 = vlaneseq
      %v1303 = vshrl.u32 %v1302, 7
      %v1304 = vsub.s32 %v1301, %v1303
      %v1305 = vrot.slane %v1255, %v1304
      %v1306 = vcombine.high %v1305, %v1305
      %v1308 = vunpack.c.l.s4 1983009808
      %v1309 = vunpack.c.0.s8 %v1308
      %v1310 = vlaneseq
      %v1311 = vshrl.u32 %v1310, 7
      %v1312 = vsub.s32 %v1309, %v1311
      %v1313 = vrot.slane %v1256, %v1312
      %v1314 = vcombine.high %v1313, %v1313
      %v1316 = vunpack.c.l.s4 1983009808
      %v1317 = vunpack.c.0.s8 %v1316
      %v1318 = vlaneseq
      %v1319 = vshrl.u32 %v1318, 7
      %v1320 = vsub.s32 %v1317, %v1319
      %v1321 = vrot.slane %v1257, %v1320
      %v1322 = vcombine.high %v1321, %v1321
      %v1324 = vunpack.c.l.s4 1983009808
      %v1325 = vunpack.c.0.s8 %v1324
      %v1326 = vlaneseq
      %v1327 = vshrl.u32 %v1326, 7
      %v1328 = vsub.s32 %v1325, %v1327
      %v1329 = vrot.slane %v1258, %v1328
      %v1330 = vcombine.high %v1329, %v1329
      %v1332 = vshrl.u32 %v1273, 16
      %v1334 = vrot.slane %v1332, 6
      %v1335 = vshll.u32 %v1273, 16
      %v1337 = vrot.slane %v1335, 7
      %v1338 = vor.u32 %v1334, %v1337
      %v1339 = vrot.slane %v1338, 2
      %v1341 = vshll.u32 %v1274, 16
      %v1343 = vrot.slane %v1341, 7
      %v1344 = vsel %vm440, %v1339, %v1343
      %v1346 = vshrl.u32 %v1281, 16
      %v1348 = vrot.slane %v1346, 6
      %v1349 = vshll.u32 %v1281, 16
      %v1351 = vrot.slane %v1349, 7
      %v1352 = vor.u32 %v1348, %v1351
      %v1353 = vrot.slane %v1352, 2
      %v1355 = vshll.u32 %v1282, 16
      %v1357 = vrot.slane %v1355, 7
      %v1358 = vsel %vm440, %v1353, %v1357
      %v1360 = vshrl.u32 %v1289, 16
      %v1362 = vrot.slane %v1360, 6
      %v1363 = vshll.u32 %v1289, 16
      %v1365 = vrot.slane %v1363, 7
      %v1366 = vor.u32 %v1362, %v1365
      %v1367 = vrot.slane %v1366, 2
      %v1369 = vshll.u32 %v1290, 16
      %v1371 = vrot.slane %v1369, 7
      %v1372 = vsel %vm440, %v1367, %v1371
      %v1374 = vshrl.u32 %v1297, 16
      %v1376 = vrot.slane %v1374, 6
      %v1377 = vshll.u32 %v1297, 16
      %v1379 = vrot.slane %v1377, 7
      %v1380 = vor.u32 %v1376, %v1379
      %v1381 = vrot.slane %v1380, 2
      %v1383 = vshll.u32 %v1298, 16
      %v1385 = vrot.slane %v1383, 7
      %v1386 = vsel %vm440, %v1381, %v1385
      %v1388 = vshrl.u32 %v1305, 16
      %v1390 = vrot.slane %v1388, 6
      %v1391 = vshll.u32 %v1305, 16
      %v1393 = vrot.slane %v1391, 7
      %v1394 = vor.u32 %v1390, %v1393
      %v1395 = vrot.slane %v1394, 2
      %v1397 = vshll.u32 %v1306, 16
      %v1399 = vrot.slane %v1397, 7
      %v1400 = vsel %vm440, %v1395, %v1399
      %v1402 = vshrl.u32 %v1313, 16
      %v1404 = vrot.slane %v1402, 6
      %v1405 = vshll.u32 %v1313, 16
      %v1407 = vrot.slane %v1405, 7
      %v1408 = vor.u32 %v1404, %v1407
      %v1409 = vrot.slane %v1408, 2
      %v1411 = vshll.u32 %v1314, 16
      %v1413 = vrot.slane %v1411, 7
      %v1414 = vsel %vm440, %v1409, %v1413
      %v1416 = vshrl.u32 %v1321, 16
      %v1418 = vrot.slane %v1416, 6
      %v1419 = vshll.u32 %v1321, 16
      %v1421 = vrot.slane %v1419, 7
      %v1422 = vor.u32 %v1418, %v1421
      %v1423 = vrot.slane %v1422, 2
      %v1425 = vshll.u32 %v1322, 16
      %v1427 = vrot.slane %v1425, 7
      %v1428 = vsel %vm440, %v1423, %v1427
      %v1430 = vshrl.u32 %v1329, 16
      %v1432 = vrot.slane %v1430, 6
      %v1433 = vshll.u32 %v1329, 16
      %v1435 = vrot.slane %v1433, 7
      %v1436 = vor.u32 %v1432, %v1435
      %v1437 = vrot.slane %v1436, 2
      %v1439 = vshll.u32 %v1330, 16
      %v1441 = vrot.slane %v1439, 7
      %v1442 = vsel %vm440, %v1437, %v1441
      %s1443 = scalar_lea.vmem %s234, 384
      %v1444 = vld [vmem:[%s1443] sm:$0xf]
      %v1445 = vld [vmem:[%s1443 + $0x4] sm:$0xf]
      %v1446 = vld [vmem:[%s1443 + $0x8] sm:$0xf]
      %v1447 = vld [vmem:[%s1443 + $0xc] sm:$0xf]
      %v1448 = vld [vmem:[%s1443 + $0x10] sm:$0xf]
      %v1449 = vld [vmem:[%s1443 + $0x14] sm:$0xf]
      %v1450 = vld [vmem:[%s1443 + $0x18] sm:$0xf]
      %v1451 = vld [vmem:[%s1443 + $0x1c] sm:$0xf]
      %v1452 = vld [vmem:[%s1443 + $0x20] sm:$0xf]
      %v1453 = vld [vmem:[%s1443 + $0x24] sm:$0xf]
      %v1454 = vld [vmem:[%s1443 + $0x28] sm:$0xf]
      %v1455 = vld [vmem:[%s1443 + $0x2c] sm:$0xf]
      %v1456 = vld [vmem:[%s1443 + $0x30] sm:$0xf]
      %v1457 = vld [vmem:[%s1443 + $0x34] sm:$0xf]
      %v1458 = vld [vmem:[%s1443 + $0x38] sm:$0xf]
      %v1459 = vld [vmem:[%s1443 + $0x3c] sm:$0xf]
      %v1460 = vld [vmem:[%s1443 + $0x40] sm:$0xf]
      %v1461 = vld [vmem:[%s1443 + $0x44] sm:$0xf]
      %v1462 = vld [vmem:[%s1443 + $0x48] sm:$0xf]
      %v1463 = vld [vmem:[%s1443 + $0x4c] sm:$0xf]
      %v1464 = vld [vmem:[%s1443 + $0x50] sm:$0xf]
      %v1465 = vld [vmem:[%s1443 + $0x54] sm:$0xf]
      %v1466 = vld [vmem:[%s1443 + $0x58] sm:$0xf]
      %v1467 = vld [vmem:[%s1443 + $0x5c] sm:$0xf]
      %v1468 = vld [vmem:[%s1443 + $0x60] sm:$0xf]
      %v1469 = vld [vmem:[%s1443 + $0x64] sm:$0xf]
      %v1470 = vld [vmem:[%s1443 + $0x68] sm:$0xf]
      %v1471 = vld [vmem:[%s1443 + $0x6c] sm:$0xf]
      %v1472 = vld [vmem:[%s1443 + $0x70] sm:$0xf]
      %v1473 = vld [vmem:[%s1443 + $0x74] sm:$0xf]
      %v1474 = vld [vmem:[%s1443 + $0x78] sm:$0xf]
      %v1475 = vld [vmem:[%s1443 + $0x7c] sm:$0xf]
      %v1476 = vcombine.low %v1344, %v1358
      %v1477 = vcombine.low %v1372, %v1386
      %v1479 = vunpack.c.l.s4 1983009808
      %v1480 = vunpack.c.0.s8 %v1479
      %v1481 = vlaneseq
      %v1482 = vshrl.u32 %v1481, 7
      %v1483 = vsub.s32 %v1480, %v1482
      %v1484 = vrot.slane %v1476, %v1483
      %v1486 = vunpack.c.l.s4 1983009808
      %v1487 = vunpack.c.0.s8 %v1486
      %v1488 = vlaneseq
      %v1489 = vshrl.u32 %v1488, 7
      %v1490 = vsub.s32 %v1487, %v1489
      %v1491 = vrot.slane %v1477, %v1490
      %v1492 = vcombine.low %v1484, %v1491
      %v1493 = vcombine.high %v1484, %v1491
      %v1494 = vcombine.low %v1400, %v1414
      %v1495 = vcombine.low %v1428, %v1442
      %v1497 = vunpack.c.l.s4 1983009808
      %v1498 = vunpack.c.0.s8 %v1497
      %v1499 = vlaneseq
      %v1500 = vshrl.u32 %v1499, 7
      %v1501 = vsub.s32 %v1498, %v1500
      %v1502 = vrot.slane %v1494, %v1501
      %v1504 = vunpack.c.l.s4 1983009808
      %v1505 = vunpack.c.0.s8 %v1504
      %v1506 = vlaneseq
      %v1507 = vshrl.u32 %v1506, 7
      %v1508 = vsub.s32 %v1505, %v1507
      %v1509 = vrot.slane %v1495, %v1508
      %v1510 = vcombine.low %v1502, %v1509
      %v1511 = vcombine.high %v1502, %v1509
      %v1548 = vunpack.c.l.b16 %v1444
      %v1549 = vunpack.c.l.b16 %v1445
      %v1550 = vunpack.c.l.b16 %v1446
      %v1551 = vunpack.c.l.b16 %v1447
      %v1552 = vunpack.c.l.b16 %v1448
      %v1553 = vunpack.c.l.b16 %v1449
      %v1554 = vunpack.c.l.b16 %v1450
      %v1555 = vunpack.c.l.b16 %v1451
      %v1556 = vunpack.c.l.b16 %v1452
      %v1557 = vunpack.c.l.b16 %v1453
      %v1558 = vunpack.c.l.b16 %v1454
      %v1559 = vunpack.c.l.b16 %v1455
      %v1560 = vunpack.c.l.b16 %v1456
      %v1561 = vunpack.c.l.b16 %v1457
      %v1562 = vunpack.c.l.b16 %v1458
      %v1563 = vunpack.c.l.b16 %v1459
      %v1564 = vunpack.c.l.b16 %v1460
      %v1565 = vunpack.c.l.b16 %v1461
      %v1566 = vunpack.c.l.b16 %v1462
      %v1567 = vunpack.c.l.b16 %v1463
      %v1568 = vunpack.c.l.b16 %v1464
      %v1569 = vunpack.c.l.b16 %v1465
      %v1570 = vunpack.c.l.b16 %v1466
      %v1571 = vunpack.c.l.b16 %v1467
      %v1572 = vunpack.c.l.b16 %v1468
      %v1573 = vunpack.c.l.b16 %v1469
      %v1574 = vunpack.c.l.b16 %v1470
      %v1575 = vunpack.c.l.b16 %v1471
      %v1576 = vunpack.c.l.b16 %v1472
      %v1577 = vunpack.c.l.b16 %v1473
      %v1578 = vunpack.c.l.b16 %v1474
      %v1579 = vunpack.c.l.b16 %v1475
      %v1580 = vpack.c.b16 %v1549, %v1548
      %v1581 = vpack.c.b16 %v1551, %v1550
      %v1582 = vpack.c.b16 %v1553, %v1552
      %v1583 = vpack.c.b16 %v1555, %v1554
      %v1584 = vpack.c.b16 %v1557, %v1556
      %v1585 = vpack.c.b16 %v1559, %v1558
      %v1586 = vpack.c.b16 %v1561, %v1560
      %v1587 = vpack.c.b16 %v1563, %v1562
      %v1588 = vpack.c.b16 %v1565, %v1564
      %v1589 = vpack.c.b16 %v1567, %v1566
      %v1590 = vpack.c.b16 %v1569, %v1568
      %v1591 = vpack.c.b16 %v1571, %v1570
      %v1592 = vpack.c.b16 %v1573, %v1572
      %v1593 = vpack.c.b16 %v1575, %v1574
      %v1594 = vpack.c.b16 %v1577, %v1576
      %v1595 = vpack.c.b16 %v1579, %v1578
      %1612 = vmatprep.subr.bf16.mxu0 0
      %1613 = vmatpush1.bf16.msra.mxu0 %v1580
      %1614 = vmatprep.subr.bf16.mxu0 0
      %1615 = vmatpush1.bf16.msra.mxu0 %v1581
      %1616 = vmatprep.subr.bf16.mxu0 0
      %1617 = vmatpush1.bf16.msra.mxu0 %v1582
      %1618 = vmatprep.subr.bf16.mxu0 0
      %1619 = vmatpush1.bf16.msra.mxu0 %v1583
      %1620 = vmatprep.subr.bf16.mxu0 0
      %1621 = vmatpush1.bf16.msra.mxu0 %v1584
      %1622 = vmatprep.subr.bf16.mxu0 0
      %1623 = vmatpush1.bf16.msra.mxu0 %v1585
      %1624 = vmatprep.subr.bf16.mxu0 0
      %1625 = vmatpush1.bf16.msra.mxu0 %v1586
      %1626 = vmatprep.subr.bf16.mxu0 0
      %1627 = vmatpush1.bf16.msra.mxu0 %v1587
      %1628 = vmatprep.subr.bf16.mxu0 0
      %1629 = vmatpush1.bf16.msra.mxu0 %v1588
      %1630 = vmatprep.subr.bf16.mxu0 0
      %1631 = vmatpush1.bf16.msra.mxu0 %v1589
      %1632 = vmatprep.subr.bf16.mxu0 0
      %1633 = vmatpush1.bf16.msra.mxu0 %v1590
      %1634 = vmatprep.subr.bf16.mxu0 0
      %1635 = vmatpush1.bf16.msra.mxu0 %v1591
      %1636 = vmatprep.subr.bf16.mxu0 0
      %1637 = vmatpush1.bf16.msra.mxu0 %v1592
      %1638 = vmatprep.subr.bf16.mxu0 0
      %1639 = vmatpush1.bf16.msra.mxu0 %v1593
      %1640 = vmatprep.subr.bf16.mxu0 0
      %1641 = vmatpush1.bf16.msra.mxu0 %v1594
      %1642 = vmatprep.subr.bf16.mxu0 0
      %1643 = vmatpush1.bf16.msra.mxu0 %v1595
      %1644 = vmatprep.mubr.bf16.mxu0 %v1493
      %1645 = vmatmul.mubr.bf16.gmra.mrb[0].mxu0 %v1492
      %v1646 = vpop.f32.mrb[0].mxu0
      %v1647 = vadd.f32 0.0, %v1646
      %v1648 = vpop.f32.mrb[0].mxu0
      %v1649 = vpop.f32.mrb[0].mxu0
      %v1650 = vadd.f32 0.0, %v1649
      %v1651 = vpop.f32.mrb[0].mxu0
      %1652 = vmatprep.mubr.bf16.mxu0 %v1511
      %1653 = vmatmul.mubr.bf16.gmra.mrb[0].mxu0 %v1510
      %v1654 = vpop.f32.mrb[0].mxu0
      %v1655 = vadd.f32 0.0, %v1654
      %v1656 = vpop.f32.mrb[0].mxu0
      %v1657 = vpop.f32.mrb[0].mxu0
      %v1658 = vadd.f32 0.0, %v1657
      %v1659 = vpop.f32.mrb[0].mxu0
      %1660 = vdwg.mxu0
      %v1661 = vadd.f32 %v1247, %v1647
      %v1662 = vadd.f32 %v1248, %v1650
      %v1663 = vadd.f32 %v1249, %v1655
      %v1664 = vadd.f32 %v1250, %v1658
      %v1665 = vld [vmem:[%s237] sm:$0x1]
      %v1667 = vlaneseq
      %v1668 = vshrl.u32 %v1667, 7
      %v1669 = vsub.s32 0, %v1668
      %v1670 = vrot.slane %v1665, %v1669
      %v1672 = vadd.f32 %v1661, %v1670
      %v1673 = vadd.f32 %v1662, %v1670
      %v1674 = vadd.f32 %v1663, %v1670
      %v1675 = vadd.f32 %v1664, %v1670
      %v1676 = vmax.f32 %v1672, 0.0
      %v1677 = vmax.f32 %v1673, 0.0
      %v1678 = vmax.f32 %v1674, 0.0
      %v1679 = vmax.f32 %v1675, 0.0
      %v1684 = vcombine.high %v1676, %v1676
      %v1685 = vcombine.high %v1677, %v1677
      %v1686 = vcombine.high %v1678, %v1678
      %v1687 = vcombine.high %v1679, %v1679
      %v1692 = vpack.c.bf16 %v1676, %v1676
      %v1693 = vpack.c.bf16 %v1684, %v1684
      %v1694 = vpack.c.bf16 %v1677, %v1677
      %v1695 = vpack.c.bf16 %v1685, %v1685
      %v1696 = vpack.c.bf16 %v1678, %v1678
      %v1697 = vpack.c.bf16 %v1686, %v1686
      %v1698 = vpack.c.bf16 %v1679, %v1679
      %v1699 = vpack.c.bf16 %v1687, %v1687
      %vm1700 = vcmask 517120
      %1701 = vst.msk [vmem:[%s247] sm:$0x3] %vm1700, %v1692
      %1702 = vst.msk [vmem:[%s247 + $0x2] sm:$0x3] %vm1700, %v1693
      %1703 = vst.msk [vmem:[%s247 + $0x4] sm:$0x3] %vm1700, %v1694
      %1704 = vst.msk [vmem:[%s247 + $0x6] sm:$0x3] %vm1700, %v1695
      %1705 = vst.msk [vmem:[%s247 + $0x8] sm:$0x3] %vm1700, %v1696
      %1706 = vst.msk [vmem:[%s247 + $0xa] sm:$0x3] %vm1700, %v1697
      %1707 = vst.msk [vmem:[%s247 + $0xc] sm:$0x3] %vm1700, %v1698
      %1708 = vst.msk [vmem:[%s247 + $0xe] sm:$0x3] %vm1700, %v1699
      %s1709 = smul.u32 2, %s19
      %p1710 = scmp.lt.s32.totalorder %s18, 1
      %s1711 = scalar_select %p1710, %s18, 1
      %p1712 = scmp.lt.s32.totalorder %s1709, 1
      %s1713 = scalar_select %p1712, %s1709, 1
      %s1714 = smul.addr %s1713, 4
      %s1715 = smul.addr %s1711, 8
      %s1716 = sadd.s32 %s1714, %s1715
      %s1717 = smul.addr %s1716, 2
      %s1718 = scalar_lea.vmem %s3, %s1717
      // Predicated region
      $region33: #{forward.9} parent=31 // pred_check
        %p1719 = pneg %p126
      $region34: #{forward.9} parent=31 // pred_check_branch
        %1721 = sbr.rel (%p1719) target = $region36
      $region35: #{forward.9} parent=31 // pred_region
        %s1722 = smul.u32 2, %s19
      $region36: #{forward.9} parent=31 // pred_fallthru
        _
    $region32: #{forward.9} parent=5 // pred_fallthru
      _
    %p1723 = scmp.le.s32.totalorder 2, %s9
    // Predicated region
    $region37: #{forward.9} parent=5 // pred_check
      %p1724 = pneg %p1723
    $region38: #{forward.9} parent=5 // pred_check_branch
      %1726 = sbr.rel (%p1724) target = $region40
    $region39: #{forward.9} parent=5 // pred_region
      %s1727 = ssub.s32 %s9, 2
      // Predicated region
      $region41: #{forward.9} parent=39 // pred_check
        %p1728 = pneg %p132
      $region42: #{forward.9} parent=39 // pred_check_branch
        %1730 = sbr.rel (%p1728) target = $region44
      $region43: #{forward.9} parent=39 // pred_region
        %s1731 = smul.u32 2, %s21
        %p1732 = scmp.lt.s32.totalorder %s20, 1
        %s1733 = scalar_select %p1732, %s20, 1
        %p1734 = scmp.lt.s32.totalorder %s1731, 1
        %s1735 = scalar_select %p1734, %s1731, 1
        %s1736 = smul.addr %s1735, 4
        %s1737 = smul.addr %s1733, 8
        %s1738 = sadd.s32 %s1736, %s1737
        %s1739 = smul.addr %s1738, 2
        %s1740 = scalar_lea.vmem %s3, %s1739
      $region44: #{forward.9} parent=39 // pred_fallthru
        _
    $region40: #{forward.9} parent=5 // pred_fallthru
      _
  $region6: #{forward.9} parent=0 // loop_footer
    %s13 = sadd.s32 1, %s9
  $region7: #{forward.9} parent=0 // loop_footer_branch
    %8 = sbr.rel target = $region3
  $region8: #{forward.9} parent=0 // loop_exit
    _

// kernel: forward.10
$region0: #{forward.10}
  #allocation0 [shape = 'u32[]', space=smem, size = 0x4, offset = 0x4, fixed_abs, tag = 'smem constant byte address 0x4 - core index']
  #allocation1 [shape = 'u32[144,128]{1,0:T(1,128)}', space=vmem, size = 0x12000, scoped, tag = 'internal scratch']
  %s0 = inlined_call_operand.vmem [shape: bf16[2,2,3,3,256], index: 0, kind: input, shape index: {}]
  %s1 = inlined_call_operand.vmem [shape: bf16[2,2,2,256,64], index: 1, kind: input, shape index: {}]
  %s2 = inlined_call_operand.vmem [shape: f32[2,1,64], index: 2, kind: input, shape index: {}]
  %s3 = inlined_call_operand.vmem [shape: bf16[2,2,2,2,64], index: 3, kind: output, shape index: {}]
  %s4 = sld [smem:[#allocation0]]
  $region45: #{forward.10} parent=0
    _
  %s6 = ssub.s32 1, %s4
  %s7 = scalar_select 0, %s6, %s4
  loop: start=0, step=1, limit=4
  $region2: #{forward.10} parent=0 // loop_pre_header
    _
  $region3: #{forward.10} parent=0 // loop_header
    %s9 = sphi 0, %s13
    %p10 = scmp.ge.s32.totalorder %s9, 4
    %s16 = sphi 0, %s28
    %s17 = sphi 0, %s24
    %s18 = sphi 0, %s16
    %s19 = sphi 0, %s17
    %s20 = sphi 0, %s18
    %s21 = sphi 0, %s19
    %s33 = sphi 0, %s35
    %s36 = sphi 0, %s33
    %s37 = sphi 0, %s36
    %s53 = sphi 0, %s37
    %s59 = sphi 0, %s61
    %s62 = sphi 0, %s59
    %s63 = sphi 0, %s62
    %s79 = sphi 0, %s63
    %s85 = sphi 0, %s87
    %s88 = sphi 0, %s85
    %s89 = sphi 0, %s88
    %s105 = sphi 0, %s89
    %s113 = sphi 0, %s115
    %s116 = sphi 0, %s113
    %s117 = sphi 0, %s116
    %s133 = sphi 0, %s117
  $region4: #{forward.10} parent=0 // loop_header_branch
    %12 = sbr.rel (%p10) target = $region8
  $region5: #{forward.10} parent=0 // loop_body
    %s14 = ssub.s32 %s9, 1
    %s15 = ssub.s32 %s9, 2
    %s22 = sadd.s32 1, %s17
    %p23 = scmp.ge.s32.totalorder %s22, 1
    %s24 = scalar_select %p23, 0, %s22
    %s25 = sadd.s32 1, %s16
    %s26 = scalar_select %p23, %s25, %s16
    %p27 = scmp.ge.s32.totalorder %s26, 2
    %s28 = scalar_select %p27, 0, %s26
    %s29 = ssub.s32 %s16, %s28
    %s30 = ssub.s32 %s17, %s24
    %s31 = sor.u32 %s29, %s30
    %p32 = scmp.eq.s32.totalorder %s31, 0
    %s34 = sadd.s32 %s33, 1
    %s35 = scalar_select %p32, %s33, %s34
    %p38 = pneg %p32
    %p39 = scmp.eq.s32.totalorder %s9, 1
    %p40 = por %p38, %p39
    %p41 = scmp.ne.s32.totalorder %s33, %s36
    %p42 = scmp.eq.s32.totalorder %s9, 0
    %p43 = por %p41, %p42
    %p44 = scmp.ne.s32.totalorder %s33, %s36
    %p45 = scmp.eq.s32.totalorder %s14, 1
    %p46 = por %p44, %p45
    %p47 = scmp.ne.s32.totalorder %s36, %s37
    %p48 = scmp.eq.s32.totalorder %s14, 0
    %p49 = por %p47, %p48
    %p50 = scmp.ne.s32.totalorder %s36, %s37
    %p51 = scmp.eq.s32.totalorder %s15, 1
    %p52 = por %p50, %p51
    %p54 = scmp.ne.s32.totalorder %s37, %s53
    %p55 = scmp.eq.s32.totalorder %s15, 0
    %p56 = por %p54, %p55
    %s57 = ssub.s32 %s16, %s28
    %p58 = scmp.eq.s32.totalorder %s57, 0
    %s60 = sadd.s32 %s59, 1
    %s61 = scalar_select %p58, %s59, %s60
    %p64 = pneg %p58
    %p65 = scmp.eq.s32.totalorder %s9, 1
    %p66 = por %p64, %p65
    %p67 = scmp.ne.s32.totalorder %s59, %s62
    %p68 = scmp.eq.s32.totalorder %s9, 0
    %p69 = por %p67, %p68
    %p70 = scmp.ne.s32.totalorder %s59, %s62
    %p71 = scmp.eq.s32.totalorder %s14, 1
    %p72 = por %p70, %p71
    %p73 = scmp.ne.s32.totalorder %s62, %s63
    %p74 = scmp.eq.s32.totalorder %s14, 0
    %p75 = por %p73, %p74
    %p76 = scmp.ne.s32.totalorder %s62, %s63
    %p77 = scmp.eq.s32.totalorder %s15, 1
    %p78 = por %p76, %p77
    %p80 = scmp.ne.s32.totalorder %s63, %s79
    %p81 = scmp.eq.s32.totalorder %s15, 0
    %p82 = por %p80, %p81
    %s83 = ssub.s32 %s16, %s28
    %p84 = scmp.eq.s32.totalorder %s83, 0
    %s86 = sadd.s32 %s85, 1
    %s87 = scalar_select %p84, %s85, %s86
    %p90 = pneg %p84
    %p91 = scmp.eq.s32.totalorder %s9, 1
    %p92 = por %p90, %p91
    %p93 = scmp.ne.s32.totalorder %s85, %s88
    %p94 = scmp.eq.s32.totalorder %s9, 0
    %p95 = por %p93, %p94
    %p96 = scmp.ne.s32.totalorder %s85, %s88
    %p97 = scmp.eq.s32.totalorder %s14, 1
    %p98 = por %p96, %p97
    %p99 = scmp.ne.s32.totalorder %s88, %s89
    %p100 = scmp.eq.s32.totalorder %s14, 0
    %p101 = por %p99, %p100
    %p102 = scmp.ne.s32.totalorder %s88, %s89
    %p103 = scmp.eq.s32.totalorder %s15, 1
    %p104 = por %p102, %p103
    %p106 = scmp.ne.s32.totalorder %s89, %s105
    %p107 = scmp.eq.s32.totalorder %s15, 0
    %p108 = por %p106, %p107
    %s109 = ssub.s32 %s16, %s28
    %s110 = ssub.s32 %s17, %s24
    %s111 = sor.u32 %s109, %s110
    %p112 = scmp.eq.s32.totalorder %s111, 0
    %s114 = sadd.s32 %s113, 1
    %s115 = scalar_select %p112, %s113, %s114
    %p118 = pneg %p112
    %p119 = scmp.eq.s32.totalorder %s9, 1
    %p120 = por %p118, %p119
    %p121 = scmp.ne.s32.totalorder %s113, %s116
    %p122 = scmp.eq.s32.totalorder %s9, 0
    %p123 = por %p121, %p122
    %p124 = scmp.ne.s32.totalorder %s113, %s116
    %p125 = scmp.eq.s32.totalorder %s14, 1
    %p126 = por %p124, %p125
    %p127 = scmp.ne.s32.totalorder %s116, %s117
    %p128 = scmp.eq.s32.totalorder %s14, 0
    %p129 = por %p127, %p128
    %p130 = scmp.ne.s32.totalorder %s116, %s117
    %p131 = scmp.eq.s32.totalorder %s15, 1
    %p132 = por %p130, %p131
    %p134 = scmp.ne.s32.totalorder %s117, %s133
    %p135 = scmp.eq.s32.totalorder %s15, 0
    %p136 = por %p134, %p135
    %p137 = scmp.le.s32.totalorder 1, %s9
    %p138 = scmp.lt.s32.totalorder %s9, 3
    %p139 = pnand %p137, %p138
    %p140 = pneg %p139
    // Predicated region
    $region9: #{forward.10} parent=5 // pred_check
      _
    $region10: #{forward.10} parent=5 // pred_check_branch
      %142 = sbr.rel (%p139) target = $region12
    $region11: #{forward.10} parent=5 // pred_region
      %s143 = ssub.s32 %s9, 1
    $region12: #{forward.10} parent=5 // pred_fallthru
      _
    %p144 = scmp.lt.s32.totalorder %s9, 2
    // Predicated region
    $region13: #{forward.10} parent=5 // pred_check
      %p145 = pneg %p144
    $region14: #{forward.10} parent=5 // pred_check_branch
      %147 = sbr.rel (%p145) target = $region16
    $region15: #{forward.10} parent=5 // pred_region
      // Predicated region
      $region17: #{forward.10} parent=15 // pred_check
        %p148 = pneg %p43
      $region18: #{forward.10} parent=15 // pred_check_branch
        %150 = sbr.rel (%p148) target = $region20
      $region19: #{forward.10} parent=15 // pred_region
        %s151 = smul.u32 2, %s17
        %p152 = scmp.lt.s32.totalorder %s16, 1
        %s153 = scalar_select %p152, %s16, 1
        %p154 = scmp.lt.s32.totalorder %s151, 1
        %s155 = scalar_select %p154, %s151, 1
        %s156 = smul.addr %s155, 6
        %s157 = smul.addr %s153, 12
        %s158 = sadd.s32 %s156, %s157
        %s159 = smul.addr %s158, 2
        %s160 = scalar_lea.vmem %s0, %s159
        %s161 = smul.u32 2, %s17
      $region20: #{forward.10} parent=15 // pred_fallthru
        _
      // Predicated region
      $region21: #{forward.10} parent=15 // pred_check
        %p162 = pneg %p69
      $region22: #{forward.10} parent=15 // pred_check_branch
        %164 = sbr.rel (%p162) target = $region24
      $region23: #{forward.10} parent=15 // pred_region
        %p165 = scmp.lt.s32.totalorder %s16, 1
        %s166 = scalar_select %p165, %s16, 1
        %s167 = smul.addr %s166, 128
        %s168 = smul.addr %s167, 4
        %s169 = scalar_lea.vmem %s1, %s168
      $region24: #{forward.10} parent=15 // pred_fallthru
        _
      // Predicated region
      $region25: #{forward.10} parent=15 // pred_check
        %p170 = pneg %p95
      $region26: #{forward.10} parent=15 // pred_check_branch
        %172 = sbr.rel (%p170) target = $region28
      $region27: #{forward.10} parent=15 // pred_region
        %p173 = scmp.lt.s32.totalorder %s16, 1
        %s174 = scalar_select %p173, %s16, 1
        %s175 = scalar_lea.vmem %s2, %s174
      $region28: #{forward.10} parent=15 // pred_fallthru
        _
    $region16: #{forward.10} parent=5 // pred_fallthru
      _
    %p176 = scmp.le.s32.totalorder 1, %s9
    %p177 = scmp.lt.s32.totalorder %s9, 3
    %p178 = pnand %p176, %p177
    %p179 = pneg %p178
    // Predicated region
    $region29: #{forward.10} parent=5 // pred_check
      _
    $region30: #{forward.10} parent=5 // pred_check_branch
      %181 = sbr.rel (%p178) target = $region32
    $region31: #{forward.10} parent=5 // pred_region
      %s182 = ssub.s32 %s9, 1
      %s183 = smul.u32 2, %s19
      %p184 = scmp.lt.s32.totalorder %s18, 1
      %s185 = scalar_select %p184, %s18, 1
      %p186 = scmp.lt.s32.totalorder %s183, 1
      %s187 = scalar_select %p186, %s183, 1
      %s188 = smul.addr %s187, 6
      %s189 = smul.addr %s185, 12
      %s190 = sadd.s32 %s188, %s189
      %s191 = smul.addr %s190, 2
      %s192 = scalar_lea.vmem %s0, %s191
      %p193 = pneg %p49
      %p194 = pneg %p46
      %p195 = scmp.lt.s32.totalorder %s18, 1
      %s196 = scalar_select %p195, %s18, 1
      %s197 = smul.addr %s196, 128
      %s198 = smul.addr %s197, 4
      %s199 = scalar_lea.vmem %s1, %s198
      %p200 = pneg %p75
      %p201 = pneg %p72
      %p202 = scmp.lt.s32.totalorder %s18, 1
      %s203 = scalar_select %p202, %s18, 1
      %s204 = scalar_lea.vmem %s2, %s203
      %p205 = pneg %p101
      %p206 = pneg %p98
      %p207 = pneg %p129
      %p208 = pneg %p126
      %s209 = smul.u32 2, %s19
      %p210 = scmp.lt.s32.totalorder %s18, 1
      %s211 = scalar_select %p210, %s18, 1
      %p212 = scmp.lt.s32.totalorder %s209, 1
      %s213 = scalar_select %p212, %s209, 1
      %s214 = smul.addr %s213, 2
      %s215 = smul.addr %s211, 4
      %s216 = sadd.s32 %s214, %s215
      %s217 = scalar_lea.vmem %s3, %s216
      %s218 = smul.u32 2, %s19
      %p219 = scmp.lt.s32.totalorder %s18, 1
      %s220 = scalar_select %p219, %s18, 1
      %p221 = scmp.lt.s32.totalorder %s218, 1
      %s222 = scalar_select %p221, %s218, 1
      %s223 = smul.addr %s222, 6
      %s224 = smul.addr %s220, 12
      %s225 = sadd.s32 %s223, %s224
      %s226 = smul.addr %s225, 2
      %s227 = scalar_lea.vmem %s0, %s226
      %s228 = smul.u32 2, %s19
      %p229 = scmp.lt.s32.totalorder %s18, 1
      %s230 = scalar_select %p229, %s18, 1
      %s231 = smul.addr %s230, 128
      %s232 = smul.addr %s231, 4
      %s233 = scalar_lea.vmem %s1, %s232
      %p234 = scmp.lt.s32.totalorder %s18, 1
      %s235 = scalar_select %p234, %s18, 1
      %s236 = scalar_lea.vmem %s2, %s235
      %s237 = smul.u32 2, %s19
      %p238 = scmp.lt.s32.totalorder %s18, 1
      %s239 = scalar_select %p238, %s18, 1
      %p240 = scmp.lt.s32.totalorder %s237, 1
      %s241 = scalar_select %p240, %s237, 1
      %s242 = smul.addr %s241, 2
      %s243 = smul.addr %s239, 4
      %s244 = sadd.s32 %s242, %s243
      %s245 = scalar_lea.vmem %s3, %s244
      %s246 = smul.u32 2, %s19
      %v248 = vld [vmem:[%s227] sm:$0x5]
      %v249 = vld [vmem:[%s227 + $0x4] sm:$0x5]
      %v250 = vld [vmem:[%s227 + $0xc] sm:$0x5]
      %v251 = vld [vmem:[%s227 + $0x10] sm:$0x5]
      %v257 = vunpack.c.l.s4 1966171168
      %v258 = vunpack.c.0.s8 %v257
      %v259 = vlaneseq
      %v260 = vshrl.u32 %v259, 7
      %v261 = vsub.s32 %v258, %v260
      %v262 = vrot.slane %v248, %v261
      %v264 = vunpack.c.l.s4 1966171168
      %v265 = vunpack.c.0.s8 %v264
      %v266 = vlaneseq
      %v267 = vshrl.u32 %v266, 7
      %v268 = vsub.s32 %v265, %v267
      %v269 = vrot.slane %v249, %v268
      %v271 = vunpack.c.l.s4 1966171168
      %v272 = vunpack.c.0.s8 %v271
      %v273 = vlaneseq
      %v274 = vshrl.u32 %v273, 7
      %v275 = vsub.s32 %v272, %v274
      %v276 = vrot.slane %v250, %v275
      %v278 = vunpack.c.l.s4 1966171168
      %v279 = vunpack.c.0.s8 %v278
      %v280 = vlaneseq
      %v281 = vshrl.u32 %v280, 7
      %v282 = vsub.s32 %v279, %v281
      %v283 = vrot.slane %v251, %v282
      %v284 = vld [vmem:[%s233] sm:$0xf]
      %v285 = vld [vmem:[%s233 + $0x4] sm:$0xf]
      %v286 = vld [vmem:[%s233 + $0x8] sm:$0xf]
      %v287 = vld [vmem:[%s233 + $0xc] sm:$0xf]
      %v288 = vld [vmem:[%s233 + $0x10] sm:$0xf]
      %v289 = vld [vmem:[%s233 + $0x14] sm:$0xf]
      %v290 = vld [vmem:[%s233 + $0x18] sm:$0xf]
      %v291 = vld [vmem:[%s233 + $0x1c] sm:$0xf]
      %v292 = vld [vmem:[%s233 + $0x20] sm:$0xf]
      %v293 = vld [vmem:[%s233 + $0x24] sm:$0xf]
      %v294 = vld [vmem:[%s233 + $0x28] sm:$0xf]
      %v295 = vld [vmem:[%s233 + $0x2c] sm:$0xf]
      %v296 = vld [vmem:[%s233 + $0x30] sm:$0xf]
      %v297 = vld [vmem:[%s233 + $0x34] sm:$0xf]
      %v298 = vld [vmem:[%s233 + $0x38] sm:$0xf]
      %v299 = vld [vmem:[%s233 + $0x3c] sm:$0xf]
      %v300 = vld [vmem:[%s233 + $0x40] sm:$0xf]
      %v301 = vld [vmem:[%s233 + $0x44] sm:$0xf]
      %v302 = vld [vmem:[%s233 + $0x48] sm:$0xf]
      %v303 = vld [vmem:[%s233 + $0x4c] sm:$0xf]
      %v304 = vld [vmem:[%s233 + $0x50] sm:$0xf]
      %v305 = vld [vmem:[%s233 + $0x54] sm:$0xf]
      %v306 = vld [vmem:[%s233 + $0x58] sm:$0xf]
      %v307 = vld [vmem:[%s233 + $0x5c] sm:$0xf]
      %v308 = vld [vmem:[%s233 + $0x60] sm:$0xf]
      %v309 = vld [vmem:[%s233 + $0x64] sm:$0xf]
      %v310 = vld [vmem:[%s233 + $0x68] sm:$0xf]
      %v311 = vld [vmem:[%s233 + $0x6c] sm:$0xf]
      %v312 = vld [vmem:[%s233 + $0x70] sm:$0xf]
      %v313 = vld [vmem:[%s233 + $0x74] sm:$0xf]
      %v314 = vld [vmem:[%s233 + $0x78] sm:$0xf]
      %v315 = vld [vmem:[%s233 + $0x7c] sm:$0xf]
      %v316 = vld [vmem:[%s227] sm:$0xf]
      %v317 = vld [vmem:[%s227 + $0x4] sm:$0xf]
      %v318 = vld [vmem:[%s227 + $0xc] sm:$0xf]
      %v319 = vld [vmem:[%s227 + $0x10] sm:$0xf]
      %v325 = vunpack.c.l.s4 1966171168
      %v326 = vunpack.c.0.s8 %v325
      %v327 = vlaneseq
      %v328 = vshrl.u32 %v327, 7
      %v329 = vsub.s32 %v326, %v328
      %v330 = vrot.slane %v316, %v329
      %v331 = vcombine.high %v330, %v330
      %v333 = vunpack.c.l.s4 1966171168
      %v334 = vunpack.c.0.s8 %v333
      %v335 = vlaneseq
      %v336 = vshrl.u32 %v335, 7
      %v337 = vsub.s32 %v334, %v336
      %v338 = vrot.slane %v317, %v337
      %v339 = vcombine.high %v338, %v338
      %v341 = vunpack.c.l.s4 1966171168
      %v342 = vunpack.c.0.s8 %v341
      %v343 = vlaneseq
      %v344 = vshrl.u32 %v343, 7
      %v345 = vsub.s32 %v342, %v344
      %v346 = vrot.slane %v318, %v345
      %v347 = vcombine.high %v346, %v346
      %v349 = vunpack.c.l.s4 1966171168
      %v350 = vunpack.c.0.s8 %v349
      %v351 = vlaneseq
      %v352 = vshrl.u32 %v351, 7
      %v353 = vsub.s32 %v350, %v352
      %v354 = vrot.slane %v319, %v353
      %v355 = vcombine.high %v354, %v354
      %vm356 = vsmask.f32 256
      %vm357 = vsmask.f32 1284
      %vm358 = vmor %vm356, %vm357
      %vm359 = vsmask.f32 2312
      %vm360 = vmor %vm358, %vm359
      %vm361 = vsmask.f32 3340
      %vm362 = vmor %vm360, %vm361
      %vm363 = vsmask.f32 4368
      %vm364 = vmor %vm362, %vm363
      %vm365 = vsmask.f32 5396
      %vm366 = vmor %vm364, %vm365
      %vm367 = vsmask.f32 6424
      %vm368 = vmor %vm366, %vm367
      %vm369 = vsmask.f32 7452
      %vm370 = vmor %vm368, %vm369
      %v372 = vshrl.u32 %v330, 16
      %v374 = vrot.slane %v372, 7
      %v375 = vrot.slane %v374, 1
      %v377 = vshll.u32 %v331, 16
      %v379 = vsel %vm370, %v375, %v377
      %v381 = vshrl.u32 %v338, 16
      %v383 = vrot.slane %v381, 7
      %v384 = vrot.slane %v383, 1
      %v386 = vshll.u32 %v339, 16
      %v388 = vsel %vm370, %v384, %v386
      %v390 = vshrl.u32 %v346, 16
      %v392 = vrot.slane %v390, 7
      %v393 = vrot.slane %v392, 1
      %v395 = vshll.u32 %v347, 16
      %v397 = vsel %vm370, %v393, %v395
      %v399 = vshrl.u32 %v354, 16
      %v401 = vrot.slane %v399, 7
      %v402 = vrot.slane %v401, 1
      %v404 = vshll.u32 %v355, 16
      %v406 = vsel %vm370, %v402, %v404
      %s407 = scalar_lea.vmem %s233, 128
      %v408 = vld [vmem:[%s407] sm:$0xf]
      %v409 = vld [vmem:[%s407 + $0x4] sm:$0xf]
      %v410 = vld [vmem:[%s407 + $0x8] sm:$0xf]
      %v411 = vld [vmem:[%s407 + $0xc] sm:$0xf]
      %v412 = vld [vmem:[%s407 + $0x10] sm:$0xf]
      %v413 = vld [vmem:[%s407 + $0x14] sm:$0xf]
      %v414 = vld [vmem:[%s407 + $0x18] sm:$0xf]
      %v415 = vld [vmem:[%s407 + $0x1c] sm:$0xf]
      %v416 = vld [vmem:[%s407 + $0x20] sm:$0xf]
      %v417 = vld [vmem:[%s407 + $0x24] sm:$0xf]
      %v418 = vld [vmem:[%s407 + $0x28] sm:$0xf]
      %v419 = vld [vmem:[%s407 + $0x2c] sm:$0xf]
      %v420 = vld [vmem:[%s407 + $0x30] sm:$0xf]
      %v421 = vld [vmem:[%s407 + $0x34] sm:$0xf]
      %v422 = vld [vmem:[%s407 + $0x38] sm:$0xf]
      %v423 = vld [vmem:[%s407 + $0x3c] sm:$0xf]
      %v424 = vld [vmem:[%s407 + $0x40] sm:$0xf]
      %v425 = vld [vmem:[%s407 + $0x44] sm:$0xf]
      %v426 = vld [vmem:[%s407 + $0x48] sm:$0xf]
      %v427 = vld [vmem:[%s407 + $0x4c] sm:$0xf]
      %v428 = vld [vmem:[%s407 + $0x50] sm:$0xf]
      %v429 = vld [vmem:[%s407 + $0x54] sm:$0xf]
      %v430 = vld [vmem:[%s407 + $0x58] sm:$0xf]
      %v431 = vld [vmem:[%s407 + $0x5c] sm:$0xf]
      %v432 = vld [vmem:[%s407 + $0x60] sm:$0xf]
      %v433 = vld [vmem:[%s407 + $0x64] sm:$0xf]
      %v434 = vld [vmem:[%s407 + $0x68] sm:$0xf]
      %v435 = vld [vmem:[%s407 + $0x6c] sm:$0xf]
      %v436 = vld [vmem:[%s407 + $0x70] sm:$0xf]
      %v437 = vld [vmem:[%s407 + $0x74] sm:$0xf]
      %v438 = vld [vmem:[%s407 + $0x78] sm:$0xf]
      %v439 = vld [vmem:[%s407 + $0x7c] sm:$0xf]
      %v440 = vcombine.low %v379, %v388
      %v441 = vcombine.low %v397, %v406
      %v443 = vunpack.c.l.s4 1966171168
      %v444 = vunpack.c.0.s8 %v443
      %v445 = vlaneseq
      %v446 = vshrl.u32 %v445, 7
      %v447 = vsub.s32 %v444, %v446
      %v448 = vrot.slane %v440, %v447
      %v450 = vunpack.c.l.s4 1966171168
      %v451 = vunpack.c.0.s8 %v450
      %v452 = vlaneseq
      %v453 = vshrl.u32 %v452, 7
      %v454 = vsub.s32 %v451, %v453
      %v455 = vrot.slane %v441, %v454
      %v456 = vcombine.low %v448, %v455
      %v457 = vcombine.high %v448, %v455
      %v459 = vunpack.c.l.s4 1966171168
      %v460 = vunpack.c.0.s8 %v459
      %v461 = vlaneseq
      %v462 = vshrl.u32 %v461, 7
      %v463 = vsub.s32 %v460, %v462
      %v464 = vrot.slane %v456, %v463
      %v466 = vunpack.c.l.s4 1966171168
      %v467 = vunpack.c.0.s8 %v466
      %v468 = vlaneseq
      %v469 = vshrl.u32 %v468, 7
      %v470 = vsub.s32 %v467, %v469
      %v471 = vrot.slane %v457, %v470
      %v506 = vunpack.c.l.b16 %v408
      %v507 = vunpack.c.l.b16 %v409
      %v508 = vunpack.c.l.b16 %v410
      %v509 = vunpack.c.l.b16 %v411
      %v510 = vunpack.c.l.b16 %v412
      %v511 = vunpack.c.l.b16 %v413
      %v512 = vunpack.c.l.b16 %v414
      %v513 = vunpack.c.l.b16 %v415
      %v514 = vunpack.c.l.b16 %v416
      %v515 = vunpack.c.l.b16 %v417
      %v516 = vunpack.c.l.b16 %v418
      %v517 = vunpack.c.l.b16 %v419
      %v518 = vunpack.c.l.b16 %v420
      %v519 = vunpack.c.l.b16 %v421
      %v520 = vunpack.c.l.b16 %v422
      %v521 = vunpack.c.l.b16 %v423
      %v522 = vunpack.c.l.b16 %v424
      %v523 = vunpack.c.l.b16 %v425
      %v524 = vunpack.c.l.b16 %v426
      %v525 = vunpack.c.l.b16 %v427
      %v526 = vunpack.c.l.b16 %v428
      %v527 = vunpack.c.l.b16 %v429
      %v528 = vunpack.c.l.b16 %v430
      %v529 = vunpack.c.l.b16 %v431
      %v530 = vunpack.c.l.b16 %v432
      %v531 = vunpack.c.l.b16 %v433
      %v532 = vunpack.c.l.b16 %v434
      %v533 = vunpack.c.l.b16 %v435
      %v534 = vunpack.c.l.b16 %v436
      %v535 = vunpack.c.l.b16 %v437
      %v536 = vunpack.c.l.b16 %v438
      %v537 = vunpack.c.l.b16 %v439
      %v538 = vpack.c.b16 %v507, %v506
      %v539 = vpack.c.b16 %v509, %v508
      %v540 = vpack.c.b16 %v511, %v510
      %v541 = vpack.c.b16 %v513, %v512
      %v542 = vpack.c.b16 %v515, %v514
      %v543 = vpack.c.b16 %v517, %v516
      %v544 = vpack.c.b16 %v519, %v518
      %v545 = vpack.c.b16 %v521, %v520
      %v546 = vpack.c.b16 %v523, %v522
      %v547 = vpack.c.b16 %v525, %v524
      %v548 = vpack.c.b16 %v527, %v526
      %v549 = vpack.c.b16 %v529, %v528
      %v550 = vpack.c.b16 %v531, %v530
      %v551 = vpack.c.b16 %v533, %v532
      %v552 = vpack.c.b16 %v535, %v534
      %v553 = vpack.c.b16 %v537, %v536
      %570 = vmatprep.subr.bf16.mxu0 0
      %571 = vmatpush1.bf16.msra.mxu0 %v538
      %572 = vmatprep.subr.bf16.mxu0 0
      %573 = vmatpush1.bf16.msra.mxu0 %v539
      %574 = vmatprep.subr.bf16.mxu0 0
      %575 = vmatpush1.bf16.msra.mxu0 %v540
      %576 = vmatprep.subr.bf16.mxu0 0
      %577 = vmatpush1.bf16.msra.mxu0 %v541
      %578 = vmatprep.subr.bf16.mxu0 0
      %579 = vmatpush1.bf16.msra.mxu0 %v542
      %580 = vmatprep.subr.bf16.mxu0 0
      %581 = vmatpush1.bf16.msra.mxu0 %v543
      %582 = vmatprep.subr.bf16.mxu0 0
      %583 = vmatpush1.bf16.msra.mxu0 %v544
      %584 = vmatprep.subr.bf16.mxu0 0
      %585 = vmatpush1.bf16.msra.mxu0 %v545
      %586 = vmatprep.subr.bf16.mxu0 0
      %587 = vmatpush1.bf16.msra.mxu0 %v546
      %588 = vmatprep.subr.bf16.mxu0 0
      %589 = vmatpush1.bf16.msra.mxu0 %v547
      %590 = vmatprep.subr.bf16.mxu0 0
      %591 = vmatpush1.bf16.msra.mxu0 %v548
      %592 = vmatprep.subr.bf16.mxu0 0
      %593 = vmatpush1.bf16.msra.mxu0 %v549
      %594 = vmatprep.subr.bf16.mxu0 0
      %595 = vmatpush1.bf16.msra.mxu0 %v550
      %596 = vmatprep.subr.bf16.mxu0 0
      %597 = vmatpush1.bf16.msra.mxu0 %v551
      %598 = vmatprep.subr.bf16.mxu0 0
      %599 = vmatpush1.bf16.msra.mxu0 %v552
      %600 = vmatprep.subr.bf16.mxu0 0
      %601 = vmatpush1.bf16.msra.mxu0 %v553
      %602 = vmatprep.mubr.bf16.mxu0 %v471
      %603 = vmatmul.mubr.bf16.gmra.mrb[0].mxu0 %v464
      %v604 = vpop.f32.mrb[0].mxu0
      %v605 = vadd.f32 0.0, %v604
      %v606 = vpop.f32.mrb[0].mxu0
      %v607 = vpop.f32.mrb[0].mxu0
      %v608 = vpop.f32.mrb[0].mxu0
      %609 = vdwg.mxu0
      %v610 = vcombine.low %v262, %v269
      %v611 = vcombine.low %v276, %v283
      %v613 = vunpack.c.l.s4 1966171168
      %v614 = vunpack.c.0.s8 %v613
      %v615 = vlaneseq
      %v616 = vshrl.u32 %v615, 7
      %v617 = vsub.s32 %v614, %v616
      %v618 = vrot.slane %v610, %v617
      %v620 = vunpack.c.l.s4 1966171168
      %v621 = vunpack.c.0.s8 %v620
      %v622 = vlaneseq
      %v623 = vshrl.u32 %v622, 7
      %v624 = vsub.s32 %v621, %v623
      %v625 = vrot.slane %v611, %v624
      %v626 = vcombine.low %v618, %v625
      %v627 = vcombine.high %v618, %v625
      %v629 = vunpack.c.l.s4 1966171168
      %v630 = vunpack.c.0.s8 %v629
      %v631 = vlaneseq
      %v632 = vshrl.u32 %v631, 7
      %v633 = vsub.s32 %v630, %v632
      %v634 = vrot.slane %v626, %v633
      %v636 = vunpack.c.l.s4 1966171168
      %v637 = vunpack.c.0.s8 %v636
      %v638 = vlaneseq
      %v639 = vshrl.u32 %v638, 7
      %v640 = vsub.s32 %v637, %v639
      %v641 = vrot.slane %v627, %v640
      %v676 = vunpack.c.l.b16 %v284
      %v677 = vunpack.c.l.b16 %v285
      %v678 = vunpack.c.l.b16 %v286
      %v679 = vunpack.c.l.b16 %v287
      %v680 = vunpack.c.l.b16 %v288
      %v681 = vunpack.c.l.b16 %v289
      %v682 = vunpack.c.l.b16 %v290
      %v683 = vunpack.c.l.b16 %v291
      %v684 = vunpack.c.l.b16 %v292
      %v685 = vunpack.c.l.b16 %v293
      %v686 = vunpack.c.l.b16 %v294
      %v687 = vunpack.c.l.b16 %v295
      %v688 = vunpack.c.l.b16 %v296
      %v689 = vunpack.c.l.b16 %v297
      %v690 = vunpack.c.l.b16 %v298
      %v691 = vunpack.c.l.b16 %v299
      %v692 = vunpack.c.l.b16 %v300
      %v693 = vunpack.c.l.b16 %v301
      %v694 = vunpack.c.l.b16 %v302
      %v695 = vunpack.c.l.b16 %v303
      %v696 = vunpack.c.l.b16 %v304
      %v697 = vunpack.c.l.b16 %v305
      %v698 = vunpack.c.l.b16 %v306
      %v699 = vunpack.c.l.b16 %v307
      %v700 = vunpack.c.l.b16 %v308
      %v701 = vunpack.c.l.b16 %v309
      %v702 = vunpack.c.l.b16 %v310
      %v703 = vunpack.c.l.b16 %v311
      %v704 = vunpack.c.l.b16 %v312
      %v705 = vunpack.c.l.b16 %v313
      %v706 = vunpack.c.l.b16 %v314
      %v707 = vunpack.c.l.b16 %v315
      %v708 = vpack.c.b16 %v677, %v676
      %v709 = vpack.c.b16 %v679, %v678
      %v710 = vpack.c.b16 %v681, %v680
      %v711 = vpack.c.b16 %v683, %v682
      %v712 = vpack.c.b16 %v685, %v684
      %v713 = vpack.c.b16 %v687, %v686
      %v714 = vpack.c.b16 %v689, %v688
      %v715 = vpack.c.b16 %v691, %v690
      %v716 = vpack.c.b16 %v693, %v692
      %v717 = vpack.c.b16 %v695, %v694
      %v718 = vpack.c.b16 %v697, %v696
      %v719 = vpack.c.b16 %v699, %v698
      %v720 = vpack.c.b16 %v701, %v700
      %v721 = vpack.c.b16 %v703, %v702
      %v722 = vpack.c.b16 %v705, %v704
      %v723 = vpack.c.b16 %v707, %v706
      %740 = vmatprep.subr.bf16.mxu0 0
      %741 = vmatpush1.bf16.msra.mxu0 %v708
      %742 = vmatprep.subr.bf16.mxu0 0
      %743 = vmatpush1.bf16.msra.mxu0 %v709
      %744 = vmatprep.subr.bf16.mxu0 0
      %745 = vmatpush1.bf16.msra.mxu0 %v710
      %746 = vmatprep.subr.bf16.mxu0 0
      %747 = vmatpush1.bf16.msra.mxu0 %v711
      %748 = vmatprep.subr.bf16.mxu0 0
      %749 = vmatpush1.bf16.msra.mxu0 %v712
      %750 = vmatprep.subr.bf16.mxu0 0
      %751 = vmatpush1.bf16.msra.mxu0 %v713
      %752 = vmatprep.subr.bf16.mxu0 0
      %753 = vmatpush1.bf16.msra.mxu0 %v714
      %754 = vmatprep.subr.bf16.mxu0 0
      %755 = vmatpush1.bf16.msra.mxu0 %v715
      %756 = vmatprep.subr.bf16.mxu0 0
      %757 = vmatpush1.bf16.msra.mxu0 %v716
      %758 = vmatprep.subr.bf16.mxu0 0
      %759 = vmatpush1.bf16.msra.mxu0 %v717
      %760 = vmatprep.subr.bf16.mxu0 0
      %761 = vmatpush1.bf16.msra.mxu0 %v718
      %762 = vmatprep.subr.bf16.mxu0 0
      %763 = vmatpush1.bf16.msra.mxu0 %v719
      %764 = vmatprep.subr.bf16.mxu0 0
      %765 = vmatpush1.bf16.msra.mxu0 %v720
      %766 = vmatprep.subr.bf16.mxu0 0
      %767 = vmatpush1.bf16.msra.mxu0 %v721
      %768 = vmatprep.subr.bf16.mxu0 0
      %769 = vmatpush1.bf16.msra.mxu0 %v722
      %770 = vmatprep.subr.bf16.mxu0 0
      %771 = vmatpush1.bf16.msra.mxu0 %v723
      %772 = vmatprep.mubr.bf16.mxu0 %v641
      %773 = vmatmul.mubr.bf16.gmra.mrb[0].mxu0 %v634
      %v774 = vpop.f32.mrb[0].mxu0
      %v775 = vadd.f32 %v605, %v774
      %v776 = vpop.f32.mrb[0].mxu0
      %v777 = vpop.f32.mrb[0].mxu0
      %v778 = vpop.f32.mrb[0].mxu0
      %779 = vdwg.mxu0
      %s780 = scalar_lea.vmem %s227, 4
      %v781 = vld [vmem:[%s780] sm:$0x5]
      %v782 = vld [vmem:[%s780 + $0x4] sm:$0x5]
      %v783 = vld [vmem:[%s780 + $0xc] sm:$0x5]
      %v784 = vld [vmem:[%s780 + $0x10] sm:$0x5]
      %v790 = vunpack.c.l.s4 1966171168
      %v791 = vunpack.c.0.s8 %v790
      %v792 = vlaneseq
      %v793 = vshrl.u32 %v792, 7
      %v794 = vsub.s32 %v791, %v793
      %v795 = vrot.slane %v781, %v794
      %v797 = vunpack.c.l.s4 1966171168
      %v798 = vunpack.c.0.s8 %v797
      %v799 = vlaneseq
      %v800 = vshrl.u32 %v799, 7
      %v801 = vsub.s32 %v798, %v800
      %v802 = vrot.slane %v782, %v801
      %v804 = vunpack.c.l.s4 1966171168
      %v805 = vunpack.c.0.s8 %v804
      %v806 = vlaneseq
      %v807 = vshrl.u32 %v806, 7
      %v808 = vsub.s32 %v805, %v807
      %v809 = vrot.slane %v783, %v808
      %v811 = vunpack.c.l.s4 1966171168
      %v812 = vunpack.c.0.s8 %v811
      %v813 = vlaneseq
      %v814 = vshrl.u32 %v813, 7
      %v815 = vsub.s32 %v812, %v814
      %v816 = vrot.slane %v784, %v815
      %s817 = scalar_lea.vmem %s233, 256
      %v818 = vld [vmem:[%s817] sm:$0xf]
      %v819 = vld [vmem:[%s817 + $0x4] sm:$0xf]
      %v820 = vld [vmem:[%s817 + $0x8] sm:$0xf]
      %v821 = vld [vmem:[%s817 + $0xc] sm:$0xf]
      %v822 = vld [vmem:[%s817 + $0x10] sm:$0xf]
      %v823 = vld [vmem:[%s817 + $0x14] sm:$0xf]
      %v824 = vld [vmem:[%s817 + $0x18] sm:$0xf]
      %v825 = vld [vmem:[%s817 + $0x1c] sm:$0xf]
      %v826 = vld [vmem:[%s817 + $0x20] sm:$0xf]
      %v827 = vld [vmem:[%s817 + $0x24] sm:$0xf]
      %v828 = vld [vmem:[%s817 + $0x28] sm:$0xf]
      %v829 = vld [vmem:[%s817 + $0x2c] sm:$0xf]
      %v830 = vld [vmem:[%s817 + $0x30] sm:$0xf]
      %v831 = vld [vmem:[%s817 + $0x34] sm:$0xf]
      %v832 = vld [vmem:[%s817 + $0x38] sm:$0xf]
      %v833 = vld [vmem:[%s817 + $0x3c] sm:$0xf]
      %v834 = vld [vmem:[%s817 + $0x40] sm:$0xf]
      %v835 = vld [vmem:[%s817 + $0x44] sm:$0xf]
      %v836 = vld [vmem:[%s817 + $0x48] sm:$0xf]
      %v837 = vld [vmem:[%s817 + $0x4c] sm:$0xf]
      %v838 = vld [vmem:[%s817 + $0x50] sm:$0xf]
      %v839 = vld [vmem:[%s817 + $0x54] sm:$0xf]
      %v840 = vld [vmem:[%s817 + $0x58] sm:$0xf]
      %v841 = vld [vmem:[%s817 + $0x5c] sm:$0xf]
      %v842 = vld [vmem:[%s817 + $0x60] sm:$0xf]
      %v843 = vld [vmem:[%s817 + $0x64] sm:$0xf]
      %v844 = vld [vmem:[%s817 + $0x68] sm:$0xf]
      %v845 = vld [vmem:[%s817 + $0x6c] sm:$0xf]
      %v846 = vld [vmem:[%s817 + $0x70] sm:$0xf]
      %v847 = vld [vmem:[%s817 + $0x74] sm:$0xf]
      %v848 = vld [vmem:[%s817 + $0x78] sm:$0xf]
      %v849 = vld [vmem:[%s817 + $0x7c] sm:$0xf]
      %v850 = vcombine.low %v795, %v802
      %v851 = vcombine.low %v809, %v816
      %v853 = vunpack.c.l.s4 1966171168
      %v854 = vunpack.c.0.s8 %v853
      %v855 = vlaneseq
      %v856 = vshrl.u32 %v855, 7
      %v857 = vsub.s32 %v854, %v856
      %v858 = vrot.slane %v850, %v857
      %v860 = vunpack.c.l.s4 1966171168
      %v861 = vunpack.c.0.s8 %v860
      %v862 = vlaneseq
      %v863 = vshrl.u32 %v862, 7
      %v864 = vsub.s32 %v861, %v863
      %v865 = vrot.slane %v851, %v864
      %v866 = vcombine.low %v858, %v865
      %v867 = vcombine.high %v858, %v865
      %v869 = vunpack.c.l.s4 1966171168
      %v870 = vunpack.c.0.s8 %v869
      %v871 = vlaneseq
      %v872 = vshrl.u32 %v871, 7
      %v873 = vsub.s32 %v870, %v872
      %v874 = vrot.slane %v866, %v873
      %v876 = vunpack.c.l.s4 1966171168
      %v877 = vunpack.c.0.s8 %v876
      %v878 = vlaneseq
      %v879 = vshrl.u32 %v878, 7
      %v880 = vsub.s32 %v877, %v879
      %v881 = vrot.slane %v867, %v880
      %v916 = vunpack.c.l.b16 %v818
      %v917 = vunpack.c.l.b16 %v819
      %v918 = vunpack.c.l.b16 %v820
      %v919 = vunpack.c.l.b16 %v821
      %v920 = vunpack.c.l.b16 %v822
      %v921 = vunpack.c.l.b16 %v823
      %v922 = vunpack.c.l.b16 %v824
      %v923 = vunpack.c.l.b16 %v825
      %v924 = vunpack.c.l.b16 %v826
      %v925 = vunpack.c.l.b16 %v827
      %v926 = vunpack.c.l.b16 %v828
      %v927 = vunpack.c.l.b16 %v829
      %v928 = vunpack.c.l.b16 %v830
      %v929 = vunpack.c.l.b16 %v831
      %v930 = vunpack.c.l.b16 %v832
      %v931 = vunpack.c.l.b16 %v833
      %v932 = vunpack.c.l.b16 %v834
      %v933 = vunpack.c.l.b16 %v835
      %v934 = vunpack.c.l.b16 %v836
      %v935 = vunpack.c.l.b16 %v837
      %v936 = vunpack.c.l.b16 %v838
      %v937 = vunpack.c.l.b16 %v839
      %v938 = vunpack.c.l.b16 %v840
      %v939 = vunpack.c.l.b16 %v841
      %v940 = vunpack.c.l.b16 %v842
      %v941 = vunpack.c.l.b16 %v843
      %v942 = vunpack.c.l.b16 %v844
      %v943 = vunpack.c.l.b16 %v845
      %v944 = vunpack.c.l.b16 %v846
      %v945 = vunpack.c.l.b16 %v847
      %v946 = vunpack.c.l.b16 %v848
      %v947 = vunpack.c.l.b16 %v849
      %v948 = vpack.c.b16 %v917, %v916
      %v949 = vpack.c.b16 %v919, %v918
      %v950 = vpack.c.b16 %v921, %v920
      %v951 = vpack.c.b16 %v923, %v922
      %v952 = vpack.c.b16 %v925, %v924
      %v953 = vpack.c.b16 %v927, %v926
      %v954 = vpack.c.b16 %v929, %v928
      %v955 = vpack.c.b16 %v931, %v930
      %v956 = vpack.c.b16 %v933, %v932
      %v957 = vpack.c.b16 %v935, %v934
      %v958 = vpack.c.b16 %v937, %v936
      %v959 = vpack.c.b16 %v939, %v938
      %v960 = vpack.c.b16 %v941, %v940
      %v961 = vpack.c.b16 %v943, %v942
      %v962 = vpack.c.b16 %v945, %v944
      %v963 = vpack.c.b16 %v947, %v946
      %980 = vmatprep.subr.bf16.mxu0 0
      %981 = vmatpush1.bf16.msra.mxu0 %v948
      %982 = vmatprep.subr.bf16.mxu0 0
      %983 = vmatpush1.bf16.msra.mxu0 %v949
      %984 = vmatprep.subr.bf16.mxu0 0
      %985 = vmatpush1.bf16.msra.mxu0 %v950
      %986 = vmatprep.subr.bf16.mxu0 0
      %987 = vmatpush1.bf16.msra.mxu0 %v951
      %988 = vmatprep.subr.bf16.mxu0 0
      %989 = vmatpush1.bf16.msra.mxu0 %v952
      %990 = vmatprep.subr.bf16.mxu0 0
      %991 = vmatpush1.bf16.msra.mxu0 %v953
      %992 = vmatprep.subr.bf16.mxu0 0
      %993 = vmatpush1.bf16.msra.mxu0 %v954
      %994 = vmatprep.subr.bf16.mxu0 0
      %995 = vmatpush1.bf16.msra.mxu0 %v955
      %996 = vmatprep.subr.bf16.mxu0 0
      %997 = vmatpush1.bf16.msra.mxu0 %v956
      %998 = vmatprep.subr.bf16.mxu0 0
      %999 = vmatpush1.bf16.msra.mxu0 %v957
      %1000 = vmatprep.subr.bf16.mxu0 0
      %1001 = vmatpush1.bf16.msra.mxu0 %v958
      %1002 = vmatprep.subr.bf16.mxu0 0
      %1003 = vmatpush1.bf16.msra.mxu0 %v959
      %1004 = vmatprep.subr.bf16.mxu0 0
      %1005 = vmatpush1.bf16.msra.mxu0 %v960
      %1006 = vmatprep.subr.bf16.mxu0 0
      %1007 = vmatpush1.bf16.msra.mxu0 %v961
      %1008 = vmatprep.subr.bf16.mxu0 0
      %1009 = vmatpush1.bf16.msra.mxu0 %v962
      %1010 = vmatprep.subr.bf16.mxu0 0
      %1011 = vmatpush1.bf16.msra.mxu0 %v963
      %1012 = vmatprep.mubr.bf16.mxu0 %v881
      %1013 = vmatmul.mubr.bf16.gmra.mrb[0].mxu0 %v874
      %v1014 = vpop.f32.mrb[0].mxu0
      %v1015 = vadd.f32 0.0, %v1014
      %v1016 = vpop.f32.mrb[0].mxu0
      %v1017 = vpop.f32.mrb[0].mxu0
      %v1018 = vpop.f32.mrb[0].mxu0
      %1019 = vdwg.mxu0
      %v1020 = vadd.f32 %v775, %v1015
      %v1021 = vld [vmem:[%s780] sm:$0xf]
      %v1022 = vld [vmem:[%s780 + $0x4] sm:$0xf]
      %v1023 = vld [vmem:[%s780 + $0xc] sm:$0xf]
      %v1024 = vld [vmem:[%s780 + $0x10] sm:$0xf]
      %v1030 = vunpack.c.l.s4 1966171168
      %v1031 = vunpack.c.0.s8 %v1030
      %v1032 = vlaneseq
      %v1033 = vshrl.u32 %v1032, 7
      %v1034 = vsub.s32 %v1031, %v1033
      %v1035 = vrot.slane %v1021, %v1034
      %v1036 = vcombine.high %v1035, %v1035
      %v1038 = vunpack.c.l.s4 1966171168
      %v1039 = vunpack.c.0.s8 %v1038
      %v1040 = vlaneseq
      %v1041 = vshrl.u32 %v1040, 7
      %v1042 = vsub.s32 %v1039, %v1041
      %v1043 = vrot.slane %v1022, %v1042
      %v1044 = vcombine.high %v1043, %v1043
      %v1046 = vunpack.c.l.s4 1966171168
      %v1047 = vunpack.c.0.s8 %v1046
      %v1048 = vlaneseq
      %v1049 = vshrl.u32 %v1048, 7
      %v1050 = vsub.s32 %v1047, %v1049
      %v1051 = vrot.slane %v1023, %v1050
      %v1052 = vcombine.high %v1051, %v1051
      %v1054 = vunpack.c.l.s4 1966171168
      %v1055 = vunpack.c.0.s8 %v1054
      %v1056 = vlaneseq
      %v1057 = vshrl.u32 %v1056, 7
      %v1058 = vsub.s32 %v1055, %v1057
      %v1059 = vrot.slane %v1024, %v1058
      %v1060 = vcombine.high %v1059, %v1059
      %v1062 = vshrl.u32 %v1035, 16
      %v1064 = vrot.slane %v1062, 7
      %v1065 = vrot.slane %v1064, 1
      %v1067 = vshll.u32 %v1036, 16
      %v1069 = vsel %vm370, %v1065, %v1067
      %v1071 = vshrl.u32 %v1043, 16
      %v1073 = vrot.slane %v1071, 7
      %v1074 = vrot.slane %v1073, 1
      %v1076 = vshll.u32 %v1044, 16
      %v1078 = vsel %vm370, %v1074, %v1076
      %v1080 = vshrl.u32 %v1051, 16
      %v1082 = vrot.slane %v1080, 7
      %v1083 = vrot.slane %v1082, 1
      %v1085 = vshll.u32 %v1052, 16
      %v1087 = vsel %vm370, %v1083, %v1085
      %v1089 = vshrl.u32 %v1059, 16
      %v1091 = vrot.slane %v1089, 7
      %v1092 = vrot.slane %v1091, 1
      %v1094 = vshll.u32 %v1060, 16
      %v1096 = vsel %vm370, %v1092, %v1094
      %s1097 = scalar_lea.vmem %s233, 384
      %v1098 = vld [vmem:[%s1097] sm:$0xf]
      %v1099 = vld [vmem:[%s1097 + $0x4] sm:$0xf]
      %v1100 = vld [vmem:[%s1097 + $0x8] sm:$0xf]
      %v1101 = vld [vmem:[%s1097 + $0xc] sm:$0xf]
      %v1102 = vld [vmem:[%s1097 + $0x10] sm:$0xf]
      %v1103 = vld [vmem:[%s1097 + $0x14] sm:$0xf]
      %v1104 = vld [vmem:[%s1097 + $0x18] sm:$0xf]
      %v1105 = vld [vmem:[%s1097 + $0x1c] sm:$0xf]
      %v1106 = vld [vmem:[%s1097 + $0x20] sm:$0xf]
      %v1107 = vld [vmem:[%s1097 + $0x24] sm:$0xf]
      %v1108 = vld [vmem:[%s1097 + $0x28] sm:$0xf]
      %v1109 = vld [vmem:[%s1097 + $0x2c] sm:$0xf]
      %v1110 = vld [vmem:[%s1097 + $0x30] sm:$0xf]
      %v1111 = vld [vmem:[%s1097 + $0x34] sm:$0xf]
      %v1112 = vld [vmem:[%s1097 + $0x38] sm:$0xf]
      %v1113 = vld [vmem:[%s1097 + $0x3c] sm:$0xf]
      %v1114 = vld [vmem:[%s1097 + $0x40] sm:$0xf]
      %v1115 = vld [vmem:[%s1097 + $0x44] sm:$0xf]
      %v1116 = vld [vmem:[%s1097 + $0x48] sm:$0xf]
      %v1117 = vld [vmem:[%s1097 + $0x4c] sm:$0xf]
      %v1118 = vld [vmem:[%s1097 + $0x50] sm:$0xf]
      %v1119 = vld [vmem:[%s1097 + $0x54] sm:$0xf]
      %v1120 = vld [vmem:[%s1097 + $0x58] sm:$0xf]
      %v1121 = vld [vmem:[%s1097 + $0x5c] sm:$0xf]
      %v1122 = vld [vmem:[%s1097 + $0x60] sm:$0xf]
      %v1123 = vld [vmem:[%s1097 + $0x64] sm:$0xf]
      %v1124 = vld [vmem:[%s1097 + $0x68] sm:$0xf]
      %v1125 = vld [vmem:[%s1097 + $0x6c] sm:$0xf]
      %v1126 = vld [vmem:[%s1097 + $0x70] sm:$0xf]
      %v1127 = vld [vmem:[%s1097 + $0x74] sm:$0xf]
      %v1128 = vld [vmem:[%s1097 + $0x78] sm:$0xf]
      %v1129 = vld [vmem:[%s1097 + $0x7c] sm:$0xf]
      %v1130 = vcombine.low %v1069, %v1078
      %v1131 = vcombine.low %v1087, %v1096
      %v1133 = vunpack.c.l.s4 1966171168
      %v1134 = vunpack.c.0.s8 %v1133
      %v1135 = vlaneseq
      %v1136 = vshrl.u32 %v1135, 7
      %v1137 = vsub.s32 %v1134, %v1136
      %v1138 = vrot.slane %v1130, %v1137
      %v1140 = vunpack.c.l.s4 1966171168
      %v1141 = vunpack.c.0.s8 %v1140
      %v1142 = vlaneseq
      %v1143 = vshrl.u32 %v1142, 7
      %v1144 = vsub.s32 %v1141, %v1143
      %v1145 = vrot.slane %v1131, %v1144
      %v1146 = vcombine.low %v1138, %v1145
      %v1147 = vcombine.high %v1138, %v1145
      %v1149 = vunpack.c.l.s4 1966171168
      %v1150 = vunpack.c.0.s8 %v1149
      %v1151 = vlaneseq
      %v1152 = vshrl.u32 %v1151, 7
      %v1153 = vsub.s32 %v1150, %v1152
      %v1154 = vrot.slane %v1146, %v1153
      %v1156 = vunpack.c.l.s4 1966171168
      %v1157 = vunpack.c.0.s8 %v1156
      %v1158 = vlaneseq
      %v1159 = vshrl.u32 %v1158, 7
      %v1160 = vsub.s32 %v1157, %v1159
      %v1161 = vrot.slane %v1147, %v1160
      %v1196 = vunpack.c.l.b16 %v1098
      %v1197 = vunpack.c.l.b16 %v1099
      %v1198 = vunpack.c.l.b16 %v1100
      %v1199 = vunpack.c.l.b16 %v1101
      %v1200 = vunpack.c.l.b16 %v1102
      %v1201 = vunpack.c.l.b16 %v1103
      %v1202 = vunpack.c.l.b16 %v1104
      %v1203 = vunpack.c.l.b16 %v1105
      %v1204 = vunpack.c.l.b16 %v1106
      %v1205 = vunpack.c.l.b16 %v1107
      %v1206 = vunpack.c.l.b16 %v1108
      %v1207 = vunpack.c.l.b16 %v1109
      %v1208 = vunpack.c.l.b16 %v1110
      %v1209 = vunpack.c.l.b16 %v1111
      %v1210 = vunpack.c.l.b16 %v1112
      %v1211 = vunpack.c.l.b16 %v1113
      %v1212 = vunpack.c.l.b16 %v1114
      %v1213 = vunpack.c.l.b16 %v1115
      %v1214 = vunpack.c.l.b16 %v1116
      %v1215 = vunpack.c.l.b16 %v1117
      %v1216 = vunpack.c.l.b16 %v1118
      %v1217 = vunpack.c.l.b16 %v1119
      %v1218 = vunpack.c.l.b16 %v1120
      %v1219 = vunpack.c.l.b16 %v1121
      %v1220 = vunpack.c.l.b16 %v1122
      %v1221 = vunpack.c.l.b16 %v1123
      %v1222 = vunpack.c.l.b16 %v1124
      %v1223 = vunpack.c.l.b16 %v1125
      %v1224 = vunpack.c.l.b16 %v1126
      %v1225 = vunpack.c.l.b16 %v1127
      %v1226 = vunpack.c.l.b16 %v1128
      %v1227 = vunpack.c.l.b16 %v1129
      %v1228 = vpack.c.b16 %v1197, %v1196
      %v1229 = vpack.c.b16 %v1199, %v1198
      %v1230 = vpack.c.b16 %v1201, %v1200
      %v1231 = vpack.c.b16 %v1203, %v1202
      %v1232 = vpack.c.b16 %v1205, %v1204
      %v1233 = vpack.c.b16 %v1207, %v1206
      %v1234 = vpack.c.b16 %v1209, %v1208
      %v1235 = vpack.c.b16 %v1211, %v1210
      %v1236 = vpack.c.b16 %v1213, %v1212
      %v1237 = vpack.c.b16 %v1215, %v1214
      %v1238 = vpack.c.b16 %v1217, %v1216
      %v1239 = vpack.c.b16 %v1219, %v1218
      %v1240 = vpack.c.b16 %v1221, %v1220
      %v1241 = vpack.c.b16 %v1223, %v1222
      %v1242 = vpack.c.b16 %v1225, %v1224
      %v1243 = vpack.c.b16 %v1227, %v1226
      %1260 = vmatprep.subr.bf16.mxu0 0
      %1261 = vmatpush1.bf16.msra.mxu0 %v1228
      %1262 = vmatprep.subr.bf16.mxu0 0
      %1263 = vmatpush1.bf16.msra.mxu0 %v1229
      %1264 = vmatprep.subr.bf16.mxu0 0
      %1265 = vmatpush1.bf16.msra.mxu0 %v1230
      %1266 = vmatprep.subr.bf16.mxu0 0
      %1267 = vmatpush1.bf16.msra.mxu0 %v1231
      %1268 = vmatprep.subr.bf16.mxu0 0
      %1269 = vmatpush1.bf16.msra.mxu0 %v1232
      %1270 = vmatprep.subr.bf16.mxu0 0
      %1271 = vmatpush1.bf16.msra.mxu0 %v1233
      %1272 = vmatprep.subr.bf16.mxu0 0
      %1273 = vmatpush1.bf16.msra.mxu0 %v1234
      %1274 = vmatprep.subr.bf16.mxu0 0
      %1275 = vmatpush1.bf16.msra.mxu0 %v1235
      %1276 = vmatprep.subr.bf16.mxu0 0
      %1277 = vmatpush1.bf16.msra.mxu0 %v1236
      %1278 = vmatprep.subr.bf16.mxu0 0
      %1279 = vmatpush1.bf16.msra.mxu0 %v1237
      %1280 = vmatprep.subr.bf16.mxu0 0
      %1281 = vmatpush1.bf16.msra.mxu0 %v1238
      %1282 = vmatprep.subr.bf16.mxu0 0
      %1283 = vmatpush1.bf16.msra.mxu0 %v1239
      %1284 = vmatprep.subr.bf16.mxu0 0
      %1285 = vmatpush1.bf16.msra.mxu0 %v1240
      %1286 = vmatprep.subr.bf16.mxu0 0
      %1287 = vmatpush1.bf16.msra.mxu0 %v1241
      %1288 = vmatprep.subr.bf16.mxu0 0
      %1289 = vmatpush1.bf16.msra.mxu0 %v1242
      %1290 = vmatprep.subr.bf16.mxu0 0
      %1291 = vmatpush1.bf16.msra.mxu0 %v1243
      %1292 = vmatprep.mubr.bf16.mxu0 %v1161
      %1293 = vmatmul.mubr.bf16.gmra.mrb[0].mxu0 %v1154
      %v1294 = vpop.f32.mrb[0].mxu0
      %v1295 = vadd.f32 0.0, %v1294
      %v1296 = vpop.f32.mrb[0].mxu0
      %v1297 = vpop.f32.mrb[0].mxu0
      %v1298 = vpop.f32.mrb[0].mxu0
      %1299 = vdwg.mxu0
      %v1300 = vadd.f32 %v1020, %v1295
      %v1301 = vld [vmem:[%s236] sm:$0x1]
      %v1303 = vlaneseq
      %v1304 = vshrl.u32 %v1303, 7
      %v1305 = vsub.s32 0, %v1304
      %v1306 = vrot.slane %v1301, %v1305
      %v1308 = vadd.f32 %v1300, %v1306
      %v1309 = vmax.f32 %v1308, 0.0
      %v1311 = vcombine.high %v1309, %v1309
      %v1313 = vunpack.c.l.s4 1983009808
      %v1314 = vunpack.c.0.s8 %v1313
      %v1315 = vlaneseq
      %v1316 = vshrl.u32 %v1315, 7
      %v1317 = vsub.s32 %v1314, %v1316
      %v1318 = vrot.slane %v1309, %v1317
      %v1320 = vunpack.c.l.s4 1983009808
      %v1321 = vunpack.c.0.s8 %v1320
      %v1322 = vlaneseq
      %v1323 = vshrl.u32 %v1322, 7
      %v1324 = vsub.s32 %v1321, %v1323
      %v1325 = vrot.slane %v1311, %v1324
      %v1326 = vcombine.high %v1318, %v1318
      %v1327 = vcombine.high %v1325, %v1325
      %v1332 = vpack.c.bf16 %v1318, %v1318
      %v1333 = vpack.c.bf16 %v1326, %v1326
      %v1334 = vpack.c.bf16 %v1325, %v1325
      %v1335 = vpack.c.bf16 %v1327, %v1327
      %vm1336 = vcmask 516096
      %1337 = vst.msk [vmem:[%s245] sm:$0x1] %vm1336, %v1332
      %1338 = vst.msk [vmem:[%s245 + $0x1] sm:$0x1] %vm1336, %v1333
      %1339 = vst.msk [vmem:[%s245 + $0x2] sm:$0x1] %vm1336, %v1334
      %1340 = vst.msk [vmem:[%s245 + $0x3] sm:$0x1] %vm1336, %v1335
      %s1341 = smul.u32 2, %s19
      %p1342 = scmp.lt.s32.totalorder %s18, 1
      %s1343 = scalar_select %p1342, %s18, 1
      %p1344 = scmp.lt.s32.totalorder %s1341, 1
      %s1345 = scalar_select %p1344, %s1341, 1
      %s1346 = smul.addr %s1345, 2
      %s1347 = smul.addr %s1343, 4
      %s1348 = sadd.s32 %s1346, %s1347
      %s1349 = scalar_lea.vmem %s3, %s1348
      // Predicated region
      $region33: #{forward.10} parent=31 // pred_check
        %p1350 = pneg %p126
      $region34: #{forward.10} parent=31 // pred_check_branch
        %1352 = sbr.rel (%p1350) target = $region36
      $region35: #{forward.10} parent=31 // pred_region
        %s1353 = smul.u32 2, %s19
      $region36: #{forward.10} parent=31 // pred_fallthru
        _
    $region32: #{forward.10} parent=5 // pred_fallthru
      _
    %p1354 = scmp.le.s32.totalorder 2, %s9
    // Predicated region
    $region37: #{forward.10} parent=5 // pred_check
      %p1355 = pneg %p1354
    $region38: #{forward.10} parent=5 // pred_check_branch
      %1357 = sbr.rel (%p1355) target = $region40
    $region39: #{forward.10} parent=5 // pred_region
      %s1358 = ssub.s32 %s9, 2
      // Predicated region
      $region41: #{forward.10} parent=39 // pred_check
        %p1359 = pneg %p132
      $region42: #{forward.10} parent=39 // pred_check_branch
        %1361 = sbr.rel (%p1359) target = $region44
      $region43: #{forward.10} parent=39 // pred_region
        %s1362 = smul.u32 2, %s21
        %p1363 = scmp.lt.s32.totalorder %s20, 1
        %s1364 = scalar_select %p1363, %s20, 1
        %p1365 = scmp.lt.s32.totalorder %s1362, 1
        %s1366 = scalar_select %p1365, %s1362, 1
        %s1367 = smul.addr %s1366, 2
        %s1368 = smul.addr %s1364, 4
        %s1369 = sadd.s32 %s1367, %s1368
        %s1370 = scalar_lea.vmem %s3, %s1369
      $region44: #{forward.10} parent=39 // pred_fallthru
        _
    $region40: #{forward.10} parent=5 // pred_fallthru
      _
  $region6: #{forward.10} parent=0 // loop_footer
    %s13 = sadd.s32 1, %s9
  $region7: #{forward.10} parent=0 // loop_footer_branch
    %8 = sbr.rel target = $region3
  $region8: #{forward.10} parent=0 // loop_exit
    _

// kernel: forward.11
$region0: #{forward.11}
  #allocation0 [shape = 'u32[]', space=smem, size = 0x4, offset = 0x4, fixed_abs, tag = 'smem constant byte address 0x4 - core index']
  #allocation1 [shape = 'u32[144,128]{1,0:T(1,128)}', space=vmem, size = 0x12000, scoped, tag = 'internal scratch']
  %s0 = inlined_call_operand.vmem [shape: bf16[2,2,2,2,256], index: 0, kind: input, shape index: {}]
  %s1 = inlined_call_operand.vmem [shape: bf16[2,2,2,256,32], index: 1, kind: input, shape index: {}]
  %s2 = inlined_call_operand.vmem [shape: f32[2,1,32], index: 2, kind: input, shape index: {}]
  %s3 = inlined_call_operand.vmem [shape: bf16[2,2,1,1,32], index: 3, kind: output, shape index: {}]
  %s4 = sld [smem:[#allocation0]]
  $region45: #{forward.11} parent=0
    _
  %s6 = ssub.s32 1, %s4
  %s7 = scalar_select 0, %s6, %s4
  loop: start=0, step=1, limit=4
  $region2: #{forward.11} parent=0 // loop_pre_header
    _
  $region3: #{forward.11} parent=0 // loop_header
    %s9 = sphi 0, %s13
    %p10 = scmp.ge.s32.totalorder %s9, 4
    %s16 = sphi 0, %s28
    %s17 = sphi 0, %s24
    %s18 = sphi 0, %s16
    %s19 = sphi 0, %s17
    %s20 = sphi 0, %s18
    %s21 = sphi 0, %s19
    %s33 = sphi 0, %s35
    %s36 = sphi 0, %s33
    %s37 = sphi 0, %s36
    %s53 = sphi 0, %s37
    %s59 = sphi 0, %s61
    %s62 = sphi 0, %s59
    %s63 = sphi 0, %s62
    %s79 = sphi 0, %s63
    %s85 = sphi 0, %s87
    %s88 = sphi 0, %s85
    %s89 = sphi 0, %s88
    %s105 = sphi 0, %s89
    %s113 = sphi 0, %s115
    %s116 = sphi 0, %s113
    %s117 = sphi 0, %s116
    %s133 = sphi 0, %s117
  $region4: #{forward.11} parent=0 // loop_header_branch
    %12 = sbr.rel (%p10) target = $region8
  $region5: #{forward.11} parent=0 // loop_body
    %s14 = ssub.s32 %s9, 1
    %s15 = ssub.s32 %s9, 2
    %s22 = sadd.s32 1, %s17
    %p23 = scmp.ge.s32.totalorder %s22, 1
    %s24 = scalar_select %p23, 0, %s22
    %s25 = sadd.s32 1, %s16
    %s26 = scalar_select %p23, %s25, %s16
    %p27 = scmp.ge.s32.totalorder %s26, 2
    %s28 = scalar_select %p27, 0, %s26
    %s29 = ssub.s32 %s16, %s28
    %s30 = ssub.s32 %s17, %s24
    %s31 = sor.u32 %s29, %s30
    %p32 = scmp.eq.s32.totalorder %s31, 0
    %s34 = sadd.s32 %s33, 1
    %s35 = scalar_select %p32, %s33, %s34
    %p38 = pneg %p32
    %p39 = scmp.eq.s32.totalorder %s9, 1
    %p40 = por %p38, %p39
    %p41 = scmp.ne.s32.totalorder %s33, %s36
    %p42 = scmp.eq.s32.totalorder %s9, 0
    %p43 = por %p41, %p42
    %p44 = scmp.ne.s32.totalorder %s33, %s36
    %p45 = scmp.eq.s32.totalorder %s14, 1
    %p46 = por %p44, %p45
    %p47 = scmp.ne.s32.totalorder %s36, %s37
    %p48 = scmp.eq.s32.totalorder %s14, 0
    %p49 = por %p47, %p48
    %p50 = scmp.ne.s32.totalorder %s36, %s37
    %p51 = scmp.eq.s32.totalorder %s15, 1
    %p52 = por %p50, %p51
    %p54 = scmp.ne.s32.totalorder %s37, %s53
    %p55 = scmp.eq.s32.totalorder %s15, 0
    %p56 = por %p54, %p55
    %s57 = ssub.s32 %s16, %s28
    %p58 = scmp.eq.s32.totalorder %s57, 0
    %s60 = sadd.s32 %s59, 1
    %s61 = scalar_select %p58, %s59, %s60
    %p64 = pneg %p58
    %p65 = scmp.eq.s32.totalorder %s9, 1
    %p66 = por %p64, %p65
    %p67 = scmp.ne.s32.totalorder %s59, %s62
    %p68 = scmp.eq.s32.totalorder %s9, 0
    %p69 = por %p67, %p68
    %p70 = scmp.ne.s32.totalorder %s59, %s62
    %p71 = scmp.eq.s32.totalorder %s14, 1
    %p72 = por %p70, %p71
    %p73 = scmp.ne.s32.totalorder %s62, %s63
    %p74 = scmp.eq.s32.totalorder %s14, 0
    %p75 = por %p73, %p74
    %p76 = scmp.ne.s32.totalorder %s62, %s63
    %p77 = scmp.eq.s32.totalorder %s15, 1
    %p78 = por %p76, %p77
    %p80 = scmp.ne.s32.totalorder %s63, %s79
    %p81 = scmp.eq.s32.totalorder %s15, 0
    %p82 = por %p80, %p81
    %s83 = ssub.s32 %s16, %s28
    %p84 = scmp.eq.s32.totalorder %s83, 0
    %s86 = sadd.s32 %s85, 1
    %s87 = scalar_select %p84, %s85, %s86
    %p90 = pneg %p84
    %p91 = scmp.eq.s32.totalorder %s9, 1
    %p92 = por %p90, %p91
    %p93 = scmp.ne.s32.totalorder %s85, %s88
    %p94 = scmp.eq.s32.totalorder %s9, 0
    %p95 = por %p93, %p94
    %p96 = scmp.ne.s32.totalorder %s85, %s88
    %p97 = scmp.eq.s32.totalorder %s14, 1
    %p98 = por %p96, %p97
    %p99 = scmp.ne.s32.totalorder %s88, %s89
    %p100 = scmp.eq.s32.totalorder %s14, 0
    %p101 = por %p99, %p100
    %p102 = scmp.ne.s32.totalorder %s88, %s89
    %p103 = scmp.eq.s32.totalorder %s15, 1
    %p104 = por %p102, %p103
    %p106 = scmp.ne.s32.totalorder %s89, %s105
    %p107 = scmp.eq.s32.totalorder %s15, 0
    %p108 = por %p106, %p107
    %s109 = ssub.s32 %s16, %s28
    %s110 = ssub.s32 %s17, %s24
    %s111 = sor.u32 %s109, %s110
    %p112 = scmp.eq.s32.totalorder %s111, 0
    %s114 = sadd.s32 %s113, 1
    %s115 = scalar_select %p112, %s113, %s114
    %p118 = pneg %p112
    %p119 = scmp.eq.s32.totalorder %s9, 1
    %p120 = por %p118, %p119
    %p121 = scmp.ne.s32.totalorder %s113, %s116
    %p122 = scmp.eq.s32.totalorder %s9, 0
    %p123 = por %p121, %p122
    %p124 = scmp.ne.s32.totalorder %s113, %s116
    %p125 = scmp.eq.s32.totalorder %s14, 1
    %p126 = por %p124, %p125
    %p127 = scmp.ne.s32.totalorder %s116, %s117
    %p128 = scmp.eq.s32.totalorder %s14, 0
    %p129 = por %p127, %p128
    %p130 = scmp.ne.s32.totalorder %s116, %s117
    %p131 = scmp.eq.s32.totalorder %s15, 1
    %p132 = por %p130, %p131
    %p134 = scmp.ne.s32.totalorder %s117, %s133
    %p135 = scmp.eq.s32.totalorder %s15, 0
    %p136 = por %p134, %p135
    %p137 = scmp.le.s32.totalorder 1, %s9
    %p138 = scmp.lt.s32.totalorder %s9, 3
    %p139 = pnand %p137, %p138
    %p140 = pneg %p139
    // Predicated region
    $region9: #{forward.11} parent=5 // pred_check
      _
    $region10: #{forward.11} parent=5 // pred_check_branch
      %142 = sbr.rel (%p139) target = $region12
    $region11: #{forward.11} parent=5 // pred_region
      %s143 = ssub.s32 %s9, 1
    $region12: #{forward.11} parent=5 // pred_fallthru
      _
    %p144 = scmp.lt.s32.totalorder %s9, 2
    // Predicated region
    $region13: #{forward.11} parent=5 // pred_check
      %p145 = pneg %p144
    $region14: #{forward.11} parent=5 // pred_check_branch
      %147 = sbr.rel (%p145) target = $region16
    $region15: #{forward.11} parent=5 // pred_region
      // Predicated region
      $region17: #{forward.11} parent=15 // pred_check
        %p148 = pneg %p43
      $region18: #{forward.11} parent=15 // pred_check_branch
        %150 = sbr.rel (%p148) target = $region20
      $region19: #{forward.11} parent=15 // pred_region
        %s151 = smul.u32 2, %s17
        %p152 = scmp.lt.s32.totalorder %s16, 1
        %s153 = scalar_select %p152, %s16, 1
        %p154 = scmp.lt.s32.totalorder %s151, 1
        %s155 = scalar_select %p154, %s151, 1
        %s156 = smul.addr %s155, 4
        %s157 = smul.addr %s153, 8
        %s158 = sadd.s32 %s156, %s157
        %s159 = scalar_lea.vmem %s0, %s158
        %s160 = smul.u32 2, %s17
      $region20: #{forward.11} parent=15 // pred_fallthru
        _
      // Predicated region
      $region21: #{forward.11} parent=15 // pred_check
        %p161 = pneg %p69
      $region22: #{forward.11} parent=15 // pred_check_branch
        %163 = sbr.rel (%p161) target = $region24
      $region23: #{forward.11} parent=15 // pred_region
        %p164 = scmp.lt.s32.totalorder %s16, 1
        %s165 = scalar_select %p164, %s16, 1
        %s166 = smul.addr %s165, 128
        %s167 = smul.addr %s166, 4
        %s168 = scalar_lea.vmem %s1, %s167
      $region24: #{forward.11} parent=15 // pred_fallthru
        _
      // Predicated region
      $region25: #{forward.11} parent=15 // pred_check
        %p169 = pneg %p95
      $region26: #{forward.11} parent=15 // pred_check_branch
        %171 = sbr.rel (%p169) target = $region28
      $region27: #{forward.11} parent=15 // pred_region
        %p172 = scmp.lt.s32.totalorder %s16, 1
        %s173 = scalar_select %p172, %s16, 1
        %s174 = scalar_lea.vmem %s2, %s173
      $region28: #{forward.11} parent=15 // pred_fallthru
        _
    $region16: #{forward.11} parent=5 // pred_fallthru
      _
    %p175 = scmp.le.s32.totalorder 1, %s9
    %p176 = scmp.lt.s32.totalorder %s9, 3
    %p177 = pnand %p175, %p176
    %p178 = pneg %p177
    // Predicated region
    $region29: #{forward.11} parent=5 // pred_check
      _
    $region30: #{forward.11} parent=5 // pred_check_branch
      %180 = sbr.rel (%p177) target = $region32
    $region31: #{forward.11} parent=5 // pred_region
      %s181 = ssub.s32 %s9, 1
      %s182 = smul.u32 2, %s19
      %p183 = scmp.lt.s32.totalorder %s18, 1
      %s184 = scalar_select %p183, %s18, 1
      %p185 = scmp.lt.s32.totalorder %s182, 1
      %s186 = scalar_select %p185, %s182, 1
      %s187 = smul.addr %s186, 4
      %s188 = smul.addr %s184, 8
      %s189 = sadd.s32 %s187, %s188
      %s190 = scalar_lea.vmem %s0, %s189
      %p191 = pneg %p49
      %p192 = pneg %p46
      %p193 = scmp.lt.s32.totalorder %s18, 1
      %s194 = scalar_select %p193, %s18, 1
      %s195 = smul.addr %s194, 128
      %s196 = smul.addr %s195, 4
      %s197 = scalar_lea.vmem %s1, %s196
      %p198 = pneg %p75
      %p199 = pneg %p72
      %p200 = scmp.lt.s32.totalorder %s18, 1
      %s201 = scalar_select %p200, %s18, 1
      %s202 = scalar_lea.vmem %s2, %s201
      %p203 = pneg %p101
      %p204 = pneg %p98
      %p205 = pneg %p129
      %p206 = pneg %p126
      %s207 = smul.u32 2, %s19
      %p208 = scmp.lt.s32.totalorder %s18, 1
      %s209 = scalar_select %p208, %s18, 1
      %p210 = scmp.lt.s32.totalorder %s207, 1
      %s211 = scalar_select %p210, %s207, 1
      %s212 = smul.addr %s209, 2
      %s213 = sadd.s32 %s211, %s212
      %s214 = scalar_lea.vmem %s3, %s213
      %s215 = smul.u32 2, %s19
      %p216 = scmp.lt.s32.totalorder %s18, 1
      %s217 = scalar_select %p216, %s18, 1
      %p218 = scmp.lt.s32.totalorder %s215, 1
      %s219 = scalar_select %p218, %s215, 1
      %s220 = smul.addr %s219, 4
      %s221 = smul.addr %s217, 8
      %s222 = sadd.s32 %s220, %s221
      %s223 = scalar_lea.vmem %s0, %s222
      %s224 = smul.u32 2, %s19
      %p225 = scmp.lt.s32.totalorder %s18, 1
      %s226 = scalar_select %p225, %s18, 1
      %s227 = smul.addr %s226, 128
      %s228 = smul.addr %s227, 4
      %s229 = scalar_lea.vmem %s1, %s228
      %p230 = scmp.lt.s32.totalorder %s18, 1
      %s231 = scalar_select %p230, %s18, 1
      %s232 = scalar_lea.vmem %s2, %s231
      %s233 = smul.u32 2, %s19
      %p234 = scmp.lt.s32.totalorder %s18, 1
      %s235 = scalar_select %p234, %s18, 1
      %p236 = scmp.lt.s32.totalorder %s233, 1
      %s237 = scalar_select %p236, %s233, 1
      %s238 = smul.addr %s235, 2
      %s239 = sadd.s32 %s237, %s238
      %s240 = scalar_lea.vmem %s3, %s239
      %s241 = smul.u32 2, %s19
      %v243 = vld [vmem:[%s223] sm:$0x3]
      %v244 = vld [vmem:[%s223 + $0x4] sm:$0x3]
      %v245 = vld [vmem:[%s229] sm:$0xf]
      %v246 = vld [vmem:[%s229 + $0x4] sm:$0xf]
      %v247 = vld [vmem:[%s229 + $0x8] sm:$0xf]
      %v248 = vld [vmem:[%s229 + $0xc] sm:$0xf]
      %v249 = vld [vmem:[%s229 + $0x10] sm:$0xf]
      %v250 = vld [vmem:[%s229 + $0x14] sm:$0xf]
      %v251 = vld [vmem:[%s229 + $0x18] sm:$0xf]
      %v252 = vld [vmem:[%s229 + $0x1c] sm:$0xf]
      %v253 = vld [vmem:[%s229 + $0x20] sm:$0xf]
      %v254 = vld [vmem:[%s229 + $0x24] sm:$0xf]
      %v255 = vld [vmem:[%s229 + $0x28] sm:$0xf]
      %v256 = vld [vmem:[%s229 + $0x2c] sm:$0xf]
      %v257 = vld [vmem:[%s229 + $0x30] sm:$0xf]
      %v258 = vld [vmem:[%s229 + $0x34] sm:$0xf]
      %v259 = vld [vmem:[%s229 + $0x38] sm:$0xf]
      %v260 = vld [vmem:[%s229 + $0x3c] sm:$0xf]
      %v261 = vld [vmem:[%s229 + $0x40] sm:$0xf]
      %v262 = vld [vmem:[%s229 + $0x44] sm:$0xf]
      %v263 = vld [vmem:[%s229 + $0x48] sm:$0xf]
      %v264 = vld [vmem:[%s229 + $0x4c] sm:$0xf]
      %v265 = vld [vmem:[%s229 + $0x50] sm:$0xf]
      %v266 = vld [vmem:[%s229 + $0x54] sm:$0xf]
      %v267 = vld [vmem:[%s229 + $0x58] sm:$0xf]
      %v268 = vld [vmem:[%s229 + $0x5c] sm:$0xf]
      %v269 = vld [vmem:[%s229 + $0x60] sm:$0xf]
      %v270 = vld [vmem:[%s229 + $0x64] sm:$0xf]
      %v271 = vld [vmem:[%s229 + $0x68] sm:$0xf]
      %v272 = vld [vmem:[%s229 + $0x6c] sm:$0xf]
      %v273 = vld [vmem:[%s229 + $0x70] sm:$0xf]
      %v274 = vld [vmem:[%s229 + $0x74] sm:$0xf]
      %v275 = vld [vmem:[%s229 + $0x78] sm:$0xf]
      %v276 = vld [vmem:[%s229 + $0x7c] sm:$0xf]
      %s277 = scalar_lea.vmem %s229, 128
      %v278 = vld [vmem:[%s277] sm:$0xf]
      %v279 = vld [vmem:[%s277 + $0x4] sm:$0xf]
      %v280 = vld [vmem:[%s277 + $0x8] sm:$0xf]
      %v281 = vld [vmem:[%s277 + $0xc] sm:$0xf]
      %v282 = vld [vmem:[%s277 + $0x10] sm:$0xf]
      %v283 = vld [vmem:[%s277 + $0x14] sm:$0xf]
      %v284 = vld [vmem:[%s277 + $0x18] sm:$0xf]
      %v285 = vld [vmem:[%s277 + $0x1c] sm:$0xf]
      %v286 = vld [vmem:[%s277 + $0x20] sm:$0xf]
      %v287 = vld [vmem:[%s277 + $0x24] sm:$0xf]
      %v288 = vld [vmem:[%s277 + $0x28] sm:$0xf]
      %v289 = vld [vmem:[%s277 + $0x2c] sm:$0xf]
      %v290 = vld [vmem:[%s277 + $0x30] sm:$0xf]
      %v291 = vld [vmem:[%s277 + $0x34] sm:$0xf]
      %v292 = vld [vmem:[%s277 + $0x38] sm:$0xf]
      %v293 = vld [vmem:[%s277 + $0x3c] sm:$0xf]
      %v294 = vld [vmem:[%s277 + $0x40] sm:$0xf]
      %v295 = vld [vmem:[%s277 + $0x44] sm:$0xf]
      %v296 = vld [vmem:[%s277 + $0x48] sm:$0xf]
      %v297 = vld [vmem:[%s277 + $0x4c] sm:$0xf]
      %v298 = vld [vmem:[%s277 + $0x50] sm:$0xf]
      %v299 = vld [vmem:[%s277 + $0x54] sm:$0xf]
      %v300 = vld [vmem:[%s277 + $0x58] sm:$0xf]
      %v301 = vld [vmem:[%s277 + $0x5c] sm:$0xf]
      %v302 = vld [vmem:[%s277 + $0x60] sm:$0xf]
      %v303 = vld [vmem:[%s277 + $0x64] sm:$0xf]
      %v304 = vld [vmem:[%s277 + $0x68] sm:$0xf]
      %v305 = vld [vmem:[%s277 + $0x6c] sm:$0xf]
      %v306 = vld [vmem:[%s277 + $0x70] sm:$0xf]
      %v307 = vld [vmem:[%s277 + $0x74] sm:$0xf]
      %v308 = vld [vmem:[%s277 + $0x78] sm:$0xf]
      %v309 = vld [vmem:[%s277 + $0x7c] sm:$0xf]
      %v313 = vunpack.c.l.s4 1966171168
      %v314 = vunpack.c.0.s8 %v313
      %v315 = vlaneseq
      %v316 = vshrl.u32 %v315, 7
      %v317 = vsub.s32 %v314, %v316
      %v318 = vrot.slane %v243, %v317
      %v319 = vcombine.high %v318, %v318
      %v321 = vunpack.c.l.s4 1966171168
      %v322 = vunpack.c.0.s8 %v321
      %v323 = vlaneseq
      %v324 = vshrl.u32 %v323, 7
      %v325 = vsub.s32 %v322, %v324
      %v326 = vrot.slane %v318, %v325
      %v328 = vunpack.c.l.s4 1966171168
      %v329 = vunpack.c.0.s8 %v328
      %v330 = vlaneseq
      %v331 = vshrl.u32 %v330, 7
      %v332 = vsub.s32 %v329, %v331
      %v333 = vrot.slane %v319, %v332
      %v335 = vunpack.c.l.s4 1966171168
      %v336 = vunpack.c.0.s8 %v335
      %v337 = vlaneseq
      %v338 = vshrl.u32 %v337, 7
      %v339 = vsub.s32 %v336, %v338
      %v340 = vrot.slane %v244, %v339
      %v341 = vcombine.high %v340, %v340
      %v343 = vunpack.c.l.s4 1966171168
      %v344 = vunpack.c.0.s8 %v343
      %v345 = vlaneseq
      %v346 = vshrl.u32 %v345, 7
      %v347 = vsub.s32 %v344, %v346
      %v348 = vrot.slane %v340, %v347
      %v350 = vunpack.c.l.s4 1966171168
      %v351 = vunpack.c.0.s8 %v350
      %v352 = vlaneseq
      %v353 = vshrl.u32 %v352, 7
      %v354 = vsub.s32 %v351, %v353
      %v355 = vrot.slane %v341, %v354
      %v356 = vunpack.c.l.b16 %v326
      %v357 = vunpack.c.l.b16 %v333
      %v358 = vunpack.c.l.b16 %v348
      %v359 = vunpack.c.l.b16 %v355
      %v360 = vrot.slane %v356, 1
      %vm361 = vcmask 1041409
      %v362 = vsel %vm361, %v358, %v360
      %v363 = vrot.slane %v357, 1
      %v364 = vsel %vm361, %v359, %v363
      %v365 = vpack.c.b16 %v362, %v362
      %v366 = vpack.c.b16 %v364, %v364
      %v401 = vunpack.c.l.b16 %v278
      %v402 = vunpack.c.l.b16 %v279
      %v403 = vunpack.c.l.b16 %v280
      %v404 = vunpack.c.l.b16 %v281
      %v405 = vunpack.c.l.b16 %v282
      %v406 = vunpack.c.l.b16 %v283
      %v407 = vunpack.c.l.b16 %v284
      %v408 = vunpack.c.l.b16 %v285
      %v409 = vunpack.c.l.b16 %v286
      %v410 = vunpack.c.l.b16 %v287
      %v411 = vunpack.c.l.b16 %v288
      %v412 = vunpack.c.l.b16 %v289
      %v413 = vunpack.c.l.b16 %v290
      %v414 = vunpack.c.l.b16 %v291
      %v415 = vunpack.c.l.b16 %v292
      %v416 = vunpack.c.l.b16 %v293
      %v417 = vunpack.c.l.b16 %v294
      %v418 = vunpack.c.l.b16 %v295
      %v419 = vunpack.c.l.b16 %v296
      %v420 = vunpack.c.l.b16 %v297
      %v421 = vunpack.c.l.b16 %v298
      %v422 = vunpack.c.l.b16 %v299
      %v423 = vunpack.c.l.b16 %v300
      %v424 = vunpack.c.l.b16 %v301
      %v425 = vunpack.c.l.b16 %v302
      %v426 = vunpack.c.l.b16 %v303
      %v427 = vunpack.c.l.b16 %v304
      %v428 = vunpack.c.l.b16 %v305
      %v429 = vunpack.c.l.b16 %v306
      %v430 = vunpack.c.l.b16 %v307
      %v431 = vunpack.c.l.b16 %v308
      %v432 = vunpack.c.l.b16 %v309
      %v433 = vpack.c.b16 %v402, %v401
      %v434 = vpack.c.b16 %v404, %v403
      %v435 = vpack.c.b16 %v406, %v405
      %v436 = vpack.c.b16 %v408, %v407
      %v437 = vpack.c.b16 %v410, %v409
      %v438 = vpack.c.b16 %v412, %v411
      %v439 = vpack.c.b16 %v414, %v413
      %v440 = vpack.c.b16 %v416, %v415
      %v441 = vpack.c.b16 %v418, %v417
      %v442 = vpack.c.b16 %v420, %v419
      %v443 = vpack.c.b16 %v422, %v421
      %v444 = vpack.c.b16 %v424, %v423
      %v445 = vpack.c.b16 %v426, %v425
      %v446 = vpack.c.b16 %v428, %v427
      %v447 = vpack.c.b16 %v430, %v429
      %v448 = vpack.c.b16 %v432, %v431
      %465 = vmatprep.subr.bf16.mxu0 0
      %466 = vmatpush1.bf16.msra.mxu0 %v433
      %467 = vmatprep.subr.bf16.mxu0 0
      %468 = vmatpush1.bf16.msra.mxu0 %v434
      %469 = vmatprep.subr.bf16.mxu0 0
      %470 = vmatpush1.bf16.msra.mxu0 %v435
      %471 = vmatprep.subr.bf16.mxu0 0
      %472 = vmatpush1.bf16.msra.mxu0 %v436
      %473 = vmatprep.subr.bf16.mxu0 0
      %474 = vmatpush1.bf16.msra.mxu0 %v437
      %475 = vmatprep.subr.bf16.mxu0 0
      %476 = vmatpush1.bf16.msra.mxu0 %v438
      %477 = vmatprep.subr.bf16.mxu0 0
      %478 = vmatpush1.bf16.msra.mxu0 %v439
      %479 = vmatprep.subr.bf16.mxu0 0
      %480 = vmatpush1.bf16.msra.mxu0 %v440
      %481 = vmatprep.subr.bf16.mxu0 0
      %482 = vmatpush1.bf16.msra.mxu0 %v441
      %483 = vmatprep.subr.bf16.mxu0 0
      %484 = vmatpush1.bf16.msra.mxu0 %v442
      %485 = vmatprep.subr.bf16.mxu0 0
      %486 = vmatpush1.bf16.msra.mxu0 %v443
      %487 = vmatprep.subr.bf16.mxu0 0
      %488 = vmatpush1.bf16.msra.mxu0 %v444
      %489 = vmatprep.subr.bf16.mxu0 0
      %490 = vmatpush1.bf16.msra.mxu0 %v445
      %491 = vmatprep.subr.bf16.mxu0 0
      %492 = vmatpush1.bf16.msra.mxu0 %v446
      %493 = vmatprep.subr.bf16.mxu0 0
      %494 = vmatpush1.bf16.msra.mxu0 %v447
      %495 = vmatprep.subr.bf16.mxu0 0
      %496 = vmatpush1.bf16.msra.mxu0 %v448
      %497 = vmatprep.mubr.bf16.mxu0 %v366
      %498 = vmatmul.mubr.bf16.gmra.mrb[0].mxu0 %v365
      %v499 = vpop.f32.mrb[0].mxu0
      %v500 = vadd.f32 0.0, %v499
      %v501 = vpop.f32.mrb[0].mxu0
      %v502 = vpop.f32.mrb[0].mxu0
      %v503 = vpop.f32.mrb[0].mxu0
      %504 = vdwg.mxu0
      %v505 = vrot.slane %v358, 7
      %v506 = vsel %vm361, %v505, %v356
      %v507 = vrot.slane %v359, 7
      %v508 = vsel %vm361, %v507, %v357
      %v509 = vpack.c.b16 %v506, %v506
      %v510 = vpack.c.b16 %v508, %v508
      %v545 = vunpack.c.l.b16 %v245
      %v546 = vunpack.c.l.b16 %v246
      %v547 = vunpack.c.l.b16 %v247
      %v548 = vunpack.c.l.b16 %v248
      %v549 = vunpack.c.l.b16 %v249
      %v550 = vunpack.c.l.b16 %v250
      %v551 = vunpack.c.l.b16 %v251
      %v552 = vunpack.c.l.b16 %v252
      %v553 = vunpack.c.l.b16 %v253
      %v554 = vunpack.c.l.b16 %v254
      %v555 = vunpack.c.l.b16 %v255
      %v556 = vunpack.c.l.b16 %v256
      %v557 = vunpack.c.l.b16 %v257
      %v558 = vunpack.c.l.b16 %v258
      %v559 = vunpack.c.l.b16 %v259
      %v560 = vunpack.c.l.b16 %v260
      %v561 = vunpack.c.l.b16 %v261
      %v562 = vunpack.c.l.b16 %v262
      %v563 = vunpack.c.l.b16 %v263
      %v564 = vunpack.c.l.b16 %v264
      %v565 = vunpack.c.l.b16 %v265
      %v566 = vunpack.c.l.b16 %v266
      %v567 = vunpack.c.l.b16 %v267
      %v568 = vunpack.c.l.b16 %v268
      %v569 = vunpack.c.l.b16 %v269
      %v570 = vunpack.c.l.b16 %v270
      %v571 = vunpack.c.l.b16 %v271
      %v572 = vunpack.c.l.b16 %v272
      %v573 = vunpack.c.l.b16 %v273
      %v574 = vunpack.c.l.b16 %v274
      %v575 = vunpack.c.l.b16 %v275
      %v576 = vunpack.c.l.b16 %v276
      %v577 = vpack.c.b16 %v546, %v545
      %v578 = vpack.c.b16 %v548, %v547
      %v579 = vpack.c.b16 %v550, %v549
      %v580 = vpack.c.b16 %v552, %v551
      %v581 = vpack.c.b16 %v554, %v553
      %v582 = vpack.c.b16 %v556, %v555
      %v583 = vpack.c.b16 %v558, %v557
      %v584 = vpack.c.b16 %v560, %v559
      %v585 = vpack.c.b16 %v562, %v561
      %v586 = vpack.c.b16 %v564, %v563
      %v587 = vpack.c.b16 %v566, %v565
      %v588 = vpack.c.b16 %v568, %v567
      %v589 = vpack.c.b16 %v570, %v569
      %v590 = vpack.c.b16 %v572, %v571
      %v591 = vpack.c.b16 %v574, %v573
      %v592 = vpack.c.b16 %v576, %v575
      %609 = vmatprep.subr.bf16.mxu0 0
      %610 = vmatpush1.bf16.msra.mxu0 %v577
      %611 = vmatprep.subr.bf16.mxu0 0
      %612 = vmatpush1.bf16.msra.mxu0 %v578
      %613 = vmatprep.subr.bf16.mxu0 0
      %614 = vmatpush1.bf16.msra.mxu0 %v579
      %615 = vmatprep.subr.bf16.mxu0 0
      %616 = vmatpush1.bf16.msra.mxu0 %v580
      %617 = vmatprep.subr.bf16.mxu0 0
      %618 = vmatpush1.bf16.msra.mxu0 %v581
      %619 = vmatprep.subr.bf16.mxu0 0
      %620 = vmatpush1.bf16.msra.mxu0 %v582
      %621 = vmatprep.subr.bf16.mxu0 0
      %622 = vmatpush1.bf16.msra.mxu0 %v583
      %623 = vmatprep.subr.bf16.mxu0 0
      %624 = vmatpush1.bf16.msra.mxu0 %v584
      %625 = vmatprep.subr.bf16.mxu0 0
      %626 = vmatpush1.bf16.msra.mxu0 %v585
      %627 = vmatprep.subr.bf16.mxu0 0
      %628 = vmatpush1.bf16.msra.mxu0 %v586
      %629 = vmatprep.subr.bf16.mxu0 0
      %630 = vmatpush1.bf16.msra.mxu0 %v587
      %631 = vmatprep.subr.bf16.mxu0 0
      %632 = vmatpush1.bf16.msra.mxu0 %v588
      %633 = vmatprep.subr.bf16.mxu0 0
      %634 = vmatpush1.bf16.msra.mxu0 %v589
      %635 = vmatprep.subr.bf16.mxu0 0
      %636 = vmatpush1.bf16.msra.mxu0 %v590
      %637 = vmatprep.subr.bf16.mxu0 0
      %638 = vmatpush1.bf16.msra.mxu0 %v591
      %639 = vmatprep.subr.bf16.mxu0 0
      %640 = vmatpush1.bf16.msra.mxu0 %v592
      %641 = vmatprep.mubr.bf16.mxu0 %v510
      %642 = vmatmul.mubr.bf16.gmra.mrb[0].mxu0 %v509
      %v643 = vpop.f32.mrb[0].mxu0
      %v644 = vadd.f32 %v500, %v643
      %v645 = vpop.f32.mrb[0].mxu0
      %v646 = vpop.f32.mrb[0].mxu0
      %v647 = vpop.f32.mrb[0].mxu0
      %648 = vdwg.mxu0
      %s649 = scalar_lea.vmem %s223, 2
      %v650 = vld [vmem:[%s649] sm:$0x3]
      %v651 = vld [vmem:[%s649 + $0x4] sm:$0x3]
      %s652 = scalar_lea.vmem %s229, 256
      %v653 = vld [vmem:[%s652] sm:$0xf]
      %v654 = vld [vmem:[%s652 + $0x4] sm:$0xf]
      %v655 = vld [vmem:[%s652 + $0x8] sm:$0xf]
      %v656 = vld [vmem:[%s652 + $0xc] sm:$0xf]
      %v657 = vld [vmem:[%s652 + $0x10] sm:$0xf]
      %v658 = vld [vmem:[%s652 + $0x14] sm:$0xf]
      %v659 = vld [vmem:[%s652 + $0x18] sm:$0xf]
      %v660 = vld [vmem:[%s652 + $0x1c] sm:$0xf]
      %v661 = vld [vmem:[%s652 + $0x20] sm:$0xf]
      %v662 = vld [vmem:[%s652 + $0x24] sm:$0xf]
      %v663 = vld [vmem:[%s652 + $0x28] sm:$0xf]
      %v664 = vld [vmem:[%s652 + $0x2c] sm:$0xf]
      %v665 = vld [vmem:[%s652 + $0x30] sm:$0xf]
      %v666 = vld [vmem:[%s652 + $0x34] sm:$0xf]
      %v667 = vld [vmem:[%s652 + $0x38] sm:$0xf]
      %v668 = vld [vmem:[%s652 + $0x3c] sm:$0xf]
      %v669 = vld [vmem:[%s652 + $0x40] sm:$0xf]
      %v670 = vld [vmem:[%s652 + $0x44] sm:$0xf]
      %v671 = vld [vmem:[%s652 + $0x48] sm:$0xf]
      %v672 = vld [vmem:[%s652 + $0x4c] sm:$0xf]
      %v673 = vld [vmem:[%s652 + $0x50] sm:$0xf]
      %v674 = vld [vmem:[%s652 + $0x54] sm:$0xf]
      %v675 = vld [vmem:[%s652 + $0x58] sm:$0xf]
      %v676 = vld [vmem:[%s652 + $0x5c] sm:$0xf]
      %v677 = vld [vmem:[%s652 + $0x60] sm:$0xf]
      %v678 = vld [vmem:[%s652 + $0x64] sm:$0xf]
      %v679 = vld [vmem:[%s652 + $0x68] sm:$0xf]
      %v680 = vld [vmem:[%s652 + $0x6c] sm:$0xf]
      %v681 = vld [vmem:[%s652 + $0x70] sm:$0xf]
      %v682 = vld [vmem:[%s652 + $0x74] sm:$0xf]
      %v683 = vld [vmem:[%s652 + $0x78] sm:$0xf]
      %v684 = vld [vmem:[%s652 + $0x7c] sm:$0xf]
      %v688 = vunpack.c.l.s4 1966171168
      %v689 = vunpack.c.0.s8 %v688
      %v690 = vlaneseq
      %v691 = vshrl.u32 %v690, 7
      %v692 = vsub.s32 %v689, %v691
      %v693 = vrot.slane %v650, %v692
      %v694 = vcombine.high %v693, %v693
      %v696 = vunpack.c.l.s4 1966171168
      %v697 = vunpack.c.0.s8 %v696
      %v698 = vlaneseq
      %v699 = vshrl.u32 %v698, 7
      %v700 = vsub.s32 %v697, %v699
      %v701 = vrot.slane %v693, %v700
      %v703 = vunpack.c.l.s4 1966171168
      %v704 = vunpack.c.0.s8 %v703
      %v705 = vlaneseq
      %v706 = vshrl.u32 %v705, 7
      %v707 = vsub.s32 %v704, %v706
      %v708 = vrot.slane %v694, %v707
      %v710 = vunpack.c.l.s4 1966171168
      %v711 = vunpack.c.0.s8 %v710
      %v712 = vlaneseq
      %v713 = vshrl.u32 %v712, 7
      %v714 = vsub.s32 %v711, %v713
      %v715 = vrot.slane %v651, %v714
      %v716 = vcombine.high %v715, %v715
      %v718 = vunpack.c.l.s4 1966171168
      %v719 = vunpack.c.0.s8 %v718
      %v720 = vlaneseq
      %v721 = vshrl.u32 %v720, 7
      %v722 = vsub.s32 %v719, %v721
      %v723 = vrot.slane %v715, %v722
      %v725 = vunpack.c.l.s4 1966171168
      %v726 = vunpack.c.0.s8 %v725
      %v727 = vlaneseq
      %v728 = vshrl.u32 %v727, 7
      %v729 = vsub.s32 %v726, %v728
      %v730 = vrot.slane %v716, %v729
      %v731 = vunpack.c.l.b16 %v701
      %v732 = vunpack.c.l.b16 %v708
      %v733 = vunpack.c.l.b16 %v723
      %v734 = vunpack.c.l.b16 %v730
      %v735 = vrot.slane %v733, 7
      %v736 = vsel %vm361, %v735, %v731
      %v737 = vrot.slane %v734, 7
      %v738 = vsel %vm361, %v737, %v732
      %v739 = vpack.c.b16 %v736, %v736
      %v740 = vpack.c.b16 %v738, %v738
      %v775 = vunpack.c.l.b16 %v653
      %v776 = vunpack.c.l.b16 %v654
      %v777 = vunpack.c.l.b16 %v655
      %v778 = vunpack.c.l.b16 %v656
      %v779 = vunpack.c.l.b16 %v657
      %v780 = vunpack.c.l.b16 %v658
      %v781 = vunpack.c.l.b16 %v659
      %v782 = vunpack.c.l.b16 %v660
      %v783 = vunpack.c.l.b16 %v661
      %v784 = vunpack.c.l.b16 %v662
      %v785 = vunpack.c.l.b16 %v663
      %v786 = vunpack.c.l.b16 %v664
      %v787 = vunpack.c.l.b16 %v665
      %v788 = vunpack.c.l.b16 %v666
      %v789 = vunpack.c.l.b16 %v667
      %v790 = vunpack.c.l.b16 %v668
      %v791 = vunpack.c.l.b16 %v669
      %v792 = vunpack.c.l.b16 %v670
      %v793 = vunpack.c.l.b16 %v671
      %v794 = vunpack.c.l.b16 %v672
      %v795 = vunpack.c.l.b16 %v673
      %v796 = vunpack.c.l.b16 %v674
      %v797 = vunpack.c.l.b16 %v675
      %v798 = vunpack.c.l.b16 %v676
      %v799 = vunpack.c.l.b16 %v677
      %v800 = vunpack.c.l.b16 %v678
      %v801 = vunpack.c.l.b16 %v679
      %v802 = vunpack.c.l.b16 %v680
      %v803 = vunpack.c.l.b16 %v681
      %v804 = vunpack.c.l.b16 %v682
      %v805 = vunpack.c.l.b16 %v683
      %v806 = vunpack.c.l.b16 %v684
      %v807 = vpack.c.b16 %v776, %v775
      %v808 = vpack.c.b16 %v778, %v777
      %v809 = vpack.c.b16 %v780, %v779
      %v810 = vpack.c.b16 %v782, %v781
      %v811 = vpack.c.b16 %v784, %v783
      %v812 = vpack.c.b16 %v786, %v785
      %v813 = vpack.c.b16 %v788, %v787
      %v814 = vpack.c.b16 %v790, %v789
      %v815 = vpack.c.b16 %v792, %v791
      %v816 = vpack.c.b16 %v794, %v793
      %v817 = vpack.c.b16 %v796, %v795
      %v818 = vpack.c.b16 %v798, %v797
      %v819 = vpack.c.b16 %v800, %v799
      %v820 = vpack.c.b16 %v802, %v801
      %v821 = vpack.c.b16 %v804, %v803
      %v822 = vpack.c.b16 %v806, %v805
      %839 = vmatprep.subr.bf16.mxu0 0
      %840 = vmatpush1.bf16.msra.mxu0 %v807
      %841 = vmatprep.subr.bf16.mxu0 0
      %842 = vmatpush1.bf16.msra.mxu0 %v808
      %843 = vmatprep.subr.bf16.mxu0 0
      %844 = vmatpush1.bf16.msra.mxu0 %v809
      %845 = vmatprep.subr.bf16.mxu0 0
      %846 = vmatpush1.bf16.msra.mxu0 %v810
      %847 = vmatprep.subr.bf16.mxu0 0
      %848 = vmatpush1.bf16.msra.mxu0 %v811
      %849 = vmatprep.subr.bf16.mxu0 0
      %850 = vmatpush1.bf16.msra.mxu0 %v812
      %851 = vmatprep.subr.bf16.mxu0 0
      %852 = vmatpush1.bf16.msra.mxu0 %v813
      %853 = vmatprep.subr.bf16.mxu0 0
      %854 = vmatpush1.bf16.msra.mxu0 %v814
      %855 = vmatprep.subr.bf16.mxu0 0
      %856 = vmatpush1.bf16.msra.mxu0 %v815
      %857 = vmatprep.subr.bf16.mxu0 0
      %858 = vmatpush1.bf16.msra.mxu0 %v816
      %859 = vmatprep.subr.bf16.mxu0 0
      %860 = vmatpush1.bf16.msra.mxu0 %v817
      %861 = vmatprep.subr.bf16.mxu0 0
      %862 = vmatpush1.bf16.msra.mxu0 %v818
      %863 = vmatprep.subr.bf16.mxu0 0
      %864 = vmatpush1.bf16.msra.mxu0 %v819
      %865 = vmatprep.subr.bf16.mxu0 0
      %866 = vmatpush1.bf16.msra.mxu0 %v820
      %867 = vmatprep.subr.bf16.mxu0 0
      %868 = vmatpush1.bf16.msra.mxu0 %v821
      %869 = vmatprep.subr.bf16.mxu0 0
      %870 = vmatpush1.bf16.msra.mxu0 %v822
      %871 = vmatprep.mubr.bf16.mxu0 %v740
      %872 = vmatmul.mubr.bf16.gmra.mrb[0].mxu0 %v739
      %v873 = vpop.f32.mrb[0].mxu0
      %v874 = vadd.f32 0.0, %v873
      %v875 = vpop.f32.mrb[0].mxu0
      %v876 = vpop.f32.mrb[0].mxu0
      %v877 = vpop.f32.mrb[0].mxu0
      %878 = vdwg.mxu0
      %v879 = vadd.f32 %v644, %v874
      %v880 = vld [vmem:[%s649] sm:$0x3]
      %v881 = vld [vmem:[%s649 + $0x4] sm:$0x3]
      %s882 = scalar_lea.vmem %s229, 384
      %v883 = vld [vmem:[%s882] sm:$0xf]
      %v884 = vld [vmem:[%s882 + $0x4] sm:$0xf]
      %v885 = vld [vmem:[%s882 + $0x8] sm:$0xf]
      %v886 = vld [vmem:[%s882 + $0xc] sm:$0xf]
      %v887 = vld [vmem:[%s882 + $0x10] sm:$0xf]
      %v888 = vld [vmem:[%s882 + $0x14] sm:$0xf]
      %v889 = vld [vmem:[%s882 + $0x18] sm:$0xf]
      %v890 = vld [vmem:[%s882 + $0x1c] sm:$0xf]
      %v891 = vld [vmem:[%s882 + $0x20] sm:$0xf]
      %v892 = vld [vmem:[%s882 + $0x24] sm:$0xf]
      %v893 = vld [vmem:[%s882 + $0x28] sm:$0xf]
      %v894 = vld [vmem:[%s882 + $0x2c] sm:$0xf]
      %v895 = vld [vmem:[%s882 + $0x30] sm:$0xf]
      %v896 = vld [vmem:[%s882 + $0x34] sm:$0xf]
      %v897 = vld [vmem:[%s882 + $0x38] sm:$0xf]
      %v898 = vld [vmem:[%s882 + $0x3c] sm:$0xf]
      %v899 = vld [vmem:[%s882 + $0x40] sm:$0xf]
      %v900 = vld [vmem:[%s882 + $0x44] sm:$0xf]
      %v901 = vld [vmem:[%s882 + $0x48] sm:$0xf]
      %v902 = vld [vmem:[%s882 + $0x4c] sm:$0xf]
      %v903 = vld [vmem:[%s882 + $0x50] sm:$0xf]
      %v904 = vld [vmem:[%s882 + $0x54] sm:$0xf]
      %v905 = vld [vmem:[%s882 + $0x58] sm:$0xf]
      %v906 = vld [vmem:[%s882 + $0x5c] sm:$0xf]
      %v907 = vld [vmem:[%s882 + $0x60] sm:$0xf]
      %v908 = vld [vmem:[%s882 + $0x64] sm:$0xf]
      %v909 = vld [vmem:[%s882 + $0x68] sm:$0xf]
      %v910 = vld [vmem:[%s882 + $0x6c] sm:$0xf]
      %v911 = vld [vmem:[%s882 + $0x70] sm:$0xf]
      %v912 = vld [vmem:[%s882 + $0x74] sm:$0xf]
      %v913 = vld [vmem:[%s882 + $0x78] sm:$0xf]
      %v914 = vld [vmem:[%s882 + $0x7c] sm:$0xf]
      %v918 = vunpack.c.l.s4 1966171168
      %v919 = vunpack.c.0.s8 %v918
      %v920 = vlaneseq
      %v921 = vshrl.u32 %v920, 7
      %v922 = vsub.s32 %v919, %v921
      %v923 = vrot.slane %v880, %v922
      %v924 = vcombine.high %v923, %v923
      %v926 = vunpack.c.l.s4 1966171168
      %v927 = vunpack.c.0.s8 %v926
      %v928 = vlaneseq
      %v929 = vshrl.u32 %v928, 7
      %v930 = vsub.s32 %v927, %v929
      %v931 = vrot.slane %v923, %v930
      %v933 = vunpack.c.l.s4 1966171168
      %v934 = vunpack.c.0.s8 %v933
      %v935 = vlaneseq
      %v936 = vshrl.u32 %v935, 7
      %v937 = vsub.s32 %v934, %v936
      %v938 = vrot.slane %v924, %v937
      %v940 = vunpack.c.l.s4 1966171168
      %v941 = vunpack.c.0.s8 %v940
      %v942 = vlaneseq
      %v943 = vshrl.u32 %v942, 7
      %v944 = vsub.s32 %v941, %v943
      %v945 = vrot.slane %v881, %v944
      %v946 = vcombine.high %v945, %v945
      %v948 = vunpack.c.l.s4 1966171168
      %v949 = vunpack.c.0.s8 %v948
      %v950 = vlaneseq
      %v951 = vshrl.u32 %v950, 7
      %v952 = vsub.s32 %v949, %v951
      %v953 = vrot.slane %v945, %v952
      %v955 = vunpack.c.l.s4 1966171168
      %v956 = vunpack.c.0.s8 %v955
      %v957 = vlaneseq
      %v958 = vshrl.u32 %v957, 7
      %v959 = vsub.s32 %v956, %v958
      %v960 = vrot.slane %v946, %v959
      %v961 = vunpack.c.l.b16 %v931
      %v962 = vunpack.c.l.b16 %v938
      %v963 = vunpack.c.l.b16 %v953
      %v964 = vunpack.c.l.b16 %v960
      %v965 = vrot.slane %v961, 1
      %v966 = vsel %vm361, %v963, %v965
      %v967 = vrot.slane %v962, 1
      %v968 = vsel %vm361, %v964, %v967
      %v969 = vpack.c.b16 %v966, %v966
      %v970 = vpack.c.b16 %v968, %v968
      %v1005 = vunpack.c.l.b16 %v883
      %v1006 = vunpack.c.l.b16 %v884
      %v1007 = vunpack.c.l.b16 %v885
      %v1008 = vunpack.c.l.b16 %v886
      %v1009 = vunpack.c.l.b16 %v887
      %v1010 = vunpack.c.l.b16 %v888
      %v1011 = vunpack.c.l.b16 %v889
      %v1012 = vunpack.c.l.b16 %v890
      %v1013 = vunpack.c.l.b16 %v891
      %v1014 = vunpack.c.l.b16 %v892
      %v1015 = vunpack.c.l.b16 %v893
      %v1016 = vunpack.c.l.b16 %v894
      %v1017 = vunpack.c.l.b16 %v895
      %v1018 = vunpack.c.l.b16 %v896
      %v1019 = vunpack.c.l.b16 %v897
      %v1020 = vunpack.c.l.b16 %v898
      %v1021 = vunpack.c.l.b16 %v899
      %v1022 = vunpack.c.l.b16 %v900
      %v1023 = vunpack.c.l.b16 %v901
      %v1024 = vunpack.c.l.b16 %v902
      %v1025 = vunpack.c.l.b16 %v903
      %v1026 = vunpack.c.l.b16 %v904
      %v1027 = vunpack.c.l.b16 %v905
      %v1028 = vunpack.c.l.b16 %v906
      %v1029 = vunpack.c.l.b16 %v907
      %v1030 = vunpack.c.l.b16 %v908
      %v1031 = vunpack.c.l.b16 %v909
      %v1032 = vunpack.c.l.b16 %v910
      %v1033 = vunpack.c.l.b16 %v911
      %v1034 = vunpack.c.l.b16 %v912
      %v1035 = vunpack.c.l.b16 %v913
      %v1036 = vunpack.c.l.b16 %v914
      %v1037 = vpack.c.b16 %v1006, %v1005
      %v1038 = vpack.c.b16 %v1008, %v1007
      %v1039 = vpack.c.b16 %v1010, %v1009
      %v1040 = vpack.c.b16 %v1012, %v1011
      %v1041 = vpack.c.b16 %v1014, %v1013
      %v1042 = vpack.c.b16 %v1016, %v1015
      %v1043 = vpack.c.b16 %v1018, %v1017
      %v1044 = vpack.c.b16 %v1020, %v1019
      %v1045 = vpack.c.b16 %v1022, %v1021
      %v1046 = vpack.c.b16 %v1024, %v1023
      %v1047 = vpack.c.b16 %v1026, %v1025
      %v1048 = vpack.c.b16 %v1028, %v1027
      %v1049 = vpack.c.b16 %v1030, %v1029
      %v1050 = vpack.c.b16 %v1032, %v1031
      %v1051 = vpack.c.b16 %v1034, %v1033
      %v1052 = vpack.c.b16 %v1036, %v1035
      %1069 = vmatprep.subr.bf16.mxu0 0
      %1070 = vmatpush1.bf16.msra.mxu0 %v1037
      %1071 = vmatprep.subr.bf16.mxu0 0
      %1072 = vmatpush1.bf16.msra.mxu0 %v1038
      %1073 = vmatprep.subr.bf16.mxu0 0
      %1074 = vmatpush1.bf16.msra.mxu0 %v1039
      %1075 = vmatprep.subr.bf16.mxu0 0
      %1076 = vmatpush1.bf16.msra.mxu0 %v1040
      %1077 = vmatprep.subr.bf16.mxu0 0
      %1078 = vmatpush1.bf16.msra.mxu0 %v1041
      %1079 = vmatprep.subr.bf16.mxu0 0
      %1080 = vmatpush1.bf16.msra.mxu0 %v1042
      %1081 = vmatprep.subr.bf16.mxu0 0
      %1082 = vmatpush1.bf16.msra.mxu0 %v1043
      %1083 = vmatprep.subr.bf16.mxu0 0
      %1084 = vmatpush1.bf16.msra.mxu0 %v1044
      %1085 = vmatprep.subr.bf16.mxu0 0
      %1086 = vmatpush1.bf16.msra.mxu0 %v1045
      %1087 = vmatprep.subr.bf16.mxu0 0
      %1088 = vmatpush1.bf16.msra.mxu0 %v1046
      %1089 = vmatprep.subr.bf16.mxu0 0
      %1090 = vmatpush1.bf16.msra.mxu0 %v1047
      %1091 = vmatprep.subr.bf16.mxu0 0
      %1092 = vmatpush1.bf16.msra.mxu0 %v1048
      %1093 = vmatprep.subr.bf16.mxu0 0
      %1094 = vmatpush1.bf16.msra.mxu0 %v1049
      %1095 = vmatprep.subr.bf16.mxu0 0
      %1096 = vmatpush1.bf16.msra.mxu0 %v1050
      %1097 = vmatprep.subr.bf16.mxu0 0
      %1098 = vmatpush1.bf16.msra.mxu0 %v1051
      %1099 = vmatprep.subr.bf16.mxu0 0
      %1100 = vmatpush1.bf16.msra.mxu0 %v1052
      %1101 = vmatprep.mubr.bf16.mxu0 %v970
      %1102 = vmatmul.mubr.bf16.gmra.mrb[0].mxu0 %v969
      %v1103 = vpop.f32.mrb[0].mxu0
      %v1104 = vadd.f32 0.0, %v1103
      %v1105 = vpop.f32.mrb[0].mxu0
      %v1106 = vpop.f32.mrb[0].mxu0
      %v1107 = vpop.f32.mrb[0].mxu0
      %1108 = vdwg.mxu0
      %v1109 = vadd.f32 %v879, %v1104
      %v1110 = vld [vmem:[%s232] sm:$0x1]
      %v1112 = vlaneseq
      %v1113 = vshrl.u32 %v1112, 7
      %v1114 = vsub.s32 0, %v1113
      %v1115 = vrot.slane %v1110, %v1114
      %v1117 = vadd.f32 %v1109, %v1115
      %v1118 = vmax.f32 %v1117, 0.0
      %v1121 = vunpack.c.l.s4 1966171168
      %v1122 = vunpack.c.0.s8 %v1121
      %v1123 = vlaneseq
      %v1124 = vshrl.u32 %v1123, 7
      %v1125 = vsub.s32 %v1122, %v1124
      %v1126 = vrot.slane %v1118, %v1125
      %v1127 = vcombine.high %v1126, %v1126
      %v1129 = vunpack.c.l.s4 1966171168
      %v1130 = vunpack.c.0.s8 %v1129
      %v1131 = vlaneseq
      %v1132 = vshrl.u32 %v1131, 7
      %v1133 = vsub.s32 %v1130, %v1132
      %v1134 = vrot.slane %v1126, %v1133
      %v1136 = vunpack.c.l.s4 1966171168
      %v1137 = vunpack.c.0.s8 %v1136
      %v1138 = vlaneseq
      %v1139 = vshrl.u32 %v1138, 7
      %v1140 = vsub.s32 %v1137, %v1139
      %v1141 = vrot.slane %v1127, %v1140
      %v1144 = vpack.c.bf16 %v1134, %v1134
      %v1145 = vpack.c.bf16 %v1141, %v1141
      %vm1146 = vcmask 253952
      %vm1147 = vsmask.f32 256
      %vm1148 = vmand %vm1146, %vm1147
      %v1149 = vld [vmem:[%s240] sm:$0x1]
      %v1150 = vsel %vm1148, %v1144, %v1149
      %1151 = vst [vmem:[%s240] sm:$0x1] %v1150
      %v1152 = vld [vmem:[%s240 + $0x1] sm:$0x1]
      %v1153 = vsel %vm1148, %v1145, %v1152
      %1154 = vst [vmem:[%s240 + $0x1] sm:$0x1] %v1153
      %s1155 = smul.u32 2, %s19
      %p1156 = scmp.lt.s32.totalorder %s18, 1
      %s1157 = scalar_select %p1156, %s18, 1
      %p1158 = scmp.lt.s32.totalorder %s1155, 1
      %s1159 = scalar_select %p1158, %s1155, 1
      %s1160 = smul.addr %s1157, 2
      %s1161 = sadd.s32 %s1159, %s1160
      %s1162 = scalar_lea.vmem %s3, %s1161
      // Predicated region
      $region33: #{forward.11} parent=31 // pred_check
        %p1163 = pneg %p126
      $region34: #{forward.11} parent=31 // pred_check_branch
        %1165 = sbr.rel (%p1163) target = $region36
      $region35: #{forward.11} parent=31 // pred_region
        %s1166 = smul.u32 2, %s19
      $region36: #{forward.11} parent=31 // pred_fallthru
        _
    $region32: #{forward.11} parent=5 // pred_fallthru
      _
    %p1167 = scmp.le.s32.totalorder 2, %s9
    // Predicated region
    $region37: #{forward.11} parent=5 // pred_check
      %p1168 = pneg %p1167
    $region38: #{forward.11} parent=5 // pred_check_branch
      %1170 = sbr.rel (%p1168) target = $region40
    $region39: #{forward.11} parent=5 // pred_region
      %s1171 = ssub.s32 %s9, 2
      // Predicated region
      $region41: #{forward.11} parent=39 // pred_check
        %p1172 = pneg %p132
      $region42: #{forward.11} parent=39 // pred_check_branch
        %1174 = sbr.rel (%p1172) target = $region44
      $region43: #{forward.11} parent=39 // pred_region
        %s1175 = smul.u32 2, %s21
        %p1176 = scmp.lt.s32.totalorder %s20, 1
        %s1177 = scalar_select %p1176, %s20, 1
        %p1178 = scmp.lt.s32.totalorder %s1175, 1
        %s1179 = scalar_select %p1178, %s1175, 1
        %s1180 = smul.addr %s1177, 2
        %s1181 = sadd.s32 %s1179, %s1180
        %s1182 = scalar_lea.vmem %s3, %s1181
      $region44: #{forward.11} parent=39 // pred_fallthru
        _
    $region40: #{forward.11} parent=5 // pred_fallthru
      _
  $region6: #{forward.11} parent=0 // loop_footer
    %s13 = sadd.s32 1, %s9
  $region7: #{forward.11} parent=0 // loop_footer_branch
    %8 = sbr.rel target = $region3
  $region8: #{forward.11} parent=0 // loop_exit
    _

// kernel: forward.12
$region0: #{forward.12}
  #allocation0 [shape = 'u32[]', space=smem, size = 0x4, offset = 0x4, fixed_abs, tag = 'smem constant byte address 0x4 - core index']
  #allocation1 [shape = 'u32[144,128]{1,0:T(1,128)}', space=vmem, size = 0x12000, scoped, tag = 'internal scratch']
  %s0 = inlined_call_operand.vmem [shape: bf16[2,16,128], index: 0, kind: input, shape index: {}]
  %s1 = inlined_call_operand.vmem [shape: bf16[2,128,256], index: 1, kind: input, shape index: {}]
  %s2 = inlined_call_operand.vmem [shape: f32[2,1,256], index: 2, kind: input, shape index: {}]
  %s3 = inlined_call_operand.vmem [shape: f32[2,16,256], index: 3, kind: output, shape index: {}]
  %s4 = sld [smem:[#allocation0]]
  $region45: #{forward.12} parent=0
    _
  %s6 = ssub.s32 1, %s4
  %s7 = scalar_select 0, %s6, %s4
  loop: start=0, step=1, limit=4
  $region2: #{forward.12} parent=0 // loop_pre_header
    _
  $region3: #{forward.12} parent=0 // loop_header
    %s9 = sphi 0, %s13
    %p10 = scmp.ge.s32.totalorder %s9, 4
    %s16 = sphi 0, %s28
    %s17 = sphi 0, %s24
    %s18 = sphi 0, %s16
    %s19 = sphi 0, %s17
    %s20 = sphi 0, %s18
    %s21 = sphi 0, %s19
    %s33 = sphi 0, %s35
    %s36 = sphi 0, %s33
    %s37 = sphi 0, %s36
    %s53 = sphi 0, %s37
    %s59 = sphi 0, %s61
    %s62 = sphi 0, %s59
    %s63 = sphi 0, %s62
    %s79 = sphi 0, %s63
    %s85 = sphi 0, %s87
    %s88 = sphi 0, %s85
    %s89 = sphi 0, %s88
    %s105 = sphi 0, %s89
    %s113 = sphi 0, %s115
    %s116 = sphi 0, %s113
    %s117 = sphi 0, %s116
    %s133 = sphi 0, %s117
  $region4: #{forward.12} parent=0 // loop_header_branch
    %12 = sbr.rel (%p10) target = $region8
  $region5: #{forward.12} parent=0 // loop_body
    %s14 = ssub.s32 %s9, 1
    %s15 = ssub.s32 %s9, 2
    %s22 = sadd.s32 1, %s17
    %p23 = scmp.ge.s32.totalorder %s22, 1
    %s24 = scalar_select %p23, 0, %s22
    %s25 = sadd.s32 1, %s16
    %s26 = scalar_select %p23, %s25, %s16
    %p27 = scmp.ge.s32.totalorder %s26, 2
    %s28 = scalar_select %p27, 0, %s26
    %s29 = ssub.s32 %s16, %s28
    %s30 = ssub.s32 %s17, %s24
    %s31 = sor.u32 %s29, %s30
    %p32 = scmp.eq.s32.totalorder %s31, 0
    %s34 = sadd.s32 %s33, 1
    %s35 = scalar_select %p32, %s33, %s34
    %p38 = pneg %p32
    %p39 = scmp.eq.s32.totalorder %s9, 1
    %p40 = por %p38, %p39
    %p41 = scmp.ne.s32.totalorder %s33, %s36
    %p42 = scmp.eq.s32.totalorder %s9, 0
    %p43 = por %p41, %p42
    %p44 = scmp.ne.s32.totalorder %s33, %s36
    %p45 = scmp.eq.s32.totalorder %s14, 1
    %p46 = por %p44, %p45
    %p47 = scmp.ne.s32.totalorder %s36, %s37
    %p48 = scmp.eq.s32.totalorder %s14, 0
    %p49 = por %p47, %p48
    %p50 = scmp.ne.s32.totalorder %s36, %s37
    %p51 = scmp.eq.s32.totalorder %s15, 1
    %p52 = por %p50, %p51
    %p54 = scmp.ne.s32.totalorder %s37, %s53
    %p55 = scmp.eq.s32.totalorder %s15, 0
    %p56 = por %p54, %p55
    %s57 = ssub.s32 %s16, %s28
    %p58 = scmp.eq.s32.totalorder %s57, 0
    %s60 = sadd.s32 %s59, 1
    %s61 = scalar_select %p58, %s59, %s60
    %p64 = pneg %p58
    %p65 = scmp.eq.s32.totalorder %s9, 1
    %p66 = por %p64, %p65
    %p67 = scmp.ne.s32.totalorder %s59, %s62
    %p68 = scmp.eq.s32.totalorder %s9, 0
    %p69 = por %p67, %p68
    %p70 = scmp.ne.s32.totalorder %s59, %s62
    %p71 = scmp.eq.s32.totalorder %s14, 1
    %p72 = por %p70, %p71
    %p73 = scmp.ne.s32.totalorder %s62, %s63
    %p74 = scmp.eq.s32.totalorder %s14, 0
    %p75 = por %p73, %p74
    %p76 = scmp.ne.s32.totalorder %s62, %s63
    %p77 = scmp.eq.s32.totalorder %s15, 1
    %p78 = por %p76, %p77
    %p80 = scmp.ne.s32.totalorder %s63, %s79
    %p81 = scmp.eq.s32.totalorder %s15, 0
    %p82 = por %p80, %p81
    %s83 = ssub.s32 %s16, %s28
    %p84 = scmp.eq.s32.totalorder %s83, 0
    %s86 = sadd.s32 %s85, 1
    %s87 = scalar_select %p84, %s85, %s86
    %p90 = pneg %p84
    %p91 = scmp.eq.s32.totalorder %s9, 1
    %p92 = por %p90, %p91
    %p93 = scmp.ne.s32.totalorder %s85, %s88
    %p94 = scmp.eq.s32.totalorder %s9, 0
    %p95 = por %p93, %p94
    %p96 = scmp.ne.s32.totalorder %s85, %s88
    %p97 = scmp.eq.s32.totalorder %s14, 1
    %p98 = por %p96, %p97
    %p99 = scmp.ne.s32.totalorder %s88, %s89
    %p100 = scmp.eq.s32.totalorder %s14, 0
    %p101 = por %p99, %p100
    %p102 = scmp.ne.s32.totalorder %s88, %s89
    %p103 = scmp.eq.s32.totalorder %s15, 1
    %p104 = por %p102, %p103
    %p106 = scmp.ne.s32.totalorder %s89, %s105
    %p107 = scmp.eq.s32.totalorder %s15, 0
    %p108 = por %p106, %p107
    %s109 = ssub.s32 %s16, %s28
    %s110 = ssub.s32 %s17, %s24
    %s111 = sor.u32 %s109, %s110
    %p112 = scmp.eq.s32.totalorder %s111, 0
    %s114 = sadd.s32 %s113, 1
    %s115 = scalar_select %p112, %s113, %s114
    %p118 = pneg %p112
    %p119 = scmp.eq.s32.totalorder %s9, 1
    %p120 = por %p118, %p119
    %p121 = scmp.ne.s32.totalorder %s113, %s116
    %p122 = scmp.eq.s32.totalorder %s9, 0
    %p123 = por %p121, %p122
    %p124 = scmp.ne.s32.totalorder %s113, %s116
    %p125 = scmp.eq.s32.totalorder %s14, 1
    %p126 = por %p124, %p125
    %p127 = scmp.ne.s32.totalorder %s116, %s117
    %p128 = scmp.eq.s32.totalorder %s14, 0
    %p129 = por %p127, %p128
    %p130 = scmp.ne.s32.totalorder %s116, %s117
    %p131 = scmp.eq.s32.totalorder %s15, 1
    %p132 = por %p130, %p131
    %p134 = scmp.ne.s32.totalorder %s117, %s133
    %p135 = scmp.eq.s32.totalorder %s15, 0
    %p136 = por %p134, %p135
    %p137 = scmp.le.s32.totalorder 1, %s9
    %p138 = scmp.lt.s32.totalorder %s9, 3
    %p139 = pnand %p137, %p138
    %p140 = pneg %p139
    // Predicated region
    $region9: #{forward.12} parent=5 // pred_check
      _
    $region10: #{forward.12} parent=5 // pred_check_branch
      %142 = sbr.rel (%p139) target = $region12
    $region11: #{forward.12} parent=5 // pred_region
      %s143 = ssub.s32 %s9, 1
    $region12: #{forward.12} parent=5 // pred_fallthru
      _
    %p144 = scmp.lt.s32.totalorder %s9, 2
    // Predicated region
    $region13: #{forward.12} parent=5 // pred_check
      %p145 = pneg %p144
    $region14: #{forward.12} parent=5 // pred_check_branch
      %147 = sbr.rel (%p145) target = $region16
    $region15: #{forward.12} parent=5 // pred_region
      // Predicated region
      $region17: #{forward.12} parent=15 // pred_check
        %p148 = pneg %p43
      $region18: #{forward.12} parent=15 // pred_check_branch
        %150 = sbr.rel (%p148) target = $region20
      $region19: #{forward.12} parent=15 // pred_region
        %s151 = smul.u32 2, %s17
        %p152 = scmp.lt.s32.totalorder %s16, 1
        %s153 = scalar_select %p152, %s16, 1
        %p154 = scmp.lt.s32.totalorder %s151, 1
        %s155 = scalar_select %p154, %s151, 1
        %s156 = smul.addr %s153, 2
        %s157 = sadd.s32 %s155, %s156
        %s158 = smul.addr %s157, 4
        %s159 = scalar_lea.vmem %s0, %s158
        %s160 = smul.u32 2, %s17
      $region20: #{forward.12} parent=15 // pred_fallthru
        _
      // Predicated region
      $region21: #{forward.12} parent=15 // pred_check
        %p161 = pneg %p69
      $region22: #{forward.12} parent=15 // pred_check_branch
        %163 = sbr.rel (%p161) target = $region24
      $region23: #{forward.12} parent=15 // pred_region
        %p164 = scmp.lt.s32.totalorder %s16, 1
        %s165 = scalar_select %p164, %s16, 1
        %s166 = smul.addr %s165, 32
        %s167 = smul.addr %s166, 4
        %s168 = scalar_lea.vmem %s1, %s167
      $region24: #{forward.12} parent=15 // pred_fallthru
        _
      // Predicated region
      $region25: #{forward.12} parent=15 // pred_check
        %p169 = pneg %p95
      $region26: #{forward.12} parent=15 // pred_check_branch
        %171 = sbr.rel (%p169) target = $region28
      $region27: #{forward.12} parent=15 // pred_region
        %p172 = scmp.lt.s32.totalorder %s16, 1
        %s173 = scalar_select %p172, %s16, 1
        %s174 = smul.addr %s173, 2
        %s175 = scalar_lea.vmem %s2, %s174
      $region28: #{forward.12} parent=15 // pred_fallthru
        _
    $region16: #{forward.12} parent=5 // pred_fallthru
      _
    %p176 = scmp.le.s32.totalorder 1, %s9
    %p177 = scmp.lt.s32.totalorder %s9, 3
    %p178 = pnand %p176, %p177
    %p179 = pneg %p178
    // Predicated region
    $region29: #{forward.12} parent=5 // pred_check
      _
    $region30: #{forward.12} parent=5 // pred_check_branch
      %181 = sbr.rel (%p178) target = $region32
    $region31: #{forward.12} parent=5 // pred_region
      %s182 = ssub.s32 %s9, 1
      %s183 = smul.u32 2, %s19
      %p184 = scmp.lt.s32.totalorder %s18, 1
      %s185 = scalar_select %p184, %s18, 1
      %p186 = scmp.lt.s32.totalorder %s183, 1
      %s187 = scalar_select %p186, %s183, 1
      %s188 = smul.addr %s185, 2
      %s189 = sadd.s32 %s187, %s188
      %s190 = smul.addr %s189, 4
      %s191 = scalar_lea.vmem %s0, %s190
      %p192 = pneg %p49
      %p193 = pneg %p46
      %p194 = scmp.lt.s32.totalorder %s18, 1
      %s195 = scalar_select %p194, %s18, 1
      %s196 = smul.addr %s195, 32
      %s197 = smul.addr %s196, 4
      %s198 = scalar_lea.vmem %s1, %s197
      %p199 = pneg %p75
      %p200 = pneg %p72
      %p201 = scmp.lt.s32.totalorder %s18, 1
      %s202 = scalar_select %p201, %s18, 1
      %s203 = smul.addr %s202, 2
      %s204 = scalar_lea.vmem %s2, %s203
      %p205 = pneg %p101
      %p206 = pneg %p98
      %p207 = pneg %p129
      %p208 = pneg %p126
      %s209 = smul.u32 2, %s19
      %p210 = scmp.lt.s32.totalorder %s18, 1
      %s211 = scalar_select %p210, %s18, 1
      %p212 = scmp.lt.s32.totalorder %s209, 1
      %s213 = scalar_select %p212, %s209, 1
      %s214 = smul.addr %s213, 2
      %s215 = smul.addr %s211, 4
      %s216 = sadd.s32 %s214, %s215
      %s217 = smul.addr %s216, 8
      %s218 = scalar_lea.vmem %s3, %s217
      %s219 = smul.u32 2, %s19
      %p220 = scmp.lt.s32.totalorder %s18, 1
      %s221 = scalar_select %p220, %s18, 1
      %p222 = scmp.lt.s32.totalorder %s219, 1
      %s223 = scalar_select %p222, %s219, 1
      %s224 = smul.addr %s221, 2
      %s225 = sadd.s32 %s223, %s224
      %s226 = smul.addr %s225, 4
      %s227 = scalar_lea.vmem %s0, %s226
      %s228 = smul.u32 2, %s19
      %p229 = scmp.lt.s32.totalorder %s18, 1
      %s230 = scalar_select %p229, %s18, 1
      %s231 = smul.addr %s230, 32
      %s232 = smul.addr %s231, 4
      %s233 = scalar_lea.vmem %s1, %s232
      %p234 = scmp.lt.s32.totalorder %s18, 1
      %s235 = scalar_select %p234, %s18, 1
      %s236 = smul.addr %s235, 2
      %s237 = scalar_lea.vmem %s2, %s236
      %s238 = smul.u32 2, %s19
      %p239 = scmp.lt.s32.totalorder %s18, 1
      %s240 = scalar_select %p239, %s18, 1
      %p241 = scmp.lt.s32.totalorder %s238, 1
      %s242 = scalar_select %p241, %s238, 1
      %s243 = smul.addr %s242, 2
      %s244 = smul.addr %s240, 4
      %s245 = sadd.s32 %s243, %s244
      %s246 = smul.addr %s245, 8
      %s247 = scalar_lea.vmem %s3, %s246
      %s248 = smul.u32 2, %s19
      %v250 = vld [vmem:[%s227] sm:$0xf]
      %v251 = vld [vmem:[%s227 + $0x4] sm:$0xf]
      %v252 = vld [vmem:[%s233] sm:$0xff]
      %v253 = vld [vmem:[%s233 + $0x8] sm:$0xff]
      %v254 = vld [vmem:[%s233 + $0x10] sm:$0xff]
      %v255 = vld [vmem:[%s233 + $0x18] sm:$0xff]
      %v256 = vld [vmem:[%s233 + $0x20] sm:$0xff]
      %v257 = vld [vmem:[%s233 + $0x28] sm:$0xff]
      %v258 = vld [vmem:[%s233 + $0x30] sm:$0xff]
      %v259 = vld [vmem:[%s233 + $0x38] sm:$0xff]
      %v260 = vld [vmem:[%s233 + $0x40] sm:$0xff]
      %v261 = vld [vmem:[%s233 + $0x48] sm:$0xff]
      %v262 = vld [vmem:[%s233 + $0x50] sm:$0xff]
      %v263 = vld [vmem:[%s233 + $0x58] sm:$0xff]
      %v264 = vld [vmem:[%s233 + $0x60] sm:$0xff]
      %v265 = vld [vmem:[%s233 + $0x68] sm:$0xff]
      %v266 = vld [vmem:[%s233 + $0x70] sm:$0xff]
      %v267 = vld [vmem:[%s233 + $0x78] sm:$0xff]
      %v268 = vld [vmem:[%s237] sm:$0x3]
      %v270 = vlaneseq
      %v271 = vshrl.u32 %v270, 7
      %v272 = vsub.s32 0, %v271
      %v273 = vrot.slane %v268, %v272
      %v274 = vlaneseq
      %v275 = vshrl.u32 %v274, 7
      %v276 = vsub.s32 1, %v275
      %v277 = vrot.slane %v268, %v276
      %v282 = vunpack.c.l.b16 %v250
      %v283 = vunpack.c.l.b16 %v251
      %v284 = vpack.c.b16 %v283, %v282
      %v302 = vunpack.c.l.b16 %v252
      %v303 = vunpack.c.h.b16 %v252
      %v304 = vunpack.c.l.b16 %v253
      %v305 = vunpack.c.h.b16 %v253
      %v306 = vunpack.c.l.b16 %v254
      %v307 = vunpack.c.h.b16 %v254
      %v308 = vunpack.c.l.b16 %v255
      %v309 = vunpack.c.h.b16 %v255
      %v310 = vunpack.c.l.b16 %v256
      %v311 = vunpack.c.h.b16 %v256
      %v312 = vunpack.c.l.b16 %v257
      %v313 = vunpack.c.h.b16 %v257
      %v314 = vunpack.c.l.b16 %v258
      %v315 = vunpack.c.h.b16 %v258
      %v316 = vunpack.c.l.b16 %v259
      %v317 = vunpack.c.h.b16 %v259
      %v318 = vunpack.c.l.b16 %v260
      %v319 = vunpack.c.h.b16 %v260
      %v320 = vunpack.c.l.b16 %v261
      %v321 = vunpack.c.h.b16 %v261
      %v322 = vunpack.c.l.b16 %v262
      %v323 = vunpack.c.h.b16 %v262
      %v324 = vunpack.c.l.b16 %v263
      %v325 = vunpack.c.h.b16 %v263
      %v326 = vunpack.c.l.b16 %v264
      %v327 = vunpack.c.h.b16 %v264
      %v328 = vunpack.c.l.b16 %v265
      %v329 = vunpack.c.h.b16 %v265
      %v330 = vunpack.c.l.b16 %v266
      %v331 = vunpack.c.h.b16 %v266
      %v332 = vunpack.c.l.b16 %v267
      %v333 = vunpack.c.h.b16 %v267
      %v334 = vpack.c.b16 %v304, %v302
      %v335 = vpack.c.b16 %v305, %v303
      %v336 = vpack.c.b16 %v308, %v306
      %v337 = vpack.c.b16 %v309, %v307
      %v338 = vpack.c.b16 %v312, %v310
      %v339 = vpack.c.b16 %v313, %v311
      %v340 = vpack.c.b16 %v316, %v314
      %v341 = vpack.c.b16 %v317, %v315
      %v342 = vpack.c.b16 %v320, %v318
      %v343 = vpack.c.b16 %v321, %v319
      %v344 = vpack.c.b16 %v324, %v322
      %v345 = vpack.c.b16 %v325, %v323
      %v346 = vpack.c.b16 %v328, %v326
      %v347 = vpack.c.b16 %v329, %v327
      %v348 = vpack.c.b16 %v332, %v330
      %v349 = vpack.c.b16 %v333, %v331
      %366 = vmatprep.subr.bf16.mxu0 %v335
      %367 = vmatpush1.bf16.msra.mxu0 %v334
      %368 = vmatprep.subr.bf16.mxu0 %v337
      %369 = vmatpush1.bf16.msra.mxu0 %v336
      %370 = vmatprep.subr.bf16.mxu0 %v339
      %371 = vmatpush1.bf16.msra.mxu0 %v338
      %372 = vmatprep.subr.bf16.mxu0 %v341
      %373 = vmatpush1.bf16.msra.mxu0 %v340
      %374 = vmatprep.subr.bf16.mxu0 %v343
      %375 = vmatpush1.bf16.msra.mxu0 %v342
      %376 = vmatprep.subr.bf16.mxu0 %v345
      %377 = vmatpush1.bf16.msra.mxu0 %v344
      %378 = vmatprep.subr.bf16.mxu0 %v347
      %379 = vmatpush1.bf16.msra.mxu0 %v346
      %380 = vmatprep.subr.bf16.mxu0 %v349
      %381 = vmatpush1.bf16.msra.mxu0 %v348
      %382 = vmatprep.subr.bf16.mxu0 0
      %383 = vmatpush1.bf16.msra.mxu0 0
      %384 = vmatprep.subr.bf16.mxu0 0
      %385 = vmatpush1.bf16.msra.mxu0 0
      %386 = vmatprep.subr.bf16.mxu0 0
      %387 = vmatpush1.bf16.msra.mxu0 0
      %388 = vmatprep.subr.bf16.mxu0 0
      %389 = vmatpush1.bf16.msra.mxu0 0
      %390 = vmatprep.subr.bf16.mxu0 0
      %391 = vmatpush1.bf16.msra.mxu0 0
      %392 = vmatprep.subr.bf16.mxu0 0
      %393 = vmatpush1.bf16.msra.mxu0 0
      %394 = vmatprep.subr.bf16.mxu0 0
      %395 = vmatpush1.bf16.msra.mxu0 0
      %396 = vmatprep.subr.bf16.mxu0 0
      %397 = vmatpush1.bf16.msra.mxu0 0
      %398 = vmatprep.mubr.bf16.mxu0 0
      %399 = vmatmul.mubr.bf16.gmra.mrb[0].mxu0 %v284
      %v400 = vpop.f32.mrb[0].mxu0
      %v401 = vadd.f32 %v273, %v400
      %v402 = vpop.f32.mrb[0].mxu0
      %v403 = vadd.f32 %v277, %v402
      %v404 = vpop.f32.mrb[0].mxu0
      %v405 = vadd.f32 %v273, %v404
      %v406 = vpop.f32.mrb[0].mxu0
      %v407 = vadd.f32 %v277, %v406
      %408 = vdwg.mxu0
      %409 = vst [vmem:[%s247] sm:$0xff] %v401
      %410 = vst [vmem:[%s247 + $0x8] sm:$0xff] %v403
      %411 = vst [vmem:[%s247 + $0x10] sm:$0xff] %v405
      %412 = vst [vmem:[%s247 + $0x18] sm:$0xff] %v407
      %s413 = smul.u32 2, %s19
      %p414 = scmp.lt.s32.totalorder %s18, 1
      %s415 = scalar_select %p414, %s18, 1
      %p416 = scmp.lt.s32.totalorder %s413, 1
      %s417 = scalar_select %p416, %s413, 1
      %s418 = smul.addr %s417, 2
      %s419 = smul.addr %s415, 4
      %s420 = sadd.s32 %s418, %s419
      %s421 = smul.addr %s420, 8
      %s422 = scalar_lea.vmem %s3, %s421
      // Predicated region
      $region33: #{forward.12} parent=31 // pred_check
        %p423 = pneg %p126
      $region34: #{forward.12} parent=31 // pred_check_branch
        %425 = sbr.rel (%p423) target = $region36
      $region35: #{forward.12} parent=31 // pred_region
        %s426 = smul.u32 2, %s19
      $region36: #{forward.12} parent=31 // pred_fallthru
        _
    $region32: #{forward.12} parent=5 // pred_fallthru
      _
    %p427 = scmp.le.s32.totalorder 2, %s9
    // Predicated region
    $region37: #{forward.12} parent=5 // pred_check
      %p428 = pneg %p427
    $region38: #{forward.12} parent=5 // pred_check_branch
      %430 = sbr.rel (%p428) target = $region40
    $region39: #{forward.12} parent=5 // pred_region
      %s431 = ssub.s32 %s9, 2
      // Predicated region
      $region41: #{forward.12} parent=39 // pred_check
        %p432 = pneg %p132
      $region42: #{forward.12} parent=39 // pred_check_branch
        %434 = sbr.rel (%p432) target = $region44
      $region43: #{forward.12} parent=39 // pred_region
        %s435 = smul.u32 2, %s21
        %p436 = scmp.lt.s32.totalorder %s20, 1
        %s437 = scalar_select %p436, %s20, 1
        %p438 = scmp.lt.s32.totalorder %s435, 1
        %s439 = scalar_select %p438, %s435, 1
        %s440 = smul.addr %s439, 2
        %s441 = smul.addr %s437, 4
        %s442 = sadd.s32 %s440, %s441
        %s443 = smul.addr %s442, 8
        %s444 = scalar_lea.vmem %s3, %s443
      $region44: #{forward.12} parent=39 // pred_fallthru
        _
    $region40: #{forward.12} parent=5 // pred_fallthru
      _
  $region6: #{forward.12} parent=0 // loop_footer
    %s13 = sadd.s32 1, %s9
  $region7: #{forward.12} parent=0 // loop_footer_branch
    %8 = sbr.rel target = $region3
  $region8: #{forward.12} parent=0 // loop_exit
    _

// kernel: squeeze.0
$region0: #{squeeze.0}
  %s0 = inlined_call_operand.vmem [shape: bf16[1,2,128], index: 0, kind: input, shape index: {}]
  %s1 = inlined_call_operand.vmem [shape: bf16[8,32], index: 1, kind: output, shape index: {}]
  $region1: #{squeeze.0} parent=0
    #allocation0 [shape = 'u8[4096]{0}', space=vmem, size = 0x1000, scoped, tag = 'scoped mem for output reshape']
    #allocation1 [shape = 'u8[4096]{0}', space=vmem, size = 0x1000, scoped, tag = 'scoped mem for input reshape']
    %s3 = smul.u32 1, 2
    %s4 = sshllo.u32 0, %s3
    %s5 = sshrl.u32 %s4, 1
    %s6 = sor.u32 %s4, %s5
    %s7 = sand.u32 %s6, 85
    %s8 = sshrl.u32 %s7, 1
    %s9 = sor.u32 %s7, %s8
    %s10 = sand.u32 51, %s9
    %s11 = sshrl.u32 %s10, 2
    %s12 = sor.u32 %s10, %s11
    %s13 = sand.u32 15, %s12
    %v14 = vld [vmem:[%s0] sm:%s13]
    %v15 = vunpack.c.l.bf16 %v14
    %v16 = vunpack.c.h.bf16 %v14
    %17 = vst [vmem:[#allocation1] sm:%s4] %v15
    %v18 = vld [vmem:[#allocation1] sm:$0x3]
    %vm19 = vcmask 261120
    %20 = vst.msk [vmem:[#allocation0] ss:$4 sm:$0x3] %vm19, %v18
    %v21 = vld [vmem:[#allocation1] sm:$0x3]
    %22 = vrot.lane.b32.xlu0 %v21, 96
    %v23 = vpop.permute.xlu0 %22
    %vm24 = vcmask 261120
    %s25 = scalar_lea.vmem [#allocation0], 1
    %26 = vst.msk [vmem:[%s25] ss:$4 sm:$0x3] %vm24, %v23
    %v27 = vld [vmem:[#allocation1] sm:$0x3]
    %28 = vrot.lane.b32.xlu0 %v27, 64
    %v29 = vpop.permute.xlu0 %28
    %vm30 = vcmask 261120
    %s31 = scalar_lea.vmem [#allocation0], 2
    %32 = vst.msk [vmem:[%s31] ss:$4 sm:$0x3] %vm30, %v29
    %v33 = vld [vmem:[#allocation1] sm:$0x3]
    %34 = vrot.lane.b32.xlu0 %v33, 32
    %v35 = vpop.permute.xlu0 %34
    %vm36 = vcmask 261120
    %s37 = scalar_lea.vmem [#allocation0], 3
    %38 = vst.msk [vmem:[%s37] ss:$4 sm:$0x3] %vm36, %v35
    %s40 = smul.u32 4, 2
    %s41 = sshllo.u32 0, %s40
    %s42 = sshrl.u32 %s40, 1
    %v43 = vld [vmem:[#allocation0] sm:%s41]
    %v44 = vpack.c.bf16 0.0, %v43
    %s45 = sshllo.u32 0, %s42
    %46 = vst [vmem:[%s1] sm:%s45] %v44

// kernel: squeeze.6
$region0: #{squeeze.6}
  %s0 = inlined_call_operand.vmem [shape: f32[1,8,72], index: 0, kind: input, shape index: {}]
  %s1 = inlined_call_operand.vmem [shape: f32[2,8,4,3,3], index: 1, kind: output, shape index: {}]
  $region1: #{squeeze.6} parent=0
    #allocation0 [shape = 'u8[262144]{0}', space=vmem, size = 0x40000, scoped, tag = 'scoped mem for output reshape']
    %v2 = vld [vmem:[%s0] sm:$0xff]
    %vm3 = vcmask 23552
    %4 = vst.msk [vmem:[#allocation0] sm:$0x1] %vm3, %v2
    %s5 = scalar_lea.vmem [#allocation0], 63
    %6 = vst.msk [vmem:[%s5] sm:$0x2] %vm3, %v2
    %s7 = scalar_lea.vmem [#allocation0], 126
    %8 = vst.msk [vmem:[%s7] sm:$0x4] %vm3, %v2
    %s9 = scalar_lea.vmem [#allocation0], 189
    %10 = vst.msk [vmem:[%s9] sm:$0x8] %vm3, %v2
    %s11 = scalar_lea.vmem [#allocation0], 252
    %12 = vst.msk [vmem:[%s11] sm:$0x10] %vm3, %v2
    %s13 = scalar_lea.vmem [#allocation0], 315
    %14 = vst.msk [vmem:[%s13] sm:$0x20] %vm3, %v2
    %s15 = scalar_lea.vmem [#allocation0], 378
    %16 = vst.msk [vmem:[%s15] sm:$0x40] %vm3, %v2
    %s17 = scalar_lea.vmem [#allocation0], 441
    %18 = vst.msk [vmem:[%s17] sm:$0x80] %vm3, %v2
    %v19 = vld [vmem:[%s0] sm:$0xff]
    %20 = vrot.lane.b32.xlu0 %v19, 125
    %v21 = vpop.permute.xlu0 %20
    %vm22 = vcmask 23552
    %s23 = scalar_lea.vmem [#allocation0], 1
    %24 = vst.msk [vmem:[%s23] sm:$0x1] %vm22, %v21
    %s25 = scalar_lea.vmem [#allocation0], 64
    %26 = vst.msk [vmem:[%s25] sm:$0x2] %vm22, %v21
    %s27 = scalar_lea.vmem [#allocation0], 127
    %28 = vst.msk [vmem:[%s27] sm:$0x4] %vm22, %v21
    %s29 = scalar_lea.vmem [#allocation0], 190
    %30 = vst.msk [vmem:[%s29] sm:$0x8] %vm22, %v21
    %s31 = scalar_lea.vmem [#allocation0], 253
    %32 = vst.msk [vmem:[%s31] sm:$0x10] %vm22, %v21
    %s33 = scalar_lea.vmem [#allocation0], 316
    %34 = vst.msk [vmem:[%s33] sm:$0x20] %vm22, %v21
    %s35 = scalar_lea.vmem [#allocation0], 379
    %36 = vst.msk [vmem:[%s35] sm:$0x40] %vm22, %v21
    %s37 = scalar_lea.vmem [#allocation0], 442
    %38 = vst.msk [vmem:[%s37] sm:$0x80] %vm22, %v21
    %v39 = vld [vmem:[%s0] sm:$0xff]
    %40 = vrot.lane.b32.xlu0 %v39, 122
    %v41 = vpop.permute.xlu0 %40
    %vm42 = vcmask 23552
    %s43 = scalar_lea.vmem [#allocation0], 2
    %44 = vst.msk [vmem:[%s43] sm:$0x1] %vm42, %v41
    %s45 = scalar_lea.vmem [#allocation0], 65
    %46 = vst.msk [vmem:[%s45] sm:$0x2] %vm42, %v41
    %s47 = scalar_lea.vmem [#allocation0], 128
    %48 = vst.msk [vmem:[%s47] sm:$0x4] %vm42, %v41
    %s49 = scalar_lea.vmem [#allocation0], 191
    %50 = vst.msk [vmem:[%s49] sm:$0x8] %vm42, %v41
    %s51 = scalar_lea.vmem [#allocation0], 254
    %52 = vst.msk [vmem:[%s51] sm:$0x10] %vm42, %v41
    %s53 = scalar_lea.vmem [#allocation0], 317
    %54 = vst.msk [vmem:[%s53] sm:$0x20] %vm42, %v41
    %s55 = scalar_lea.vmem [#allocation0], 380
    %56 = vst.msk [vmem:[%s55] sm:$0x40] %vm42, %v41
    %s57 = scalar_lea.vmem [#allocation0], 443
    %58 = vst.msk [vmem:[%s57] sm:$0x80] %vm42, %v41
    %v59 = vld [vmem:[%s0] sm:$0xff]
    %60 = vrot.lane.b32.xlu0 %v59, 119
    %v61 = vpop.permute.xlu0 %60
    %vm62 = vcmask 23552
    %s63 = scalar_lea.vmem [#allocation0], 8
    %64 = vst.msk [vmem:[%s63] sm:$0x1] %vm62, %v61
    %s65 = scalar_lea.vmem [#allocation0], 71
    %66 = vst.msk [vmem:[%s65] sm:$0x2] %vm62, %v61
    %s67 = scalar_lea.vmem [#allocation0], 134
    %68 = vst.msk [vmem:[%s67] sm:$0x4] %vm62, %v61
    %s69 = scalar_lea.vmem [#allocation0], 197
    %70 = vst.msk [vmem:[%s69] sm:$0x8] %vm62, %v61
    %s71 = scalar_lea.vmem [#allocation0], 260
    %72 = vst.msk [vmem:[%s71] sm:$0x10] %vm62, %v61
    %s73 = scalar_lea.vmem [#allocation0], 323
    %74 = vst.msk [vmem:[%s73] sm:$0x20] %vm62, %v61
    %s75 = scalar_lea.vmem [#allocation0], 386
    %76 = vst.msk [vmem:[%s75] sm:$0x40] %vm62, %v61
    %s77 = scalar_lea.vmem [#allocation0], 449
    %78 = vst.msk [vmem:[%s77] sm:$0x80] %vm62, %v61
    %v79 = vld [vmem:[%s0] sm:$0xff]
    %80 = vrot.lane.b32.xlu0 %v79, 116
    %v81 = vpop.permute.xlu0 %80
    %vm82 = vcmask 23552
    %s83 = scalar_lea.vmem [#allocation0], 9
    %84 = vst.msk [vmem:[%s83] sm:$0x1] %vm82, %v81
    %s85 = scalar_lea.vmem [#allocation0], 72
    %86 = vst.msk [vmem:[%s85] sm:$0x2] %vm82, %v81
    %s87 = scalar_lea.vmem [#allocation0], 135
    %88 = vst.msk [vmem:[%s87] sm:$0x4] %vm82, %v81
    %s89 = scalar_lea.vmem [#allocation0], 198
    %90 = vst.msk [vmem:[%s89] sm:$0x8] %vm82, %v81
    %s91 = scalar_lea.vmem [#allocation0], 261
    %92 = vst.msk [vmem:[%s91] sm:$0x10] %vm82, %v81
    %s93 = scalar_lea.vmem [#allocation0], 324
    %94 = vst.msk [vmem:[%s93] sm:$0x20] %vm82, %v81
    %s95 = scalar_lea.vmem [#allocation0], 387
    %96 = vst.msk [vmem:[%s95] sm:$0x40] %vm82, %v81
    %s97 = scalar_lea.vmem [#allocation0], 450
    %98 = vst.msk [vmem:[%s97] sm:$0x80] %vm82, %v81
    %v99 = vld [vmem:[%s0] sm:$0xff]
    %100 = vrot.lane.b32.xlu0 %v99, 113
    %v101 = vpop.permute.xlu0 %100
    %vm102 = vcmask 23552
    %s103 = scalar_lea.vmem [#allocation0], 10
    %104 = vst.msk [vmem:[%s103] sm:$0x1] %vm102, %v101
    %s105 = scalar_lea.vmem [#allocation0], 73
    %106 = vst.msk [vmem:[%s105] sm:$0x2] %vm102, %v101
    %s107 = scalar_lea.vmem [#allocation0], 136
    %108 = vst.msk [vmem:[%s107] sm:$0x4] %vm102, %v101
    %s109 = scalar_lea.vmem [#allocation0], 199
    %110 = vst.msk [vmem:[%s109] sm:$0x8] %vm102, %v101
    %s111 = scalar_lea.vmem [#allocation0], 262
    %112 = vst.msk [vmem:[%s111] sm:$0x10] %vm102, %v101
    %s113 = scalar_lea.vmem [#allocation0], 325
    %114 = vst.msk [vmem:[%s113] sm:$0x20] %vm102, %v101
    %s115 = scalar_lea.vmem [#allocation0], 388
    %116 = vst.msk [vmem:[%s115] sm:$0x40] %vm102, %v101
    %s117 = scalar_lea.vmem [#allocation0], 451
    %118 = vst.msk [vmem:[%s117] sm:$0x80] %vm102, %v101
    %v119 = vld [vmem:[%s0] sm:$0xff]
    %120 = vrot.lane.b32.xlu0 %v119, 110
    %v121 = vpop.permute.xlu0 %120
    %vm122 = vcmask 23552
    %s123 = scalar_lea.vmem [#allocation0], 16
    %124 = vst.msk [vmem:[%s123] sm:$0x1] %vm122, %v121
    %s125 = scalar_lea.vmem [#allocation0], 79
    %126 = vst.msk [vmem:[%s125] sm:$0x2] %vm122, %v121
    %s127 = scalar_lea.vmem [#allocation0], 142
    %128 = vst.msk [vmem:[%s127] sm:$0x4] %vm122, %v121
    %s129 = scalar_lea.vmem [#allocation0], 205
    %130 = vst.msk [vmem:[%s129] sm:$0x8] %vm122, %v121
    %s131 = scalar_lea.vmem [#allocation0], 268
    %132 = vst.msk [vmem:[%s131] sm:$0x10] %vm122, %v121
    %s133 = scalar_lea.vmem [#allocation0], 331
    %134 = vst.msk [vmem:[%s133] sm:$0x20] %vm122, %v121
    %s135 = scalar_lea.vmem [#allocation0], 394
    %136 = vst.msk [vmem:[%s135] sm:$0x40] %vm122, %v121
    %s137 = scalar_lea.vmem [#allocation0], 457
    %138 = vst.msk [vmem:[%s137] sm:$0x80] %vm122, %v121
    %v139 = vld [vmem:[%s0] sm:$0xff]
    %140 = vrot.lane.b32.xlu0 %v139, 107
    %v141 = vpop.permute.xlu0 %140
    %vm142 = vcmask 23552
    %s143 = scalar_lea.vmem [#allocation0], 17
    %144 = vst.msk [vmem:[%s143] sm:$0x1] %vm142, %v141
    %s145 = scalar_lea.vmem [#allocation0], 80
    %146 = vst.msk [vmem:[%s145] sm:$0x2] %vm142, %v141
    %s147 = scalar_lea.vmem [#allocation0], 143
    %148 = vst.msk [vmem:[%s147] sm:$0x4] %vm142, %v141
    %s149 = scalar_lea.vmem [#allocation0], 206
    %150 = vst.msk [vmem:[%s149] sm:$0x8] %vm142, %v141
    %s151 = scalar_lea.vmem [#allocation0], 269
    %152 = vst.msk [vmem:[%s151] sm:$0x10] %vm142, %v141
    %s153 = scalar_lea.vmem [#allocation0], 332
    %154 = vst.msk [vmem:[%s153] sm:$0x20] %vm142, %v141
    %s155 = scalar_lea.vmem [#allocation0], 395
    %156 = vst.msk [vmem:[%s155] sm:$0x40] %vm142, %v141
    %s157 = scalar_lea.vmem [#allocation0], 458
    %158 = vst.msk [vmem:[%s157] sm:$0x80] %vm142, %v141
    %v159 = vld [vmem:[%s0] sm:$0xff]
    %160 = vrot.lane.b32.xlu0 %v159, 104
    %v161 = vpop.permute.xlu0 %160
    %vm162 = vcmask 23552
    %s163 = scalar_lea.vmem [#allocation0], 18
    %164 = vst.msk [vmem:[%s163] sm:$0x1] %vm162, %v161
    %s165 = scalar_lea.vmem [#allocation0], 81
    %166 = vst.msk [vmem:[%s165] sm:$0x2] %vm162, %v161
    %s167 = scalar_lea.vmem [#allocation0], 144
    %168 = vst.msk [vmem:[%s167] sm:$0x4] %vm162, %v161
    %s169 = scalar_lea.vmem [#allocation0], 207
    %170 = vst.msk [vmem:[%s169] sm:$0x8] %vm162, %v161
    %s171 = scalar_lea.vmem [#allocation0], 270
    %172 = vst.msk [vmem:[%s171] sm:$0x10] %vm162, %v161
    %s173 = scalar_lea.vmem [#allocation0], 333
    %174 = vst.msk [vmem:[%s173] sm:$0x20] %vm162, %v161
    %s175 = scalar_lea.vmem [#allocation0], 396
    %176 = vst.msk [vmem:[%s175] sm:$0x40] %vm162, %v161
    %s177 = scalar_lea.vmem [#allocation0], 459
    %178 = vst.msk [vmem:[%s177] sm:$0x80] %vm162, %v161
    %v179 = vld [vmem:[%s0] sm:$0xff]
    %180 = vrot.lane.b32.xlu0 %v179, 101
    %v181 = vpop.permute.xlu0 %180
    %vm182 = vcmask 23552
    %s183 = scalar_lea.vmem [#allocation0], 24
    %184 = vst.msk [vmem:[%s183] sm:$0x1] %vm182, %v181
    %s185 = scalar_lea.vmem [#allocation0], 87
    %186 = vst.msk [vmem:[%s185] sm:$0x2] %vm182, %v181
    %s187 = scalar_lea.vmem [#allocation0], 150
    %188 = vst.msk [vmem:[%s187] sm:$0x4] %vm182, %v181
    %s189 = scalar_lea.vmem [#allocation0], 213
    %190 = vst.msk [vmem:[%s189] sm:$0x8] %vm182, %v181
    %s191 = scalar_lea.vmem [#allocation0], 276
    %192 = vst.msk [vmem:[%s191] sm:$0x10] %vm182, %v181
    %s193 = scalar_lea.vmem [#allocation0], 339
    %194 = vst.msk [vmem:[%s193] sm:$0x20] %vm182, %v181
    %s195 = scalar_lea.vmem [#allocation0], 402
    %196 = vst.msk [vmem:[%s195] sm:$0x40] %vm182, %v181
    %s197 = scalar_lea.vmem [#allocation0], 465
    %198 = vst.msk [vmem:[%s197] sm:$0x80] %vm182, %v181
    %v199 = vld [vmem:[%s0] sm:$0xff]
    %200 = vrot.lane.b32.xlu0 %v199, 98
    %v201 = vpop.permute.xlu0 %200
    %vm202 = vcmask 23552
    %s203 = scalar_lea.vmem [#allocation0], 25
    %204 = vst.msk [vmem:[%s203] sm:$0x1] %vm202, %v201
    %s205 = scalar_lea.vmem [#allocation0], 88
    %206 = vst.msk [vmem:[%s205] sm:$0x2] %vm202, %v201
    %s207 = scalar_lea.vmem [#allocation0], 151
    %208 = vst.msk [vmem:[%s207] sm:$0x4] %vm202, %v201
    %s209 = scalar_lea.vmem [#allocation0], 214
    %210 = vst.msk [vmem:[%s209] sm:$0x8] %vm202, %v201
    %s211 = scalar_lea.vmem [#allocation0], 277
    %212 = vst.msk [vmem:[%s211] sm:$0x10] %vm202, %v201
    %s213 = scalar_lea.vmem [#allocation0], 340
    %214 = vst.msk [vmem:[%s213] sm:$0x20] %vm202, %v201
    %s215 = scalar_lea.vmem [#allocation0], 403
    %216 = vst.msk [vmem:[%s215] sm:$0x40] %vm202, %v201
    %s217 = scalar_lea.vmem [#allocation0], 466
    %218 = vst.msk [vmem:[%s217] sm:$0x80] %vm202, %v201
    %v219 = vld [vmem:[%s0] sm:$0xff]
    %220 = vrot.lane.b32.xlu0 %v219, 95
    %v221 = vpop.permute.xlu0 %220
    %vm222 = vcmask 23552
    %s223 = scalar_lea.vmem [#allocation0], 26
    %224 = vst.msk [vmem:[%s223] sm:$0x1] %vm222, %v221
    %s225 = scalar_lea.vmem [#allocation0], 89
    %226 = vst.msk [vmem:[%s225] sm:$0x2] %vm222, %v221
    %s227 = scalar_lea.vmem [#allocation0], 152
    %228 = vst.msk [vmem:[%s227] sm:$0x4] %vm222, %v221
    %s229 = scalar_lea.vmem [#allocation0], 215
    %230 = vst.msk [vmem:[%s229] sm:$0x8] %vm222, %v221
    %s231 = scalar_lea.vmem [#allocation0], 278
    %232 = vst.msk [vmem:[%s231] sm:$0x10] %vm222, %v221
    %s233 = scalar_lea.vmem [#allocation0], 341
    %234 = vst.msk [vmem:[%s233] sm:$0x20] %vm222, %v221
    %s235 = scalar_lea.vmem [#allocation0], 404
    %236 = vst.msk [vmem:[%s235] sm:$0x40] %vm222, %v221
    %s237 = scalar_lea.vmem [#allocation0], 467
    %238 = vst.msk [vmem:[%s237] sm:$0x80] %vm222, %v221
    %v239 = vld [vmem:[%s0] sm:$0xff]
    %240 = vrot.lane.b32.xlu0 %v239, 92
    %v241 = vpop.permute.xlu0 %240
    %vm242 = vcmask 23552
    %s243 = scalar_lea.vmem [#allocation0], 32
    %244 = vst.msk [vmem:[%s243] sm:$0x1] %vm242, %v241
    %s245 = scalar_lea.vmem [#allocation0], 95
    %246 = vst.msk [vmem:[%s245] sm:$0x2] %vm242, %v241
    %s247 = scalar_lea.vmem [#allocation0], 158
    %248 = vst.msk [vmem:[%s247] sm:$0x4] %vm242, %v241
    %s249 = scalar_lea.vmem [#allocation0], 221
    %250 = vst.msk [vmem:[%s249] sm:$0x8] %vm242, %v241
    %s251 = scalar_lea.vmem [#allocation0], 284
    %252 = vst.msk [vmem:[%s251] sm:$0x10] %vm242, %v241
    %s253 = scalar_lea.vmem [#allocation0], 347
    %254 = vst.msk [vmem:[%s253] sm:$0x20] %vm242, %v241
    %s255 = scalar_lea.vmem [#allocation0], 410
    %256 = vst.msk [vmem:[%s255] sm:$0x40] %vm242, %v241
    %s257 = scalar_lea.vmem [#allocation0], 473
    %258 = vst.msk [vmem:[%s257] sm:$0x80] %vm242, %v241
    %v259 = vld [vmem:[%s0] sm:$0xff]
    %260 = vrot.lane.b32.xlu0 %v259, 89
    %v261 = vpop.permute.xlu0 %260
    %vm262 = vcmask 23552
    %s263 = scalar_lea.vmem [#allocation0], 33
    %264 = vst.msk [vmem:[%s263] sm:$0x1] %vm262, %v261
    %s265 = scalar_lea.vmem [#allocation0], 96
    %266 = vst.msk [vmem:[%s265] sm:$0x2] %vm262, %v261
    %s267 = scalar_lea.vmem [#allocation0], 159
    %268 = vst.msk [vmem:[%s267] sm:$0x4] %vm262, %v261
    %s269 = scalar_lea.vmem [#allocation0], 222
    %270 = vst.msk [vmem:[%s269] sm:$0x8] %vm262, %v261
    %s271 = scalar_lea.vmem [#allocation0], 285
    %272 = vst.msk [vmem:[%s271] sm:$0x10] %vm262, %v261
    %s273 = scalar_lea.vmem [#allocation0], 348
    %274 = vst.msk [vmem:[%s273] sm:$0x20] %vm262, %v261
    %s275 = scalar_lea.vmem [#allocation0], 411
    %276 = vst.msk [vmem:[%s275] sm:$0x40] %vm262, %v261
    %s277 = scalar_lea.vmem [#allocation0], 474
    %278 = vst.msk [vmem:[%s277] sm:$0x80] %vm262, %v261
    %v279 = vld [vmem:[%s0] sm:$0xff]
    %280 = vrot.lane.b32.xlu0 %v279, 86
    %v281 = vpop.permute.xlu0 %280
    %vm282 = vcmask 23552
    %s283 = scalar_lea.vmem [#allocation0], 34
    %284 = vst.msk [vmem:[%s283] sm:$0x1] %vm282, %v281
    %s285 = scalar_lea.vmem [#allocation0], 97
    %286 = vst.msk [vmem:[%s285] sm:$0x2] %vm282, %v281
    %s287 = scalar_lea.vmem [#allocation0], 160
    %288 = vst.msk [vmem:[%s287] sm:$0x4] %vm282, %v281
    %s289 = scalar_lea.vmem [#allocation0], 223
    %290 = vst.msk [vmem:[%s289] sm:$0x8] %vm282, %v281
    %s291 = scalar_lea.vmem [#allocation0], 286
    %292 = vst.msk [vmem:[%s291] sm:$0x10] %vm282, %v281
    %s293 = scalar_lea.vmem [#allocation0], 349
    %294 = vst.msk [vmem:[%s293] sm:$0x20] %vm282, %v281
    %s295 = scalar_lea.vmem [#allocation0], 412
    %296 = vst.msk [vmem:[%s295] sm:$0x40] %vm282, %v281
    %s297 = scalar_lea.vmem [#allocation0], 475
    %298 = vst.msk [vmem:[%s297] sm:$0x80] %vm282, %v281
    %v299 = vld [vmem:[%s0] sm:$0xff]
    %300 = vrot.lane.b32.xlu0 %v299, 83
    %v301 = vpop.permute.xlu0 %300
    %vm302 = vcmask 23552
    %s303 = scalar_lea.vmem [#allocation0], 40
    %304 = vst.msk [vmem:[%s303] sm:$0x1] %vm302, %v301
    %s305 = scalar_lea.vmem [#allocation0], 103
    %306 = vst.msk [vmem:[%s305] sm:$0x2] %vm302, %v301
    %s307 = scalar_lea.vmem [#allocation0], 166
    %308 = vst.msk [vmem:[%s307] sm:$0x4] %vm302, %v301
    %s309 = scalar_lea.vmem [#allocation0], 229
    %310 = vst.msk [vmem:[%s309] sm:$0x8] %vm302, %v301
    %s311 = scalar_lea.vmem [#allocation0], 292
    %312 = vst.msk [vmem:[%s311] sm:$0x10] %vm302, %v301
    %s313 = scalar_lea.vmem [#allocation0], 355
    %314 = vst.msk [vmem:[%s313] sm:$0x20] %vm302, %v301
    %s315 = scalar_lea.vmem [#allocation0], 418
    %316 = vst.msk [vmem:[%s315] sm:$0x40] %vm302, %v301
    %s317 = scalar_lea.vmem [#allocation0], 481
    %318 = vst.msk [vmem:[%s317] sm:$0x80] %vm302, %v301
    %v319 = vld [vmem:[%s0] sm:$0xff]
    %320 = vrot.lane.b32.xlu0 %v319, 80
    %v321 = vpop.permute.xlu0 %320
    %vm322 = vcmask 23552
    %s323 = scalar_lea.vmem [#allocation0], 41
    %324 = vst.msk [vmem:[%s323] sm:$0x1] %vm322, %v321
    %s325 = scalar_lea.vmem [#allocation0], 104
    %326 = vst.msk [vmem:[%s325] sm:$0x2] %vm322, %v321
    %s327 = scalar_lea.vmem [#allocation0], 167
    %328 = vst.msk [vmem:[%s327] sm:$0x4] %vm322, %v321
    %s329 = scalar_lea.vmem [#allocation0], 230
    %330 = vst.msk [vmem:[%s329] sm:$0x8] %vm322, %v321
    %s331 = scalar_lea.vmem [#allocation0], 293
    %332 = vst.msk [vmem:[%s331] sm:$0x10] %vm322, %v321
    %s333 = scalar_lea.vmem [#allocation0], 356
    %334 = vst.msk [vmem:[%s333] sm:$0x20] %vm322, %v321
    %s335 = scalar_lea.vmem [#allocation0], 419
    %336 = vst.msk [vmem:[%s335] sm:$0x40] %vm322, %v321
    %s337 = scalar_lea.vmem [#allocation0], 482
    %338 = vst.msk [vmem:[%s337] sm:$0x80] %vm322, %v321
    %v339 = vld [vmem:[%s0] sm:$0xff]
    %340 = vrot.lane.b32.xlu0 %v339, 77
    %v341 = vpop.permute.xlu0 %340
    %vm342 = vcmask 23552
    %s343 = scalar_lea.vmem [#allocation0], 42
    %344 = vst.msk [vmem:[%s343] sm:$0x1] %vm342, %v341
    %s345 = scalar_lea.vmem [#allocation0], 105
    %346 = vst.msk [vmem:[%s345] sm:$0x2] %vm342, %v341
    %s347 = scalar_lea.vmem [#allocation0], 168
    %348 = vst.msk [vmem:[%s347] sm:$0x4] %vm342, %v341
    %s349 = scalar_lea.vmem [#allocation0], 231
    %350 = vst.msk [vmem:[%s349] sm:$0x8] %vm342, %v341
    %s351 = scalar_lea.vmem [#allocation0], 294
    %352 = vst.msk [vmem:[%s351] sm:$0x10] %vm342, %v341
    %s353 = scalar_lea.vmem [#allocation0], 357
    %354 = vst.msk [vmem:[%s353] sm:$0x20] %vm342, %v341
    %s355 = scalar_lea.vmem [#allocation0], 420
    %356 = vst.msk [vmem:[%s355] sm:$0x40] %vm342, %v341
    %s357 = scalar_lea.vmem [#allocation0], 483
    %358 = vst.msk [vmem:[%s357] sm:$0x80] %vm342, %v341
    %v359 = vld [vmem:[%s0] sm:$0xff]
    %360 = vrot.lane.b32.xlu0 %v359, 74
    %v361 = vpop.permute.xlu0 %360
    %vm362 = vcmask 23552
    %s363 = scalar_lea.vmem [#allocation0], 48
    %364 = vst.msk [vmem:[%s363] sm:$0x1] %vm362, %v361
    %s365 = scalar_lea.vmem [#allocation0], 111
    %366 = vst.msk [vmem:[%s365] sm:$0x2] %vm362, %v361
    %s367 = scalar_lea.vmem [#allocation0], 174
    %368 = vst.msk [vmem:[%s367] sm:$0x4] %vm362, %v361
    %s369 = scalar_lea.vmem [#allocation0], 237
    %370 = vst.msk [vmem:[%s369] sm:$0x8] %vm362, %v361
    %s371 = scalar_lea.vmem [#allocation0], 300
    %372 = vst.msk [vmem:[%s371] sm:$0x10] %vm362, %v361
    %s373 = scalar_lea.vmem [#allocation0], 363
    %374 = vst.msk [vmem:[%s373] sm:$0x20] %vm362, %v361
    %s375 = scalar_lea.vmem [#allocation0], 426
    %376 = vst.msk [vmem:[%s375] sm:$0x40] %vm362, %v361
    %s377 = scalar_lea.vmem [#allocation0], 489
    %378 = vst.msk [vmem:[%s377] sm:$0x80] %vm362, %v361
    %v379 = vld [vmem:[%s0] sm:$0xff]
    %380 = vrot.lane.b32.xlu0 %v379, 71
    %v381 = vpop.permute.xlu0 %380
    %vm382 = vcmask 23552
    %s383 = scalar_lea.vmem [#allocation0], 49
    %384 = vst.msk [vmem:[%s383] sm:$0x1] %vm382, %v381
    %s385 = scalar_lea.vmem [#allocation0], 112
    %386 = vst.msk [vmem:[%s385] sm:$0x2] %vm382, %v381
    %s387 = scalar_lea.vmem [#allocation0], 175
    %388 = vst.msk [vmem:[%s387] sm:$0x4] %vm382, %v381
    %s389 = scalar_lea.vmem [#allocation0], 238
    %390 = vst.msk [vmem:[%s389] sm:$0x8] %vm382, %v381
    %s391 = scalar_lea.vmem [#allocation0], 301
    %392 = vst.msk [vmem:[%s391] sm:$0x10] %vm382, %v381
    %s393 = scalar_lea.vmem [#allocation0], 364
    %394 = vst.msk [vmem:[%s393] sm:$0x20] %vm382, %v381
    %s395 = scalar_lea.vmem [#allocation0], 427
    %396 = vst.msk [vmem:[%s395] sm:$0x40] %vm382, %v381
    %s397 = scalar_lea.vmem [#allocation0], 490
    %398 = vst.msk [vmem:[%s397] sm:$0x80] %vm382, %v381
    %v399 = vld [vmem:[%s0] sm:$0xff]
    %400 = vrot.lane.b32.xlu0 %v399, 68
    %v401 = vpop.permute.xlu0 %400
    %vm402 = vcmask 23552
    %s403 = scalar_lea.vmem [#allocation0], 50
    %404 = vst.msk [vmem:[%s403] sm:$0x1] %vm402, %v401
    %s405 = scalar_lea.vmem [#allocation0], 113
    %406 = vst.msk [vmem:[%s405] sm:$0x2] %vm402, %v401
    %s407 = scalar_lea.vmem [#allocation0], 176
    %408 = vst.msk [vmem:[%s407] sm:$0x4] %vm402, %v401
    %s409 = scalar_lea.vmem [#allocation0], 239
    %410 = vst.msk [vmem:[%s409] sm:$0x8] %vm402, %v401
    %s411 = scalar_lea.vmem [#allocation0], 302
    %412 = vst.msk [vmem:[%s411] sm:$0x10] %vm402, %v401
    %s413 = scalar_lea.vmem [#allocation0], 365
    %414 = vst.msk [vmem:[%s413] sm:$0x20] %vm402, %v401
    %s415 = scalar_lea.vmem [#allocation0], 428
    %416 = vst.msk [vmem:[%s415] sm:$0x40] %vm402, %v401
    %s417 = scalar_lea.vmem [#allocation0], 491
    %418 = vst.msk [vmem:[%s417] sm:$0x80] %vm402, %v401
    %v419 = vld [vmem:[%s0] sm:$0xff]
    %420 = vrot.lane.b32.xlu0 %v419, 65
    %v421 = vpop.permute.xlu0 %420
    %vm422 = vcmask 23552
    %s423 = scalar_lea.vmem [#allocation0], 56
    %424 = vst.msk [vmem:[%s423] sm:$0x1] %vm422, %v421
    %s425 = scalar_lea.vmem [#allocation0], 119
    %426 = vst.msk [vmem:[%s425] sm:$0x2] %vm422, %v421
    %s427 = scalar_lea.vmem [#allocation0], 182
    %428 = vst.msk [vmem:[%s427] sm:$0x4] %vm422, %v421
    %s429 = scalar_lea.vmem [#allocation0], 245
    %430 = vst.msk [vmem:[%s429] sm:$0x8] %vm422, %v421
    %s431 = scalar_lea.vmem [#allocation0], 308
    %432 = vst.msk [vmem:[%s431] sm:$0x10] %vm422, %v421
    %s433 = scalar_lea.vmem [#allocation0], 371
    %434 = vst.msk [vmem:[%s433] sm:$0x20] %vm422, %v421
    %s435 = scalar_lea.vmem [#allocation0], 434
    %436 = vst.msk [vmem:[%s435] sm:$0x40] %vm422, %v421
    %s437 = scalar_lea.vmem [#allocation0], 497
    %438 = vst.msk [vmem:[%s437] sm:$0x80] %vm422, %v421
    %v439 = vld [vmem:[%s0] sm:$0xff]
    %440 = vrot.lane.b32.xlu0 %v439, 62
    %v441 = vpop.permute.xlu0 %440
    %vm442 = vcmask 23552
    %s443 = scalar_lea.vmem [#allocation0], 57
    %444 = vst.msk [vmem:[%s443] sm:$0x1] %vm442, %v441
    %s445 = scalar_lea.vmem [#allocation0], 120
    %446 = vst.msk [vmem:[%s445] sm:$0x2] %vm442, %v441
    %s447 = scalar_lea.vmem [#allocation0], 183
    %448 = vst.msk [vmem:[%s447] sm:$0x4] %vm442, %v441
    %s449 = scalar_lea.vmem [#allocation0], 246
    %450 = vst.msk [vmem:[%s449] sm:$0x8] %vm442, %v441
    %s451 = scalar_lea.vmem [#allocation0], 309
    %452 = vst.msk [vmem:[%s451] sm:$0x10] %vm442, %v441
    %s453 = scalar_lea.vmem [#allocation0], 372
    %454 = vst.msk [vmem:[%s453] sm:$0x20] %vm442, %v441
    %s455 = scalar_lea.vmem [#allocation0], 435
    %456 = vst.msk [vmem:[%s455] sm:$0x40] %vm442, %v441
    %s457 = scalar_lea.vmem [#allocation0], 498
    %458 = vst.msk [vmem:[%s457] sm:$0x80] %vm442, %v441
    %v459 = vld [vmem:[%s0] sm:$0xff]
    %460 = vrot.lane.b32.xlu0 %v459, 59
    %v461 = vpop.permute.xlu0 %460
    %vm462 = vcmask 23552
    %s463 = scalar_lea.vmem [#allocation0], 58
    %464 = vst.msk [vmem:[%s463] sm:$0x1] %vm462, %v461
    %s465 = scalar_lea.vmem [#allocation0], 121
    %466 = vst.msk [vmem:[%s465] sm:$0x2] %vm462, %v461
    %s467 = scalar_lea.vmem [#allocation0], 184
    %468 = vst.msk [vmem:[%s467] sm:$0x4] %vm462, %v461
    %s469 = scalar_lea.vmem [#allocation0], 247
    %470 = vst.msk [vmem:[%s469] sm:$0x8] %vm462, %v461
    %s471 = scalar_lea.vmem [#allocation0], 310
    %472 = vst.msk [vmem:[%s471] sm:$0x10] %vm462, %v461
    %s473 = scalar_lea.vmem [#allocation0], 373
    %474 = vst.msk [vmem:[%s473] sm:$0x20] %vm462, %v461
    %s475 = scalar_lea.vmem [#allocation0], 436
    %476 = vst.msk [vmem:[%s475] sm:$0x40] %vm462, %v461
    %s477 = scalar_lea.vmem [#allocation0], 499
    %478 = vst.msk [vmem:[%s477] sm:$0x80] %vm462, %v461
    %s480 = sshllo.u32 0, 4
    %v482 = vld [vmem:[#allocation0] sm:%s480]
    %s483 = sshllo.u32 0, 4
    %484 = vst [vmem:[%s1] sm:%s483] %v482
    %s485 = scalar_lea.vmem [#allocation0], 8
    %v486 = vld [vmem:[%s485] sm:%s480]
    %s487 = sshllo.u32 0, 4
    %s488 = scalar_lea.vmem %s1, 4
    %489 = vst [vmem:[%s488] sm:%s487] %v486
    %s490 = scalar_lea.vmem [#allocation0], 16
    %v491 = vld [vmem:[%s490] sm:%s480]
    %s492 = sshllo.u32 0, 4
    %s493 = smul.addr 4, 2
    %s494 = scalar_lea.vmem %s1, %s493
    %495 = vst [vmem:[%s494] sm:%s492] %v491
    %s496 = scalar_lea.vmem [#allocation0], 24
    %v497 = vld [vmem:[%s496] sm:%s480]
    %s498 = sshllo.u32 0, 4
    %s499 = smul.addr 4, 3
    %s500 = scalar_lea.vmem %s1, %s499
    %501 = vst [vmem:[%s500] sm:%s498] %v497
    %s502 = scalar_lea.vmem [#allocation0], 32
    %v503 = vld [vmem:[%s502] sm:%s480]
    %s504 = sshllo.u32 0, 4
    %s505 = smul.addr 4, 4
    %s506 = scalar_lea.vmem %s1, %s505
    %507 = vst [vmem:[%s506] sm:%s504] %v503
    %s508 = scalar_lea.vmem [#allocation0], 40
    %v509 = vld [vmem:[%s508] sm:%s480]
    %s510 = sshllo.u32 0, 4
    %s511 = smul.addr 4, 5
    %s512 = scalar_lea.vmem %s1, %s511
    %513 = vst [vmem:[%s512] sm:%s510] %v509
    %s514 = scalar_lea.vmem [#allocation0], 48
    %v515 = vld [vmem:[%s514] sm:%s480]
    %s516 = sshllo.u32 0, 4
    %s517 = smul.addr 4, 6
    %s518 = scalar_lea.vmem %s1, %s517
    %519 = vst [vmem:[%s518] sm:%s516] %v515
    %s520 = scalar_lea.vmem [#allocation0], 56
    %v521 = vld [vmem:[%s520] sm:%s480]
    %s522 = sshllo.u32 0, 4
    %s523 = smul.addr 4, 7
    %s524 = scalar_lea.vmem %s1, %s523
    %525 = vst [vmem:[%s524] sm:%s522] %v521
    %s526 = scalar_lea.vmem [#allocation0], 64
    %v527 = vld [vmem:[%s526] sm:%s480]
    %s528 = sshllo.u32 0, 4
    %s529 = smul.addr 4, 8
    %s530 = scalar_lea.vmem %s1, %s529
    %531 = vst [vmem:[%s530] sm:%s528] %v527
    %s532 = scalar_lea.vmem [#allocation0], 72
    %v533 = vld [vmem:[%s532] sm:%s480]
    %s534 = sshllo.u32 0, 4
    %s535 = smul.addr 4, 9
    %s536 = scalar_lea.vmem %s1, %s535
    %537 = vst [vmem:[%s536] sm:%s534] %v533
    %s538 = scalar_lea.vmem [#allocation0], 80
    %v539 = vld [vmem:[%s538] sm:%s480]
    %s540 = sshllo.u32 0, 4
    %s541 = smul.addr 4, 10
    %s542 = scalar_lea.vmem %s1, %s541
    %543 = vst [vmem:[%s542] sm:%s540] %v539
    %s544 = scalar_lea.vmem [#allocation0], 88
    %v545 = vld [vmem:[%s544] sm:%s480]
    %s546 = sshllo.u32 0, 4
    %s547 = smul.addr 4, 11
    %s548 = scalar_lea.vmem %s1, %s547
    %549 = vst [vmem:[%s548] sm:%s546] %v545
    %s550 = scalar_lea.vmem [#allocation0], 96
    %v551 = vld [vmem:[%s550] sm:%s480]
    %s552 = sshllo.u32 0, 4
    %s553 = smul.addr 4, 12
    %s554 = scalar_lea.vmem %s1, %s553
    %555 = vst [vmem:[%s554] sm:%s552] %v551
    %s556 = scalar_lea.vmem [#allocation0], 104
    %v557 = vld [vmem:[%s556] sm:%s480]
    %s558 = sshllo.u32 0, 4
    %s559 = smul.addr 4, 13
    %s560 = scalar_lea.vmem %s1, %s559
    %561 = vst [vmem:[%s560] sm:%s558] %v557
    %s562 = scalar_lea.vmem [#allocation0], 112
    %v563 = vld [vmem:[%s562] sm:%s480]
    %s564 = sshllo.u32 0, 4
    %s565 = smul.addr 4, 14
    %s566 = scalar_lea.vmem %s1, %s565
    %567 = vst [vmem:[%s566] sm:%s564] %v563
    %s568 = scalar_lea.vmem [#allocation0], 120
    %v569 = vld [vmem:[%s568] sm:%s480]
    %s570 = sshllo.u32 0, 4
    %s571 = smul.addr 4, 15
    %s572 = scalar_lea.vmem %s1, %s571
    %573 = vst [vmem:[%s572] sm:%s570] %v569
    %s574 = scalar_lea.vmem [#allocation0], 128
    %v575 = vld [vmem:[%s574] sm:%s480]
    %s576 = sshllo.u32 0, 4
    %s577 = smul.addr 4, 16
    %s578 = scalar_lea.vmem %s1, %s577
    %579 = vst [vmem:[%s578] sm:%s576] %v575
    %s580 = scalar_lea.vmem [#allocation0], 136
    %v581 = vld [vmem:[%s580] sm:%s480]
    %s582 = sshllo.u32 0, 4
    %s583 = smul.addr 4, 17
    %s584 = scalar_lea.vmem %s1, %s583
    %585 = vst [vmem:[%s584] sm:%s582] %v581
    %s586 = scalar_lea.vmem [#allocation0], 144
    %v587 = vld [vmem:[%s586] sm:%s480]
    %s588 = sshllo.u32 0, 4
    %s589 = smul.addr 4, 18
    %s590 = scalar_lea.vmem %s1, %s589
    %591 = vst [vmem:[%s590] sm:%s588] %v587
    %s592 = scalar_lea.vmem [#allocation0], 152
    %v593 = vld [vmem:[%s592] sm:%s480]
    %s594 = sshllo.u32 0, 4
    %s595 = smul.addr 4, 19
    %s596 = scalar_lea.vmem %s1, %s595
    %597 = vst [vmem:[%s596] sm:%s594] %v593
    %s598 = scalar_lea.vmem [#allocation0], 160
    %v599 = vld [vmem:[%s598] sm:%s480]
    %s600 = sshllo.u32 0, 4
    %s601 = smul.addr 4, 20
    %s602 = scalar_lea.vmem %s1, %s601
    %603 = vst [vmem:[%s602] sm:%s600] %v599
    %s604 = scalar_lea.vmem [#allocation0], 168
    %v605 = vld [vmem:[%s604] sm:%s480]
    %s606 = sshllo.u32 0, 4
    %s607 = smul.addr 4, 21
    %s608 = scalar_lea.vmem %s1, %s607
    %609 = vst [vmem:[%s608] sm:%s606] %v605
    %s610 = scalar_lea.vmem [#allocation0], 176
    %v611 = vld [vmem:[%s610] sm:%s480]
    %s612 = sshllo.u32 0, 4
    %s613 = smul.addr 4, 22
    %s614 = scalar_lea.vmem %s1, %s613
    %615 = vst [vmem:[%s614] sm:%s612] %v611
    %s616 = scalar_lea.vmem [#allocation0], 184
    %v617 = vld [vmem:[%s616] sm:%s480]
    %s618 = sshllo.u32 0, 4
    %s619 = smul.addr 4, 23
    %s620 = scalar_lea.vmem %s1, %s619
    %621 = vst [vmem:[%s620] sm:%s618] %v617
    %s622 = scalar_lea.vmem [#allocation0], 192
    %v623 = vld [vmem:[%s622] sm:%s480]
    %s624 = sshllo.u32 0, 4
    %s625 = smul.addr 4, 24
    %s626 = scalar_lea.vmem %s1, %s625
    %627 = vst [vmem:[%s626] sm:%s624] %v623
    %s628 = scalar_lea.vmem [#allocation0], 200
    %v629 = vld [vmem:[%s628] sm:%s480]
    %s630 = sshllo.u32 0, 4
    %s631 = smul.addr 4, 25
    %s632 = scalar_lea.vmem %s1, %s631
    %633 = vst [vmem:[%s632] sm:%s630] %v629
    %s634 = scalar_lea.vmem [#allocation0], 208
    %v635 = vld [vmem:[%s634] sm:%s480]
    %s636 = sshllo.u32 0, 4
    %s637 = smul.addr 4, 26
    %s638 = scalar_lea.vmem %s1, %s637
    %639 = vst [vmem:[%s638] sm:%s636] %v635
    %s640 = scalar_lea.vmem [#allocation0], 216
    %v641 = vld [vmem:[%s640] sm:%s480]
    %s642 = sshllo.u32 0, 4
    %s643 = smul.addr 4, 27
    %s644 = scalar_lea.vmem %s1, %s643
    %645 = vst [vmem:[%s644] sm:%s642] %v641
    %s646 = scalar_lea.vmem [#allocation0], 224
    %v647 = vld [vmem:[%s646] sm:%s480]
    %s648 = sshllo.u32 0, 4
    %s649 = smul.addr 4, 28
    %s650 = scalar_lea.vmem %s1, %s649
    %651 = vst [vmem:[%s650] sm:%s648] %v647
    %s652 = scalar_lea.vmem [#allocation0], 232
    %v653 = vld [vmem:[%s652] sm:%s480]
    %s654 = sshllo.u32 0, 4
    %s655 = smul.addr 4, 29
    %s656 = scalar_lea.vmem %s1, %s655
    %657 = vst [vmem:[%s656] sm:%s654] %v653
    %s658 = scalar_lea.vmem [#allocation0], 240
    %v659 = vld [vmem:[%s658] sm:%s480]
    %s660 = sshllo.u32 0, 4
    %s661 = smul.addr 4, 30
    %s662 = scalar_lea.vmem %s1, %s661
    %663 = vst [vmem:[%s662] sm:%s660] %v659
    %s664 = scalar_lea.vmem [#allocation0], 248
    %v665 = vld [vmem:[%s664] sm:%s480]
    %s666 = sshllo.u32 0, 4
    %s667 = smul.addr 4, 31
    %s668 = scalar_lea.vmem %s1, %s667
    %669 = vst [vmem:[%s668] sm:%s666] %v665
    %s670 = scalar_lea.vmem [#allocation0], 256
    %v671 = vld [vmem:[%s670] sm:%s480]
    %s672 = sshllo.u32 0, 4
    %s673 = smul.addr 4, 32
    %s674 = scalar_lea.vmem %s1, %s673
    %675 = vst [vmem:[%s674] sm:%s672] %v671
    %s676 = scalar_lea.vmem [#allocation0], 264
    %v677 = vld [vmem:[%s676] sm:%s480]
    %s678 = sshllo.u32 0, 4
    %s679 = smul.addr 4, 33
    %s680 = scalar_lea.vmem %s1, %s679
    %681 = vst [vmem:[%s680] sm:%s678] %v677
    %s682 = scalar_lea.vmem [#allocation0], 272
    %v683 = vld [vmem:[%s682] sm:%s480]
    %s684 = sshllo.u32 0, 4
    %s685 = smul.addr 4, 34
    %s686 = scalar_lea.vmem %s1, %s685
    %687 = vst [vmem:[%s686] sm:%s684] %v683
    %s688 = scalar_lea.vmem [#allocation0], 280
    %v689 = vld [vmem:[%s688] sm:%s480]
    %s690 = sshllo.u32 0, 4
    %s691 = smul.addr 4, 35
    %s692 = scalar_lea.vmem %s1, %s691
    %693 = vst [vmem:[%s692] sm:%s690] %v689
    %s694 = scalar_lea.vmem [#allocation0], 288
    %v695 = vld [vmem:[%s694] sm:%s480]
    %s696 = sshllo.u32 0, 4
    %s697 = smul.addr 4, 36
    %s698 = scalar_lea.vmem %s1, %s697
    %699 = vst [vmem:[%s698] sm:%s696] %v695
    %s700 = scalar_lea.vmem [#allocation0], 296
    %v701 = vld [vmem:[%s700] sm:%s480]
    %s702 = sshllo.u32 0, 4
    %s703 = smul.addr 4, 37
    %s704 = scalar_lea.vmem %s1, %s703
    %705 = vst [vmem:[%s704] sm:%s702] %v701
    %s706 = scalar_lea.vmem [#allocation0], 304
    %v707 = vld [vmem:[%s706] sm:%s480]
    %s708 = sshllo.u32 0, 4
    %s709 = smul.addr 4, 38
    %s710 = scalar_lea.vmem %s1, %s709
    %711 = vst [vmem:[%s710] sm:%s708] %v707
    %s712 = scalar_lea.vmem [#allocation0], 312
    %v713 = vld [vmem:[%s712] sm:%s480]
    %s714 = sshllo.u32 0, 4
    %s715 = smul.addr 4, 39
    %s716 = scalar_lea.vmem %s1, %s715
    %717 = vst [vmem:[%s716] sm:%s714] %v713
    %s718 = scalar_lea.vmem [#allocation0], 320
    %v719 = vld [vmem:[%s718] sm:%s480]
    %s720 = sshllo.u32 0, 4
    %s721 = smul.addr 4, 40
    %s722 = scalar_lea.vmem %s1, %s721
    %723 = vst [vmem:[%s722] sm:%s720] %v719
    %s724 = scalar_lea.vmem [#allocation0], 328
    %v725 = vld [vmem:[%s724] sm:%s480]
    %s726 = sshllo.u32 0, 4
    %s727 = smul.addr 4, 41
    %s728 = scalar_lea.vmem %s1, %s727
    %729 = vst [vmem:[%s728] sm:%s726] %v725
    %s730 = scalar_lea.vmem [#allocation0], 336
    %v731 = vld [vmem:[%s730] sm:%s480]
    %s732 = sshllo.u32 0, 4
    %s733 = smul.addr 4, 42
    %s734 = scalar_lea.vmem %s1, %s733
    %735 = vst [vmem:[%s734] sm:%s732] %v731
    %s736 = scalar_lea.vmem [#allocation0], 344
    %v737 = vld [vmem:[%s736] sm:%s480]
    %s738 = sshllo.u32 0, 4
    %s739 = smul.addr 4, 43
    %s740 = scalar_lea.vmem %s1, %s739
    %741 = vst [vmem:[%s740] sm:%s738] %v737
    %s742 = scalar_lea.vmem [#allocation0], 352
    %v743 = vld [vmem:[%s742] sm:%s480]
    %s744 = sshllo.u32 0, 4
    %s745 = smul.addr 4, 44
    %s746 = scalar_lea.vmem %s1, %s745
    %747 = vst [vmem:[%s746] sm:%s744] %v743
    %s748 = scalar_lea.vmem [#allocation0], 360
    %v749 = vld [vmem:[%s748] sm:%s480]
    %s750 = sshllo.u32 0, 4
    %s751 = smul.addr 4, 45
    %s752 = scalar_lea.vmem %s1, %s751
    %753 = vst [vmem:[%s752] sm:%s750] %v749
    %s754 = scalar_lea.vmem [#allocation0], 368
    %v755 = vld [vmem:[%s754] sm:%s480]
    %s756 = sshllo.u32 0, 4
    %s757 = smul.addr 4, 46
    %s758 = scalar_lea.vmem %s1, %s757
    %759 = vst [vmem:[%s758] sm:%s756] %v755
    %s760 = scalar_lea.vmem [#allocation0], 376
    %v761 = vld [vmem:[%s760] sm:%s480]
    %s762 = sshllo.u32 0, 4
    %s763 = smul.addr 4, 47
    %s764 = scalar_lea.vmem %s1, %s763
    %765 = vst [vmem:[%s764] sm:%s762] %v761
    %s766 = scalar_lea.vmem [#allocation0], 384
    %v767 = vld [vmem:[%s766] sm:%s480]
    %s768 = sshllo.u32 0, 4
    %s769 = smul.addr 4, 48
    %s770 = scalar_lea.vmem %s1, %s769
    %771 = vst [vmem:[%s770] sm:%s768] %v767
    %s772 = scalar_lea.vmem [#allocation0], 392
    %v773 = vld [vmem:[%s772] sm:%s480]
    %s774 = sshllo.u32 0, 4
    %s775 = smul.addr 4, 49
    %s776 = scalar_lea.vmem %s1, %s775
    %777 = vst [vmem:[%s776] sm:%s774] %v773
    %s778 = scalar_lea.vmem [#allocation0], 400
    %v779 = vld [vmem:[%s778] sm:%s480]
    %s780 = sshllo.u32 0, 4
    %s781 = smul.addr 4, 50
    %s782 = scalar_lea.vmem %s1, %s781
    %783 = vst [vmem:[%s782] sm:%s780] %v779
    %s784 = scalar_lea.vmem [#allocation0], 408
    %v785 = vld [vmem:[%s784] sm:%s480]
    %s786 = sshllo.u32 0, 4
    %s787 = smul.addr 4, 51
    %s788 = scalar_lea.vmem %s1, %s787
    %789 = vst [vmem:[%s788] sm:%s786] %v785
    %s790 = scalar_lea.vmem [#allocation0], 416
    %v791 = vld [vmem:[%s790] sm:%s480]
    %s792 = sshllo.u32 0, 4
    %s793 = smul.addr 4, 52
    %s794 = scalar_lea.vmem %s1, %s793
    %795 = vst [vmem:[%s794] sm:%s792] %v791
    %s796 = scalar_lea.vmem [#allocation0], 424
    %v797 = vld [vmem:[%s796] sm:%s480]
    %s798 = sshllo.u32 0, 4
    %s799 = smul.addr 4, 53
    %s800 = scalar_lea.vmem %s1, %s799
    %801 = vst [vmem:[%s800] sm:%s798] %v797
    %s802 = scalar_lea.vmem [#allocation0], 432
    %v803 = vld [vmem:[%s802] sm:%s480]
    %s804 = sshllo.u32 0, 4
    %s805 = smul.addr 4, 54
    %s806 = scalar_lea.vmem %s1, %s805
    %807 = vst [vmem:[%s806] sm:%s804] %v803
    %s808 = scalar_lea.vmem [#allocation0], 440
    %v809 = vld [vmem:[%s808] sm:%s480]
    %s810 = sshllo.u32 0, 4
    %s811 = smul.addr 4, 55
    %s812 = scalar_lea.vmem %s1, %s811
    %813 = vst [vmem:[%s812] sm:%s810] %v809
    %s814 = scalar_lea.vmem [#allocation0], 448
    %v815 = vld [vmem:[%s814] sm:%s480]
    %s816 = sshllo.u32 0, 4
    %s817 = smul.addr 4, 56
    %s818 = scalar_lea.vmem %s1, %s817
    %819 = vst [vmem:[%s818] sm:%s816] %v815
    %s820 = scalar_lea.vmem [#allocation0], 456
    %v821 = vld [vmem:[%s820] sm:%s480]
    %s822 = sshllo.u32 0, 4
    %s823 = smul.addr 4, 57
    %s824 = scalar_lea.vmem %s1, %s823
    %825 = vst [vmem:[%s824] sm:%s822] %v821
    %s826 = scalar_lea.vmem [#allocation0], 464
    %v827 = vld [vmem:[%s826] sm:%s480]
    %s828 = sshllo.u32 0, 4
    %s829 = smul.addr 4, 58
    %s830 = scalar_lea.vmem %s1, %s829
    %831 = vst [vmem:[%s830] sm:%s828] %v827
    %s832 = scalar_lea.vmem [#allocation0], 472
    %v833 = vld [vmem:[%s832] sm:%s480]
    %s834 = sshllo.u32 0, 4
    %s835 = smul.addr 4, 59
    %s836 = scalar_lea.vmem %s1, %s835
    %837 = vst [vmem:[%s836] sm:%s834] %v833
    %s838 = scalar_lea.vmem [#allocation0], 480
    %v839 = vld [vmem:[%s838] sm:%s480]
    %s840 = sshllo.u32 0, 4
    %s841 = smul.addr 4, 60
    %s842 = scalar_lea.vmem %s1, %s841
    %843 = vst [vmem:[%s842] sm:%s840] %v839
    %s844 = scalar_lea.vmem [#allocation0], 488
    %v845 = vld [vmem:[%s844] sm:%s480]
    %s846 = sshllo.u32 0, 4
    %s847 = smul.addr 4, 61
    %s848 = scalar_lea.vmem %s1, %s847
    %849 = vst [vmem:[%s848] sm:%s846] %v845
    %s850 = scalar_lea.vmem [#allocation0], 496
    %v851 = vld [vmem:[%s850] sm:%s480]
    %s852 = sshllo.u32 0, 4
    %s853 = smul.addr 4, 62
    %s854 = scalar_lea.vmem %s1, %s853
    %855 = vst [vmem:[%s854] sm:%s852] %v851
    %s856 = scalar_lea.vmem [#allocation0], 504
    %v857 = vld [vmem:[%s856] sm:%s480]
    %s858 = sshllo.u32 0, 4
    %s859 = smul.addr 4, 63
    %s860 = scalar_lea.vmem %s1, %s859
    %861 = vst [vmem:[%s860] sm:%s858] %v857

// kernel: squeeze.7
$region0: #{squeeze.7}
  %s0 = inlined_call_operand.vmem [shape: f32[1,10,6], index: 0, kind: input, shape index: {}]
  %s1 = inlined_call_operand.vmem [shape: f32[2,6,5], index: 1, kind: output, shape index: {}]
  %s2 = smov 3
  %v3 = vld [vmem:[%s0] ss:$5 sm:%s2]
  %vm4 = vcmask 39936
  %5 = vst.msk [vmem:[%s1] ss:$8 sm:$0x3] %vm4, %v3
  %s6 = scalar_lea.vmem %s0, 4
  %s7 = smov 3
  %v8 = vld [vmem:[%s6] ss:$5 sm:%s7]
  %9 = vrot.lane.b32.xlu0 %v8, 127
  %v10 = vpop.permute.xlu0 %9
  %vm11 = vcmask 39936
  %s12 = scalar_lea.vmem %s1, 5
  %13 = vst.msk [vmem:[%s12] ss:$8 sm:$0x3] %vm11, %v10
  %s14 = scalar_lea.vmem %s0, 3
  %s15 = smov 3
  %v16 = vld [vmem:[%s14] ss:$5 sm:%s15]
  %17 = vrot.lane.b32.xlu0 %v16, 126
  %v18 = vpop.permute.xlu0 %17
  %vm19 = vcmask 31744
  %s20 = scalar_lea.vmem %s1, 4
  %21 = vst.msk [vmem:[%s20] ss:$8 sm:$0x3] %vm19, %v18
  %s22 = scalar_lea.vmem %s0, 2
  %s23 = smov 3
  %v24 = vld [vmem:[%s22] ss:$5 sm:%s23]
  %25 = vrot.lane.b32.xlu0 %v24, 125
  %v26 = vpop.permute.xlu0 %25
  %vm27 = vcmask 23552
  %s28 = scalar_lea.vmem %s1, 3
  %29 = vst.msk [vmem:[%s28] ss:$8 sm:$0x3] %vm27, %v26
  %s30 = scalar_lea.vmem %s0, 1
  %s31 = smov 3
  %v32 = vld [vmem:[%s30] ss:$5 sm:%s31]
  %33 = vrot.lane.b32.xlu0 %v32, 124
  %v34 = vpop.permute.xlu0 %33
  %vm35 = vcmask 15360
  %s36 = scalar_lea.vmem %s1, 2
  %37 = vst.msk [vmem:[%s36] ss:$8 sm:$0x3] %vm35, %v34
  %s38 = smov 3
  %v39 = vld [vmem:[%s0] ss:$5 sm:%s38]
  %40 = vrot.lane.b32.xlu0 %v39, 123
  %v41 = vpop.permute.xlu0 %40
  %vm42 = vcmask 7168
  %s43 = scalar_lea.vmem %s1, 1
  %44 = vst.msk [vmem:[%s43] ss:$8 sm:$0x3] %vm42, %v41
  %s45 = scalar_lea.vmem %s0, 4
  %s46 = smov 3
  %v47 = vld [vmem:[%s45] ss:$5 sm:%s46]
  %48 = vrot.lane.b32.xlu0 %v47, 4
  %v49 = vpop.permute.xlu0 %48
  %vm50 = vcmask 39968
  %s51 = scalar_lea.vmem %s1, 4
  %52 = vst.msk [vmem:[%s51] ss:$8 sm:$0x3] %vm50, %v49
  %s53 = scalar_lea.vmem %s0, 3
  %s54 = smov 3
  %v55 = vld [vmem:[%s53] ss:$5 sm:%s54]
  %56 = vrot.lane.b32.xlu0 %v55, 3
  %v57 = vpop.permute.xlu0 %56
  %vm58 = vcmask 39960
  %s59 = scalar_lea.vmem %s1, 3
  %60 = vst.msk [vmem:[%s59] ss:$8 sm:$0x3] %vm58, %v57
  %s61 = scalar_lea.vmem %s0, 2
  %s62 = smov 3
  %v63 = vld [vmem:[%s61] ss:$5 sm:%s62]
  %64 = vrot.lane.b32.xlu0 %v63, 2
  %v65 = vpop.permute.xlu0 %64
  %vm66 = vcmask 39952
  %s67 = scalar_lea.vmem %s1, 2
  %68 = vst.msk [vmem:[%s67] ss:$8 sm:$0x3] %vm66, %v65
  %s69 = scalar_lea.vmem %s0, 1
  %s70 = smov 3
  %v71 = vld [vmem:[%s69] ss:$5 sm:%s70]
  %72 = vrot.lane.b32.xlu0 %v71, 1
  %v73 = vpop.permute.xlu0 %72
  %vm74 = vcmask 39944
  %s75 = scalar_lea.vmem %s1, 1
  %76 = vst.msk [vmem:[%s75] ss:$8 sm:$0x3] %vm74, %v73

// kernel: forward.13
$region0: #{forward.13}
  #allocation0 [shape = 'u32[]', space=smem, size = 0x4, offset = 0x4, fixed_abs, tag = 'smem constant byte address 0x4 - core index']
  #allocation1 [shape = 'u32[144,128]{1,0:T(1,128)}', space=vmem, size = 0x12000, scoped, tag = 'internal scratch']
  %s0 = inlined_call_operand.vmem [shape: bf16[2,16,128], index: 0, kind: input, shape index: {}]
  %s1 = inlined_call_operand.vmem [shape: bf16[2,128,128], index: 1, kind: input, shape index: {}]
  %s2 = inlined_call_operand.vmem [shape: f32[2,1,128], index: 2, kind: input, shape index: {}]
  %s3 = inlined_call_operand.vmem [shape: f32[2,16,128], index: 3, kind: output, shape index: {}]
  %s4 = sld [smem:[#allocation0]]
  $region45: #{forward.13} parent=0
    _
  %s6 = ssub.s32 1, %s4
  %s7 = scalar_select 0, %s6, %s4
  loop: start=0, step=1, limit=4
  $region2: #{forward.13} parent=0 // loop_pre_header
    _
  $region3: #{forward.13} parent=0 // loop_header
    %s9 = sphi 0, %s13
    %p10 = scmp.ge.s32.totalorder %s9, 4
    %s16 = sphi 0, %s28
    %s17 = sphi 0, %s24
    %s18 = sphi 0, %s16
    %s19 = sphi 0, %s17
    %s20 = sphi 0, %s18
    %s21 = sphi 0, %s19
    %s33 = sphi 0, %s35
    %s36 = sphi 0, %s33
    %s37 = sphi 0, %s36
    %s53 = sphi 0, %s37
    %s59 = sphi 0, %s61
    %s62 = sphi 0, %s59
    %s63 = sphi 0, %s62
    %s79 = sphi 0, %s63
    %s85 = sphi 0, %s87
    %s88 = sphi 0, %s85
    %s89 = sphi 0, %s88
    %s105 = sphi 0, %s89
    %s113 = sphi 0, %s115
    %s116 = sphi 0, %s113
    %s117 = sphi 0, %s116
    %s133 = sphi 0, %s117
  $region4: #{forward.13} parent=0 // loop_header_branch
    %12 = sbr.rel (%p10) target = $region8
  $region5: #{forward.13} parent=0 // loop_body
    %s14 = ssub.s32 %s9, 1
    %s15 = ssub.s32 %s9, 2
    %s22 = sadd.s32 1, %s17
    %p23 = scmp.ge.s32.totalorder %s22, 1
    %s24 = scalar_select %p23, 0, %s22
    %s25 = sadd.s32 1, %s16
    %s26 = scalar_select %p23, %s25, %s16
    %p27 = scmp.ge.s32.totalorder %s26, 2
    %s28 = scalar_select %p27, 0, %s26
    %s29 = ssub.s32 %s16, %s28
    %s30 = ssub.s32 %s17, %s24
    %s31 = sor.u32 %s29, %s30
    %p32 = scmp.eq.s32.totalorder %s31, 0
    %s34 = sadd.s32 %s33, 1
    %s35 = scalar_select %p32, %s33, %s34
    %p38 = pneg %p32
    %p39 = scmp.eq.s32.totalorder %s9, 1
    %p40 = por %p38, %p39
    %p41 = scmp.ne.s32.totalorder %s33, %s36
    %p42 = scmp.eq.s32.totalorder %s9, 0
    %p43 = por %p41, %p42
    %p44 = scmp.ne.s32.totalorder %s33, %s36
    %p45 = scmp.eq.s32.totalorder %s14, 1
    %p46 = por %p44, %p45
    %p47 = scmp.ne.s32.totalorder %s36, %s37
    %p48 = scmp.eq.s32.totalorder %s14, 0
    %p49 = por %p47, %p48
    %p50 = scmp.ne.s32.totalorder %s36, %s37
    %p51 = scmp.eq.s32.totalorder %s15, 1
    %p52 = por %p50, %p51
    %p54 = scmp.ne.s32.totalorder %s37, %s53
    %p55 = scmp.eq.s32.totalorder %s15, 0
    %p56 = por %p54, %p55
    %s57 = ssub.s32 %s16, %s28
    %p58 = scmp.eq.s32.totalorder %s57, 0
    %s60 = sadd.s32 %s59, 1
    %s61 = scalar_select %p58, %s59, %s60
    %p64 = pneg %p58
    %p65 = scmp.eq.s32.totalorder %s9, 1
    %p66 = por %p64, %p65
    %p67 = scmp.ne.s32.totalorder %s59, %s62
    %p68 = scmp.eq.s32.totalorder %s9, 0
    %p69 = por %p67, %p68
    %p70 = scmp.ne.s32.totalorder %s59, %s62
    %p71 = scmp.eq.s32.totalorder %s14, 1
    %p72 = por %p70, %p71
    %p73 = scmp.ne.s32.totalorder %s62, %s63
    %p74 = scmp.eq.s32.totalorder %s14, 0
    %p75 = por %p73, %p74
    %p76 = scmp.ne.s32.totalorder %s62, %s63
    %p77 = scmp.eq.s32.totalorder %s15, 1
    %p78 = por %p76, %p77
    %p80 = scmp.ne.s32.totalorder %s63, %s79
    %p81 = scmp.eq.s32.totalorder %s15, 0
    %p82 = por %p80, %p81
    %s83 = ssub.s32 %s16, %s28
    %p84 = scmp.eq.s32.totalorder %s83, 0
    %s86 = sadd.s32 %s85, 1
    %s87 = scalar_select %p84, %s85, %s86
    %p90 = pneg %p84
    %p91 = scmp.eq.s32.totalorder %s9, 1
    %p92 = por %p90, %p91
    %p93 = scmp.ne.s32.totalorder %s85, %s88
    %p94 = scmp.eq.s32.totalorder %s9, 0
    %p95 = por %p93, %p94
    %p96 = scmp.ne.s32.totalorder %s85, %s88
    %p97 = scmp.eq.s32.totalorder %s14, 1
    %p98 = por %p96, %p97
    %p99 = scmp.ne.s32.totalorder %s88, %s89
    %p100 = scmp.eq.s32.totalorder %s14, 0
    %p101 = por %p99, %p100
    %p102 = scmp.ne.s32.totalorder %s88, %s89
    %p103 = scmp.eq.s32.totalorder %s15, 1
    %p104 = por %p102, %p103
    %p106 = scmp.ne.s32.totalorder %s89, %s105
    %p107 = scmp.eq.s32.totalorder %s15, 0
    %p108 = por %p106, %p107
    %s109 = ssub.s32 %s16, %s28
    %s110 = ssub.s32 %s17, %s24
    %s111 = sor.u32 %s109, %s110
    %p112 = scmp.eq.s32.totalorder %s111, 0
    %s114 = sadd.s32 %s113, 1
    %s115 = scalar_select %p112, %s113, %s114
    %p118 = pneg %p112
    %p119 = scmp.eq.s32.totalorder %s9, 1
    %p120 = por %p118, %p119
    %p121 = scmp.ne.s32.totalorder %s113, %s116
    %p122 = scmp.eq.s32.totalorder %s9, 0
    %p123 = por %p121, %p122
    %p124 = scmp.ne.s32.totalorder %s113, %s116
    %p125 = scmp.eq.s32.totalorder %s14, 1
    %p126 = por %p124, %p125
    %p127 = scmp.ne.s32.totalorder %s116, %s117
    %p128 = scmp.eq.s32.totalorder %s14, 0
    %p129 = por %p127, %p128
    %p130 = scmp.ne.s32.totalorder %s116, %s117
    %p131 = scmp.eq.s32.totalorder %s15, 1
    %p132 = por %p130, %p131
    %p134 = scmp.ne.s32.totalorder %s117, %s133
    %p135 = scmp.eq.s32.totalorder %s15, 0
    %p136 = por %p134, %p135
    %p137 = scmp.le.s32.totalorder 1, %s9
    %p138 = scmp.lt.s32.totalorder %s9, 3
    %p139 = pnand %p137, %p138
    %p140 = pneg %p139
    // Predicated region
    $region9: #{forward.13} parent=5 // pred_check
      _
    $region10: #{forward.13} parent=5 // pred_check_branch
      %142 = sbr.rel (%p139) target = $region12
    $region11: #{forward.13} parent=5 // pred_region
      %s143 = ssub.s32 %s9, 1
    $region12: #{forward.13} parent=5 // pred_fallthru
      _
    %p144 = scmp.lt.s32.totalorder %s9, 2
    // Predicated region
    $region13: #{forward.13} parent=5 // pred_check
      %p145 = pneg %p144
    $region14: #{forward.13} parent=5 // pred_check_branch
      %147 = sbr.rel (%p145) target = $region16
    $region15: #{forward.13} parent=5 // pred_region
      // Predicated region
      $region17: #{forward.13} parent=15 // pred_check
        %p148 = pneg %p43
      $region18: #{forward.13} parent=15 // pred_check_branch
        %150 = sbr.rel (%p148) target = $region20
      $region19: #{forward.13} parent=15 // pred_region
        %s151 = smul.u32 2, %s17
        %p152 = scmp.lt.s32.totalorder %s16, 1
        %s153 = scalar_select %p152, %s16, 1
        %p154 = scmp.lt.s32.totalorder %s151, 1
        %s155 = scalar_select %p154, %s151, 1
        %s156 = smul.addr %s153, 2
        %s157 = sadd.s32 %s155, %s156
        %s158 = smul.addr %s157, 4
        %s159 = scalar_lea.vmem %s0, %s158
        %s160 = smul.u32 2, %s17
      $region20: #{forward.13} parent=15 // pred_fallthru
        _
      // Predicated region
      $region21: #{forward.13} parent=15 // pred_check
        %p161 = pneg %p69
      $region22: #{forward.13} parent=15 // pred_check_branch
        %163 = sbr.rel (%p161) target = $region24
      $region23: #{forward.13} parent=15 // pred_region
        %p164 = scmp.lt.s32.totalorder %s16, 1
        %s165 = scalar_select %p164, %s16, 1
        %s166 = smul.addr %s165, 16
        %s167 = smul.addr %s166, 4
        %s168 = scalar_lea.vmem %s1, %s167
      $region24: #{forward.13} parent=15 // pred_fallthru
        _
      // Predicated region
      $region25: #{forward.13} parent=15 // pred_check
        %p169 = pneg %p95
      $region26: #{forward.13} parent=15 // pred_check_branch
        %171 = sbr.rel (%p169) target = $region28
      $region27: #{forward.13} parent=15 // pred_region
        %p172 = scmp.lt.s32.totalorder %s16, 1
        %s173 = scalar_select %p172, %s16, 1
        %s174 = scalar_lea.vmem %s2, %s173
      $region28: #{forward.13} parent=15 // pred_fallthru
        _
    $region16: #{forward.13} parent=5 // pred_fallthru
      _
    %p175 = scmp.le.s32.totalorder 1, %s9
    %p176 = scmp.lt.s32.totalorder %s9, 3
    %p177 = pnand %p175, %p176
    %p178 = pneg %p177
    // Predicated region
    $region29: #{forward.13} parent=5 // pred_check
      _
    $region30: #{forward.13} parent=5 // pred_check_branch
      %180 = sbr.rel (%p177) target = $region32
    $region31: #{forward.13} parent=5 // pred_region
      %s181 = ssub.s32 %s9, 1
      %s182 = smul.u32 2, %s19
      %p183 = scmp.lt.s32.totalorder %s18, 1
      %s184 = scalar_select %p183, %s18, 1
      %p185 = scmp.lt.s32.totalorder %s182, 1
      %s186 = scalar_select %p185, %s182, 1
      %s187 = smul.addr %s184, 2
      %s188 = sadd.s32 %s186, %s187
      %s189 = smul.addr %s188, 4
      %s190 = scalar_lea.vmem %s0, %s189
      %p191 = pneg %p49
      %p192 = pneg %p46
      %p193 = scmp.lt.s32.totalorder %s18, 1
      %s194 = scalar_select %p193, %s18, 1
      %s195 = smul.addr %s194, 16
      %s196 = smul.addr %s195, 4
      %s197 = scalar_lea.vmem %s1, %s196
      %p198 = pneg %p75
      %p199 = pneg %p72
      %p200 = scmp.lt.s32.totalorder %s18, 1
      %s201 = scalar_select %p200, %s18, 1
      %s202 = scalar_lea.vmem %s2, %s201
      %p203 = pneg %p101
      %p204 = pneg %p98
      %p205 = pneg %p129
      %p206 = pneg %p126
      %s207 = smul.u32 2, %s19
      %p208 = scmp.lt.s32.totalorder %s18, 1
      %s209 = scalar_select %p208, %s18, 1
      %p210 = scmp.lt.s32.totalorder %s207, 1
      %s211 = scalar_select %p210, %s207, 1
      %s212 = smul.addr %s209, 2
      %s213 = sadd.s32 %s211, %s212
      %s214 = smul.addr %s213, 8
      %s215 = scalar_lea.vmem %s3, %s214
      %s216 = smul.u32 2, %s19
      %p217 = scmp.lt.s32.totalorder %s18, 1
      %s218 = scalar_select %p217, %s18, 1
      %p219 = scmp.lt.s32.totalorder %s216, 1
      %s220 = scalar_select %p219, %s216, 1
      %s221 = smul.addr %s218, 2
      %s222 = sadd.s32 %s220, %s221
      %s223 = smul.addr %s222, 4
      %s224 = scalar_lea.vmem %s0, %s223
      %s225 = smul.u32 2, %s19
      %p226 = scmp.lt.s32.totalorder %s18, 1
      %s227 = scalar_select %p226, %s18, 1
      %s228 = smul.addr %s227, 16
      %s229 = smul.addr %s228, 4
      %s230 = scalar_lea.vmem %s1, %s229
      %p231 = scmp.lt.s32.totalorder %s18, 1
      %s232 = scalar_select %p231, %s18, 1
      %s233 = scalar_lea.vmem %s2, %s232
      %s234 = smul.u32 2, %s19
      %p235 = scmp.lt.s32.totalorder %s18, 1
      %s236 = scalar_select %p235, %s18, 1
      %p237 = scmp.lt.s32.totalorder %s234, 1
      %s238 = scalar_select %p237, %s234, 1
      %s239 = smul.addr %s236, 2
      %s240 = sadd.s32 %s238, %s239
      %s241 = smul.addr %s240, 8
      %s242 = scalar_lea.vmem %s3, %s241
      %s243 = smul.u32 2, %s19
      %v245 = vld [vmem:[%s224] sm:$0xf]
      %v246 = vld [vmem:[%s224 + $0x4] sm:$0xf]
      %v247 = vld [vmem:[%s230] sm:$0xf]
      %v248 = vld [vmem:[%s230 + $0x4] sm:$0xf]
      %v249 = vld [vmem:[%s230 + $0x8] sm:$0xf]
      %v250 = vld [vmem:[%s230 + $0xc] sm:$0xf]
      %v251 = vld [vmem:[%s230 + $0x10] sm:$0xf]
      %v252 = vld [vmem:[%s230 + $0x14] sm:$0xf]
      %v253 = vld [vmem:[%s230 + $0x18] sm:$0xf]
      %v254 = vld [vmem:[%s230 + $0x1c] sm:$0xf]
      %v255 = vld [vmem:[%s230 + $0x20] sm:$0xf]
      %v256 = vld [vmem:[%s230 + $0x24] sm:$0xf]
      %v257 = vld [vmem:[%s230 + $0x28] sm:$0xf]
      %v258 = vld [vmem:[%s230 + $0x2c] sm:$0xf]
      %v259 = vld [vmem:[%s230 + $0x30] sm:$0xf]
      %v260 = vld [vmem:[%s230 + $0x34] sm:$0xf]
      %v261 = vld [vmem:[%s230 + $0x38] sm:$0xf]
      %v262 = vld [vmem:[%s230 + $0x3c] sm:$0xf]
      %v263 = vld [vmem:[%s233] sm:$0x1]
      %v265 = vlaneseq
      %v266 = vshrl.u32 %v265, 7
      %v267 = vsub.s32 0, %v266
      %v268 = vrot.slane %v263, %v267
      %v272 = vunpack.c.l.b16 %v245
      %v273 = vunpack.c.l.b16 %v246
      %v274 = vpack.c.b16 %v273, %v272
      %v292 = vunpack.c.l.b16 %v247
      %v293 = vunpack.c.l.b16 %v248
      %v294 = vunpack.c.l.b16 %v249
      %v295 = vunpack.c.l.b16 %v250
      %v296 = vunpack.c.l.b16 %v251
      %v297 = vunpack.c.l.b16 %v252
      %v298 = vunpack.c.l.b16 %v253
      %v299 = vunpack.c.l.b16 %v254
      %v300 = vunpack.c.l.b16 %v255
      %v301 = vunpack.c.l.b16 %v256
      %v302 = vunpack.c.l.b16 %v257
      %v303 = vunpack.c.l.b16 %v258
      %v304 = vunpack.c.l.b16 %v259
      %v305 = vunpack.c.l.b16 %v260
      %v306 = vunpack.c.l.b16 %v261
      %v307 = vunpack.c.l.b16 %v262
      %v308 = vpack.c.b16 %v293, %v292
      %v309 = vpack.c.b16 %v295, %v294
      %v310 = vpack.c.b16 %v297, %v296
      %v311 = vpack.c.b16 %v299, %v298
      %v312 = vpack.c.b16 %v301, %v300
      %v313 = vpack.c.b16 %v303, %v302
      %v314 = vpack.c.b16 %v305, %v304
      %v315 = vpack.c.b16 %v307, %v306
      %324 = vmatprep.subr.bf16.mxu0 0
      %325 = vmatpush1.bf16.msra.mxu0 %v308
      %326 = vmatprep.subr.bf16.mxu0 0
      %327 = vmatpush1.bf16.msra.mxu0 %v309
      %328 = vmatprep.subr.bf16.mxu0 0
      %329 = vmatpush1.bf16.msra.mxu0 %v310
      %330 = vmatprep.subr.bf16.mxu0 0
      %331 = vmatpush1.bf16.msra.mxu0 %v311
      %332 = vmatprep.subr.bf16.mxu0 0
      %333 = vmatpush1.bf16.msra.mxu0 %v312
      %334 = vmatprep.subr.bf16.mxu0 0
      %335 = vmatpush1.bf16.msra.mxu0 %v313
      %336 = vmatprep.subr.bf16.mxu0 0
      %337 = vmatpush1.bf16.msra.mxu0 %v314
      %338 = vmatprep.subr.bf16.mxu0 0
      %339 = vmatpush1.bf16.msra.mxu0 %v315
      %340 = vmatprep.subr.bf16.mxu0 0
      %341 = vmatpush1.bf16.msra.mxu0 0
      %342 = vmatprep.subr.bf16.mxu0 0
      %343 = vmatpush1.bf16.msra.mxu0 0
      %344 = vmatprep.subr.bf16.mxu0 0
      %345 = vmatpush1.bf16.msra.mxu0 0
      %346 = vmatprep.subr.bf16.mxu0 0
      %347 = vmatpush1.bf16.msra.mxu0 0
      %348 = vmatprep.subr.bf16.mxu0 0
      %349 = vmatpush1.bf16.msra.mxu0 0
      %350 = vmatprep.subr.bf16.mxu0 0
      %351 = vmatpush1.bf16.msra.mxu0 0
      %352 = vmatprep.subr.bf16.mxu0 0
      %353 = vmatpush1.bf16.msra.mxu0 0
      %354 = vmatprep.subr.bf16.mxu0 0
      %355 = vmatpush1.bf16.msra.mxu0 0
      %356 = vmatprep.mubr.bf16.mxu0 0
      %357 = vmatmul.mubr.bf16.gmra.mrb[0].mxu0 %v274
      %v358 = vpop.f32.mrb[0].mxu0
      %v359 = vadd.f32 %v268, %v358
      %v360 = vpop.f32.mrb[0].mxu0
      %v361 = vpop.f32.mrb[0].mxu0
      %v362 = vadd.f32 %v268, %v361
      %v363 = vpop.f32.mrb[0].mxu0
      %364 = vdwg.mxu0
      %365 = vst [vmem:[%s242] sm:$0xff] %v359
      %366 = vst [vmem:[%s242 + $0x8] sm:$0xff] %v362
      %s367 = smul.u32 2, %s19
      %p368 = scmp.lt.s32.totalorder %s18, 1
      %s369 = scalar_select %p368, %s18, 1
      %p370 = scmp.lt.s32.totalorder %s367, 1
      %s371 = scalar_select %p370, %s367, 1
      %s372 = smul.addr %s369, 2
      %s373 = sadd.s32 %s371, %s372
      %s374 = smul.addr %s373, 8
      %s375 = scalar_lea.vmem %s3, %s374
      // Predicated region
      $region33: #{forward.13} parent=31 // pred_check
        %p376 = pneg %p126
      $region34: #{forward.13} parent=31 // pred_check_branch
        %378 = sbr.rel (%p376) target = $region36
      $region35: #{forward.13} parent=31 // pred_region
        %s379 = smul.u32 2, %s19
      $region36: #{forward.13} parent=31 // pred_fallthru
        _
    $region32: #{forward.13} parent=5 // pred_fallthru
      _
    %p380 = scmp.le.s32.totalorder 2, %s9
    // Predicated region
    $region37: #{forward.13} parent=5 // pred_check
      %p381 = pneg %p380
    $region38: #{forward.13} parent=5 // pred_check_branch
      %383 = sbr.rel (%p381) target = $region40
    $region39: #{forward.13} parent=5 // pred_region
      %s384 = ssub.s32 %s9, 2
      // Predicated region
      $region41: #{forward.13} parent=39 // pred_check
        %p385 = pneg %p132
      $region42: #{forward.13} parent=39 // pred_check_branch
        %387 = sbr.rel (%p385) target = $region44
      $region43: #{forward.13} parent=39 // pred_region
        %s388 = smul.u32 2, %s21
        %p389 = scmp.lt.s32.totalorder %s20, 1
        %s390 = scalar_select %p389, %s20, 1
        %p391 = scmp.lt.s32.totalorder %s388, 1
        %s392 = scalar_select %p391, %s388, 1
        %s393 = smul.addr %s390, 2
        %s394 = sadd.s32 %s392, %s393
        %s395 = smul.addr %s394, 8
        %s396 = scalar_lea.vmem %s3, %s395
      $region44: #{forward.13} parent=39 // pred_fallthru
        _
    $region40: #{forward.13} parent=5 // pred_fallthru
      _
  $region6: #{forward.13} parent=0 // loop_footer
    %s13 = sadd.s32 1, %s9
  $region7: #{forward.13} parent=0 // loop_footer_branch
    %8 = sbr.rel target = $region3
  $region8: #{forward.13} parent=0 // loop_exit
    _

</llo_original>
